<compile_context>
chip_gen: v5e
topology: v5e:2x2
jax: 0.10.0
libtpu: 0.0.40
codegen_flags: <defaults>
</compile_context>

<pallas_src>
import math

import jax
import jax.numpy as jnp
from jax import lax
from jax.experimental import pallas as pl
from jax.experimental.pallas import tpu as pltpu


def _plane_consts(rh, rw, row_is_y, col_is_y):
    """Per-fused-column constants for one plane: row idx, col idx, axis flags."""
    a = jnp.arange(rh * rw, dtype=jnp.int32)
    return jnp.stack([
        (a // rw).astype(jnp.float32),                       # row index inside plane
        (a % rw).astype(jnp.float32),                        # col index inside plane
        jnp.full((rh * rw,), 1.0 if row_is_y else 0.0, jnp.float32),  # row axis is y?
        jnp.full((rh * rw,), 1.0 if col_is_y else 0.0, jnp.float32),  # col axis is y?
    ], axis=0)


def triplane_fields_forward(inp, aabb, p_xy, p_xz, p_yz, w1, b1, w2, b2, cls_emb,
                            resolutions, tile_n=512):
    """Runs the fused Pallas kernel.  Returns (out (N, output_dim), entropy scalar)."""
    rx, ry, rz = resolutions
    n_total, _ = inp.shape
    hidden = w1.shape[1]
    num_cls = w2.shape[1]
    out_dim = cls_emb.shape[1]

    k_xy = ry * rx
    k_xz = rz * rx
    k_yz = rz * ry
    k_total = k_xy + k_xz + k_yz

    # All three planes in one feature-last table, with the first decoder Linear
    # folded in (exact; done once by XLA), then cast to bf16 for the MXU.
    plane_cat = jnp.concatenate([p_xy, p_xz, p_yz], axis=0)             # (K_total, C)
    pw1 = jnp.dot(plane_cat, w1,
                  precision=lax.Precision.HIGHEST).astype(jnp.bfloat16)  # (K_total, H)

    # Per-column constants of the fused K axis (hoisted out of the grid loop).
    consts = jnp.concatenate([
        _plane_consts(ry, rx, True, False),     # xy plane: rows=y, cols=x
        _plane_consts(rz, rx, False, False),    # xz plane: rows=z, cols=x
        _plane_consts(rz, ry, False, True),     # yz plane: rows=z, cols=y
    ], axis=1)                                                           # (4, K_total)

    # Lane-dense output with at least one spare lane for the entropy partials.
    out_pad = pl.cdiv(out_dim + 1, 128) * 128
    emb_pad = jnp.pad(cls_emb, ((0, 0), (0, out_pad - out_dim)))

    n_pad = pl.cdiv(n_total, tile_n) * tile_n
    inp_p = jnp.pad(inp, ((0, n_pad - n_total), (0, 0)))
    n_tiles = n_pad // tile_n

    def kernel(inp_ref, aabb_ref, const_ref, pw1_ref, b1_ref, w2_ref, b2_ref,
               emb_ref, out_ref):
        pts = inp_ref[...]                                   # (TN, 3)
        aabb_v = aabb_ref[...]                               # (2, 3)
        amin = aabb_v[0:1, :]
        amax = aabb_v[1:2, :]
        x = (pts - amin) / (amax - amin) * 2.0 - 1.0         # [-1, 1]

        def cont_coord(u, r):
            # align_corners=True continuous pixel coordinate, border clamp.
            return jnp.clip((u + 1.0) * 0.5 * (r - 1), 0.0, float(r - 1))

        px = cont_coord(x[:, 0:1], rx)                       # (TN, 1)
        py = cont_coord(x[:, 1:2], ry)
        pz = cont_coord(x[:, 2:3], rz)

        row_idx_c = const_ref[0:1, :]                        # (1, K_total)
        col_idx_c = const_ref[1:2, :]
        row_is_y = const_ref[2:3, :] > 0.5                   # xy plane rows are y
        col_is_y = const_ref[3:4, :] > 0.5                   # yz plane cols are y

        # Separable bilinear "tent" weights, built directly in the fused
        # lane-dense (TN, K_total) layout (~11 VPU ops / element in total).
        p_row = jnp.where(row_is_y, py, pz)                  # (TN, K_total)
        p_col = jnp.where(col_is_y, py, px)
        w_row = jnp.maximum(1.0 - jnp.abs(row_idx_c - p_row), 0.0)
        w_col = jnp.maximum(1.0 - jnp.abs(col_idx_c - p_col), 0.0)
        w_all = (w_row * w_col).astype(jnp.bfloat16)         # (TN, K_total) bf16

        # TriplanesEncoding (3 bilinear samples, reduce='sum') fused with the
        # first decoder Linear (W1 already folded into pw1): ONE bf16 MXU matmul.
        h = jnp.maximum(
            jnp.dot(w_all, pw1_ref[...], preferred_element_type=jnp.float32)
            + b1_ref[...], 0.0)                              # (TN, hidden)
        logits = (jnp.dot(h, w2_ref[...], preferred_element_type=jnp.float32)
                  + b2_ref[...])                             # (TN, num_cls)

        # Softmax (exact normalization; only num_cls lanes so cost is negligible).
        m = jnp.max(logits, axis=-1, keepdims=True)
        e = jnp.exp(logits - m)
        prob = e / jnp.sum(e, axis=-1, keepdims=True)        # (TN, num_cls)

        out_mm = jnp.dot(prob, emb_ref[...], preferred_element_type=jnp.float32)

        # Per-point entropy packed into the spare padded lane `out_dim`; the
        # wrapper averages that column over the first N rows (padded rows are
        # dropped by the [:N] slice, so no masking is needed here).
        ent_pt = -jnp.sum(prob * jnp.log(prob + 1e-5), axis=-1, keepdims=True)
        col = lax.broadcasted_iota(jnp.int32, (1, out_pad), 1)
        out_ref[...] = jnp.where(col == out_dim, ent_pt, out_mm)

    full = lambda shape: pl.BlockSpec(shape, lambda i: tuple(0 for _ in shape))

    flops = 2 * n_pad * (k_total * hidden + hidden * num_cls + num_cls * out_pad)
    transcendentals = n_pad * (2 * num_cls + 1)              # exp + log + divide
    bytes_accessed = int(inp_p.nbytes + aabb.nbytes + consts.nbytes + pw1.nbytes
                         + b1.nbytes + w2.nbytes + b2.nbytes + emb_pad.nbytes
                         + n_pad * out_pad * 4)

    out_full = pl.pallas_call(
        kernel,
        out_shape=jax.ShapeDtypeStruct((n_pad, out_pad), jnp.float32),
        grid_spec=pltpu.PrefetchScalarGridSpec(
            num_scalar_prefetch=0,
            grid=(n_tiles,),
            in_specs=[
                pl.BlockSpec((tile_n, 3), lambda i: (i, 0)),  # points (tiled)
                full((2, 3)),                                 # aabb
                full((4, k_total)),                           # per-column constants
                full((k_total, hidden)),                      # plane table @ W1 (bf16)
                full((1, hidden)),                            # b1
                full((hidden, num_cls)),                      # W2
                full((1, num_cls)),                           # b2
                full((num_cls, out_pad)),                     # cls embedding (padded)
            ],
            out_specs=pl.BlockSpec((tile_n, out_pad), lambda i: (i, 0)),
        ),
        compiler_params=pltpu.CompilerParams(
            dimension_semantics=("parallel",),               # no cross-iter state
            vmem_limit_bytes=32 * 1024 * 1024),              # v7x-safe default
        cost_estimate=pl.CostEstimate(
            flops=flops, transcendentals=transcendentals,
            bytes_accessed=bytes_accessed),
    )(inp_p, aabb, consts, pw1, b1, w2, b2, emb_pad)

    out = out_full[:n_total, :out_dim]
    entropy = jnp.mean(out_full[:n_total, out_dim])
    return out, entropy


def reference_forward(inp, aabb, p_xy, p_xz, p_yz, w1, b1, w2, b2, cls_emb, resolutions):
    """Pure-JAX reference for correctness checking."""
    rx, ry, rz = resolutions
    x = (inp - aabb[0]) / (aabb[1] - aabb[0]) * 2.0 - 1.0

    def axis_w(u, r):
        px = jnp.clip((u + 1.0) * 0.5 * (r - 1), 0.0, float(r - 1))
        i0 = jnp.floor(px)
        t = px - i0
        idx = jnp.arange(r, dtype=jnp.float32)[None, :]
        return (jnp.where(idx == i0[:, None], 1.0 - t[:, None], 0.0)
                + jnp.where(idx == i0[:, None] + 1.0, t[:, None], 0.0))

    wx, wy, wz = axis_w(x[:, 0], rx), axis_w(x[:, 1], ry), axis_w(x[:, 2], rz)

    def sample(plane, w_h, w_w, rh, rw):
        wo = (w_h[:, :, None] * w_w[:, None, :]).reshape(-1, rh * rw)
        return wo @ plane

    feat = (sample(p_xy, wy, wx, ry, rx)
            + sample(p_xz, wz, wx, rz, rx)
            + sample(p_yz, wz, wy, rz, ry))
    h = jnp.maximum(feat @ w1 + b1, 0.0)
    logits = h @ w2 + b2
    prob = jax.nn.softmax(logits, axis=-1)
    entropy = jnp.mean(-jnp.sum(prob * jnp.log(prob + 1e-5), axis=1))
    return prob @ cls_emb, entropy


if __name__ == "__main__":
    # Small config consistent with the module defaults (feat_dim=64, hidden=64,
    # num_cls=3, output_dim=96) at a small plane resolution.
    resolutions = (16, 16, 16)      # (Rx, Ry, Rz)
    feat_dim = 64
    hidden = 64
    num_cls = 3
    output_dim = 96
    n_points = 1000                 # exercises padding (tile_n=512 -> 2 tiles)
    init_a, init_b = 0.1, 0.5

    rx, ry, rz = resolutions
    key = jax.random.PRNGKey(0)
    ks = jax.random.split(key, 12)

    aabb = jnp.array([[-1.5, -1.0, -2.0], [1.5, 1.0, 2.0]], dtype=jnp.float32)
    u = jax.random.uniform(ks[0], (n_points, 3), dtype=jnp.float32)
    inp = aabb[0] + u * (aabb[1] - aabb[0])

    # TriplanesEncoding params: uniform(init_a, init_b), stored feature-last (H*W, C).
    p_xy = jax.random.uniform(ks[1], (ry * rx, feat_dim), jnp.float32, init_a, init_b)
    p_xz = jax.random.uniform(ks[2], (rz * rx, feat_dim), jnp.float32, init_a, init_b)
    p_yz = jax.random.uniform(ks[3], (rz * ry, feat_dim), jnp.float32, init_a, init_b)

    # 2-layer MLP decoder (Linear default-style uniform init, deterministic).
    lim1 = 1.0 / math.sqrt(feat_dim)
    lim2 = 1.0 / math.sqrt(hidden)
    w1 = jax.random.uniform(ks[4], (feat_dim, hidden), jnp.float32, -lim1, lim1)
    b1 = jax.random.uniform(ks[5], (1, hidden), jnp.float32, -lim1, lim1)
    w2 = jax.random.uniform(ks[6], (hidden, num_cls), jnp.float32, -lim2, lim2)
    b2 = jax.random.uniform(ks[7], (1, num_cls), jnp.float32, -lim2, lim2)

    # cls_embedding: Embedding(num_cls, output_dim), N(0,1) init; forward uses rows [0,1,2].
    cls_emb = jax.random.normal(ks[8], (num_cls, output_dim), jnp.float32)

    out, entropy = triplane_fields_forward(
        inp, aabb, p_xy, p_xz, p_yz, w1, b1, w2, b2, cls_emb, resolutions)
    out = jax.block_until_ready(out)
    entropy = jax.block_until_ready(entropy)

    ref_out, ref_ent = reference_forward(
        inp, aabb, p_xy, p_xz, p_yz, w1, b1, w2, b2, cls_emb, resolutions)

    assert out.shape == (n_points, output_dim)
    # Tolerance covers the bf16 sampling matmul (f32 accumulation) and the
    # different (fused-K, W1-folded) accumulation order vs. the f32 reference.
    assert jnp.allclose(out, ref_out, atol=1e-2, rtol=1e-2), "output mismatch"
    assert jnp.allclose(entropy, ref_ent, atol=1e-2, rtol=1e-2), "entropy mismatch"

    print("KERNEL_OK")
</pallas_src>

<mosaic_0001>
module attributes {stable_mosaic.version = 11 : i64} {
  func.func @kernel(%arg0: i32, %arg1: memref<512x3xf32, #tpu.memory_space<vmem>>, %arg2: memref<2x3xf32, #tpu.memory_space<vmem>>, %arg3: memref<4x768xf32, #tpu.memory_space<vmem>>, %arg4: memref<768x64xbf16, #tpu.memory_space<vmem>>, %arg5: memref<1x64xf32, #tpu.memory_space<vmem>>, %arg6: memref<64x3xf32, #tpu.memory_space<vmem>>, %arg7: memref<1x3xf32, #tpu.memory_space<vmem>>, %arg8: memref<3x128xf32, #tpu.memory_space<vmem>>, %arg9: memref<512x128xf32, #tpu.memory_space<vmem>>) attributes {dimension_semantics = [#tpu.dimension_semantics<parallel>], iteration_bounds = array<i64: 2>, scalar_prefetch = 0 : i64, scratch_operands = 0 : i64, tpu.core_type = #tpu.core_type<tc>, window_params = [{transform_indices = @transform_0, window_bounds = array<i64: 512, 3>}, {pipeline_mode = #tpu.pipeline_mode<synchronous>, transform_indices = @transform_1, window_bounds = array<i64: 2, 3>}, {pipeline_mode = #tpu.pipeline_mode<synchronous>, transform_indices = @transform_2, window_bounds = array<i64: 4, 768>}, {pipeline_mode = #tpu.pipeline_mode<synchronous>, transform_indices = @transform_3, window_bounds = array<i64: 768, 64>}, {pipeline_mode = #tpu.pipeline_mode<synchronous>, transform_indices = @transform_4, window_bounds = array<i64: 1, 64>}, {pipeline_mode = #tpu.pipeline_mode<synchronous>, transform_indices = @transform_5, window_bounds = array<i64: 64, 3>}, {pipeline_mode = #tpu.pipeline_mode<synchronous>, transform_indices = @transform_6, window_bounds = array<i64: 1, 3>}, {pipeline_mode = #tpu.pipeline_mode<synchronous>, transform_indices = @transform_7, window_bounds = array<i64: 3, 128>}, {transform_indices = @transform_8, window_bounds = array<i64: 512, 128>}]} {
    %c0 = arith.constant 0 : index
    %c0_0 = arith.constant 0 : index
    %0 = vector.load %arg1[%c0, %c0_0] : memref<512x3xf32, #tpu.memory_space<vmem>>, vector<512x3xf32>
    %c0_1 = arith.constant 0 : index
    %c0_2 = arith.constant 0 : index
    %1 = vector.load %arg2[%c0_1, %c0_2] : memref<2x3xf32, #tpu.memory_space<vmem>>, vector<2x3xf32>
    %2 = vector.extract_strided_slice %1 {offsets = [0, 0], sizes = [1, 3], strides = [1, 1]} : vector<2x3xf32> to vector<1x3xf32>
    %3 = vector.extract_strided_slice %1 {offsets = [1, 0], sizes = [1, 3], strides = [1, 1]} : vector<2x3xf32> to vector<1x3xf32>
    %4 = vector.broadcast %2 : vector<1x3xf32> to vector<512x3xf32>
    %5 = arith.subf %0, %4 : vector<512x3xf32>
    %6 = arith.subf %3, %2 : vector<1x3xf32>
    %7 = vector.broadcast %6 : vector<1x3xf32> to vector<512x3xf32>
    %8 = arith.divf %5, %7 : vector<512x3xf32>
    %cst = arith.constant 2.000000e+00 : f32
    %9 = vector.broadcast %cst : f32 to vector<512x3xf32>
    %10 = arith.mulf %8, %9 : vector<512x3xf32>
    %cst_3 = arith.constant 1.000000e+00 : f32
    %11 = vector.broadcast %cst_3 : f32 to vector<512x3xf32>
    %12 = arith.subf %10, %11 : vector<512x3xf32>
    %13 = vector.extract_strided_slice %12 {offsets = [0, 0], sizes = [512, 1], strides = [1, 1]} : vector<512x3xf32> to vector<512x1xf32>
    %cst_4 = arith.constant 1.000000e+00 : f32
    %14 = vector.broadcast %cst_4 : f32 to vector<512x1xf32>
    %15 = arith.addf %13, %14 : vector<512x1xf32>
    %cst_5 = arith.constant 5.000000e-01 : f32
    %16 = vector.broadcast %cst_5 : f32 to vector<512x1xf32>
    %17 = arith.mulf %15, %16 : vector<512x1xf32>
    %cst_6 = arith.constant 1.500000e+01 : f32
    %18 = vector.broadcast %cst_6 : f32 to vector<512x1xf32>
    %19 = arith.mulf %17, %18 : vector<512x1xf32>
    %cst_7 = arith.constant 0.000000e+00 : f32
    %cst_8 = arith.constant 1.500000e+01 : f32
    %20 = vector.broadcast %cst_7 : f32 to vector<512x1xf32>
    %21 = arith.maximumf %20, %19 : vector<512x1xf32>
    %22 = vector.broadcast %cst_8 : f32 to vector<512x1xf32>
    %23 = arith.minimumf %22, %21 : vector<512x1xf32>
    %24 = vector.extract_strided_slice %12 {offsets = [0, 1], sizes = [512, 1], strides = [1, 1]} : vector<512x3xf32> to vector<512x1xf32>
    %cst_9 = arith.constant 1.000000e+00 : f32
    %25 = vector.broadcast %cst_9 : f32 to vector<512x1xf32>
    %26 = arith.addf %24, %25 : vector<512x1xf32>
    %cst_10 = arith.constant 5.000000e-01 : f32
    %27 = vector.broadcast %cst_10 : f32 to vector<512x1xf32>
    %28 = arith.mulf %26, %27 : vector<512x1xf32>
    %cst_11 = arith.constant 1.500000e+01 : f32
    %29 = vector.broadcast %cst_11 : f32 to vector<512x1xf32>
    %30 = arith.mulf %28, %29 : vector<512x1xf32>
    %cst_12 = arith.constant 0.000000e+00 : f32
    %cst_13 = arith.constant 1.500000e+01 : f32
    %31 = vector.broadcast %cst_12 : f32 to vector<512x1xf32>
    %32 = arith.maximumf %31, %30 : vector<512x1xf32>
    %33 = vector.broadcast %cst_13 : f32 to vector<512x1xf32>
    %34 = arith.minimumf %33, %32 : vector<512x1xf32>
    %35 = vector.extract_strided_slice %12 {offsets = [0, 2], sizes = [512, 1], strides = [1, 1]} : vector<512x3xf32> to vector<512x1xf32>
    %cst_14 = arith.constant 1.000000e+00 : f32
    %36 = vector.broadcast %cst_14 : f32 to vector<512x1xf32>
    %37 = arith.addf %35, %36 : vector<512x1xf32>
    %cst_15 = arith.constant 5.000000e-01 : f32
    %38 = vector.broadcast %cst_15 : f32 to vector<512x1xf32>
    %39 = arith.mulf %37, %38 : vector<512x1xf32>
    %cst_16 = arith.constant 1.500000e+01 : f32
    %40 = vector.broadcast %cst_16 : f32 to vector<512x1xf32>
    %41 = arith.mulf %39, %40 : vector<512x1xf32>
    %cst_17 = arith.constant 0.000000e+00 : f32
    %cst_18 = arith.constant 1.500000e+01 : f32
    %42 = vector.broadcast %cst_17 : f32 to vector<512x1xf32>
    %43 = arith.maximumf %42, %41 : vector<512x1xf32>
    %44 = vector.broadcast %cst_18 : f32 to vector<512x1xf32>
    %45 = arith.minimumf %44, %43 : vector<512x1xf32>
    %c0_19 = arith.constant 0 : index
    %c0_20 = arith.constant 0 : index
    %46 = vector.load %arg3[%c0_19, %c0_20] : memref<4x768xf32, #tpu.memory_space<vmem>>, vector<1x768xf32>
    %c1 = arith.constant 1 : index
    %c0_21 = arith.constant 0 : index
    %47 = vector.load %arg3[%c1, %c0_21] : memref<4x768xf32, #tpu.memory_space<vmem>>, vector<1x768xf32>
    %c2 = arith.constant 2 : index
    %c0_22 = arith.constant 0 : index
    %48 = vector.load %arg3[%c2, %c0_22] : memref<4x768xf32, #tpu.memory_space<vmem>>, vector<1x768xf32>
    %cst_23 = arith.constant 5.000000e-01 : f32
    %49 = vector.broadcast %cst_23 : f32 to vector<1x768xf32>
    %50 = arith.cmpf ogt, %48, %49 : vector<1x768xf32>
    %c3 = arith.constant 3 : index
    %c0_24 = arith.constant 0 : index
    %51 = vector.load %arg3[%c3, %c0_24] : memref<4x768xf32, #tpu.memory_space<vmem>>, vector<1x768xf32>
    %cst_25 = arith.constant 5.000000e-01 : f32
    %52 = vector.broadcast %cst_25 : f32 to vector<1x768xf32>
    %53 = arith.cmpf ogt, %51, %52 : vector<1x768xf32>
    %54 = vector.shape_cast %50 : vector<1x768xi1> to vector<1x768xi1>
    %55 = vector.broadcast %54 : vector<1x768xi1> to vector<512x768xi1>
    %56 = vector.shape_cast %34 : vector<512x1xf32> to vector<512x1xf32>
    %57 = vector.broadcast %56 : vector<512x1xf32> to vector<512x768xf32>
    %58 = vector.shape_cast %45 : vector<512x1xf32> to vector<512x1xf32>
    %59 = vector.broadcast %58 : vector<512x1xf32> to vector<512x768xf32>
    %60 = arith.select %55, %57, %59 : vector<512x768xi1>, vector<512x768xf32>
    %61 = vector.shape_cast %53 : vector<1x768xi1> to vector<1x768xi1>
    %62 = vector.broadcast %61 : vector<1x768xi1> to vector<512x768xi1>
    %63 = vector.shape_cast %34 : vector<512x1xf32> to vector<512x1xf32>
    %64 = vector.broadcast %63 : vector<512x1xf32> to vector<512x768xf32>
    %65 = vector.shape_cast %23 : vector<512x1xf32> to vector<512x1xf32>
    %66 = vector.broadcast %65 : vector<512x1xf32> to vector<512x768xf32>
    %67 = arith.select %62, %64, %66 : vector<512x768xi1>, vector<512x768xf32>
    %68 = vector.broadcast %46 : vector<1x768xf32> to vector<512x768xf32>
    %69 = arith.subf %68, %60 : vector<512x768xf32>
    %70 = math.absf %69 : vector<512x768xf32>
    %cst_26 = arith.constant 1.000000e+00 : f32
    %71 = vector.broadcast %cst_26 : f32 to vector<512x768xf32>
    %72 = arith.subf %71, %70 : vector<512x768xf32>
    %cst_27 = arith.constant 0.000000e+00 : f32
    %73 = vector.broadcast %cst_27 : f32 to vector<512x768xf32>
    %74 = arith.maximumf %72, %73 : vector<512x768xf32>
    %75 = vector.broadcast %47 : vector<1x768xf32> to vector<512x768xf32>
    %76 = arith.subf %75, %67 : vector<512x768xf32>
    %77 = math.absf %76 : vector<512x768xf32>
    %cst_28 = arith.constant 1.000000e+00 : f32
    %78 = vector.broadcast %cst_28 : f32 to vector<512x768xf32>
    %79 = arith.subf %78, %77 : vector<512x768xf32>
    %cst_29 = arith.constant 0.000000e+00 : f32
    %80 = vector.broadcast %cst_29 : f32 to vector<512x768xf32>
    %81 = arith.maximumf %79, %80 : vector<512x768xf32>
    %82 = arith.mulf %74, %81 : vector<512x768xf32>
    %83 = arith.truncf %82 : vector<512x768xf32> to vector<512x768xbf16>
    %c0_30 = arith.constant 0 : index
    %c0_31 = arith.constant 0 : index
    %84 = vector.load %arg4[%c0_30, %c0_31] : memref<768x64xbf16, #tpu.memory_space<vmem>>, vector<768x64xbf16>
    %cst_32 = arith.constant dense<0.000000e+00> : vector<512x64xf32>
    %85 = tpu.matmul %83, %84, %cst_32 {dimension_numbers = #tpu.dot_dimension_numbers<[1], [0], [0], [1], [0, 0, 1, 1], [], []>} : vector<512x768xbf16>, vector<768x64xbf16>, vector<512x64xf32> -> vector<512x64xf32>
    %c0_33 = arith.constant 0 : index
    %c0_34 = arith.constant 0 : index
    %86 = vector.load %arg5[%c0_33, %c0_34] : memref<1x64xf32, #tpu.memory_space<vmem>>, vector<1x64xf32>
    %87 = vector.broadcast %86 : vector<1x64xf32> to vector<512x64xf32>
    %88 = arith.addf %85, %87 : vector<512x64xf32>
    %cst_35 = arith.constant 0.000000e+00 : f32
    %89 = vector.broadcast %cst_35 : f32 to vector<512x64xf32>
    %90 = arith.maximumf %88, %89 : vector<512x64xf32>
    %c0_36 = arith.constant 0 : index
    %c0_37 = arith.constant 0 : index
    %91 = vector.load %arg6[%c0_36, %c0_37] : memref<64x3xf32, #tpu.memory_space<vmem>>, vector<64x3xf32>
    %cst_38 = arith.constant dense<0.000000e+00> : vector<512x3xf32>
    %92 = tpu.matmul %90, %91, %cst_38 {dimension_numbers = #tpu.dot_dimension_numbers<[1], [0], [0], [1], [0, 0, 1, 1], [], []>} : vector<512x64xf32>, vector<64x3xf32>, vector<512x3xf32> -> vector<512x3xf32>
    %c0_39 = arith.constant 0 : index
    %c0_40 = arith.constant 0 : index
    %93 = vector.load %arg7[%c0_39, %c0_40] : memref<1x3xf32, #tpu.memory_space<vmem>>, vector<1x3xf32>
    %94 = vector.broadcast %93 : vector<1x3xf32> to vector<512x3xf32>
    %95 = arith.addf %92, %94 : vector<512x3xf32>
    %cst_41 = arith.constant dense<0xFF800000> : vector<512xf32>
    %96 = vector.multi_reduction <maximumf>, %95, %cst_41 [1] : vector<512x3xf32> to vector<512xf32>
    %97 = vector.shape_cast %96 : vector<512xf32> to vector<512x1xf32>
    %98 = vector.broadcast %97 : vector<512x1xf32> to vector<512x3xf32>
    %99 = arith.subf %95, %98 : vector<512x3xf32>
    %100 = math.exp %99 : vector<512x3xf32>
    %cst_42 = arith.constant dense<0.000000e+00> : vector<512xf32>
    %101 = vector.multi_reduction <add>, %100, %cst_42 [1] : vector<512x3xf32> to vector<512xf32>
    %102 = vector.shape_cast %101 : vector<512xf32> to vector<512x1xf32>
    %103 = vector.broadcast %102 : vector<512x1xf32> to vector<512x3xf32>
    %104 = arith.divf %100, %103 : vector<512x3xf32>
    %c0_43 = arith.constant 0 : index
    %c0_44 = arith.constant 0 : index
    %105 = vector.load %arg8[%c0_43, %c0_44] : memref<3x128xf32, #tpu.memory_space<vmem>>, vector<3x128xf32>
    %cst_45 = arith.constant dense<0.000000e+00> : vector<512x128xf32>
    %106 = tpu.matmul %104, %105, %cst_45 {dimension_numbers = #tpu.dot_dimension_numbers<[1], [0], [0], [1], [0, 0, 1, 1], [], []>} : vector<512x3xf32>, vector<3x128xf32>, vector<512x128xf32> -> vector<512x128xf32>
    %cst_46 = arith.constant 9.99999974E-6 : f32
    %107 = vector.broadcast %cst_46 : f32 to vector<512x3xf32>
    %108 = arith.addf %104, %107 : vector<512x3xf32>
    %109 = math.log %108 : vector<512x3xf32>
    %110 = arith.mulf %104, %109 : vector<512x3xf32>
    %cst_47 = arith.constant dense<0.000000e+00> : vector<512xf32>
    %111 = vector.multi_reduction <add>, %110, %cst_47 [1] : vector<512x3xf32> to vector<512xf32>
    %112 = vector.shape_cast %111 : vector<512xf32> to vector<512x1xf32>
    %cst_48 = arith.constant 0.000000e+00 : f32
    %113 = vector.broadcast %cst_48 : f32 to vector<512x1xf32>
    %114 = arith.subf %113, %112 : vector<512x1xf32>
    %115 = tpu.iota {dimensions = array<i32: 1>} : vector<1x128xi32>
    %c96_i32 = arith.constant 96 : i32
    %116 = vector.broadcast %c96_i32 : i32 to vector<1x128xi32>
    %117 = arith.cmpi eq, %115, %116 : vector<1x128xi32>
    %118 = vector.shape_cast %117 : vector<1x128xi1> to vector<1x128xi1>
    %119 = vector.broadcast %118 : vector<1x128xi1> to vector<512x128xi1>
    %120 = vector.shape_cast %114 : vector<512x1xf32> to vector<512x1xf32>
    %121 = vector.broadcast %120 : vector<512x1xf32> to vector<512x128xf32>
    %122 = arith.select %119, %121, %106 : vector<512x128xi1>, vector<512x128xf32>
    %c0_49 = arith.constant 0 : index
    %c0_50 = arith.constant 0 : index
    %123 = vector.load %arg9[%c0_49, %c0_50] : memref<512x128xf32, #tpu.memory_space<vmem>>, vector<512x128xf32>
    tpu.vector_store %arg9[%c0_49, %c0_50], %122 {strides = array<i32>} : memref<512x128xf32, #tpu.memory_space<vmem>>, vector<512x128xf32>,
    return
  }
  func.func @transform_0(%arg0: i32) -> (i32, i32) {
    %c0_i32 = arith.constant 0 : i32
    %c0_i32_0 = arith.constant 0 : i32
    return %arg0, %c0_i32 : i32, i32
  }
  func.func @transform_1(%arg0: i32) -> (i32, i32) {
    %c0_i32 = arith.constant 0 : i32
    %c0_i32_0 = arith.constant 0 : i32
    %c0_i32_1 = arith.constant 0 : i32
    return %c0_i32, %c0_i32_0 : i32, i32
  }
  func.func @transform_2(%arg0: i32) -> (i32, i32) {
    %c0_i32 = arith.constant 0 : i32
    %c0_i32_0 = arith.constant 0 : i32
    %c0_i32_1 = arith.constant 0 : i32
    return %c0_i32, %c0_i32_0 : i32, i32
  }
  func.func @transform_3(%arg0: i32) -> (i32, i32) {
    %c0_i32 = arith.constant 0 : i32
    %c0_i32_0 = arith.constant 0 : i32
    %c0_i32_1 = arith.constant 0 : i32
    return %c0_i32, %c0_i32_0 : i32, i32
  }
  func.func @transform_4(%arg0: i32) -> (i32, i32) {
    %c0_i32 = arith.constant 0 : i32
    %c0_i32_0 = arith.constant 0 : i32
    %c0_i32_1 = arith.constant 0 : i32
    return %c0_i32, %c0_i32_0 : i32, i32
  }
  func.func @transform_5(%arg0: i32) -> (i32, i32) {
    %c0_i32 = arith.constant 0 : i32
    %c0_i32_0 = arith.constant 0 : i32
    %c0_i32_1 = arith.constant 0 : i32
    return %c0_i32, %c0_i32_0 : i32, i32
  }
  func.func @transform_6(%arg0: i32) -> (i32, i32) {
    %c0_i32 = arith.constant 0 : i32
    %c0_i32_0 = arith.constant 0 : i32
    %c0_i32_1 = arith.constant 0 : i32
    return %c0_i32, %c0_i32_0 : i32, i32
  }
  func.func @transform_7(%arg0: i32) -> (i32, i32) {
    %c0_i32 = arith.constant 0 : i32
    %c0_i32_0 = arith.constant 0 : i32
    %c0_i32_1 = arith.constant 0 : i32
    return %c0_i32, %c0_i32_0 : i32, i32
  }
  func.func @transform_8(%arg0: i32) -> (i32, i32) {
    %c0_i32 = arith.constant 0 : i32
    %c0_i32_0 = arith.constant 0 : i32
    return %arg0, %c0_i32 : i32, i32
  }
}

</mosaic_0001>

<llo_original>
// kernel: tpu_custom_call.1
$region0: #{tpu_custom_call.1}
  #allocation0 [shape = 'u32[]', space=smem, size = 0x4, offset = 0x4, fixed_abs, tag = 'smem constant byte address 0x4 - core index']
  #allocation1 [shape = 'u32[72,128]{1,0:T(1,128)}', space=vmem, size = 0x9000, scoped, tag = 'internal scratch']
  %s0 = inlined_call_operand.vmem [shape: f32[1024,3], index: 0, kind: input, shape index: {}]
  %s1 = inlined_call_operand.vmem [shape: f32[2,3], index: 1, kind: input, shape index: {}]
  %s2 = inlined_call_operand.vmem [shape: f32[4,768], index: 2, kind: input, shape index: {}]
  %s3 = inlined_call_operand.vmem [shape: bf16[768,64], index: 3, kind: input, shape index: {}]
  %s4 = inlined_call_operand.vmem [shape: f32[1,64], index: 4, kind: input, shape index: {}]
  %s5 = inlined_call_operand.vmem [shape: f32[64,3], index: 5, kind: input, shape index: {}]
  %s6 = inlined_call_operand.vmem [shape: f32[1,3], index: 6, kind: input, shape index: {}]
  %s7 = inlined_call_operand.vmem [shape: f32[3,128], index: 7, kind: input, shape index: {}]
  %s8 = inlined_call_operand.hbm [shape: f32[1024,128], index: 8, kind: output, shape index: {}]
  %s9 = sld [smem:[#allocation0]]
  $region65: #{tpu_custom_call.1} parent=0
    _
  %s11 = ssub.s32 1, %s9
  %s12 = scalar_select 0, %s11, %s9
  $region1: #{tpu_custom_call.1} parent=0
    #allocation2 [shape = 'u8[524288]{0}', space=vmem, size = 0x80000, scoped, tag = 'output window, operand 0']
    #allocation3 [shape = 's32[2]{0}', space=sflag, size = 0x8, scoped, tag = 'scoped memory for tpu_custom_call.1']
    %13 = vsyncpa [#allocation3], 0
    %s14 = scalar_lea.sflag [#allocation3], 1
    %15 = vsyncpa %s14, 0
    loop: start=0, step=1, limit=4
    $region2: #{tpu_custom_call.1} parent=1 // loop_pre_header
      _
    $region3: #{tpu_custom_call.1} parent=1 // loop_header
      %s17 = sphi 0, %s21
      %p18 = scmp.ge.s32.totalorder %s17, 4
      %s27 = sphi 0, %s29
      %s30 = sphi 0, %s27
      %s31 = sphi 0, %s30
      %s47 = sphi 0, %s31
      %s51 = sphi 0, %s51
      %s53 = sphi 0, %s51
      %s54 = sphi 0, %s53
      %s68 = sphi 0, %s54
      %s72 = sphi 0, %s72
      %s74 = sphi 0, %s72
      %s75 = sphi 0, %s74
      %s89 = sphi 0, %s75
      %s93 = sphi 0, %s93
      %s95 = sphi 0, %s93
      %s96 = sphi 0, %s95
      %s110 = sphi 0, %s96
      %s114 = sphi 0, %s114
      %s116 = sphi 0, %s114
      %s117 = sphi 0, %s116
      %s131 = sphi 0, %s117
      %s135 = sphi 0, %s135
      %s137 = sphi 0, %s135
      %s138 = sphi 0, %s137
      %s152 = sphi 0, %s138
      %s156 = sphi 0, %s156
      %s158 = sphi 0, %s156
      %s159 = sphi 0, %s158
      %s173 = sphi 0, %s159
      %s177 = sphi 0, %s177
      %s179 = sphi 0, %s177
      %s180 = sphi 0, %s179
      %s194 = sphi 0, %s180
      %s200 = sphi 0, %s202
      %s203 = sphi 0, %s200
      %s204 = sphi 0, %s203
      %s220 = sphi 0, %s204
    $region4: #{tpu_custom_call.1} parent=1 // loop_header_branch
      %20 = sbr.rel (%p18) target = $region8
    $region5: #{tpu_custom_call.1} parent=1 // loop_body
      %s22 = ssub.s32 %s17, 1
      %s23 = ssub.s32 %s17, 2
      %s24 = sadd.s32 %s17, 1
      %s25 = ssub.s32 %s17, %s24
      %p26 = scmp.eq.s32.totalorder %s25, 0
      %s28 = sadd.s32 %s27, 1
      %s29 = scalar_select %p26, %s27, %s28
      %p32 = pneg %p26
      %p33 = scmp.eq.s32.totalorder %s17, 1
      %p34 = por %p32, %p33
      %p35 = scmp.ne.s32.totalorder %s27, %s30
      %p36 = scmp.eq.s32.totalorder %s17, 0
      %p37 = por %p35, %p36
      %p38 = scmp.ne.s32.totalorder %s27, %s30
      %p39 = scmp.eq.s32.totalorder %s22, 1
      %p40 = por %p38, %p39
      %p41 = scmp.ne.s32.totalorder %s30, %s31
      %p42 = scmp.eq.s32.totalorder %s22, 0
      %p43 = por %p41, %p42
      %p44 = scmp.ne.s32.totalorder %s30, %s31
      %p45 = scmp.eq.s32.totalorder %s23, 1
      %p46 = por %p44, %p45
      %p48 = scmp.ne.s32.totalorder %s31, %s47
      %p49 = scmp.eq.s32.totalorder %s23, 0
      %p50 = por %p48, %p49
      %s52 = sadd.s32 %s51, 1
      %p55 = scmp.eq.s32.totalorder %s17, 1
      %p56 = scmp.ne.s32.totalorder %s51, %s53
      %p57 = scmp.eq.s32.totalorder %s17, 0
      %p58 = por %p56, %p57
      %p59 = scmp.ne.s32.totalorder %s51, %s53
      %p60 = scmp.eq.s32.totalorder %s22, 1
      %p61 = por %p59, %p60
      %p62 = scmp.ne.s32.totalorder %s53, %s54
      %p63 = scmp.eq.s32.totalorder %s22, 0
      %p64 = por %p62, %p63
      %p65 = scmp.ne.s32.totalorder %s53, %s54
      %p66 = scmp.eq.s32.totalorder %s23, 1
      %p67 = por %p65, %p66
      %p69 = scmp.ne.s32.totalorder %s54, %s68
      %p70 = scmp.eq.s32.totalorder %s23, 0
      %p71 = por %p69, %p70
      %s73 = sadd.s32 %s72, 1
      %p76 = scmp.eq.s32.totalorder %s17, 1
      %p77 = scmp.ne.s32.totalorder %s72, %s74
      %p78 = scmp.eq.s32.totalorder %s17, 0
      %p79 = por %p77, %p78
      %p80 = scmp.ne.s32.totalorder %s72, %s74
      %p81 = scmp.eq.s32.totalorder %s22, 1
      %p82 = por %p80, %p81
      %p83 = scmp.ne.s32.totalorder %s74, %s75
      %p84 = scmp.eq.s32.totalorder %s22, 0
      %p85 = por %p83, %p84
      %p86 = scmp.ne.s32.totalorder %s74, %s75
      %p87 = scmp.eq.s32.totalorder %s23, 1
      %p88 = por %p86, %p87
      %p90 = scmp.ne.s32.totalorder %s75, %s89
      %p91 = scmp.eq.s32.totalorder %s23, 0
      %p92 = por %p90, %p91
      %s94 = sadd.s32 %s93, 1
      %p97 = scmp.eq.s32.totalorder %s17, 1
      %p98 = scmp.ne.s32.totalorder %s93, %s95
      %p99 = scmp.eq.s32.totalorder %s17, 0
      %p100 = por %p98, %p99
      %p101 = scmp.ne.s32.totalorder %s93, %s95
      %p102 = scmp.eq.s32.totalorder %s22, 1
      %p103 = por %p101, %p102
      %p104 = scmp.ne.s32.totalorder %s95, %s96
      %p105 = scmp.eq.s32.totalorder %s22, 0
      %p106 = por %p104, %p105
      %p107 = scmp.ne.s32.totalorder %s95, %s96
      %p108 = scmp.eq.s32.totalorder %s23, 1
      %p109 = por %p107, %p108
      %p111 = scmp.ne.s32.totalorder %s96, %s110
      %p112 = scmp.eq.s32.totalorder %s23, 0
      %p113 = por %p111, %p112
      %s115 = sadd.s32 %s114, 1
      %p118 = scmp.eq.s32.totalorder %s17, 1
      %p119 = scmp.ne.s32.totalorder %s114, %s116
      %p120 = scmp.eq.s32.totalorder %s17, 0
      %p121 = por %p119, %p120
      %p122 = scmp.ne.s32.totalorder %s114, %s116
      %p123 = scmp.eq.s32.totalorder %s22, 1
      %p124 = por %p122, %p123
      %p125 = scmp.ne.s32.totalorder %s116, %s117
      %p126 = scmp.eq.s32.totalorder %s22, 0
      %p127 = por %p125, %p126
      %p128 = scmp.ne.s32.totalorder %s116, %s117
      %p129 = scmp.eq.s32.totalorder %s23, 1
      %p130 = por %p128, %p129
      %p132 = scmp.ne.s32.totalorder %s117, %s131
      %p133 = scmp.eq.s32.totalorder %s23, 0
      %p134 = por %p132, %p133
      %s136 = sadd.s32 %s135, 1
      %p139 = scmp.eq.s32.totalorder %s17, 1
      %p140 = scmp.ne.s32.totalorder %s135, %s137
      %p141 = scmp.eq.s32.totalorder %s17, 0
      %p142 = por %p140, %p141
      %p143 = scmp.ne.s32.totalorder %s135, %s137
      %p144 = scmp.eq.s32.totalorder %s22, 1
      %p145 = por %p143, %p144
      %p146 = scmp.ne.s32.totalorder %s137, %s138
      %p147 = scmp.eq.s32.totalorder %s22, 0
      %p148 = por %p146, %p147
      %p149 = scmp.ne.s32.totalorder %s137, %s138
      %p150 = scmp.eq.s32.totalorder %s23, 1
      %p151 = por %p149, %p150
      %p153 = scmp.ne.s32.totalorder %s138, %s152
      %p154 = scmp.eq.s32.totalorder %s23, 0
      %p155 = por %p153, %p154
      %s157 = sadd.s32 %s156, 1
      %p160 = scmp.eq.s32.totalorder %s17, 1
      %p161 = scmp.ne.s32.totalorder %s156, %s158
      %p162 = scmp.eq.s32.totalorder %s17, 0
      %p163 = por %p161, %p162
      %p164 = scmp.ne.s32.totalorder %s156, %s158
      %p165 = scmp.eq.s32.totalorder %s22, 1
      %p166 = por %p164, %p165
      %p167 = scmp.ne.s32.totalorder %s158, %s159
      %p168 = scmp.eq.s32.totalorder %s22, 0
      %p169 = por %p167, %p168
      %p170 = scmp.ne.s32.totalorder %s158, %s159
      %p171 = scmp.eq.s32.totalorder %s23, 1
      %p172 = por %p170, %p171
      %p174 = scmp.ne.s32.totalorder %s159, %s173
      %p175 = scmp.eq.s32.totalorder %s23, 0
      %p176 = por %p174, %p175
      %s178 = sadd.s32 %s177, 1
      %p181 = scmp.eq.s32.totalorder %s17, 1
      %p182 = scmp.ne.s32.totalorder %s177, %s179
      %p183 = scmp.eq.s32.totalorder %s17, 0
      %p184 = por %p182, %p183
      %p185 = scmp.ne.s32.totalorder %s177, %s179
      %p186 = scmp.eq.s32.totalorder %s22, 1
      %p187 = por %p185, %p186
      %p188 = scmp.ne.s32.totalorder %s179, %s180
      %p189 = scmp.eq.s32.totalorder %s22, 0
      %p190 = por %p188, %p189
      %p191 = scmp.ne.s32.totalorder %s179, %s180
      %p192 = scmp.eq.s32.totalorder %s23, 1
      %p193 = por %p191, %p192
      %p195 = scmp.ne.s32.totalorder %s180, %s194
      %p196 = scmp.eq.s32.totalorder %s23, 0
      %p197 = por %p195, %p196
      %s198 = ssub.s32 %s17, %s24
      %p199 = scmp.eq.s32.totalorder %s198, 0
      %s201 = sadd.s32 %s200, 1
      %s202 = scalar_select %p199, %s200, %s201
      %p205 = pneg %p199
      %p206 = scmp.eq.s32.totalorder %s17, 1
      %p207 = por %p205, %p206
      %p208 = scmp.ne.s32.totalorder %s200, %s203
      %p209 = scmp.eq.s32.totalorder %s17, 0
      %p210 = por %p208, %p209
      %p211 = scmp.ne.s32.totalorder %s200, %s203
      %p212 = scmp.eq.s32.totalorder %s22, 1
      %p213 = por %p211, %p212
      %p214 = scmp.ne.s32.totalorder %s203, %s204
      %p215 = scmp.eq.s32.totalorder %s22, 0
      %p216 = por %p214, %p215
      %p217 = scmp.ne.s32.totalorder %s203, %s204
      %p218 = scmp.eq.s32.totalorder %s23, 1
      %p219 = por %p217, %p218
      %p221 = scmp.ne.s32.totalorder %s204, %s220
      %p222 = scmp.eq.s32.totalorder %s23, 0
      %p223 = por %p221, %p222
      %p224 = scmp.le.s32.totalorder 1, %s17
      %p225 = scmp.lt.s32.totalorder %s17, 3
      %p226 = pnand %p224, %p225
      %p227 = pneg %p226
      // Predicated region
      $region9: #{tpu_custom_call.1} parent=5 // pred_check
        _
      $region10: #{tpu_custom_call.1} parent=5 // pred_check_branch
        %229 = sbr.rel (%p226) target = $region12
      $region11: #{tpu_custom_call.1} parent=5 // pred_region
        %s230 = ssub.s32 %s17, 1
        // Predicated region
        $region13: #{tpu_custom_call.1} parent=11 // pred_check
          %p231 = pneg %p64
        $region14: #{tpu_custom_call.1} parent=11 // pred_check_branch
          %233 = sbr.rel (%p231) target = $region16
        $region15: #{tpu_custom_call.1} parent=11 // pred_region
          _
        $region16: #{tpu_custom_call.1} parent=11 // pred_fallthru
          _
        // Predicated region
        $region17: #{tpu_custom_call.1} parent=11 // pred_check
          %p234 = pneg %p85
        $region18: #{tpu_custom_call.1} parent=11 // pred_check_branch
          %236 = sbr.rel (%p234) target = $region20
        $region19: #{tpu_custom_call.1} parent=11 // pred_region
          _
        $region20: #{tpu_custom_call.1} parent=11 // pred_fallthru
          _
        // Predicated region
        $region21: #{tpu_custom_call.1} parent=11 // pred_check
          %p237 = pneg %p106
        $region22: #{tpu_custom_call.1} parent=11 // pred_check_branch
          %239 = sbr.rel (%p237) target = $region24
        $region23: #{tpu_custom_call.1} parent=11 // pred_region
          _
        $region24: #{tpu_custom_call.1} parent=11 // pred_fallthru
          _
        // Predicated region
        $region25: #{tpu_custom_call.1} parent=11 // pred_check
          %p240 = pneg %p127
        $region26: #{tpu_custom_call.1} parent=11 // pred_check_branch
          %242 = sbr.rel (%p240) target = $region28
        $region27: #{tpu_custom_call.1} parent=11 // pred_region
          _
        $region28: #{tpu_custom_call.1} parent=11 // pred_fallthru
          _
        // Predicated region
        $region29: #{tpu_custom_call.1} parent=11 // pred_check
          %p243 = pneg %p148
        $region30: #{tpu_custom_call.1} parent=11 // pred_check_branch
          %245 = sbr.rel (%p243) target = $region32
        $region31: #{tpu_custom_call.1} parent=11 // pred_region
          _
        $region32: #{tpu_custom_call.1} parent=11 // pred_fallthru
          _
        // Predicated region
        $region33: #{tpu_custom_call.1} parent=11 // pred_check
          %p246 = pneg %p169
        $region34: #{tpu_custom_call.1} parent=11 // pred_check_branch
          %248 = sbr.rel (%p246) target = $region36
        $region35: #{tpu_custom_call.1} parent=11 // pred_region
          _
        $region36: #{tpu_custom_call.1} parent=11 // pred_fallthru
          _
        // Predicated region
        $region37: #{tpu_custom_call.1} parent=11 // pred_check
          %p249 = pneg %p190
        $region38: #{tpu_custom_call.1} parent=11 // pred_check_branch
          %251 = sbr.rel (%p249) target = $region40
        $region39: #{tpu_custom_call.1} parent=11 // pred_region
          _
        $region40: #{tpu_custom_call.1} parent=11 // pred_fallthru
          _
      $region12: #{tpu_custom_call.1} parent=5 // pred_fallthru
        _
      %p252 = scmp.lt.s32.totalorder %s17, 2
      // Predicated region
      $region41: #{tpu_custom_call.1} parent=5 // pred_check
        %p253 = pneg %p252
      $region42: #{tpu_custom_call.1} parent=5 // pred_check_branch
        %255 = sbr.rel (%p253) target = $region44
      $region43: #{tpu_custom_call.1} parent=5 // pred_region
        // Predicated region
        $region45: #{tpu_custom_call.1} parent=43 // pred_check
          %p256 = pneg %p37
        $region46: #{tpu_custom_call.1} parent=43 // pred_check_branch
          %258 = sbr.rel (%p256) target = $region48
        $region47: #{tpu_custom_call.1} parent=43 // pred_region
          %s259 = smul.u32 64, %s17
          %p260 = scmp.lt.s32.totalorder %s259, 127
          %s261 = scalar_select %p260, %s259, 127
          %s262 = smul.addr %s261, 8
          %s263 = scalar_lea.vmem %s0, %s262
          %s264 = smul.u32 64, %s17
        $region48: #{tpu_custom_call.1} parent=43 // pred_fallthru
          _
      $region44: #{tpu_custom_call.1} parent=5 // pred_fallthru
        _
      %p265 = scmp.le.s32.totalorder 1, %s17
      %p266 = scmp.lt.s32.totalorder %s17, 3
      %p267 = pnand %p265, %p266
      %p268 = pneg %p267
      // Predicated region
      $region49: #{tpu_custom_call.1} parent=5 // pred_check
        _
      $region50: #{tpu_custom_call.1} parent=5 // pred_check_branch
        %270 = sbr.rel (%p267) target = $region52
      $region51: #{tpu_custom_call.1} parent=5 // pred_region
        %s271 = ssub.s32 %s17, 1
        %s272 = smul.u32 64, %s22
        %p273 = scmp.lt.s32.totalorder %s272, 127
        %s274 = scalar_select %p273, %s272, 127
        %s275 = smul.addr %s274, 8
        %s276 = scalar_lea.vmem %s0, %s275
        %p277 = pneg %p43
        %p278 = pneg %p40
        %p279 = pneg %p64
        %p280 = pneg %p61
        %p281 = pneg %p85
        %p282 = pneg %p82
        %p283 = pneg %p106
        %p284 = pneg %p103
        %p285 = pneg %p127
        %p286 = pneg %p124
        %p287 = pneg %p148
        %p288 = pneg %p145
        %p289 = pneg %p169
        %p290 = pneg %p166
        %p291 = pneg %p190
        %p292 = pneg %p187
        %p293 = pneg %p216
        %p294 = pneg %p213
        %s295 = sand.u32 %s203, 1
        %s296 = scalar_lea.sflag [#allocation3], %s295
        %s297 = sand.u32 %s203, 1
        %s298 = smul.addr %s297, 512
        %s299 = scalar_lea.vmem [#allocation2], %s298
        %s300 = smul.u32 64, %s22
        %p301 = scmp.lt.s32.totalorder %s300, 127
        %s302 = scalar_select %p301, %s300, 127
        %s303 = smul.addr %s302, 8
        %s304 = scalar_lea.vmem %s0, %s303
        %s305 = smul.u32 64, %s22
        %s306 = smul.u32 64, %s22
        %v307 = vld [vmem:[%s304] sm:$0xff]
        %v308 = vld [vmem:[%s304 + $0x8] sm:$0xff]
        %v309 = vld [vmem:[%s304 + $0x10] sm:$0xff]
        %v310 = vld [vmem:[%s304 + $0x18] sm:$0xff]
        %v311 = vld [vmem:[%s304 + $0x20] sm:$0xff]
        %v312 = vld [vmem:[%s304 + $0x28] sm:$0xff]
        %v313 = vld [vmem:[%s304 + $0x30] sm:$0xff]
        %v314 = vld [vmem:[%s304 + $0x38] sm:$0xff]
        %v315 = vld [vmem:[%s304 + $0x40] sm:$0xff]
        %v316 = vld [vmem:[%s304 + $0x48] sm:$0xff]
        %v317 = vld [vmem:[%s304 + $0x50] sm:$0xff]
        %v318 = vld [vmem:[%s304 + $0x58] sm:$0xff]
        %v319 = vld [vmem:[%s304 + $0x60] sm:$0xff]
        %v320 = vld [vmem:[%s304 + $0x68] sm:$0xff]
        %v321 = vld [vmem:[%s304 + $0x70] sm:$0xff]
        %v322 = vld [vmem:[%s304 + $0x78] sm:$0xff]
        %v323 = vld [vmem:[%s304 + $0x80] sm:$0xff]
        %v324 = vld [vmem:[%s304 + $0x88] sm:$0xff]
        %v325 = vld [vmem:[%s304 + $0x90] sm:$0xff]
        %v326 = vld [vmem:[%s304 + $0x98] sm:$0xff]
        %v327 = vld [vmem:[%s304 + $0xa0] sm:$0xff]
        %v328 = vld [vmem:[%s304 + $0xa8] sm:$0xff]
        %v329 = vld [vmem:[%s304 + $0xb0] sm:$0xff]
        %v330 = vld [vmem:[%s304 + $0xb8] sm:$0xff]
        %v331 = vld [vmem:[%s304 + $0xc0] sm:$0xff]
        %v332 = vld [vmem:[%s304 + $0xc8] sm:$0xff]
        %v333 = vld [vmem:[%s304 + $0xd0] sm:$0xff]
        %v334 = vld [vmem:[%s304 + $0xd8] sm:$0xff]
        %v335 = vld [vmem:[%s304 + $0xe0] sm:$0xff]
        %v336 = vld [vmem:[%s304 + $0xe8] sm:$0xff]
        %v337 = vld [vmem:[%s304 + $0xf0] sm:$0xff]
        %v338 = vld [vmem:[%s304 + $0xf8] sm:$0xff]
        %v339 = vld [vmem:[%s304 + $0x100] sm:$0xff]
        %v340 = vld [vmem:[%s304 + $0x108] sm:$0xff]
        %v341 = vld [vmem:[%s304 + $0x110] sm:$0xff]
        %v342 = vld [vmem:[%s304 + $0x118] sm:$0xff]
        %v343 = vld [vmem:[%s304 + $0x120] sm:$0xff]
        %v344 = vld [vmem:[%s304 + $0x128] sm:$0xff]
        %v345 = vld [vmem:[%s304 + $0x130] sm:$0xff]
        %v346 = vld [vmem:[%s304 + $0x138] sm:$0xff]
        %v347 = vld [vmem:[%s304 + $0x140] sm:$0xff]
        %v348 = vld [vmem:[%s304 + $0x148] sm:$0xff]
        %v349 = vld [vmem:[%s304 + $0x150] sm:$0xff]
        %v350 = vld [vmem:[%s304 + $0x158] sm:$0xff]
        %v351 = vld [vmem:[%s304 + $0x160] sm:$0xff]
        %v352 = vld [vmem:[%s304 + $0x168] sm:$0xff]
        %v353 = vld [vmem:[%s304 + $0x170] sm:$0xff]
        %v354 = vld [vmem:[%s304 + $0x178] sm:$0xff]
        %v355 = vld [vmem:[%s304 + $0x180] sm:$0xff]
        %v356 = vld [vmem:[%s304 + $0x188] sm:$0xff]
        %v357 = vld [vmem:[%s304 + $0x190] sm:$0xff]
        %v358 = vld [vmem:[%s304 + $0x198] sm:$0xff]
        %v359 = vld [vmem:[%s304 + $0x1a0] sm:$0xff]
        %v360 = vld [vmem:[%s304 + $0x1a8] sm:$0xff]
        %v361 = vld [vmem:[%s304 + $0x1b0] sm:$0xff]
        %v362 = vld [vmem:[%s304 + $0x1b8] sm:$0xff]
        %v363 = vld [vmem:[%s304 + $0x1c0] sm:$0xff]
        %v364 = vld [vmem:[%s304 + $0x1c8] sm:$0xff]
        %v365 = vld [vmem:[%s304 + $0x1d0] sm:$0xff]
        %v366 = vld [vmem:[%s304 + $0x1d8] sm:$0xff]
        %v367 = vld [vmem:[%s304 + $0x1e0] sm:$0xff]
        %v368 = vld [vmem:[%s304 + $0x1e8] sm:$0xff]
        %v369 = vld [vmem:[%s304 + $0x1f0] sm:$0xff]
        %v370 = vld [vmem:[%s304 + $0x1f8] sm:$0xff]
        %v371 = vld [vmem:[%s1] sm:$0x3]
        %v372 = vperm.slane %v371, 0
        %v373 = vsub.f32 %v307, %v372
        %v374 = vsub.f32 %v308, %v372
        %v375 = vsub.f32 %v309, %v372
        %v376 = vsub.f32 %v310, %v372
        %v377 = vsub.f32 %v311, %v372
        %v378 = vsub.f32 %v312, %v372
        %v379 = vsub.f32 %v313, %v372
        %v380 = vsub.f32 %v314, %v372
        %v381 = vsub.f32 %v315, %v372
        %v382 = vsub.f32 %v316, %v372
        %v383 = vsub.f32 %v317, %v372
        %v384 = vsub.f32 %v318, %v372
        %v385 = vsub.f32 %v319, %v372
        %v386 = vsub.f32 %v320, %v372
        %v387 = vsub.f32 %v321, %v372
        %v388 = vsub.f32 %v322, %v372
        %v389 = vsub.f32 %v323, %v372
        %v390 = vsub.f32 %v324, %v372
        %v391 = vsub.f32 %v325, %v372
        %v392 = vsub.f32 %v326, %v372
        %v393 = vsub.f32 %v327, %v372
        %v394 = vsub.f32 %v328, %v372
        %v395 = vsub.f32 %v329, %v372
        %v396 = vsub.f32 %v330, %v372
        %v397 = vsub.f32 %v331, %v372
        %v398 = vsub.f32 %v332, %v372
        %v399 = vsub.f32 %v333, %v372
        %v400 = vsub.f32 %v334, %v372
        %v401 = vsub.f32 %v335, %v372
        %v402 = vsub.f32 %v336, %v372
        %v403 = vsub.f32 %v337, %v372
        %v404 = vsub.f32 %v338, %v372
        %v405 = vsub.f32 %v339, %v372
        %v406 = vsub.f32 %v340, %v372
        %v407 = vsub.f32 %v341, %v372
        %v408 = vsub.f32 %v342, %v372
        %v409 = vsub.f32 %v343, %v372
        %v410 = vsub.f32 %v344, %v372
        %v411 = vsub.f32 %v345, %v372
        %v412 = vsub.f32 %v346, %v372
        %v413 = vsub.f32 %v347, %v372
        %v414 = vsub.f32 %v348, %v372
        %v415 = vsub.f32 %v349, %v372
        %v416 = vsub.f32 %v350, %v372
        %v417 = vsub.f32 %v351, %v372
        %v418 = vsub.f32 %v352, %v372
        %v419 = vsub.f32 %v353, %v372
        %v420 = vsub.f32 %v354, %v372
        %v421 = vsub.f32 %v355, %v372
        %v422 = vsub.f32 %v356, %v372
        %v423 = vsub.f32 %v357, %v372
        %v424 = vsub.f32 %v358, %v372
        %v425 = vsub.f32 %v359, %v372
        %v426 = vsub.f32 %v360, %v372
        %v427 = vsub.f32 %v361, %v372
        %v428 = vsub.f32 %v362, %v372
        %v429 = vsub.f32 %v363, %v372
        %v430 = vsub.f32 %v364, %v372
        %v431 = vsub.f32 %v365, %v372
        %v432 = vsub.f32 %v366, %v372
        %v433 = vsub.f32 %v367, %v372
        %v434 = vsub.f32 %v368, %v372
        %v435 = vsub.f32 %v369, %v372
        %v436 = vsub.f32 %v370, %v372
        %v438 = vrot.slane %v371, 7
        %v440 = vsub.f32 %v371, %v438
        %v441 = vperm.slane %v440, 1
        %v442 = vrcp.pop %v441
        %v443 = vmul.f32 %v441, %v442
        %v444 = vsub.f32 1.0, %v443
        %v445 = vmul.f32 %v442, %v444
        %v446 = vadd.f32 %v442, %v445
        %vm447 = vweird.f32 %v441
        %vm448 = vweird.f32 %v442
        %vm449 = vmor %vm447, %vm448
        %v450 = vsel %vm449, %v442, %v446
        %v451 = vand.u32 2147483647, %v441
        %vm452 = vcmp.eq.f32.partialorder %v451, 8.507059e+37
        %v453 = vand.u32 %v441, 2147483648
        %v454 = vor.u32 1.1754944e-38, %v453
        %v455 = vsel %vm452, %v454, %v450
        %v456 = vmul.f32 %v373, %v455
        %v457 = vmul.f32 %v374, %v455
        %v458 = vmul.f32 %v375, %v455
        %v459 = vmul.f32 %v376, %v455
        %v460 = vmul.f32 %v377, %v455
        %v461 = vmul.f32 %v378, %v455
        %v462 = vmul.f32 %v379, %v455
        %v463 = vmul.f32 %v380, %v455
        %v464 = vmul.f32 %v381, %v455
        %v465 = vmul.f32 %v382, %v455
        %v466 = vmul.f32 %v383, %v455
        %v467 = vmul.f32 %v384, %v455
        %v468 = vmul.f32 %v385, %v455
        %v469 = vmul.f32 %v386, %v455
        %v470 = vmul.f32 %v387, %v455
        %v471 = vmul.f32 %v388, %v455
        %v472 = vmul.f32 %v389, %v455
        %v473 = vmul.f32 %v390, %v455
        %v474 = vmul.f32 %v391, %v455
        %v475 = vmul.f32 %v392, %v455
        %v476 = vmul.f32 %v393, %v455
        %v477 = vmul.f32 %v394, %v455
        %v478 = vmul.f32 %v395, %v455
        %v479 = vmul.f32 %v396, %v455
        %v480 = vmul.f32 %v397, %v455
        %v481 = vmul.f32 %v398, %v455
        %v482 = vmul.f32 %v399, %v455
        %v483 = vmul.f32 %v400, %v455
        %v484 = vmul.f32 %v401, %v455
        %v485 = vmul.f32 %v402, %v455
        %v486 = vmul.f32 %v403, %v455
        %v487 = vmul.f32 %v404, %v455
        %v488 = vmul.f32 %v405, %v455
        %v489 = vmul.f32 %v406, %v455
        %v490 = vmul.f32 %v407, %v455
        %v491 = vmul.f32 %v408, %v455
        %v492 = vmul.f32 %v409, %v455
        %v493 = vmul.f32 %v410, %v455
        %v494 = vmul.f32 %v411, %v455
        %v495 = vmul.f32 %v412, %v455
        %v496 = vmul.f32 %v413, %v455
        %v497 = vmul.f32 %v414, %v455
        %v498 = vmul.f32 %v415, %v455
        %v499 = vmul.f32 %v416, %v455
        %v500 = vmul.f32 %v417, %v455
        %v501 = vmul.f32 %v418, %v455
        %v502 = vmul.f32 %v419, %v455
        %v503 = vmul.f32 %v420, %v455
        %v504 = vmul.f32 %v421, %v455
        %v505 = vmul.f32 %v422, %v455
        %v506 = vmul.f32 %v423, %v455
        %v507 = vmul.f32 %v424, %v455
        %v508 = vmul.f32 %v425, %v455
        %v509 = vmul.f32 %v426, %v455
        %v510 = vmul.f32 %v427, %v455
        %v511 = vmul.f32 %v428, %v455
        %v512 = vmul.f32 %v429, %v455
        %v513 = vmul.f32 %v430, %v455
        %v514 = vmul.f32 %v431, %v455
        %v515 = vmul.f32 %v432, %v455
        %v516 = vmul.f32 %v433, %v455
        %v517 = vmul.f32 %v434, %v455
        %v518 = vmul.f32 %v435, %v455
        %v519 = vmul.f32 %v436, %v455
        %v520 = vmul.f32 %v456, 2.0
        %v521 = vmul.f32 %v457, 2.0
        %v522 = vmul.f32 %v458, 2.0
        %v523 = vmul.f32 %v459, 2.0
        %v524 = vmul.f32 %v460, 2.0
        %v525 = vmul.f32 %v461, 2.0
        %v526 = vmul.f32 %v462, 2.0
        %v527 = vmul.f32 %v463, 2.0
        %v528 = vmul.f32 %v464, 2.0
        %v529 = vmul.f32 %v465, 2.0
        %v530 = vmul.f32 %v466, 2.0
        %v531 = vmul.f32 %v467, 2.0
        %v532 = vmul.f32 %v468, 2.0
        %v533 = vmul.f32 %v469, 2.0
        %v534 = vmul.f32 %v470, 2.0
        %v535 = vmul.f32 %v471, 2.0
        %v536 = vmul.f32 %v472, 2.0
        %v537 = vmul.f32 %v473, 2.0
        %v538 = vmul.f32 %v474, 2.0
        %v539 = vmul.f32 %v475, 2.0
        %v540 = vmul.f32 %v476, 2.0
        %v541 = vmul.f32 %v477, 2.0
        %v542 = vmul.f32 %v478, 2.0
        %v543 = vmul.f32 %v479, 2.0
        %v544 = vmul.f32 %v480, 2.0
        %v545 = vmul.f32 %v481, 2.0
        %v546 = vmul.f32 %v482, 2.0
        %v547 = vmul.f32 %v483, 2.0
        %v548 = vmul.f32 %v484, 2.0
        %v549 = vmul.f32 %v485, 2.0
        %v550 = vmul.f32 %v486, 2.0
        %v551 = vmul.f32 %v487, 2.0
        %v552 = vmul.f32 %v488, 2.0
        %v553 = vmul.f32 %v489, 2.0
        %v554 = vmul.f32 %v490, 2.0
        %v555 = vmul.f32 %v491, 2.0
        %v556 = vmul.f32 %v492, 2.0
        %v557 = vmul.f32 %v493, 2.0
        %v558 = vmul.f32 %v494, 2.0
        %v559 = vmul.f32 %v495, 2.0
        %v560 = vmul.f32 %v496, 2.0
        %v561 = vmul.f32 %v497, 2.0
        %v562 = vmul.f32 %v498, 2.0
        %v563 = vmul.f32 %v499, 2.0
        %v564 = vmul.f32 %v500, 2.0
        %v565 = vmul.f32 %v501, 2.0
        %v566 = vmul.f32 %v502, 2.0
        %v567 = vmul.f32 %v503, 2.0
        %v568 = vmul.f32 %v504, 2.0
        %v569 = vmul.f32 %v505, 2.0
        %v570 = vmul.f32 %v506, 2.0
        %v571 = vmul.f32 %v507, 2.0
        %v572 = vmul.f32 %v508, 2.0
        %v573 = vmul.f32 %v509, 2.0
        %v574 = vmul.f32 %v510, 2.0
        %v575 = vmul.f32 %v511, 2.0
        %v576 = vmul.f32 %v512, 2.0
        %v577 = vmul.f32 %v513, 2.0
        %v578 = vmul.f32 %v514, 2.0
        %v579 = vmul.f32 %v515, 2.0
        %v580 = vmul.f32 %v516, 2.0
        %v581 = vmul.f32 %v517, 2.0
        %v582 = vmul.f32 %v518, 2.0
        %v583 = vmul.f32 %v519, 2.0
        %v584 = vsub.f32 %v520, 1.0
        %v585 = vsub.f32 %v521, 1.0
        %v586 = vsub.f32 %v522, 1.0
        %v587 = vsub.f32 %v523, 1.0
        %v588 = vsub.f32 %v524, 1.0
        %v589 = vsub.f32 %v525, 1.0
        %v590 = vsub.f32 %v526, 1.0
        %v591 = vsub.f32 %v527, 1.0
        %v592 = vsub.f32 %v528, 1.0
        %v593 = vsub.f32 %v529, 1.0
        %v594 = vsub.f32 %v530, 1.0
        %v595 = vsub.f32 %v531, 1.0
        %v596 = vsub.f32 %v532, 1.0
        %v597 = vsub.f32 %v533, 1.0
        %v598 = vsub.f32 %v534, 1.0
        %v599 = vsub.f32 %v535, 1.0
        %v600 = vsub.f32 %v536, 1.0
        %v601 = vsub.f32 %v537, 1.0
        %v602 = vsub.f32 %v538, 1.0
        %v603 = vsub.f32 %v539, 1.0
        %v604 = vsub.f32 %v540, 1.0
        %v605 = vsub.f32 %v541, 1.0
        %v606 = vsub.f32 %v542, 1.0
        %v607 = vsub.f32 %v543, 1.0
        %v608 = vsub.f32 %v544, 1.0
        %v609 = vsub.f32 %v545, 1.0
        %v610 = vsub.f32 %v546, 1.0
        %v611 = vsub.f32 %v547, 1.0
        %v612 = vsub.f32 %v548, 1.0
        %v613 = vsub.f32 %v549, 1.0
        %v614 = vsub.f32 %v550, 1.0
        %v615 = vsub.f32 %v551, 1.0
        %v616 = vsub.f32 %v552, 1.0
        %v617 = vsub.f32 %v553, 1.0
        %v618 = vsub.f32 %v554, 1.0
        %v619 = vsub.f32 %v555, 1.0
        %v620 = vsub.f32 %v556, 1.0
        %v621 = vsub.f32 %v557, 1.0
        %v622 = vsub.f32 %v558, 1.0
        %v623 = vsub.f32 %v559, 1.0
        %v624 = vsub.f32 %v560, 1.0
        %v625 = vsub.f32 %v561, 1.0
        %v626 = vsub.f32 %v562, 1.0
        %v627 = vsub.f32 %v563, 1.0
        %v628 = vsub.f32 %v564, 1.0
        %v629 = vsub.f32 %v565, 1.0
        %v630 = vsub.f32 %v566, 1.0
        %v631 = vsub.f32 %v567, 1.0
        %v632 = vsub.f32 %v568, 1.0
        %v633 = vsub.f32 %v569, 1.0
        %v634 = vsub.f32 %v570, 1.0
        %v635 = vsub.f32 %v571, 1.0
        %v636 = vsub.f32 %v572, 1.0
        %v637 = vsub.f32 %v573, 1.0
        %v638 = vsub.f32 %v574, 1.0
        %v639 = vsub.f32 %v575, 1.0
        %v640 = vsub.f32 %v576, 1.0
        %v641 = vsub.f32 %v577, 1.0
        %v642 = vsub.f32 %v578, 1.0
        %v643 = vsub.f32 %v579, 1.0
        %v644 = vsub.f32 %v580, 1.0
        %v645 = vsub.f32 %v581, 1.0
        %v646 = vsub.f32 %v582, 1.0
        %v647 = vsub.f32 %v583, 1.0
        %v648 = vadd.f32 %v584, 1.0
        %v649 = vadd.f32 %v585, 1.0
        %v650 = vadd.f32 %v586, 1.0
        %v651 = vadd.f32 %v587, 1.0
        %v652 = vadd.f32 %v588, 1.0
        %v653 = vadd.f32 %v589, 1.0
        %v654 = vadd.f32 %v590, 1.0
        %v655 = vadd.f32 %v591, 1.0
        %v656 = vadd.f32 %v592, 1.0
        %v657 = vadd.f32 %v593, 1.0
        %v658 = vadd.f32 %v594, 1.0
        %v659 = vadd.f32 %v595, 1.0
        %v660 = vadd.f32 %v596, 1.0
        %v661 = vadd.f32 %v597, 1.0
        %v662 = vadd.f32 %v598, 1.0
        %v663 = vadd.f32 %v599, 1.0
        %v664 = vadd.f32 %v600, 1.0
        %v665 = vadd.f32 %v601, 1.0
        %v666 = vadd.f32 %v602, 1.0
        %v667 = vadd.f32 %v603, 1.0
        %v668 = vadd.f32 %v604, 1.0
        %v669 = vadd.f32 %v605, 1.0
        %v670 = vadd.f32 %v606, 1.0
        %v671 = vadd.f32 %v607, 1.0
        %v672 = vadd.f32 %v608, 1.0
        %v673 = vadd.f32 %v609, 1.0
        %v674 = vadd.f32 %v610, 1.0
        %v675 = vadd.f32 %v611, 1.0
        %v676 = vadd.f32 %v612, 1.0
        %v677 = vadd.f32 %v613, 1.0
        %v678 = vadd.f32 %v614, 1.0
        %v679 = vadd.f32 %v615, 1.0
        %v680 = vadd.f32 %v616, 1.0
        %v681 = vadd.f32 %v617, 1.0
        %v682 = vadd.f32 %v618, 1.0
        %v683 = vadd.f32 %v619, 1.0
        %v684 = vadd.f32 %v620, 1.0
        %v685 = vadd.f32 %v621, 1.0
        %v686 = vadd.f32 %v622, 1.0
        %v687 = vadd.f32 %v623, 1.0
        %v688 = vadd.f32 %v624, 1.0
        %v689 = vadd.f32 %v625, 1.0
        %v690 = vadd.f32 %v626, 1.0
        %v691 = vadd.f32 %v627, 1.0
        %v692 = vadd.f32 %v628, 1.0
        %v693 = vadd.f32 %v629, 1.0
        %v694 = vadd.f32 %v630, 1.0
        %v695 = vadd.f32 %v631, 1.0
        %v696 = vadd.f32 %v632, 1.0
        %v697 = vadd.f32 %v633, 1.0
        %v698 = vadd.f32 %v634, 1.0
        %v699 = vadd.f32 %v635, 1.0
        %v700 = vadd.f32 %v636, 1.0
        %v701 = vadd.f32 %v637, 1.0
        %v702 = vadd.f32 %v638, 1.0
        %v703 = vadd.f32 %v639, 1.0
        %v704 = vadd.f32 %v640, 1.0
        %v705 = vadd.f32 %v641, 1.0
        %v706 = vadd.f32 %v642, 1.0
        %v707 = vadd.f32 %v643, 1.0
        %v708 = vadd.f32 %v644, 1.0
        %v709 = vadd.f32 %v645, 1.0
        %v710 = vadd.f32 %v646, 1.0
        %v711 = vadd.f32 %v647, 1.0
        %v712 = vmul.f32 %v648, 0.5
        %v713 = vmul.f32 %v649, 0.5
        %v714 = vmul.f32 %v650, 0.5
        %v715 = vmul.f32 %v651, 0.5
        %v716 = vmul.f32 %v652, 0.5
        %v717 = vmul.f32 %v653, 0.5
        %v718 = vmul.f32 %v654, 0.5
        %v719 = vmul.f32 %v655, 0.5
        %v720 = vmul.f32 %v656, 0.5
        %v721 = vmul.f32 %v657, 0.5
        %v722 = vmul.f32 %v658, 0.5
        %v723 = vmul.f32 %v659, 0.5
        %v724 = vmul.f32 %v660, 0.5
        %v725 = vmul.f32 %v661, 0.5
        %v726 = vmul.f32 %v662, 0.5
        %v727 = vmul.f32 %v663, 0.5
        %v728 = vmul.f32 %v664, 0.5
        %v729 = vmul.f32 %v665, 0.5
        %v730 = vmul.f32 %v666, 0.5
        %v731 = vmul.f32 %v667, 0.5
        %v732 = vmul.f32 %v668, 0.5
        %v733 = vmul.f32 %v669, 0.5
        %v734 = vmul.f32 %v670, 0.5
        %v735 = vmul.f32 %v671, 0.5
        %v736 = vmul.f32 %v672, 0.5
        %v737 = vmul.f32 %v673, 0.5
        %v738 = vmul.f32 %v674, 0.5
        %v739 = vmul.f32 %v675, 0.5
        %v740 = vmul.f32 %v676, 0.5
        %v741 = vmul.f32 %v677, 0.5
        %v742 = vmul.f32 %v678, 0.5
        %v743 = vmul.f32 %v679, 0.5
        %v744 = vmul.f32 %v680, 0.5
        %v745 = vmul.f32 %v681, 0.5
        %v746 = vmul.f32 %v682, 0.5
        %v747 = vmul.f32 %v683, 0.5
        %v748 = vmul.f32 %v684, 0.5
        %v749 = vmul.f32 %v685, 0.5
        %v750 = vmul.f32 %v686, 0.5
        %v751 = vmul.f32 %v687, 0.5
        %v752 = vmul.f32 %v688, 0.5
        %v753 = vmul.f32 %v689, 0.5
        %v754 = vmul.f32 %v690, 0.5
        %v755 = vmul.f32 %v691, 0.5
        %v756 = vmul.f32 %v692, 0.5
        %v757 = vmul.f32 %v693, 0.5
        %v758 = vmul.f32 %v694, 0.5
        %v759 = vmul.f32 %v695, 0.5
        %v760 = vmul.f32 %v696, 0.5
        %v761 = vmul.f32 %v697, 0.5
        %v762 = vmul.f32 %v698, 0.5
        %v763 = vmul.f32 %v699, 0.5
        %v764 = vmul.f32 %v700, 0.5
        %v765 = vmul.f32 %v701, 0.5
        %v766 = vmul.f32 %v702, 0.5
        %v767 = vmul.f32 %v703, 0.5
        %v768 = vmul.f32 %v704, 0.5
        %v769 = vmul.f32 %v705, 0.5
        %v770 = vmul.f32 %v706, 0.5
        %v771 = vmul.f32 %v707, 0.5
        %v772 = vmul.f32 %v708, 0.5
        %v773 = vmul.f32 %v709, 0.5
        %v774 = vmul.f32 %v710, 0.5
        %v775 = vmul.f32 %v711, 0.5
        %v776 = vmul.f32 %v712, 15.0
        %v777 = vmul.f32 %v713, 15.0
        %v778 = vmul.f32 %v714, 15.0
        %v779 = vmul.f32 %v715, 15.0
        %v780 = vmul.f32 %v716, 15.0
        %v781 = vmul.f32 %v717, 15.0
        %v782 = vmul.f32 %v718, 15.0
        %v783 = vmul.f32 %v719, 15.0
        %v784 = vmul.f32 %v720, 15.0
        %v785 = vmul.f32 %v721, 15.0
        %v786 = vmul.f32 %v722, 15.0
        %v787 = vmul.f32 %v723, 15.0
        %v788 = vmul.f32 %v724, 15.0
        %v789 = vmul.f32 %v725, 15.0
        %v790 = vmul.f32 %v726, 15.0
        %v791 = vmul.f32 %v727, 15.0
        %v792 = vmul.f32 %v728, 15.0
        %v793 = vmul.f32 %v729, 15.0
        %v794 = vmul.f32 %v730, 15.0
        %v795 = vmul.f32 %v731, 15.0
        %v796 = vmul.f32 %v732, 15.0
        %v797 = vmul.f32 %v733, 15.0
        %v798 = vmul.f32 %v734, 15.0
        %v799 = vmul.f32 %v735, 15.0
        %v800 = vmul.f32 %v736, 15.0
        %v801 = vmul.f32 %v737, 15.0
        %v802 = vmul.f32 %v738, 15.0
        %v803 = vmul.f32 %v739, 15.0
        %v804 = vmul.f32 %v740, 15.0
        %v805 = vmul.f32 %v741, 15.0
        %v806 = vmul.f32 %v742, 15.0
        %v807 = vmul.f32 %v743, 15.0
        %v808 = vmul.f32 %v744, 15.0
        %v809 = vmul.f32 %v745, 15.0
        %v810 = vmul.f32 %v746, 15.0
        %v811 = vmul.f32 %v747, 15.0
        %v812 = vmul.f32 %v748, 15.0
        %v813 = vmul.f32 %v749, 15.0
        %v814 = vmul.f32 %v750, 15.0
        %v815 = vmul.f32 %v751, 15.0
        %v816 = vmul.f32 %v752, 15.0
        %v817 = vmul.f32 %v753, 15.0
        %v818 = vmul.f32 %v754, 15.0
        %v819 = vmul.f32 %v755, 15.0
        %v820 = vmul.f32 %v756, 15.0
        %v821 = vmul.f32 %v757, 15.0
        %v822 = vmul.f32 %v758, 15.0
        %v823 = vmul.f32 %v759, 15.0
        %v824 = vmul.f32 %v760, 15.0
        %v825 = vmul.f32 %v761, 15.0
        %v826 = vmul.f32 %v762, 15.0
        %v827 = vmul.f32 %v763, 15.0
        %v828 = vmul.f32 %v764, 15.0
        %v829 = vmul.f32 %v765, 15.0
        %v830 = vmul.f32 %v766, 15.0
        %v831 = vmul.f32 %v767, 15.0
        %v832 = vmul.f32 %v768, 15.0
        %v833 = vmul.f32 %v769, 15.0
        %v834 = vmul.f32 %v770, 15.0
        %v835 = vmul.f32 %v771, 15.0
        %v836 = vmul.f32 %v772, 15.0
        %v837 = vmul.f32 %v773, 15.0
        %v838 = vmul.f32 %v774, 15.0
        %v839 = vmul.f32 %v775, 15.0
        %v840 = vmax.f32 %v776, 0.0
        %v841 = vmax.f32 %v777, 0.0
        %v842 = vmax.f32 %v778, 0.0
        %v843 = vmax.f32 %v779, 0.0
        %v844 = vmax.f32 %v780, 0.0
        %v845 = vmax.f32 %v781, 0.0
        %v846 = vmax.f32 %v782, 0.0
        %v847 = vmax.f32 %v783, 0.0
        %v848 = vmax.f32 %v784, 0.0
        %v849 = vmax.f32 %v785, 0.0
        %v850 = vmax.f32 %v786, 0.0
        %v851 = vmax.f32 %v787, 0.0
        %v852 = vmax.f32 %v788, 0.0
        %v853 = vmax.f32 %v789, 0.0
        %v854 = vmax.f32 %v790, 0.0
        %v855 = vmax.f32 %v791, 0.0
        %v856 = vmax.f32 %v792, 0.0
        %v857 = vmax.f32 %v793, 0.0
        %v858 = vmax.f32 %v794, 0.0
        %v859 = vmax.f32 %v795, 0.0
        %v860 = vmax.f32 %v796, 0.0
        %v861 = vmax.f32 %v797, 0.0
        %v862 = vmax.f32 %v798, 0.0
        %v863 = vmax.f32 %v799, 0.0
        %v864 = vmax.f32 %v800, 0.0
        %v865 = vmax.f32 %v801, 0.0
        %v866 = vmax.f32 %v802, 0.0
        %v867 = vmax.f32 %v803, 0.0
        %v868 = vmax.f32 %v804, 0.0
        %v869 = vmax.f32 %v805, 0.0
        %v870 = vmax.f32 %v806, 0.0
        %v871 = vmax.f32 %v807, 0.0
        %v872 = vmax.f32 %v808, 0.0
        %v873 = vmax.f32 %v809, 0.0
        %v874 = vmax.f32 %v810, 0.0
        %v875 = vmax.f32 %v811, 0.0
        %v876 = vmax.f32 %v812, 0.0
        %v877 = vmax.f32 %v813, 0.0
        %v878 = vmax.f32 %v814, 0.0
        %v879 = vmax.f32 %v815, 0.0
        %v880 = vmax.f32 %v816, 0.0
        %v881 = vmax.f32 %v817, 0.0
        %v882 = vmax.f32 %v818, 0.0
        %v883 = vmax.f32 %v819, 0.0
        %v884 = vmax.f32 %v820, 0.0
        %v885 = vmax.f32 %v821, 0.0
        %v886 = vmax.f32 %v822, 0.0
        %v887 = vmax.f32 %v823, 0.0
        %v888 = vmax.f32 %v824, 0.0
        %v889 = vmax.f32 %v825, 0.0
        %v890 = vmax.f32 %v826, 0.0
        %v891 = vmax.f32 %v827, 0.0
        %v892 = vmax.f32 %v828, 0.0
        %v893 = vmax.f32 %v829, 0.0
        %v894 = vmax.f32 %v830, 0.0
        %v895 = vmax.f32 %v831, 0.0
        %v896 = vmax.f32 %v832, 0.0
        %v897 = vmax.f32 %v833, 0.0
        %v898 = vmax.f32 %v834, 0.0
        %v899 = vmax.f32 %v835, 0.0
        %v900 = vmax.f32 %v836, 0.0
        %v901 = vmax.f32 %v837, 0.0
        %v902 = vmax.f32 %v838, 0.0
        %v903 = vmax.f32 %v839, 0.0
        %v904 = vmin.f32 %v840, 15.0
        %v905 = vmin.f32 %v841, 15.0
        %v906 = vmin.f32 %v842, 15.0
        %v907 = vmin.f32 %v843, 15.0
        %v908 = vmin.f32 %v844, 15.0
        %v909 = vmin.f32 %v845, 15.0
        %v910 = vmin.f32 %v846, 15.0
        %v911 = vmin.f32 %v847, 15.0
        %v912 = vmin.f32 %v848, 15.0
        %v913 = vmin.f32 %v849, 15.0
        %v914 = vmin.f32 %v850, 15.0
        %v915 = vmin.f32 %v851, 15.0
        %v916 = vmin.f32 %v852, 15.0
        %v917 = vmin.f32 %v853, 15.0
        %v918 = vmin.f32 %v854, 15.0
        %v919 = vmin.f32 %v855, 15.0
        %v920 = vmin.f32 %v856, 15.0
        %v921 = vmin.f32 %v857, 15.0
        %v922 = vmin.f32 %v858, 15.0
        %v923 = vmin.f32 %v859, 15.0
        %v924 = vmin.f32 %v860, 15.0
        %v925 = vmin.f32 %v861, 15.0
        %v926 = vmin.f32 %v862, 15.0
        %v927 = vmin.f32 %v863, 15.0
        %v928 = vmin.f32 %v864, 15.0
        %v929 = vmin.f32 %v865, 15.0
        %v930 = vmin.f32 %v866, 15.0
        %v931 = vmin.f32 %v867, 15.0
        %v932 = vmin.f32 %v868, 15.0
        %v933 = vmin.f32 %v869, 15.0
        %v934 = vmin.f32 %v870, 15.0
        %v935 = vmin.f32 %v871, 15.0
        %v936 = vmin.f32 %v872, 15.0
        %v937 = vmin.f32 %v873, 15.0
        %v938 = vmin.f32 %v874, 15.0
        %v939 = vmin.f32 %v875, 15.0
        %v940 = vmin.f32 %v876, 15.0
        %v941 = vmin.f32 %v877, 15.0
        %v942 = vmin.f32 %v878, 15.0
        %v943 = vmin.f32 %v879, 15.0
        %v944 = vmin.f32 %v880, 15.0
        %v945 = vmin.f32 %v881, 15.0
        %v946 = vmin.f32 %v882, 15.0
        %v947 = vmin.f32 %v883, 15.0
        %v948 = vmin.f32 %v884, 15.0
        %v949 = vmin.f32 %v885, 15.0
        %v950 = vmin.f32 %v886, 15.0
        %v951 = vmin.f32 %v887, 15.0
        %v952 = vmin.f32 %v888, 15.0
        %v953 = vmin.f32 %v889, 15.0
        %v954 = vmin.f32 %v890, 15.0
        %v955 = vmin.f32 %v891, 15.0
        %v956 = vmin.f32 %v892, 15.0
        %v957 = vmin.f32 %v893, 15.0
        %v958 = vmin.f32 %v894, 15.0
        %v959 = vmin.f32 %v895, 15.0
        %v960 = vmin.f32 %v896, 15.0
        %v961 = vmin.f32 %v897, 15.0
        %v962 = vmin.f32 %v898, 15.0
        %v963 = vmin.f32 %v899, 15.0
        %v964 = vmin.f32 %v900, 15.0
        %v965 = vmin.f32 %v901, 15.0
        %v966 = vmin.f32 %v902, 15.0
        %v967 = vmin.f32 %v903, 15.0
        %v968 = vld [vmem:[%s2] ss:$4 sm:$0x3f]
        %s969 = scalar_lea.vmem %s2, 1
        %v970 = vld [vmem:[%s969] ss:$4 sm:$0x3f]
        %s971 = scalar_lea.vmem %s2, 2
        %v972 = vld [vmem:[%s971] ss:$4 sm:$0x3f]
        %vm973 = vcmp.gt.f32.partialorder %v972, 0.5
        %s974 = scalar_lea.vmem %s2, 3
        %v975 = vld [vmem:[%s974] ss:$4 sm:$0x3f]
        %vm976 = vcmp.gt.f32.partialorder %v975, 0.5
        %v977 = vsel %vm973, 1, 0
        %v978 = vperm.slane %v977, 0
        %v979 = vperm.slane %v977, 1
        %v980 = vperm.slane %v977, 2
        %v981 = vperm.slane %v977, 3
        %v982 = vperm.slane %v977, 4
        %v983 = vperm.slane %v977, 5
        %vm984 = vcmp.eq.s32.totalorder %v978, 1
        %vm985 = vcmp.eq.s32.totalorder %v979, 1
        %vm986 = vcmp.eq.s32.totalorder %v980, 1
        %vm987 = vcmp.eq.s32.totalorder %v981, 1
        %vm988 = vcmp.eq.s32.totalorder %v982, 1
        %vm989 = vcmp.eq.s32.totalorder %v983, 1
        %991 = vset.pattern.permute.xlu0 1
        %992 = vperm.xlu0 %991, %v904
        %v993 = vpop.permute.xlu0 %992
        %996 = vset.pattern.permute.xlu0 1
        %997 = vperm.xlu0 %996, %v905
        %v998 = vpop.permute.xlu0 %997
        %1001 = vset.pattern.permute.xlu0 1
        %1002 = vperm.xlu0 %1001, %v906
        %v1003 = vpop.permute.xlu0 %1002
        %1006 = vset.pattern.permute.xlu0 1
        %1007 = vperm.xlu0 %1006, %v907
        %v1008 = vpop.permute.xlu0 %1007
        %1011 = vset.pattern.permute.xlu0 1
        %1012 = vperm.xlu0 %1011, %v908
        %v1013 = vpop.permute.xlu0 %1012
        %1016 = vset.pattern.permute.xlu0 1
        %1017 = vperm.xlu0 %1016, %v909
        %v1018 = vpop.permute.xlu0 %1017
        %1021 = vset.pattern.permute.xlu0 1
        %1022 = vperm.xlu0 %1021, %v910
        %v1023 = vpop.permute.xlu0 %1022
        %1026 = vset.pattern.permute.xlu0 1
        %1027 = vperm.xlu0 %1026, %v911
        %v1028 = vpop.permute.xlu0 %1027
        %1031 = vset.pattern.permute.xlu0 1
        %1032 = vperm.xlu0 %1031, %v912
        %v1033 = vpop.permute.xlu0 %1032
        %1036 = vset.pattern.permute.xlu0 1
        %1037 = vperm.xlu0 %1036, %v913
        %v1038 = vpop.permute.xlu0 %1037
        %1041 = vset.pattern.permute.xlu0 1
        %1042 = vperm.xlu0 %1041, %v914
        %v1043 = vpop.permute.xlu0 %1042
        %1046 = vset.pattern.permute.xlu0 1
        %1047 = vperm.xlu0 %1046, %v915
        %v1048 = vpop.permute.xlu0 %1047
        %1051 = vset.pattern.permute.xlu0 1
        %1052 = vperm.xlu0 %1051, %v916
        %v1053 = vpop.permute.xlu0 %1052
        %1056 = vset.pattern.permute.xlu0 1
        %1057 = vperm.xlu0 %1056, %v917
        %v1058 = vpop.permute.xlu0 %1057
        %1061 = vset.pattern.permute.xlu0 1
        %1062 = vperm.xlu0 %1061, %v918
        %v1063 = vpop.permute.xlu0 %1062
        %1066 = vset.pattern.permute.xlu0 1
        %1067 = vperm.xlu0 %1066, %v919
        %v1068 = vpop.permute.xlu0 %1067
        %1071 = vset.pattern.permute.xlu0 1
        %1072 = vperm.xlu0 %1071, %v920
        %v1073 = vpop.permute.xlu0 %1072
        %1076 = vset.pattern.permute.xlu0 1
        %1077 = vperm.xlu0 %1076, %v921
        %v1078 = vpop.permute.xlu0 %1077
        %1081 = vset.pattern.permute.xlu0 1
        %1082 = vperm.xlu0 %1081, %v922
        %v1083 = vpop.permute.xlu0 %1082
        %1086 = vset.pattern.permute.xlu0 1
        %1087 = vperm.xlu0 %1086, %v923
        %v1088 = vpop.permute.xlu0 %1087
        %1091 = vset.pattern.permute.xlu0 1
        %1092 = vperm.xlu0 %1091, %v924
        %v1093 = vpop.permute.xlu0 %1092
        %1096 = vset.pattern.permute.xlu0 1
        %1097 = vperm.xlu0 %1096, %v925
        %v1098 = vpop.permute.xlu0 %1097
        %1101 = vset.pattern.permute.xlu0 1
        %1102 = vperm.xlu0 %1101, %v926
        %v1103 = vpop.permute.xlu0 %1102
        %1106 = vset.pattern.permute.xlu0 1
        %1107 = vperm.xlu0 %1106, %v927
        %v1108 = vpop.permute.xlu0 %1107
        %1111 = vset.pattern.permute.xlu0 1
        %1112 = vperm.xlu0 %1111, %v928
        %v1113 = vpop.permute.xlu0 %1112
        %1116 = vset.pattern.permute.xlu0 1
        %1117 = vperm.xlu0 %1116, %v929
        %v1118 = vpop.permute.xlu0 %1117
        %1121 = vset.pattern.permute.xlu0 1
        %1122 = vperm.xlu0 %1121, %v930
        %v1123 = vpop.permute.xlu0 %1122
        %1126 = vset.pattern.permute.xlu0 1
        %1127 = vperm.xlu0 %1126, %v931
        %v1128 = vpop.permute.xlu0 %1127
        %1131 = vset.pattern.permute.xlu0 1
        %1132 = vperm.xlu0 %1131, %v932
        %v1133 = vpop.permute.xlu0 %1132
        %1136 = vset.pattern.permute.xlu0 1
        %1137 = vperm.xlu0 %1136, %v933
        %v1138 = vpop.permute.xlu0 %1137
        %1141 = vset.pattern.permute.xlu0 1
        %1142 = vperm.xlu0 %1141, %v934
        %v1143 = vpop.permute.xlu0 %1142
        %1146 = vset.pattern.permute.xlu0 1
        %1147 = vperm.xlu0 %1146, %v935
        %v1148 = vpop.permute.xlu0 %1147
        %1151 = vset.pattern.permute.xlu0 1
        %1152 = vperm.xlu0 %1151, %v936
        %v1153 = vpop.permute.xlu0 %1152
        %1156 = vset.pattern.permute.xlu0 1
        %1157 = vperm.xlu0 %1156, %v937
        %v1158 = vpop.permute.xlu0 %1157
        %1161 = vset.pattern.permute.xlu0 1
        %1162 = vperm.xlu0 %1161, %v938
        %v1163 = vpop.permute.xlu0 %1162
        %1166 = vset.pattern.permute.xlu0 1
        %1167 = vperm.xlu0 %1166, %v939
        %v1168 = vpop.permute.xlu0 %1167
        %1171 = vset.pattern.permute.xlu0 1
        %1172 = vperm.xlu0 %1171, %v940
        %v1173 = vpop.permute.xlu0 %1172
        %1176 = vset.pattern.permute.xlu0 1
        %1177 = vperm.xlu0 %1176, %v941
        %v1178 = vpop.permute.xlu0 %1177
        %1181 = vset.pattern.permute.xlu0 1
        %1182 = vperm.xlu0 %1181, %v942
        %v1183 = vpop.permute.xlu0 %1182
        %1186 = vset.pattern.permute.xlu0 1
        %1187 = vperm.xlu0 %1186, %v943
        %v1188 = vpop.permute.xlu0 %1187
        %1191 = vset.pattern.permute.xlu0 1
        %1192 = vperm.xlu0 %1191, %v944
        %v1193 = vpop.permute.xlu0 %1192
        %1196 = vset.pattern.permute.xlu0 1
        %1197 = vperm.xlu0 %1196, %v945
        %v1198 = vpop.permute.xlu0 %1197
        %1201 = vset.pattern.permute.xlu0 1
        %1202 = vperm.xlu0 %1201, %v946
        %v1203 = vpop.permute.xlu0 %1202
        %1206 = vset.pattern.permute.xlu0 1
        %1207 = vperm.xlu0 %1206, %v947
        %v1208 = vpop.permute.xlu0 %1207
        %1211 = vset.pattern.permute.xlu0 1
        %1212 = vperm.xlu0 %1211, %v948
        %v1213 = vpop.permute.xlu0 %1212
        %1216 = vset.pattern.permute.xlu0 1
        %1217 = vperm.xlu0 %1216, %v949
        %v1218 = vpop.permute.xlu0 %1217
        %1221 = vset.pattern.permute.xlu0 1
        %1222 = vperm.xlu0 %1221, %v950
        %v1223 = vpop.permute.xlu0 %1222
        %1226 = vset.pattern.permute.xlu0 1
        %1227 = vperm.xlu0 %1226, %v951
        %v1228 = vpop.permute.xlu0 %1227
        %1231 = vset.pattern.permute.xlu0 1
        %1232 = vperm.xlu0 %1231, %v952
        %v1233 = vpop.permute.xlu0 %1232
        %1236 = vset.pattern.permute.xlu0 1
        %1237 = vperm.xlu0 %1236, %v953
        %v1238 = vpop.permute.xlu0 %1237
        %1241 = vset.pattern.permute.xlu0 1
        %1242 = vperm.xlu0 %1241, %v954
        %v1243 = vpop.permute.xlu0 %1242
        %1246 = vset.pattern.permute.xlu0 1
        %1247 = vperm.xlu0 %1246, %v955
        %v1248 = vpop.permute.xlu0 %1247
        %1251 = vset.pattern.permute.xlu0 1
        %1252 = vperm.xlu0 %1251, %v956
        %v1253 = vpop.permute.xlu0 %1252
        %1256 = vset.pattern.permute.xlu0 1
        %1257 = vperm.xlu0 %1256, %v957
        %v1258 = vpop.permute.xlu0 %1257
        %1261 = vset.pattern.permute.xlu0 1
        %1262 = vperm.xlu0 %1261, %v958
        %v1263 = vpop.permute.xlu0 %1262
        %1266 = vset.pattern.permute.xlu0 1
        %1267 = vperm.xlu0 %1266, %v959
        %v1268 = vpop.permute.xlu0 %1267
        %1271 = vset.pattern.permute.xlu0 1
        %1272 = vperm.xlu0 %1271, %v960
        %v1273 = vpop.permute.xlu0 %1272
        %1276 = vset.pattern.permute.xlu0 1
        %1277 = vperm.xlu0 %1276, %v961
        %v1278 = vpop.permute.xlu0 %1277
        %1281 = vset.pattern.permute.xlu0 1
        %1282 = vperm.xlu0 %1281, %v962
        %v1283 = vpop.permute.xlu0 %1282
        %1286 = vset.pattern.permute.xlu0 1
        %1287 = vperm.xlu0 %1286, %v963
        %v1288 = vpop.permute.xlu0 %1287
        %1291 = vset.pattern.permute.xlu0 1
        %1292 = vperm.xlu0 %1291, %v964
        %v1293 = vpop.permute.xlu0 %1292
        %1296 = vset.pattern.permute.xlu0 1
        %1297 = vperm.xlu0 %1296, %v965
        %v1298 = vpop.permute.xlu0 %1297
        %1301 = vset.pattern.permute.xlu0 1
        %1302 = vperm.xlu0 %1301, %v966
        %v1303 = vpop.permute.xlu0 %1302
        %1306 = vset.pattern.permute.xlu0 1
        %1307 = vperm.xlu0 %1306, %v967
        %v1308 = vpop.permute.xlu0 %1307
        %1310 = vset.pattern.permute.xlu0 2
        %1311 = vperm.xlu0 %1310, %v904
        %v1312 = vpop.permute.xlu0 %1311
        %1314 = vset.pattern.permute.xlu0 2
        %1315 = vperm.xlu0 %1314, %v905
        %v1316 = vpop.permute.xlu0 %1315
        %1318 = vset.pattern.permute.xlu0 2
        %1319 = vperm.xlu0 %1318, %v906
        %v1320 = vpop.permute.xlu0 %1319
        %1322 = vset.pattern.permute.xlu0 2
        %1323 = vperm.xlu0 %1322, %v907
        %v1324 = vpop.permute.xlu0 %1323
        %1326 = vset.pattern.permute.xlu0 2
        %1327 = vperm.xlu0 %1326, %v908
        %v1328 = vpop.permute.xlu0 %1327
        %1330 = vset.pattern.permute.xlu0 2
        %1331 = vperm.xlu0 %1330, %v909
        %v1332 = vpop.permute.xlu0 %1331
        %1334 = vset.pattern.permute.xlu0 2
        %1335 = vperm.xlu0 %1334, %v910
        %v1336 = vpop.permute.xlu0 %1335
        %1338 = vset.pattern.permute.xlu0 2
        %1339 = vperm.xlu0 %1338, %v911
        %v1340 = vpop.permute.xlu0 %1339
        %1342 = vset.pattern.permute.xlu0 2
        %1343 = vperm.xlu0 %1342, %v912
        %v1344 = vpop.permute.xlu0 %1343
        %1346 = vset.pattern.permute.xlu0 2
        %1347 = vperm.xlu0 %1346, %v913
        %v1348 = vpop.permute.xlu0 %1347
        %1350 = vset.pattern.permute.xlu0 2
        %1351 = vperm.xlu0 %1350, %v914
        %v1352 = vpop.permute.xlu0 %1351
        %1354 = vset.pattern.permute.xlu0 2
        %1355 = vperm.xlu0 %1354, %v915
        %v1356 = vpop.permute.xlu0 %1355
        %1358 = vset.pattern.permute.xlu0 2
        %1359 = vperm.xlu0 %1358, %v916
        %v1360 = vpop.permute.xlu0 %1359
        %1362 = vset.pattern.permute.xlu0 2
        %1363 = vperm.xlu0 %1362, %v917
        %v1364 = vpop.permute.xlu0 %1363
        %1366 = vset.pattern.permute.xlu0 2
        %1367 = vperm.xlu0 %1366, %v918
        %v1368 = vpop.permute.xlu0 %1367
        %1370 = vset.pattern.permute.xlu0 2
        %1371 = vperm.xlu0 %1370, %v919
        %v1372 = vpop.permute.xlu0 %1371
        %1374 = vset.pattern.permute.xlu0 2
        %1375 = vperm.xlu0 %1374, %v920
        %v1376 = vpop.permute.xlu0 %1375
        %1378 = vset.pattern.permute.xlu0 2
        %1379 = vperm.xlu0 %1378, %v921
        %v1380 = vpop.permute.xlu0 %1379
        %1382 = vset.pattern.permute.xlu0 2
        %1383 = vperm.xlu0 %1382, %v922
        %v1384 = vpop.permute.xlu0 %1383
        %1386 = vset.pattern.permute.xlu0 2
        %1387 = vperm.xlu0 %1386, %v923
        %v1388 = vpop.permute.xlu0 %1387
        %1390 = vset.pattern.permute.xlu0 2
        %1391 = vperm.xlu0 %1390, %v924
        %v1392 = vpop.permute.xlu0 %1391
        %1394 = vset.pattern.permute.xlu0 2
        %1395 = vperm.xlu0 %1394, %v925
        %v1396 = vpop.permute.xlu0 %1395
        %1398 = vset.pattern.permute.xlu0 2
        %1399 = vperm.xlu0 %1398, %v926
        %v1400 = vpop.permute.xlu0 %1399
        %1402 = vset.pattern.permute.xlu0 2
        %1403 = vperm.xlu0 %1402, %v927
        %v1404 = vpop.permute.xlu0 %1403
        %1406 = vset.pattern.permute.xlu0 2
        %1407 = vperm.xlu0 %1406, %v928
        %v1408 = vpop.permute.xlu0 %1407
        %1410 = vset.pattern.permute.xlu0 2
        %1411 = vperm.xlu0 %1410, %v929
        %v1412 = vpop.permute.xlu0 %1411
        %1414 = vset.pattern.permute.xlu0 2
        %1415 = vperm.xlu0 %1414, %v930
        %v1416 = vpop.permute.xlu0 %1415
        %1418 = vset.pattern.permute.xlu0 2
        %1419 = vperm.xlu0 %1418, %v931
        %v1420 = vpop.permute.xlu0 %1419
        %1422 = vset.pattern.permute.xlu0 2
        %1423 = vperm.xlu0 %1422, %v932
        %v1424 = vpop.permute.xlu0 %1423
        %1426 = vset.pattern.permute.xlu0 2
        %1427 = vperm.xlu0 %1426, %v933
        %v1428 = vpop.permute.xlu0 %1427
        %1430 = vset.pattern.permute.xlu0 2
        %1431 = vperm.xlu0 %1430, %v934
        %v1432 = vpop.permute.xlu0 %1431
        %1434 = vset.pattern.permute.xlu0 2
        %1435 = vperm.xlu0 %1434, %v935
        %v1436 = vpop.permute.xlu0 %1435
        %1438 = vset.pattern.permute.xlu0 2
        %1439 = vperm.xlu0 %1438, %v936
        %v1440 = vpop.permute.xlu0 %1439
        %1442 = vset.pattern.permute.xlu0 2
        %1443 = vperm.xlu0 %1442, %v937
        %v1444 = vpop.permute.xlu0 %1443
        %1446 = vset.pattern.permute.xlu0 2
        %1447 = vperm.xlu0 %1446, %v938
        %v1448 = vpop.permute.xlu0 %1447
        %1450 = vset.pattern.permute.xlu0 2
        %1451 = vperm.xlu0 %1450, %v939
        %v1452 = vpop.permute.xlu0 %1451
        %1454 = vset.pattern.permute.xlu0 2
        %1455 = vperm.xlu0 %1454, %v940
        %v1456 = vpop.permute.xlu0 %1455
        %1458 = vset.pattern.permute.xlu0 2
        %1459 = vperm.xlu0 %1458, %v941
        %v1460 = vpop.permute.xlu0 %1459
        %1462 = vset.pattern.permute.xlu0 2
        %1463 = vperm.xlu0 %1462, %v942
        %v1464 = vpop.permute.xlu0 %1463
        %1466 = vset.pattern.permute.xlu0 2
        %1467 = vperm.xlu0 %1466, %v943
        %v1468 = vpop.permute.xlu0 %1467
        %1470 = vset.pattern.permute.xlu0 2
        %1471 = vperm.xlu0 %1470, %v944
        %v1472 = vpop.permute.xlu0 %1471
        %1474 = vset.pattern.permute.xlu0 2
        %1475 = vperm.xlu0 %1474, %v945
        %v1476 = vpop.permute.xlu0 %1475
        %1478 = vset.pattern.permute.xlu0 2
        %1479 = vperm.xlu0 %1478, %v946
        %v1480 = vpop.permute.xlu0 %1479
        %1482 = vset.pattern.permute.xlu0 2
        %1483 = vperm.xlu0 %1482, %v947
        %v1484 = vpop.permute.xlu0 %1483
        %1486 = vset.pattern.permute.xlu0 2
        %1487 = vperm.xlu0 %1486, %v948
        %v1488 = vpop.permute.xlu0 %1487
        %1490 = vset.pattern.permute.xlu0 2
        %1491 = vperm.xlu0 %1490, %v949
        %v1492 = vpop.permute.xlu0 %1491
        %1494 = vset.pattern.permute.xlu0 2
        %1495 = vperm.xlu0 %1494, %v950
        %v1496 = vpop.permute.xlu0 %1495
        %1498 = vset.pattern.permute.xlu0 2
        %1499 = vperm.xlu0 %1498, %v951
        %v1500 = vpop.permute.xlu0 %1499
        %1502 = vset.pattern.permute.xlu0 2
        %1503 = vperm.xlu0 %1502, %v952
        %v1504 = vpop.permute.xlu0 %1503
        %1506 = vset.pattern.permute.xlu0 2
        %1507 = vperm.xlu0 %1506, %v953
        %v1508 = vpop.permute.xlu0 %1507
        %1510 = vset.pattern.permute.xlu0 2
        %1511 = vperm.xlu0 %1510, %v954
        %v1512 = vpop.permute.xlu0 %1511
        %1514 = vset.pattern.permute.xlu0 2
        %1515 = vperm.xlu0 %1514, %v955
        %v1516 = vpop.permute.xlu0 %1515
        %1518 = vset.pattern.permute.xlu0 2
        %1519 = vperm.xlu0 %1518, %v956
        %v1520 = vpop.permute.xlu0 %1519
        %1522 = vset.pattern.permute.xlu0 2
        %1523 = vperm.xlu0 %1522, %v957
        %v1524 = vpop.permute.xlu0 %1523
        %1526 = vset.pattern.permute.xlu0 2
        %1527 = vperm.xlu0 %1526, %v958
        %v1528 = vpop.permute.xlu0 %1527
        %1530 = vset.pattern.permute.xlu0 2
        %1531 = vperm.xlu0 %1530, %v959
        %v1532 = vpop.permute.xlu0 %1531
        %1534 = vset.pattern.permute.xlu0 2
        %1535 = vperm.xlu0 %1534, %v960
        %v1536 = vpop.permute.xlu0 %1535
        %1538 = vset.pattern.permute.xlu0 2
        %1539 = vperm.xlu0 %1538, %v961
        %v1540 = vpop.permute.xlu0 %1539
        %1542 = vset.pattern.permute.xlu0 2
        %1543 = vperm.xlu0 %1542, %v962
        %v1544 = vpop.permute.xlu0 %1543
        %1546 = vset.pattern.permute.xlu0 2
        %1547 = vperm.xlu0 %1546, %v963
        %v1548 = vpop.permute.xlu0 %1547
        %1550 = vset.pattern.permute.xlu0 2
        %1551 = vperm.xlu0 %1550, %v964
        %v1552 = vpop.permute.xlu0 %1551
        %1554 = vset.pattern.permute.xlu0 2
        %1555 = vperm.xlu0 %1554, %v965
        %v1556 = vpop.permute.xlu0 %1555
        %1558 = vset.pattern.permute.xlu0 2
        %1559 = vperm.xlu0 %1558, %v966
        %v1560 = vpop.permute.xlu0 %1559
        %1562 = vset.pattern.permute.xlu0 2
        %1563 = vperm.xlu0 %1562, %v967
        %v1564 = vpop.permute.xlu0 %1563
        %v1566 = vsel %vm984, %v993, %v1312
        %v1567 = vsel %vm985, %v993, %v1312
        %v1568 = vsel %vm986, %v993, %v1312
        %v1569 = vsel %vm987, %v993, %v1312
        %v1570 = vsel %vm988, %v993, %v1312
        %v1571 = vsel %vm989, %v993, %v1312
        %v1572 = vsel %vm984, %v998, %v1316
        %v1573 = vsel %vm985, %v998, %v1316
        %v1574 = vsel %vm986, %v998, %v1316
        %v1575 = vsel %vm987, %v998, %v1316
        %v1576 = vsel %vm988, %v998, %v1316
        %v1577 = vsel %vm989, %v998, %v1316
        %v1578 = vsel %vm984, %v1003, %v1320
        %v1579 = vsel %vm985, %v1003, %v1320
        %v1580 = vsel %vm986, %v1003, %v1320
        %v1581 = vsel %vm987, %v1003, %v1320
        %v1582 = vsel %vm988, %v1003, %v1320
        %v1583 = vsel %vm989, %v1003, %v1320
        %v1584 = vsel %vm984, %v1008, %v1324
        %v1585 = vsel %vm985, %v1008, %v1324
        %v1586 = vsel %vm986, %v1008, %v1324
        %v1587 = vsel %vm987, %v1008, %v1324
        %v1588 = vsel %vm988, %v1008, %v1324
        %v1589 = vsel %vm989, %v1008, %v1324
        %v1590 = vsel %vm984, %v1013, %v1328
        %v1591 = vsel %vm985, %v1013, %v1328
        %v1592 = vsel %vm986, %v1013, %v1328
        %v1593 = vsel %vm987, %v1013, %v1328
        %v1594 = vsel %vm988, %v1013, %v1328
        %v1595 = vsel %vm989, %v1013, %v1328
        %v1596 = vsel %vm984, %v1018, %v1332
        %v1597 = vsel %vm985, %v1018, %v1332
        %v1598 = vsel %vm986, %v1018, %v1332
        %v1599 = vsel %vm987, %v1018, %v1332
        %v1600 = vsel %vm988, %v1018, %v1332
        %v1601 = vsel %vm989, %v1018, %v1332
        %v1602 = vsel %vm984, %v1023, %v1336
        %v1603 = vsel %vm985, %v1023, %v1336
        %v1604 = vsel %vm986, %v1023, %v1336
        %v1605 = vsel %vm987, %v1023, %v1336
        %v1606 = vsel %vm988, %v1023, %v1336
        %v1607 = vsel %vm989, %v1023, %v1336
        %v1608 = vsel %vm984, %v1028, %v1340
        %v1609 = vsel %vm985, %v1028, %v1340
        %v1610 = vsel %vm986, %v1028, %v1340
        %v1611 = vsel %vm987, %v1028, %v1340
        %v1612 = vsel %vm988, %v1028, %v1340
        %v1613 = vsel %vm989, %v1028, %v1340
        %v1614 = vsel %vm984, %v1033, %v1344
        %v1615 = vsel %vm985, %v1033, %v1344
        %v1616 = vsel %vm986, %v1033, %v1344
        %v1617 = vsel %vm987, %v1033, %v1344
        %v1618 = vsel %vm988, %v1033, %v1344
        %v1619 = vsel %vm989, %v1033, %v1344
        %v1620 = vsel %vm984, %v1038, %v1348
        %v1621 = vsel %vm985, %v1038, %v1348
        %v1622 = vsel %vm986, %v1038, %v1348
        %v1623 = vsel %vm987, %v1038, %v1348
        %v1624 = vsel %vm988, %v1038, %v1348
        %v1625 = vsel %vm989, %v1038, %v1348
        %v1626 = vsel %vm984, %v1043, %v1352
        %v1627 = vsel %vm985, %v1043, %v1352
        %v1628 = vsel %vm986, %v1043, %v1352
        %v1629 = vsel %vm987, %v1043, %v1352
        %v1630 = vsel %vm988, %v1043, %v1352
        %v1631 = vsel %vm989, %v1043, %v1352
        %v1632 = vsel %vm984, %v1048, %v1356
        %v1633 = vsel %vm985, %v1048, %v1356
        %v1634 = vsel %vm986, %v1048, %v1356
        %v1635 = vsel %vm987, %v1048, %v1356
        %v1636 = vsel %vm988, %v1048, %v1356
        %v1637 = vsel %vm989, %v1048, %v1356
        %v1638 = vsel %vm984, %v1053, %v1360
        %v1639 = vsel %vm985, %v1053, %v1360
        %v1640 = vsel %vm986, %v1053, %v1360
        %v1641 = vsel %vm987, %v1053, %v1360
        %v1642 = vsel %vm988, %v1053, %v1360
        %v1643 = vsel %vm989, %v1053, %v1360
        %v1644 = vsel %vm984, %v1058, %v1364
        %v1645 = vsel %vm985, %v1058, %v1364
        %v1646 = vsel %vm986, %v1058, %v1364
        %v1647 = vsel %vm987, %v1058, %v1364
        %v1648 = vsel %vm988, %v1058, %v1364
        %v1649 = vsel %vm989, %v1058, %v1364
        %v1650 = vsel %vm984, %v1063, %v1368
        %v1651 = vsel %vm985, %v1063, %v1368
        %v1652 = vsel %vm986, %v1063, %v1368
        %v1653 = vsel %vm987, %v1063, %v1368
        %v1654 = vsel %vm988, %v1063, %v1368
        %v1655 = vsel %vm989, %v1063, %v1368
        %v1656 = vsel %vm984, %v1068, %v1372
        %v1657 = vsel %vm985, %v1068, %v1372
        %v1658 = vsel %vm986, %v1068, %v1372
        %v1659 = vsel %vm987, %v1068, %v1372
        %v1660 = vsel %vm988, %v1068, %v1372
        %v1661 = vsel %vm989, %v1068, %v1372
        %v1662 = vsel %vm984, %v1073, %v1376
        %v1663 = vsel %vm985, %v1073, %v1376
        %v1664 = vsel %vm986, %v1073, %v1376
        %v1665 = vsel %vm987, %v1073, %v1376
        %v1666 = vsel %vm988, %v1073, %v1376
        %v1667 = vsel %vm989, %v1073, %v1376
        %v1668 = vsel %vm984, %v1078, %v1380
        %v1669 = vsel %vm985, %v1078, %v1380
        %v1670 = vsel %vm986, %v1078, %v1380
        %v1671 = vsel %vm987, %v1078, %v1380
        %v1672 = vsel %vm988, %v1078, %v1380
        %v1673 = vsel %vm989, %v1078, %v1380
        %v1674 = vsel %vm984, %v1083, %v1384
        %v1675 = vsel %vm985, %v1083, %v1384
        %v1676 = vsel %vm986, %v1083, %v1384
        %v1677 = vsel %vm987, %v1083, %v1384
        %v1678 = vsel %vm988, %v1083, %v1384
        %v1679 = vsel %vm989, %v1083, %v1384
        %v1680 = vsel %vm984, %v1088, %v1388
        %v1681 = vsel %vm985, %v1088, %v1388
        %v1682 = vsel %vm986, %v1088, %v1388
        %v1683 = vsel %vm987, %v1088, %v1388
        %v1684 = vsel %vm988, %v1088, %v1388
        %v1685 = vsel %vm989, %v1088, %v1388
        %v1686 = vsel %vm984, %v1093, %v1392
        %v1687 = vsel %vm985, %v1093, %v1392
        %v1688 = vsel %vm986, %v1093, %v1392
        %v1689 = vsel %vm987, %v1093, %v1392
        %v1690 = vsel %vm988, %v1093, %v1392
        %v1691 = vsel %vm989, %v1093, %v1392
        %v1692 = vsel %vm984, %v1098, %v1396
        %v1693 = vsel %vm985, %v1098, %v1396
        %v1694 = vsel %vm986, %v1098, %v1396
        %v1695 = vsel %vm987, %v1098, %v1396
        %v1696 = vsel %vm988, %v1098, %v1396
        %v1697 = vsel %vm989, %v1098, %v1396
        %v1698 = vsel %vm984, %v1103, %v1400
        %v1699 = vsel %vm985, %v1103, %v1400
        %v1700 = vsel %vm986, %v1103, %v1400
        %v1701 = vsel %vm987, %v1103, %v1400
        %v1702 = vsel %vm988, %v1103, %v1400
        %v1703 = vsel %vm989, %v1103, %v1400
        %v1704 = vsel %vm984, %v1108, %v1404
        %v1705 = vsel %vm985, %v1108, %v1404
        %v1706 = vsel %vm986, %v1108, %v1404
        %v1707 = vsel %vm987, %v1108, %v1404
        %v1708 = vsel %vm988, %v1108, %v1404
        %v1709 = vsel %vm989, %v1108, %v1404
        %v1710 = vsel %vm984, %v1113, %v1408
        %v1711 = vsel %vm985, %v1113, %v1408
        %v1712 = vsel %vm986, %v1113, %v1408
        %v1713 = vsel %vm987, %v1113, %v1408
        %v1714 = vsel %vm988, %v1113, %v1408
        %v1715 = vsel %vm989, %v1113, %v1408
        %v1716 = vsel %vm984, %v1118, %v1412
        %v1717 = vsel %vm985, %v1118, %v1412
        %v1718 = vsel %vm986, %v1118, %v1412
        %v1719 = vsel %vm987, %v1118, %v1412
        %v1720 = vsel %vm988, %v1118, %v1412
        %v1721 = vsel %vm989, %v1118, %v1412
        %v1722 = vsel %vm984, %v1123, %v1416
        %v1723 = vsel %vm985, %v1123, %v1416
        %v1724 = vsel %vm986, %v1123, %v1416
        %v1725 = vsel %vm987, %v1123, %v1416
        %v1726 = vsel %vm988, %v1123, %v1416
        %v1727 = vsel %vm989, %v1123, %v1416
        %v1728 = vsel %vm984, %v1128, %v1420
        %v1729 = vsel %vm985, %v1128, %v1420
        %v1730 = vsel %vm986, %v1128, %v1420
        %v1731 = vsel %vm987, %v1128, %v1420
        %v1732 = vsel %vm988, %v1128, %v1420
        %v1733 = vsel %vm989, %v1128, %v1420
        %v1734 = vsel %vm984, %v1133, %v1424
        %v1735 = vsel %vm985, %v1133, %v1424
        %v1736 = vsel %vm986, %v1133, %v1424
        %v1737 = vsel %vm987, %v1133, %v1424
        %v1738 = vsel %vm988, %v1133, %v1424
        %v1739 = vsel %vm989, %v1133, %v1424
        %v1740 = vsel %vm984, %v1138, %v1428
        %v1741 = vsel %vm985, %v1138, %v1428
        %v1742 = vsel %vm986, %v1138, %v1428
        %v1743 = vsel %vm987, %v1138, %v1428
        %v1744 = vsel %vm988, %v1138, %v1428
        %v1745 = vsel %vm989, %v1138, %v1428
        %v1746 = vsel %vm984, %v1143, %v1432
        %v1747 = vsel %vm985, %v1143, %v1432
        %v1748 = vsel %vm986, %v1143, %v1432
        %v1749 = vsel %vm987, %v1143, %v1432
        %v1750 = vsel %vm988, %v1143, %v1432
        %v1751 = vsel %vm989, %v1143, %v1432
        %v1752 = vsel %vm984, %v1148, %v1436
        %v1753 = vsel %vm985, %v1148, %v1436
        %v1754 = vsel %vm986, %v1148, %v1436
        %v1755 = vsel %vm987, %v1148, %v1436
        %v1756 = vsel %vm988, %v1148, %v1436
        %v1757 = vsel %vm989, %v1148, %v1436
        %v1758 = vsel %vm984, %v1153, %v1440
        %v1759 = vsel %vm985, %v1153, %v1440
        %v1760 = vsel %vm986, %v1153, %v1440
        %v1761 = vsel %vm987, %v1153, %v1440
        %v1762 = vsel %vm988, %v1153, %v1440
        %v1763 = vsel %vm989, %v1153, %v1440
        %v1764 = vsel %vm984, %v1158, %v1444
        %v1765 = vsel %vm985, %v1158, %v1444
        %v1766 = vsel %vm986, %v1158, %v1444
        %v1767 = vsel %vm987, %v1158, %v1444
        %v1768 = vsel %vm988, %v1158, %v1444
        %v1769 = vsel %vm989, %v1158, %v1444
        %v1770 = vsel %vm984, %v1163, %v1448
        %v1771 = vsel %vm985, %v1163, %v1448
        %v1772 = vsel %vm986, %v1163, %v1448
        %v1773 = vsel %vm987, %v1163, %v1448
        %v1774 = vsel %vm988, %v1163, %v1448
        %v1775 = vsel %vm989, %v1163, %v1448
        %v1776 = vsel %vm984, %v1168, %v1452
        %v1777 = vsel %vm985, %v1168, %v1452
        %v1778 = vsel %vm986, %v1168, %v1452
        %v1779 = vsel %vm987, %v1168, %v1452
        %v1780 = vsel %vm988, %v1168, %v1452
        %v1781 = vsel %vm989, %v1168, %v1452
        %v1782 = vsel %vm984, %v1173, %v1456
        %v1783 = vsel %vm985, %v1173, %v1456
        %v1784 = vsel %vm986, %v1173, %v1456
        %v1785 = vsel %vm987, %v1173, %v1456
        %v1786 = vsel %vm988, %v1173, %v1456
        %v1787 = vsel %vm989, %v1173, %v1456
        %v1788 = vsel %vm984, %v1178, %v1460
        %v1789 = vsel %vm985, %v1178, %v1460
        %v1790 = vsel %vm986, %v1178, %v1460
        %v1791 = vsel %vm987, %v1178, %v1460
        %v1792 = vsel %vm988, %v1178, %v1460
        %v1793 = vsel %vm989, %v1178, %v1460
        %v1794 = vsel %vm984, %v1183, %v1464
        %v1795 = vsel %vm985, %v1183, %v1464
        %v1796 = vsel %vm986, %v1183, %v1464
        %v1797 = vsel %vm987, %v1183, %v1464
        %v1798 = vsel %vm988, %v1183, %v1464
        %v1799 = vsel %vm989, %v1183, %v1464
        %v1800 = vsel %vm984, %v1188, %v1468
        %v1801 = vsel %vm985, %v1188, %v1468
        %v1802 = vsel %vm986, %v1188, %v1468
        %v1803 = vsel %vm987, %v1188, %v1468
        %v1804 = vsel %vm988, %v1188, %v1468
        %v1805 = vsel %vm989, %v1188, %v1468
        %v1806 = vsel %vm984, %v1193, %v1472
        %v1807 = vsel %vm985, %v1193, %v1472
        %v1808 = vsel %vm986, %v1193, %v1472
        %v1809 = vsel %vm987, %v1193, %v1472
        %v1810 = vsel %vm988, %v1193, %v1472
        %v1811 = vsel %vm989, %v1193, %v1472
        %v1812 = vsel %vm984, %v1198, %v1476
        %v1813 = vsel %vm985, %v1198, %v1476
        %v1814 = vsel %vm986, %v1198, %v1476
        %v1815 = vsel %vm987, %v1198, %v1476
        %v1816 = vsel %vm988, %v1198, %v1476
        %v1817 = vsel %vm989, %v1198, %v1476
        %v1818 = vsel %vm984, %v1203, %v1480
        %v1819 = vsel %vm985, %v1203, %v1480
        %v1820 = vsel %vm986, %v1203, %v1480
        %v1821 = vsel %vm987, %v1203, %v1480
        %v1822 = vsel %vm988, %v1203, %v1480
        %v1823 = vsel %vm989, %v1203, %v1480
        %v1824 = vsel %vm984, %v1208, %v1484
        %v1825 = vsel %vm985, %v1208, %v1484
        %v1826 = vsel %vm986, %v1208, %v1484
        %v1827 = vsel %vm987, %v1208, %v1484
        %v1828 = vsel %vm988, %v1208, %v1484
        %v1829 = vsel %vm989, %v1208, %v1484
        %v1830 = vsel %vm984, %v1213, %v1488
        %v1831 = vsel %vm985, %v1213, %v1488
        %v1832 = vsel %vm986, %v1213, %v1488
        %v1833 = vsel %vm987, %v1213, %v1488
        %v1834 = vsel %vm988, %v1213, %v1488
        %v1835 = vsel %vm989, %v1213, %v1488
        %v1836 = vsel %vm984, %v1218, %v1492
        %v1837 = vsel %vm985, %v1218, %v1492
        %v1838 = vsel %vm986, %v1218, %v1492
        %v1839 = vsel %vm987, %v1218, %v1492
        %v1840 = vsel %vm988, %v1218, %v1492
        %v1841 = vsel %vm989, %v1218, %v1492
        %v1842 = vsel %vm984, %v1223, %v1496
        %v1843 = vsel %vm985, %v1223, %v1496
        %v1844 = vsel %vm986, %v1223, %v1496
        %v1845 = vsel %vm987, %v1223, %v1496
        %v1846 = vsel %vm988, %v1223, %v1496
        %v1847 = vsel %vm989, %v1223, %v1496
        %v1848 = vsel %vm984, %v1228, %v1500
        %v1849 = vsel %vm985, %v1228, %v1500
        %v1850 = vsel %vm986, %v1228, %v1500
        %v1851 = vsel %vm987, %v1228, %v1500
        %v1852 = vsel %vm988, %v1228, %v1500
        %v1853 = vsel %vm989, %v1228, %v1500
        %v1854 = vsel %vm984, %v1233, %v1504
        %v1855 = vsel %vm985, %v1233, %v1504
        %v1856 = vsel %vm986, %v1233, %v1504
        %v1857 = vsel %vm987, %v1233, %v1504
        %v1858 = vsel %vm988, %v1233, %v1504
        %v1859 = vsel %vm989, %v1233, %v1504
        %v1860 = vsel %vm984, %v1238, %v1508
        %v1861 = vsel %vm985, %v1238, %v1508
        %v1862 = vsel %vm986, %v1238, %v1508
        %v1863 = vsel %vm987, %v1238, %v1508
        %v1864 = vsel %vm988, %v1238, %v1508
        %v1865 = vsel %vm989, %v1238, %v1508
        %v1866 = vsel %vm984, %v1243, %v1512
        %v1867 = vsel %vm985, %v1243, %v1512
        %v1868 = vsel %vm986, %v1243, %v1512
        %v1869 = vsel %vm987, %v1243, %v1512
        %v1870 = vsel %vm988, %v1243, %v1512
        %v1871 = vsel %vm989, %v1243, %v1512
        %v1872 = vsel %vm984, %v1248, %v1516
        %v1873 = vsel %vm985, %v1248, %v1516
        %v1874 = vsel %vm986, %v1248, %v1516
        %v1875 = vsel %vm987, %v1248, %v1516
        %v1876 = vsel %vm988, %v1248, %v1516
        %v1877 = vsel %vm989, %v1248, %v1516
        %v1878 = vsel %vm984, %v1253, %v1520
        %v1879 = vsel %vm985, %v1253, %v1520
        %v1880 = vsel %vm986, %v1253, %v1520
        %v1881 = vsel %vm987, %v1253, %v1520
        %v1882 = vsel %vm988, %v1253, %v1520
        %v1883 = vsel %vm989, %v1253, %v1520
        %v1884 = vsel %vm984, %v1258, %v1524
        %v1885 = vsel %vm985, %v1258, %v1524
        %v1886 = vsel %vm986, %v1258, %v1524
        %v1887 = vsel %vm987, %v1258, %v1524
        %v1888 = vsel %vm988, %v1258, %v1524
        %v1889 = vsel %vm989, %v1258, %v1524
        %v1890 = vsel %vm984, %v1263, %v1528
        %v1891 = vsel %vm985, %v1263, %v1528
        %v1892 = vsel %vm986, %v1263, %v1528
        %v1893 = vsel %vm987, %v1263, %v1528
        %v1894 = vsel %vm988, %v1263, %v1528
        %v1895 = vsel %vm989, %v1263, %v1528
        %v1896 = vsel %vm984, %v1268, %v1532
        %v1897 = vsel %vm985, %v1268, %v1532
        %v1898 = vsel %vm986, %v1268, %v1532
        %v1899 = vsel %vm987, %v1268, %v1532
        %v1900 = vsel %vm988, %v1268, %v1532
        %v1901 = vsel %vm989, %v1268, %v1532
        %v1902 = vsel %vm984, %v1273, %v1536
        %v1903 = vsel %vm985, %v1273, %v1536
        %v1904 = vsel %vm986, %v1273, %v1536
        %v1905 = vsel %vm987, %v1273, %v1536
        %v1906 = vsel %vm988, %v1273, %v1536
        %v1907 = vsel %vm989, %v1273, %v1536
        %v1908 = vsel %vm984, %v1278, %v1540
        %v1909 = vsel %vm985, %v1278, %v1540
        %v1910 = vsel %vm986, %v1278, %v1540
        %v1911 = vsel %vm987, %v1278, %v1540
        %v1912 = vsel %vm988, %v1278, %v1540
        %v1913 = vsel %vm989, %v1278, %v1540
        %v1914 = vsel %vm984, %v1283, %v1544
        %v1915 = vsel %vm985, %v1283, %v1544
        %v1916 = vsel %vm986, %v1283, %v1544
        %v1917 = vsel %vm987, %v1283, %v1544
        %v1918 = vsel %vm988, %v1283, %v1544
        %v1919 = vsel %vm989, %v1283, %v1544
        %v1920 = vsel %vm984, %v1288, %v1548
        %v1921 = vsel %vm985, %v1288, %v1548
        %v1922 = vsel %vm986, %v1288, %v1548
        %v1923 = vsel %vm987, %v1288, %v1548
        %v1924 = vsel %vm988, %v1288, %v1548
        %v1925 = vsel %vm989, %v1288, %v1548
        %v1926 = vsel %vm984, %v1293, %v1552
        %v1927 = vsel %vm985, %v1293, %v1552
        %v1928 = vsel %vm986, %v1293, %v1552
        %v1929 = vsel %vm987, %v1293, %v1552
        %v1930 = vsel %vm988, %v1293, %v1552
        %v1931 = vsel %vm989, %v1293, %v1552
        %v1932 = vsel %vm984, %v1298, %v1556
        %v1933 = vsel %vm985, %v1298, %v1556
        %v1934 = vsel %vm986, %v1298, %v1556
        %v1935 = vsel %vm987, %v1298, %v1556
        %v1936 = vsel %vm988, %v1298, %v1556
        %v1937 = vsel %vm989, %v1298, %v1556
        %v1938 = vsel %vm984, %v1303, %v1560
        %v1939 = vsel %vm985, %v1303, %v1560
        %v1940 = vsel %vm986, %v1303, %v1560
        %v1941 = vsel %vm987, %v1303, %v1560
        %v1942 = vsel %vm988, %v1303, %v1560
        %v1943 = vsel %vm989, %v1303, %v1560
        %v1944 = vsel %vm984, %v1308, %v1564
        %v1945 = vsel %vm985, %v1308, %v1564
        %v1946 = vsel %vm986, %v1308, %v1564
        %v1947 = vsel %vm987, %v1308, %v1564
        %v1948 = vsel %vm988, %v1308, %v1564
        %v1949 = vsel %vm989, %v1308, %v1564
        %v1950 = vsel %vm976, 1, 0
        %v1951 = vperm.slane %v1950, 0
        %v1952 = vperm.slane %v1950, 1
        %v1953 = vperm.slane %v1950, 2
        %v1954 = vperm.slane %v1950, 3
        %v1955 = vperm.slane %v1950, 4
        %v1956 = vperm.slane %v1950, 5
        %vm1957 = vcmp.eq.s32.totalorder %v1951, 1
        %vm1958 = vcmp.eq.s32.totalorder %v1952, 1
        %vm1959 = vcmp.eq.s32.totalorder %v1953, 1
        %vm1960 = vcmp.eq.s32.totalorder %v1954, 1
        %vm1961 = vcmp.eq.s32.totalorder %v1955, 1
        %vm1962 = vcmp.eq.s32.totalorder %v1956, 1
        %1963 = vset.pattern.permute.xlu0 0
        %1964 = vperm.xlu0 %1963, %v904
        %v1965 = vpop.permute.xlu0 %1964
        %1967 = vset.pattern.permute.xlu0 0
        %1968 = vperm.xlu0 %1967, %v905
        %v1969 = vpop.permute.xlu0 %1968
        %1971 = vset.pattern.permute.xlu0 0
        %1972 = vperm.xlu0 %1971, %v906
        %v1973 = vpop.permute.xlu0 %1972
        %1975 = vset.pattern.permute.xlu0 0
        %1976 = vperm.xlu0 %1975, %v907
        %v1977 = vpop.permute.xlu0 %1976
        %1979 = vset.pattern.permute.xlu0 0
        %1980 = vperm.xlu0 %1979, %v908
        %v1981 = vpop.permute.xlu0 %1980
        %1983 = vset.pattern.permute.xlu0 0
        %1984 = vperm.xlu0 %1983, %v909
        %v1985 = vpop.permute.xlu0 %1984
        %1987 = vset.pattern.permute.xlu0 0
        %1988 = vperm.xlu0 %1987, %v910
        %v1989 = vpop.permute.xlu0 %1988
        %1991 = vset.pattern.permute.xlu0 0
        %1992 = vperm.xlu0 %1991, %v911
        %v1993 = vpop.permute.xlu0 %1992
        %1995 = vset.pattern.permute.xlu0 0
        %1996 = vperm.xlu0 %1995, %v912
        %v1997 = vpop.permute.xlu0 %1996
        %1999 = vset.pattern.permute.xlu0 0
        %2000 = vperm.xlu0 %1999, %v913
        %v2001 = vpop.permute.xlu0 %2000
        %2003 = vset.pattern.permute.xlu0 0
        %2004 = vperm.xlu0 %2003, %v914
        %v2005 = vpop.permute.xlu0 %2004
        %2007 = vset.pattern.permute.xlu0 0
        %2008 = vperm.xlu0 %2007, %v915
        %v2009 = vpop.permute.xlu0 %2008
        %2011 = vset.pattern.permute.xlu0 0
        %2012 = vperm.xlu0 %2011, %v916
        %v2013 = vpop.permute.xlu0 %2012
        %2015 = vset.pattern.permute.xlu0 0
        %2016 = vperm.xlu0 %2015, %v917
        %v2017 = vpop.permute.xlu0 %2016
        %2019 = vset.pattern.permute.xlu0 0
        %2020 = vperm.xlu0 %2019, %v918
        %v2021 = vpop.permute.xlu0 %2020
        %2023 = vset.pattern.permute.xlu0 0
        %2024 = vperm.xlu0 %2023, %v919
        %v2025 = vpop.permute.xlu0 %2024
        %2027 = vset.pattern.permute.xlu0 0
        %2028 = vperm.xlu0 %2027, %v920
        %v2029 = vpop.permute.xlu0 %2028
        %2031 = vset.pattern.permute.xlu0 0
        %2032 = vperm.xlu0 %2031, %v921
        %v2033 = vpop.permute.xlu0 %2032
        %2035 = vset.pattern.permute.xlu0 0
        %2036 = vperm.xlu0 %2035, %v922
        %v2037 = vpop.permute.xlu0 %2036
        %2039 = vset.pattern.permute.xlu0 0
        %2040 = vperm.xlu0 %2039, %v923
        %v2041 = vpop.permute.xlu0 %2040
        %2043 = vset.pattern.permute.xlu0 0
        %2044 = vperm.xlu0 %2043, %v924
        %v2045 = vpop.permute.xlu0 %2044
        %2047 = vset.pattern.permute.xlu0 0
        %2048 = vperm.xlu0 %2047, %v925
        %v2049 = vpop.permute.xlu0 %2048
        %2051 = vset.pattern.permute.xlu0 0
        %2052 = vperm.xlu0 %2051, %v926
        %v2053 = vpop.permute.xlu0 %2052
        %2055 = vset.pattern.permute.xlu0 0
        %2056 = vperm.xlu0 %2055, %v927
        %v2057 = vpop.permute.xlu0 %2056
        %2059 = vset.pattern.permute.xlu0 0
        %2060 = vperm.xlu0 %2059, %v928
        %v2061 = vpop.permute.xlu0 %2060
        %2063 = vset.pattern.permute.xlu0 0
        %2064 = vperm.xlu0 %2063, %v929
        %v2065 = vpop.permute.xlu0 %2064
        %2067 = vset.pattern.permute.xlu0 0
        %2068 = vperm.xlu0 %2067, %v930
        %v2069 = vpop.permute.xlu0 %2068
        %2071 = vset.pattern.permute.xlu0 0
        %2072 = vperm.xlu0 %2071, %v931
        %v2073 = vpop.permute.xlu0 %2072
        %2075 = vset.pattern.permute.xlu0 0
        %2076 = vperm.xlu0 %2075, %v932
        %v2077 = vpop.permute.xlu0 %2076
        %2079 = vset.pattern.permute.xlu0 0
        %2080 = vperm.xlu0 %2079, %v933
        %v2081 = vpop.permute.xlu0 %2080
        %2083 = vset.pattern.permute.xlu0 0
        %2084 = vperm.xlu0 %2083, %v934
        %v2085 = vpop.permute.xlu0 %2084
        %2087 = vset.pattern.permute.xlu0 0
        %2088 = vperm.xlu0 %2087, %v935
        %v2089 = vpop.permute.xlu0 %2088
        %2091 = vset.pattern.permute.xlu0 0
        %2092 = vperm.xlu0 %2091, %v936
        %v2093 = vpop.permute.xlu0 %2092
        %2095 = vset.pattern.permute.xlu0 0
        %2096 = vperm.xlu0 %2095, %v937
        %v2097 = vpop.permute.xlu0 %2096
        %2099 = vset.pattern.permute.xlu0 0
        %2100 = vperm.xlu0 %2099, %v938
        %v2101 = vpop.permute.xlu0 %2100
        %2103 = vset.pattern.permute.xlu0 0
        %2104 = vperm.xlu0 %2103, %v939
        %v2105 = vpop.permute.xlu0 %2104
        %2107 = vset.pattern.permute.xlu0 0
        %2108 = vperm.xlu0 %2107, %v940
        %v2109 = vpop.permute.xlu0 %2108
        %2111 = vset.pattern.permute.xlu0 0
        %2112 = vperm.xlu0 %2111, %v941
        %v2113 = vpop.permute.xlu0 %2112
        %2115 = vset.pattern.permute.xlu0 0
        %2116 = vperm.xlu0 %2115, %v942
        %v2117 = vpop.permute.xlu0 %2116
        %2119 = vset.pattern.permute.xlu0 0
        %2120 = vperm.xlu0 %2119, %v943
        %v2121 = vpop.permute.xlu0 %2120
        %2123 = vset.pattern.permute.xlu0 0
        %2124 = vperm.xlu0 %2123, %v944
        %v2125 = vpop.permute.xlu0 %2124
        %2127 = vset.pattern.permute.xlu0 0
        %2128 = vperm.xlu0 %2127, %v945
        %v2129 = vpop.permute.xlu0 %2128
        %2131 = vset.pattern.permute.xlu0 0
        %2132 = vperm.xlu0 %2131, %v946
        %v2133 = vpop.permute.xlu0 %2132
        %2135 = vset.pattern.permute.xlu0 0
        %2136 = vperm.xlu0 %2135, %v947
        %v2137 = vpop.permute.xlu0 %2136
        %2139 = vset.pattern.permute.xlu0 0
        %2140 = vperm.xlu0 %2139, %v948
        %v2141 = vpop.permute.xlu0 %2140
        %2143 = vset.pattern.permute.xlu0 0
        %2144 = vperm.xlu0 %2143, %v949
        %v2145 = vpop.permute.xlu0 %2144
        %2147 = vset.pattern.permute.xlu0 0
        %2148 = vperm.xlu0 %2147, %v950
        %v2149 = vpop.permute.xlu0 %2148
        %2151 = vset.pattern.permute.xlu0 0
        %2152 = vperm.xlu0 %2151, %v951
        %v2153 = vpop.permute.xlu0 %2152
        %2155 = vset.pattern.permute.xlu0 0
        %2156 = vperm.xlu0 %2155, %v952
        %v2157 = vpop.permute.xlu0 %2156
        %2159 = vset.pattern.permute.xlu0 0
        %2160 = vperm.xlu0 %2159, %v953
        %v2161 = vpop.permute.xlu0 %2160
        %2163 = vset.pattern.permute.xlu0 0
        %2164 = vperm.xlu0 %2163, %v954
        %v2165 = vpop.permute.xlu0 %2164
        %2167 = vset.pattern.permute.xlu0 0
        %2168 = vperm.xlu0 %2167, %v955
        %v2169 = vpop.permute.xlu0 %2168
        %2171 = vset.pattern.permute.xlu0 0
        %2172 = vperm.xlu0 %2171, %v956
        %v2173 = vpop.permute.xlu0 %2172
        %2175 = vset.pattern.permute.xlu0 0
        %2176 = vperm.xlu0 %2175, %v957
        %v2177 = vpop.permute.xlu0 %2176
        %2179 = vset.pattern.permute.xlu0 0
        %2180 = vperm.xlu0 %2179, %v958
        %v2181 = vpop.permute.xlu0 %2180
        %2183 = vset.pattern.permute.xlu0 0
        %2184 = vperm.xlu0 %2183, %v959
        %v2185 = vpop.permute.xlu0 %2184
        %2187 = vset.pattern.permute.xlu0 0
        %2188 = vperm.xlu0 %2187, %v960
        %v2189 = vpop.permute.xlu0 %2188
        %2191 = vset.pattern.permute.xlu0 0
        %2192 = vperm.xlu0 %2191, %v961
        %v2193 = vpop.permute.xlu0 %2192
        %2195 = vset.pattern.permute.xlu0 0
        %2196 = vperm.xlu0 %2195, %v962
        %v2197 = vpop.permute.xlu0 %2196
        %2199 = vset.pattern.permute.xlu0 0
        %2200 = vperm.xlu0 %2199, %v963
        %v2201 = vpop.permute.xlu0 %2200
        %2203 = vset.pattern.permute.xlu0 0
        %2204 = vperm.xlu0 %2203, %v964
        %v2205 = vpop.permute.xlu0 %2204
        %2207 = vset.pattern.permute.xlu0 0
        %2208 = vperm.xlu0 %2207, %v965
        %v2209 = vpop.permute.xlu0 %2208
        %2211 = vset.pattern.permute.xlu0 0
        %2212 = vperm.xlu0 %2211, %v966
        %v2213 = vpop.permute.xlu0 %2212
        %2215 = vset.pattern.permute.xlu0 0
        %2216 = vperm.xlu0 %2215, %v967
        %v2217 = vpop.permute.xlu0 %2216
        %v2219 = vsel %vm1957, %v993, %v1965
        %v2220 = vsel %vm1958, %v993, %v1965
        %v2221 = vsel %vm1959, %v993, %v1965
        %v2222 = vsel %vm1960, %v993, %v1965
        %v2223 = vsel %vm1961, %v993, %v1965
        %v2224 = vsel %vm1962, %v993, %v1965
        %v2225 = vsel %vm1957, %v998, %v1969
        %v2226 = vsel %vm1958, %v998, %v1969
        %v2227 = vsel %vm1959, %v998, %v1969
        %v2228 = vsel %vm1960, %v998, %v1969
        %v2229 = vsel %vm1961, %v998, %v1969
        %v2230 = vsel %vm1962, %v998, %v1969
        %v2231 = vsel %vm1957, %v1003, %v1973
        %v2232 = vsel %vm1958, %v1003, %v1973
        %v2233 = vsel %vm1959, %v1003, %v1973
        %v2234 = vsel %vm1960, %v1003, %v1973
        %v2235 = vsel %vm1961, %v1003, %v1973
        %v2236 = vsel %vm1962, %v1003, %v1973
        %v2237 = vsel %vm1957, %v1008, %v1977
        %v2238 = vsel %vm1958, %v1008, %v1977
        %v2239 = vsel %vm1959, %v1008, %v1977
        %v2240 = vsel %vm1960, %v1008, %v1977
        %v2241 = vsel %vm1961, %v1008, %v1977
        %v2242 = vsel %vm1962, %v1008, %v1977
        %v2243 = vsel %vm1957, %v1013, %v1981
        %v2244 = vsel %vm1958, %v1013, %v1981
        %v2245 = vsel %vm1959, %v1013, %v1981
        %v2246 = vsel %vm1960, %v1013, %v1981
        %v2247 = vsel %vm1961, %v1013, %v1981
        %v2248 = vsel %vm1962, %v1013, %v1981
        %v2249 = vsel %vm1957, %v1018, %v1985
        %v2250 = vsel %vm1958, %v1018, %v1985
        %v2251 = vsel %vm1959, %v1018, %v1985
        %v2252 = vsel %vm1960, %v1018, %v1985
        %v2253 = vsel %vm1961, %v1018, %v1985
        %v2254 = vsel %vm1962, %v1018, %v1985
        %v2255 = vsel %vm1957, %v1023, %v1989
        %v2256 = vsel %vm1958, %v1023, %v1989
        %v2257 = vsel %vm1959, %v1023, %v1989
        %v2258 = vsel %vm1960, %v1023, %v1989
        %v2259 = vsel %vm1961, %v1023, %v1989
        %v2260 = vsel %vm1962, %v1023, %v1989
        %v2261 = vsel %vm1957, %v1028, %v1993
        %v2262 = vsel %vm1958, %v1028, %v1993
        %v2263 = vsel %vm1959, %v1028, %v1993
        %v2264 = vsel %vm1960, %v1028, %v1993
        %v2265 = vsel %vm1961, %v1028, %v1993
        %v2266 = vsel %vm1962, %v1028, %v1993
        %v2267 = vsel %vm1957, %v1033, %v1997
        %v2268 = vsel %vm1958, %v1033, %v1997
        %v2269 = vsel %vm1959, %v1033, %v1997
        %v2270 = vsel %vm1960, %v1033, %v1997
        %v2271 = vsel %vm1961, %v1033, %v1997
        %v2272 = vsel %vm1962, %v1033, %v1997
        %v2273 = vsel %vm1957, %v1038, %v2001
        %v2274 = vsel %vm1958, %v1038, %v2001
        %v2275 = vsel %vm1959, %v1038, %v2001
        %v2276 = vsel %vm1960, %v1038, %v2001
        %v2277 = vsel %vm1961, %v1038, %v2001
        %v2278 = vsel %vm1962, %v1038, %v2001
        %v2279 = vsel %vm1957, %v1043, %v2005
        %v2280 = vsel %vm1958, %v1043, %v2005
        %v2281 = vsel %vm1959, %v1043, %v2005
        %v2282 = vsel %vm1960, %v1043, %v2005
        %v2283 = vsel %vm1961, %v1043, %v2005
        %v2284 = vsel %vm1962, %v1043, %v2005
        %v2285 = vsel %vm1957, %v1048, %v2009
        %v2286 = vsel %vm1958, %v1048, %v2009
        %v2287 = vsel %vm1959, %v1048, %v2009
        %v2288 = vsel %vm1960, %v1048, %v2009
        %v2289 = vsel %vm1961, %v1048, %v2009
        %v2290 = vsel %vm1962, %v1048, %v2009
        %v2291 = vsel %vm1957, %v1053, %v2013
        %v2292 = vsel %vm1958, %v1053, %v2013
        %v2293 = vsel %vm1959, %v1053, %v2013
        %v2294 = vsel %vm1960, %v1053, %v2013
        %v2295 = vsel %vm1961, %v1053, %v2013
        %v2296 = vsel %vm1962, %v1053, %v2013
        %v2297 = vsel %vm1957, %v1058, %v2017
        %v2298 = vsel %vm1958, %v1058, %v2017
        %v2299 = vsel %vm1959, %v1058, %v2017
        %v2300 = vsel %vm1960, %v1058, %v2017
        %v2301 = vsel %vm1961, %v1058, %v2017
        %v2302 = vsel %vm1962, %v1058, %v2017
        %v2303 = vsel %vm1957, %v1063, %v2021
        %v2304 = vsel %vm1958, %v1063, %v2021
        %v2305 = vsel %vm1959, %v1063, %v2021
        %v2306 = vsel %vm1960, %v1063, %v2021
        %v2307 = vsel %vm1961, %v1063, %v2021
        %v2308 = vsel %vm1962, %v1063, %v2021
        %v2309 = vsel %vm1957, %v1068, %v2025
        %v2310 = vsel %vm1958, %v1068, %v2025
        %v2311 = vsel %vm1959, %v1068, %v2025
        %v2312 = vsel %vm1960, %v1068, %v2025
        %v2313 = vsel %vm1961, %v1068, %v2025
        %v2314 = vsel %vm1962, %v1068, %v2025
        %v2315 = vsel %vm1957, %v1073, %v2029
        %v2316 = vsel %vm1958, %v1073, %v2029
        %v2317 = vsel %vm1959, %v1073, %v2029
        %v2318 = vsel %vm1960, %v1073, %v2029
        %v2319 = vsel %vm1961, %v1073, %v2029
        %v2320 = vsel %vm1962, %v1073, %v2029
        %v2321 = vsel %vm1957, %v1078, %v2033
        %v2322 = vsel %vm1958, %v1078, %v2033
        %v2323 = vsel %vm1959, %v1078, %v2033
        %v2324 = vsel %vm1960, %v1078, %v2033
        %v2325 = vsel %vm1961, %v1078, %v2033
        %v2326 = vsel %vm1962, %v1078, %v2033
        %v2327 = vsel %vm1957, %v1083, %v2037
        %v2328 = vsel %vm1958, %v1083, %v2037
        %v2329 = vsel %vm1959, %v1083, %v2037
        %v2330 = vsel %vm1960, %v1083, %v2037
        %v2331 = vsel %vm1961, %v1083, %v2037
        %v2332 = vsel %vm1962, %v1083, %v2037
        %v2333 = vsel %vm1957, %v1088, %v2041
        %v2334 = vsel %vm1958, %v1088, %v2041
        %v2335 = vsel %vm1959, %v1088, %v2041
        %v2336 = vsel %vm1960, %v1088, %v2041
        %v2337 = vsel %vm1961, %v1088, %v2041
        %v2338 = vsel %vm1962, %v1088, %v2041
        %v2339 = vsel %vm1957, %v1093, %v2045
        %v2340 = vsel %vm1958, %v1093, %v2045
        %v2341 = vsel %vm1959, %v1093, %v2045
        %v2342 = vsel %vm1960, %v1093, %v2045
        %v2343 = vsel %vm1961, %v1093, %v2045
        %v2344 = vsel %vm1962, %v1093, %v2045
        %v2345 = vsel %vm1957, %v1098, %v2049
        %v2346 = vsel %vm1958, %v1098, %v2049
        %v2347 = vsel %vm1959, %v1098, %v2049
        %v2348 = vsel %vm1960, %v1098, %v2049
        %v2349 = vsel %vm1961, %v1098, %v2049
        %v2350 = vsel %vm1962, %v1098, %v2049
        %v2351 = vsel %vm1957, %v1103, %v2053
        %v2352 = vsel %vm1958, %v1103, %v2053
        %v2353 = vsel %vm1959, %v1103, %v2053
        %v2354 = vsel %vm1960, %v1103, %v2053
        %v2355 = vsel %vm1961, %v1103, %v2053
        %v2356 = vsel %vm1962, %v1103, %v2053
        %v2357 = vsel %vm1957, %v1108, %v2057
        %v2358 = vsel %vm1958, %v1108, %v2057
        %v2359 = vsel %vm1959, %v1108, %v2057
        %v2360 = vsel %vm1960, %v1108, %v2057
        %v2361 = vsel %vm1961, %v1108, %v2057
        %v2362 = vsel %vm1962, %v1108, %v2057
        %v2363 = vsel %vm1957, %v1113, %v2061
        %v2364 = vsel %vm1958, %v1113, %v2061
        %v2365 = vsel %vm1959, %v1113, %v2061
        %v2366 = vsel %vm1960, %v1113, %v2061
        %v2367 = vsel %vm1961, %v1113, %v2061
        %v2368 = vsel %vm1962, %v1113, %v2061
        %v2369 = vsel %vm1957, %v1118, %v2065
        %v2370 = vsel %vm1958, %v1118, %v2065
        %v2371 = vsel %vm1959, %v1118, %v2065
        %v2372 = vsel %vm1960, %v1118, %v2065
        %v2373 = vsel %vm1961, %v1118, %v2065
        %v2374 = vsel %vm1962, %v1118, %v2065
        %v2375 = vsel %vm1957, %v1123, %v2069
        %v2376 = vsel %vm1958, %v1123, %v2069
        %v2377 = vsel %vm1959, %v1123, %v2069
        %v2378 = vsel %vm1960, %v1123, %v2069
        %v2379 = vsel %vm1961, %v1123, %v2069
        %v2380 = vsel %vm1962, %v1123, %v2069
        %v2381 = vsel %vm1957, %v1128, %v2073
        %v2382 = vsel %vm1958, %v1128, %v2073
        %v2383 = vsel %vm1959, %v1128, %v2073
        %v2384 = vsel %vm1960, %v1128, %v2073
        %v2385 = vsel %vm1961, %v1128, %v2073
        %v2386 = vsel %vm1962, %v1128, %v2073
        %v2387 = vsel %vm1957, %v1133, %v2077
        %v2388 = vsel %vm1958, %v1133, %v2077
        %v2389 = vsel %vm1959, %v1133, %v2077
        %v2390 = vsel %vm1960, %v1133, %v2077
        %v2391 = vsel %vm1961, %v1133, %v2077
        %v2392 = vsel %vm1962, %v1133, %v2077
        %v2393 = vsel %vm1957, %v1138, %v2081
        %v2394 = vsel %vm1958, %v1138, %v2081
        %v2395 = vsel %vm1959, %v1138, %v2081
        %v2396 = vsel %vm1960, %v1138, %v2081
        %v2397 = vsel %vm1961, %v1138, %v2081
        %v2398 = vsel %vm1962, %v1138, %v2081
        %v2399 = vsel %vm1957, %v1143, %v2085
        %v2400 = vsel %vm1958, %v1143, %v2085
        %v2401 = vsel %vm1959, %v1143, %v2085
        %v2402 = vsel %vm1960, %v1143, %v2085
        %v2403 = vsel %vm1961, %v1143, %v2085
        %v2404 = vsel %vm1962, %v1143, %v2085
        %v2405 = vsel %vm1957, %v1148, %v2089
        %v2406 = vsel %vm1958, %v1148, %v2089
        %v2407 = vsel %vm1959, %v1148, %v2089
        %v2408 = vsel %vm1960, %v1148, %v2089
        %v2409 = vsel %vm1961, %v1148, %v2089
        %v2410 = vsel %vm1962, %v1148, %v2089
        %v2411 = vsel %vm1957, %v1153, %v2093
        %v2412 = vsel %vm1958, %v1153, %v2093
        %v2413 = vsel %vm1959, %v1153, %v2093
        %v2414 = vsel %vm1960, %v1153, %v2093
        %v2415 = vsel %vm1961, %v1153, %v2093
        %v2416 = vsel %vm1962, %v1153, %v2093
        %v2417 = vsel %vm1957, %v1158, %v2097
        %v2418 = vsel %vm1958, %v1158, %v2097
        %v2419 = vsel %vm1959, %v1158, %v2097
        %v2420 = vsel %vm1960, %v1158, %v2097
        %v2421 = vsel %vm1961, %v1158, %v2097
        %v2422 = vsel %vm1962, %v1158, %v2097
        %v2423 = vsel %vm1957, %v1163, %v2101
        %v2424 = vsel %vm1958, %v1163, %v2101
        %v2425 = vsel %vm1959, %v1163, %v2101
        %v2426 = vsel %vm1960, %v1163, %v2101
        %v2427 = vsel %vm1961, %v1163, %v2101
        %v2428 = vsel %vm1962, %v1163, %v2101
        %v2429 = vsel %vm1957, %v1168, %v2105
        %v2430 = vsel %vm1958, %v1168, %v2105
        %v2431 = vsel %vm1959, %v1168, %v2105
        %v2432 = vsel %vm1960, %v1168, %v2105
        %v2433 = vsel %vm1961, %v1168, %v2105
        %v2434 = vsel %vm1962, %v1168, %v2105
        %v2435 = vsel %vm1957, %v1173, %v2109
        %v2436 = vsel %vm1958, %v1173, %v2109
        %v2437 = vsel %vm1959, %v1173, %v2109
        %v2438 = vsel %vm1960, %v1173, %v2109
        %v2439 = vsel %vm1961, %v1173, %v2109
        %v2440 = vsel %vm1962, %v1173, %v2109
        %v2441 = vsel %vm1957, %v1178, %v2113
        %v2442 = vsel %vm1958, %v1178, %v2113
        %v2443 = vsel %vm1959, %v1178, %v2113
        %v2444 = vsel %vm1960, %v1178, %v2113
        %v2445 = vsel %vm1961, %v1178, %v2113
        %v2446 = vsel %vm1962, %v1178, %v2113
        %v2447 = vsel %vm1957, %v1183, %v2117
        %v2448 = vsel %vm1958, %v1183, %v2117
        %v2449 = vsel %vm1959, %v1183, %v2117
        %v2450 = vsel %vm1960, %v1183, %v2117
        %v2451 = vsel %vm1961, %v1183, %v2117
        %v2452 = vsel %vm1962, %v1183, %v2117
        %v2453 = vsel %vm1957, %v1188, %v2121
        %v2454 = vsel %vm1958, %v1188, %v2121
        %v2455 = vsel %vm1959, %v1188, %v2121
        %v2456 = vsel %vm1960, %v1188, %v2121
        %v2457 = vsel %vm1961, %v1188, %v2121
        %v2458 = vsel %vm1962, %v1188, %v2121
        %v2459 = vsel %vm1957, %v1193, %v2125
        %v2460 = vsel %vm1958, %v1193, %v2125
        %v2461 = vsel %vm1959, %v1193, %v2125
        %v2462 = vsel %vm1960, %v1193, %v2125
        %v2463 = vsel %vm1961, %v1193, %v2125
        %v2464 = vsel %vm1962, %v1193, %v2125
        %v2465 = vsel %vm1957, %v1198, %v2129
        %v2466 = vsel %vm1958, %v1198, %v2129
        %v2467 = vsel %vm1959, %v1198, %v2129
        %v2468 = vsel %vm1960, %v1198, %v2129
        %v2469 = vsel %vm1961, %v1198, %v2129
        %v2470 = vsel %vm1962, %v1198, %v2129
        %v2471 = vsel %vm1957, %v1203, %v2133
        %v2472 = vsel %vm1958, %v1203, %v2133
        %v2473 = vsel %vm1959, %v1203, %v2133
        %v2474 = vsel %vm1960, %v1203, %v2133
        %v2475 = vsel %vm1961, %v1203, %v2133
        %v2476 = vsel %vm1962, %v1203, %v2133
        %v2477 = vsel %vm1957, %v1208, %v2137
        %v2478 = vsel %vm1958, %v1208, %v2137
        %v2479 = vsel %vm1959, %v1208, %v2137
        %v2480 = vsel %vm1960, %v1208, %v2137
        %v2481 = vsel %vm1961, %v1208, %v2137
        %v2482 = vsel %vm1962, %v1208, %v2137
        %v2483 = vsel %vm1957, %v1213, %v2141
        %v2484 = vsel %vm1958, %v1213, %v2141
        %v2485 = vsel %vm1959, %v1213, %v2141
        %v2486 = vsel %vm1960, %v1213, %v2141
        %v2487 = vsel %vm1961, %v1213, %v2141
        %v2488 = vsel %vm1962, %v1213, %v2141
        %v2489 = vsel %vm1957, %v1218, %v2145
        %v2490 = vsel %vm1958, %v1218, %v2145
        %v2491 = vsel %vm1959, %v1218, %v2145
        %v2492 = vsel %vm1960, %v1218, %v2145
        %v2493 = vsel %vm1961, %v1218, %v2145
        %v2494 = vsel %vm1962, %v1218, %v2145
        %v2495 = vsel %vm1957, %v1223, %v2149
        %v2496 = vsel %vm1958, %v1223, %v2149
        %v2497 = vsel %vm1959, %v1223, %v2149
        %v2498 = vsel %vm1960, %v1223, %v2149
        %v2499 = vsel %vm1961, %v1223, %v2149
        %v2500 = vsel %vm1962, %v1223, %v2149
        %v2501 = vsel %vm1957, %v1228, %v2153
        %v2502 = vsel %vm1958, %v1228, %v2153
        %v2503 = vsel %vm1959, %v1228, %v2153
        %v2504 = vsel %vm1960, %v1228, %v2153
        %v2505 = vsel %vm1961, %v1228, %v2153
        %v2506 = vsel %vm1962, %v1228, %v2153
        %v2507 = vsel %vm1957, %v1233, %v2157
        %v2508 = vsel %vm1958, %v1233, %v2157
        %v2509 = vsel %vm1959, %v1233, %v2157
        %v2510 = vsel %vm1960, %v1233, %v2157
        %v2511 = vsel %vm1961, %v1233, %v2157
        %v2512 = vsel %vm1962, %v1233, %v2157
        %v2513 = vsel %vm1957, %v1238, %v2161
        %v2514 = vsel %vm1958, %v1238, %v2161
        %v2515 = vsel %vm1959, %v1238, %v2161
        %v2516 = vsel %vm1960, %v1238, %v2161
        %v2517 = vsel %vm1961, %v1238, %v2161
        %v2518 = vsel %vm1962, %v1238, %v2161
        %v2519 = vsel %vm1957, %v1243, %v2165
        %v2520 = vsel %vm1958, %v1243, %v2165
        %v2521 = vsel %vm1959, %v1243, %v2165
        %v2522 = vsel %vm1960, %v1243, %v2165
        %v2523 = vsel %vm1961, %v1243, %v2165
        %v2524 = vsel %vm1962, %v1243, %v2165
        %v2525 = vsel %vm1957, %v1248, %v2169
        %v2526 = vsel %vm1958, %v1248, %v2169
        %v2527 = vsel %vm1959, %v1248, %v2169
        %v2528 = vsel %vm1960, %v1248, %v2169
        %v2529 = vsel %vm1961, %v1248, %v2169
        %v2530 = vsel %vm1962, %v1248, %v2169
        %v2531 = vsel %vm1957, %v1253, %v2173
        %v2532 = vsel %vm1958, %v1253, %v2173
        %v2533 = vsel %vm1959, %v1253, %v2173
        %v2534 = vsel %vm1960, %v1253, %v2173
        %v2535 = vsel %vm1961, %v1253, %v2173
        %v2536 = vsel %vm1962, %v1253, %v2173
        %v2537 = vsel %vm1957, %v1258, %v2177
        %v2538 = vsel %vm1958, %v1258, %v2177
        %v2539 = vsel %vm1959, %v1258, %v2177
        %v2540 = vsel %vm1960, %v1258, %v2177
        %v2541 = vsel %vm1961, %v1258, %v2177
        %v2542 = vsel %vm1962, %v1258, %v2177
        %v2543 = vsel %vm1957, %v1263, %v2181
        %v2544 = vsel %vm1958, %v1263, %v2181
        %v2545 = vsel %vm1959, %v1263, %v2181
        %v2546 = vsel %vm1960, %v1263, %v2181
        %v2547 = vsel %vm1961, %v1263, %v2181
        %v2548 = vsel %vm1962, %v1263, %v2181
        %v2549 = vsel %vm1957, %v1268, %v2185
        %v2550 = vsel %vm1958, %v1268, %v2185
        %v2551 = vsel %vm1959, %v1268, %v2185
        %v2552 = vsel %vm1960, %v1268, %v2185
        %v2553 = vsel %vm1961, %v1268, %v2185
        %v2554 = vsel %vm1962, %v1268, %v2185
        %v2555 = vsel %vm1957, %v1273, %v2189
        %v2556 = vsel %vm1958, %v1273, %v2189
        %v2557 = vsel %vm1959, %v1273, %v2189
        %v2558 = vsel %vm1960, %v1273, %v2189
        %v2559 = vsel %vm1961, %v1273, %v2189
        %v2560 = vsel %vm1962, %v1273, %v2189
        %v2561 = vsel %vm1957, %v1278, %v2193
        %v2562 = vsel %vm1958, %v1278, %v2193
        %v2563 = vsel %vm1959, %v1278, %v2193
        %v2564 = vsel %vm1960, %v1278, %v2193
        %v2565 = vsel %vm1961, %v1278, %v2193
        %v2566 = vsel %vm1962, %v1278, %v2193
        %v2567 = vsel %vm1957, %v1283, %v2197
        %v2568 = vsel %vm1958, %v1283, %v2197
        %v2569 = vsel %vm1959, %v1283, %v2197
        %v2570 = vsel %vm1960, %v1283, %v2197
        %v2571 = vsel %vm1961, %v1283, %v2197
        %v2572 = vsel %vm1962, %v1283, %v2197
        %v2573 = vsel %vm1957, %v1288, %v2201
        %v2574 = vsel %vm1958, %v1288, %v2201
        %v2575 = vsel %vm1959, %v1288, %v2201
        %v2576 = vsel %vm1960, %v1288, %v2201
        %v2577 = vsel %vm1961, %v1288, %v2201
        %v2578 = vsel %vm1962, %v1288, %v2201
        %v2579 = vsel %vm1957, %v1293, %v2205
        %v2580 = vsel %vm1958, %v1293, %v2205
        %v2581 = vsel %vm1959, %v1293, %v2205
        %v2582 = vsel %vm1960, %v1293, %v2205
        %v2583 = vsel %vm1961, %v1293, %v2205
        %v2584 = vsel %vm1962, %v1293, %v2205
        %v2585 = vsel %vm1957, %v1298, %v2209
        %v2586 = vsel %vm1958, %v1298, %v2209
        %v2587 = vsel %vm1959, %v1298, %v2209
        %v2588 = vsel %vm1960, %v1298, %v2209
        %v2589 = vsel %vm1961, %v1298, %v2209
        %v2590 = vsel %vm1962, %v1298, %v2209
        %v2591 = vsel %vm1957, %v1303, %v2213
        %v2592 = vsel %vm1958, %v1303, %v2213
        %v2593 = vsel %vm1959, %v1303, %v2213
        %v2594 = vsel %vm1960, %v1303, %v2213
        %v2595 = vsel %vm1961, %v1303, %v2213
        %v2596 = vsel %vm1962, %v1303, %v2213
        %v2597 = vsel %vm1957, %v1308, %v2217
        %v2598 = vsel %vm1958, %v1308, %v2217
        %v2599 = vsel %vm1959, %v1308, %v2217
        %v2600 = vsel %vm1960, %v1308, %v2217
        %v2601 = vsel %vm1961, %v1308, %v2217
        %v2602 = vsel %vm1962, %v1308, %v2217
        %v2604 = vperm.slane %v968, 0
        %v2605 = vperm.slane %v968, 1
        %v2606 = vperm.slane %v968, 2
        %v2607 = vperm.slane %v968, 3
        %v2608 = vperm.slane %v968, 4
        %v2609 = vperm.slane %v968, 5
        %v2616 = vsub.f32 %v2604, %v1566
        %v2617 = vsub.f32 %v2605, %v1567
        %v2618 = vsub.f32 %v2606, %v1568
        %v2619 = vsub.f32 %v2607, %v1569
        %v2620 = vsub.f32 %v2608, %v1570
        %v2621 = vsub.f32 %v2609, %v1571
        %v2622 = vsub.f32 %v2604, %v1572
        %v2623 = vsub.f32 %v2605, %v1573
        %v2624 = vsub.f32 %v2606, %v1574
        %v2625 = vsub.f32 %v2607, %v1575
        %v2626 = vsub.f32 %v2608, %v1576
        %v2627 = vsub.f32 %v2609, %v1577
        %v2628 = vsub.f32 %v2604, %v1578
        %v2629 = vsub.f32 %v2605, %v1579
        %v2630 = vsub.f32 %v2606, %v1580
        %v2631 = vsub.f32 %v2607, %v1581
        %v2632 = vsub.f32 %v2608, %v1582
        %v2633 = vsub.f32 %v2609, %v1583
        %v2634 = vsub.f32 %v2604, %v1584
        %v2635 = vsub.f32 %v2605, %v1585
        %v2636 = vsub.f32 %v2606, %v1586
        %v2637 = vsub.f32 %v2607, %v1587
        %v2638 = vsub.f32 %v2608, %v1588
        %v2639 = vsub.f32 %v2609, %v1589
        %v2640 = vsub.f32 %v2604, %v1590
        %v2641 = vsub.f32 %v2605, %v1591
        %v2642 = vsub.f32 %v2606, %v1592
        %v2643 = vsub.f32 %v2607, %v1593
        %v2644 = vsub.f32 %v2608, %v1594
        %v2645 = vsub.f32 %v2609, %v1595
        %v2646 = vsub.f32 %v2604, %v1596
        %v2647 = vsub.f32 %v2605, %v1597
        %v2648 = vsub.f32 %v2606, %v1598
        %v2649 = vsub.f32 %v2607, %v1599
        %v2650 = vsub.f32 %v2608, %v1600
        %v2651 = vsub.f32 %v2609, %v1601
        %v2652 = vsub.f32 %v2604, %v1602
        %v2653 = vsub.f32 %v2605, %v1603
        %v2654 = vsub.f32 %v2606, %v1604
        %v2655 = vsub.f32 %v2607, %v1605
        %v2656 = vsub.f32 %v2608, %v1606
        %v2657 = vsub.f32 %v2609, %v1607
        %v2658 = vsub.f32 %v2604, %v1608
        %v2659 = vsub.f32 %v2605, %v1609
        %v2660 = vsub.f32 %v2606, %v1610
        %v2661 = vsub.f32 %v2607, %v1611
        %v2662 = vsub.f32 %v2608, %v1612
        %v2663 = vsub.f32 %v2609, %v1613
        %v2664 = vsub.f32 %v2604, %v1614
        %v2665 = vsub.f32 %v2605, %v1615
        %v2666 = vsub.f32 %v2606, %v1616
        %v2667 = vsub.f32 %v2607, %v1617
        %v2668 = vsub.f32 %v2608, %v1618
        %v2669 = vsub.f32 %v2609, %v1619
        %v2670 = vsub.f32 %v2604, %v1620
        %v2671 = vsub.f32 %v2605, %v1621
        %v2672 = vsub.f32 %v2606, %v1622
        %v2673 = vsub.f32 %v2607, %v1623
        %v2674 = vsub.f32 %v2608, %v1624
        %v2675 = vsub.f32 %v2609, %v1625
        %v2676 = vsub.f32 %v2604, %v1626
        %v2677 = vsub.f32 %v2605, %v1627
        %v2678 = vsub.f32 %v2606, %v1628
        %v2679 = vsub.f32 %v2607, %v1629
        %v2680 = vsub.f32 %v2608, %v1630
        %v2681 = vsub.f32 %v2609, %v1631
        %v2682 = vsub.f32 %v2604, %v1632
        %v2683 = vsub.f32 %v2605, %v1633
        %v2684 = vsub.f32 %v2606, %v1634
        %v2685 = vsub.f32 %v2607, %v1635
        %v2686 = vsub.f32 %v2608, %v1636
        %v2687 = vsub.f32 %v2609, %v1637
        %v2688 = vsub.f32 %v2604, %v1638
        %v2689 = vsub.f32 %v2605, %v1639
        %v2690 = vsub.f32 %v2606, %v1640
        %v2691 = vsub.f32 %v2607, %v1641
        %v2692 = vsub.f32 %v2608, %v1642
        %v2693 = vsub.f32 %v2609, %v1643
        %v2694 = vsub.f32 %v2604, %v1644
        %v2695 = vsub.f32 %v2605, %v1645
        %v2696 = vsub.f32 %v2606, %v1646
        %v2697 = vsub.f32 %v2607, %v1647
        %v2698 = vsub.f32 %v2608, %v1648
        %v2699 = vsub.f32 %v2609, %v1649
        %v2700 = vsub.f32 %v2604, %v1650
        %v2701 = vsub.f32 %v2605, %v1651
        %v2702 = vsub.f32 %v2606, %v1652
        %v2703 = vsub.f32 %v2607, %v1653
        %v2704 = vsub.f32 %v2608, %v1654
        %v2705 = vsub.f32 %v2609, %v1655
        %v2706 = vsub.f32 %v2604, %v1656
        %v2707 = vsub.f32 %v2605, %v1657
        %v2708 = vsub.f32 %v2606, %v1658
        %v2709 = vsub.f32 %v2607, %v1659
        %v2710 = vsub.f32 %v2608, %v1660
        %v2711 = vsub.f32 %v2609, %v1661
        %v2712 = vsub.f32 %v2604, %v1662
        %v2713 = vsub.f32 %v2605, %v1663
        %v2714 = vsub.f32 %v2606, %v1664
        %v2715 = vsub.f32 %v2607, %v1665
        %v2716 = vsub.f32 %v2608, %v1666
        %v2717 = vsub.f32 %v2609, %v1667
        %v2718 = vsub.f32 %v2604, %v1668
        %v2719 = vsub.f32 %v2605, %v1669
        %v2720 = vsub.f32 %v2606, %v1670
        %v2721 = vsub.f32 %v2607, %v1671
        %v2722 = vsub.f32 %v2608, %v1672
        %v2723 = vsub.f32 %v2609, %v1673
        %v2724 = vsub.f32 %v2604, %v1674
        %v2725 = vsub.f32 %v2605, %v1675
        %v2726 = vsub.f32 %v2606, %v1676
        %v2727 = vsub.f32 %v2607, %v1677
        %v2728 = vsub.f32 %v2608, %v1678
        %v2729 = vsub.f32 %v2609, %v1679
        %v2730 = vsub.f32 %v2604, %v1680
        %v2731 = vsub.f32 %v2605, %v1681
        %v2732 = vsub.f32 %v2606, %v1682
        %v2733 = vsub.f32 %v2607, %v1683
        %v2734 = vsub.f32 %v2608, %v1684
        %v2735 = vsub.f32 %v2609, %v1685
        %v2736 = vsub.f32 %v2604, %v1686
        %v2737 = vsub.f32 %v2605, %v1687
        %v2738 = vsub.f32 %v2606, %v1688
        %v2739 = vsub.f32 %v2607, %v1689
        %v2740 = vsub.f32 %v2608, %v1690
        %v2741 = vsub.f32 %v2609, %v1691
        %v2742 = vsub.f32 %v2604, %v1692
        %v2743 = vsub.f32 %v2605, %v1693
        %v2744 = vsub.f32 %v2606, %v1694
        %v2745 = vsub.f32 %v2607, %v1695
        %v2746 = vsub.f32 %v2608, %v1696
        %v2747 = vsub.f32 %v2609, %v1697
        %v2748 = vsub.f32 %v2604, %v1698
        %v2749 = vsub.f32 %v2605, %v1699
        %v2750 = vsub.f32 %v2606, %v1700
        %v2751 = vsub.f32 %v2607, %v1701
        %v2752 = vsub.f32 %v2608, %v1702
        %v2753 = vsub.f32 %v2609, %v1703
        %v2754 = vsub.f32 %v2604, %v1704
        %v2755 = vsub.f32 %v2605, %v1705
        %v2756 = vsub.f32 %v2606, %v1706
        %v2757 = vsub.f32 %v2607, %v1707
        %v2758 = vsub.f32 %v2608, %v1708
        %v2759 = vsub.f32 %v2609, %v1709
        %v2760 = vsub.f32 %v2604, %v1710
        %v2761 = vsub.f32 %v2605, %v1711
        %v2762 = vsub.f32 %v2606, %v1712
        %v2763 = vsub.f32 %v2607, %v1713
        %v2764 = vsub.f32 %v2608, %v1714
        %v2765 = vsub.f32 %v2609, %v1715
        %v2766 = vsub.f32 %v2604, %v1716
        %v2767 = vsub.f32 %v2605, %v1717
        %v2768 = vsub.f32 %v2606, %v1718
        %v2769 = vsub.f32 %v2607, %v1719
        %v2770 = vsub.f32 %v2608, %v1720
        %v2771 = vsub.f32 %v2609, %v1721
        %v2772 = vsub.f32 %v2604, %v1722
        %v2773 = vsub.f32 %v2605, %v1723
        %v2774 = vsub.f32 %v2606, %v1724
        %v2775 = vsub.f32 %v2607, %v1725
        %v2776 = vsub.f32 %v2608, %v1726
        %v2777 = vsub.f32 %v2609, %v1727
        %v2778 = vsub.f32 %v2604, %v1728
        %v2779 = vsub.f32 %v2605, %v1729
        %v2780 = vsub.f32 %v2606, %v1730
        %v2781 = vsub.f32 %v2607, %v1731
        %v2782 = vsub.f32 %v2608, %v1732
        %v2783 = vsub.f32 %v2609, %v1733
        %v2784 = vsub.f32 %v2604, %v1734
        %v2785 = vsub.f32 %v2605, %v1735
        %v2786 = vsub.f32 %v2606, %v1736
        %v2787 = vsub.f32 %v2607, %v1737
        %v2788 = vsub.f32 %v2608, %v1738
        %v2789 = vsub.f32 %v2609, %v1739
        %v2790 = vsub.f32 %v2604, %v1740
        %v2791 = vsub.f32 %v2605, %v1741
        %v2792 = vsub.f32 %v2606, %v1742
        %v2793 = vsub.f32 %v2607, %v1743
        %v2794 = vsub.f32 %v2608, %v1744
        %v2795 = vsub.f32 %v2609, %v1745
        %v2796 = vsub.f32 %v2604, %v1746
        %v2797 = vsub.f32 %v2605, %v1747
        %v2798 = vsub.f32 %v2606, %v1748
        %v2799 = vsub.f32 %v2607, %v1749
        %v2800 = vsub.f32 %v2608, %v1750
        %v2801 = vsub.f32 %v2609, %v1751
        %v2802 = vsub.f32 %v2604, %v1752
        %v2803 = vsub.f32 %v2605, %v1753
        %v2804 = vsub.f32 %v2606, %v1754
        %v2805 = vsub.f32 %v2607, %v1755
        %v2806 = vsub.f32 %v2608, %v1756
        %v2807 = vsub.f32 %v2609, %v1757
        %v2808 = vsub.f32 %v2604, %v1758
        %v2809 = vsub.f32 %v2605, %v1759
        %v2810 = vsub.f32 %v2606, %v1760
        %v2811 = vsub.f32 %v2607, %v1761
        %v2812 = vsub.f32 %v2608, %v1762
        %v2813 = vsub.f32 %v2609, %v1763
        %v2814 = vsub.f32 %v2604, %v1764
        %v2815 = vsub.f32 %v2605, %v1765
        %v2816 = vsub.f32 %v2606, %v1766
        %v2817 = vsub.f32 %v2607, %v1767
        %v2818 = vsub.f32 %v2608, %v1768
        %v2819 = vsub.f32 %v2609, %v1769
        %v2820 = vsub.f32 %v2604, %v1770
        %v2821 = vsub.f32 %v2605, %v1771
        %v2822 = vsub.f32 %v2606, %v1772
        %v2823 = vsub.f32 %v2607, %v1773
        %v2824 = vsub.f32 %v2608, %v1774
        %v2825 = vsub.f32 %v2609, %v1775
        %v2826 = vsub.f32 %v2604, %v1776
        %v2827 = vsub.f32 %v2605, %v1777
        %v2828 = vsub.f32 %v2606, %v1778
        %v2829 = vsub.f32 %v2607, %v1779
        %v2830 = vsub.f32 %v2608, %v1780
        %v2831 = vsub.f32 %v2609, %v1781
        %v2832 = vsub.f32 %v2604, %v1782
        %v2833 = vsub.f32 %v2605, %v1783
        %v2834 = vsub.f32 %v2606, %v1784
        %v2835 = vsub.f32 %v2607, %v1785
        %v2836 = vsub.f32 %v2608, %v1786
        %v2837 = vsub.f32 %v2609, %v1787
        %v2838 = vsub.f32 %v2604, %v1788
        %v2839 = vsub.f32 %v2605, %v1789
        %v2840 = vsub.f32 %v2606, %v1790
        %v2841 = vsub.f32 %v2607, %v1791
        %v2842 = vsub.f32 %v2608, %v1792
        %v2843 = vsub.f32 %v2609, %v1793
        %v2844 = vsub.f32 %v2604, %v1794
        %v2845 = vsub.f32 %v2605, %v1795
        %v2846 = vsub.f32 %v2606, %v1796
        %v2847 = vsub.f32 %v2607, %v1797
        %v2848 = vsub.f32 %v2608, %v1798
        %v2849 = vsub.f32 %v2609, %v1799
        %v2850 = vsub.f32 %v2604, %v1800
        %v2851 = vsub.f32 %v2605, %v1801
        %v2852 = vsub.f32 %v2606, %v1802
        %v2853 = vsub.f32 %v2607, %v1803
        %v2854 = vsub.f32 %v2608, %v1804
        %v2855 = vsub.f32 %v2609, %v1805
        %v2856 = vsub.f32 %v2604, %v1806
        %v2857 = vsub.f32 %v2605, %v1807
        %v2858 = vsub.f32 %v2606, %v1808
        %v2859 = vsub.f32 %v2607, %v1809
        %v2860 = vsub.f32 %v2608, %v1810
        %v2861 = vsub.f32 %v2609, %v1811
        %v2862 = vsub.f32 %v2604, %v1812
        %v2863 = vsub.f32 %v2605, %v1813
        %v2864 = vsub.f32 %v2606, %v1814
        %v2865 = vsub.f32 %v2607, %v1815
        %v2866 = vsub.f32 %v2608, %v1816
        %v2867 = vsub.f32 %v2609, %v1817
        %v2868 = vsub.f32 %v2604, %v1818
        %v2869 = vsub.f32 %v2605, %v1819
        %v2870 = vsub.f32 %v2606, %v1820
        %v2871 = vsub.f32 %v2607, %v1821
        %v2872 = vsub.f32 %v2608, %v1822
        %v2873 = vsub.f32 %v2609, %v1823
        %v2874 = vsub.f32 %v2604, %v1824
        %v2875 = vsub.f32 %v2605, %v1825
        %v2876 = vsub.f32 %v2606, %v1826
        %v2877 = vsub.f32 %v2607, %v1827
        %v2878 = vsub.f32 %v2608, %v1828
        %v2879 = vsub.f32 %v2609, %v1829
        %v2880 = vsub.f32 %v2604, %v1830
        %v2881 = vsub.f32 %v2605, %v1831
        %v2882 = vsub.f32 %v2606, %v1832
        %v2883 = vsub.f32 %v2607, %v1833
        %v2884 = vsub.f32 %v2608, %v1834
        %v2885 = vsub.f32 %v2609, %v1835
        %v2886 = vsub.f32 %v2604, %v1836
        %v2887 = vsub.f32 %v2605, %v1837
        %v2888 = vsub.f32 %v2606, %v1838
        %v2889 = vsub.f32 %v2607, %v1839
        %v2890 = vsub.f32 %v2608, %v1840
        %v2891 = vsub.f32 %v2609, %v1841
        %v2892 = vsub.f32 %v2604, %v1842
        %v2893 = vsub.f32 %v2605, %v1843
        %v2894 = vsub.f32 %v2606, %v1844
        %v2895 = vsub.f32 %v2607, %v1845
        %v2896 = vsub.f32 %v2608, %v1846
        %v2897 = vsub.f32 %v2609, %v1847
        %v2898 = vsub.f32 %v2604, %v1848
        %v2899 = vsub.f32 %v2605, %v1849
        %v2900 = vsub.f32 %v2606, %v1850
        %v2901 = vsub.f32 %v2607, %v1851
        %v2902 = vsub.f32 %v2608, %v1852
        %v2903 = vsub.f32 %v2609, %v1853
        %v2904 = vsub.f32 %v2604, %v1854
        %v2905 = vsub.f32 %v2605, %v1855
        %v2906 = vsub.f32 %v2606, %v1856
        %v2907 = vsub.f32 %v2607, %v1857
        %v2908 = vsub.f32 %v2608, %v1858
        %v2909 = vsub.f32 %v2609, %v1859
        %v2910 = vsub.f32 %v2604, %v1860
        %v2911 = vsub.f32 %v2605, %v1861
        %v2912 = vsub.f32 %v2606, %v1862
        %v2913 = vsub.f32 %v2607, %v1863
        %v2914 = vsub.f32 %v2608, %v1864
        %v2915 = vsub.f32 %v2609, %v1865
        %v2916 = vsub.f32 %v2604, %v1866
        %v2917 = vsub.f32 %v2605, %v1867
        %v2918 = vsub.f32 %v2606, %v1868
        %v2919 = vsub.f32 %v2607, %v1869
        %v2920 = vsub.f32 %v2608, %v1870
        %v2921 = vsub.f32 %v2609, %v1871
        %v2922 = vsub.f32 %v2604, %v1872
        %v2923 = vsub.f32 %v2605, %v1873
        %v2924 = vsub.f32 %v2606, %v1874
        %v2925 = vsub.f32 %v2607, %v1875
        %v2926 = vsub.f32 %v2608, %v1876
        %v2927 = vsub.f32 %v2609, %v1877
        %v2928 = vsub.f32 %v2604, %v1878
        %v2929 = vsub.f32 %v2605, %v1879
        %v2930 = vsub.f32 %v2606, %v1880
        %v2931 = vsub.f32 %v2607, %v1881
        %v2932 = vsub.f32 %v2608, %v1882
        %v2933 = vsub.f32 %v2609, %v1883
        %v2934 = vsub.f32 %v2604, %v1884
        %v2935 = vsub.f32 %v2605, %v1885
        %v2936 = vsub.f32 %v2606, %v1886
        %v2937 = vsub.f32 %v2607, %v1887
        %v2938 = vsub.f32 %v2608, %v1888
        %v2939 = vsub.f32 %v2609, %v1889
        %v2940 = vsub.f32 %v2604, %v1890
        %v2941 = vsub.f32 %v2605, %v1891
        %v2942 = vsub.f32 %v2606, %v1892
        %v2943 = vsub.f32 %v2607, %v1893
        %v2944 = vsub.f32 %v2608, %v1894
        %v2945 = vsub.f32 %v2609, %v1895
        %v2946 = vsub.f32 %v2604, %v1896
        %v2947 = vsub.f32 %v2605, %v1897
        %v2948 = vsub.f32 %v2606, %v1898
        %v2949 = vsub.f32 %v2607, %v1899
        %v2950 = vsub.f32 %v2608, %v1900
        %v2951 = vsub.f32 %v2609, %v1901
        %v2952 = vsub.f32 %v2604, %v1902
        %v2953 = vsub.f32 %v2605, %v1903
        %v2954 = vsub.f32 %v2606, %v1904
        %v2955 = vsub.f32 %v2607, %v1905
        %v2956 = vsub.f32 %v2608, %v1906
        %v2957 = vsub.f32 %v2609, %v1907
        %v2958 = vsub.f32 %v2604, %v1908
        %v2959 = vsub.f32 %v2605, %v1909
        %v2960 = vsub.f32 %v2606, %v1910
        %v2961 = vsub.f32 %v2607, %v1911
        %v2962 = vsub.f32 %v2608, %v1912
        %v2963 = vsub.f32 %v2609, %v1913
        %v2964 = vsub.f32 %v2604, %v1914
        %v2965 = vsub.f32 %v2605, %v1915
        %v2966 = vsub.f32 %v2606, %v1916
        %v2967 = vsub.f32 %v2607, %v1917
        %v2968 = vsub.f32 %v2608, %v1918
        %v2969 = vsub.f32 %v2609, %v1919
        %v2970 = vsub.f32 %v2604, %v1920
        %v2971 = vsub.f32 %v2605, %v1921
        %v2972 = vsub.f32 %v2606, %v1922
        %v2973 = vsub.f32 %v2607, %v1923
        %v2974 = vsub.f32 %v2608, %v1924
        %v2975 = vsub.f32 %v2609, %v1925
        %v2976 = vsub.f32 %v2604, %v1926
        %v2977 = vsub.f32 %v2605, %v1927
        %v2978 = vsub.f32 %v2606, %v1928
        %v2979 = vsub.f32 %v2607, %v1929
        %v2980 = vsub.f32 %v2608, %v1930
        %v2981 = vsub.f32 %v2609, %v1931
        %v2982 = vsub.f32 %v2604, %v1932
        %v2983 = vsub.f32 %v2605, %v1933
        %v2984 = vsub.f32 %v2606, %v1934
        %v2985 = vsub.f32 %v2607, %v1935
        %v2986 = vsub.f32 %v2608, %v1936
        %v2987 = vsub.f32 %v2609, %v1937
        %v2988 = vsub.f32 %v2604, %v1938
        %v2989 = vsub.f32 %v2605, %v1939
        %v2990 = vsub.f32 %v2606, %v1940
        %v2991 = vsub.f32 %v2607, %v1941
        %v2992 = vsub.f32 %v2608, %v1942
        %v2993 = vsub.f32 %v2609, %v1943
        %v2994 = vsub.f32 %v2604, %v1944
        %v2995 = vsub.f32 %v2605, %v1945
        %v2996 = vsub.f32 %v2606, %v1946
        %v2997 = vsub.f32 %v2607, %v1947
        %v2998 = vsub.f32 %v2608, %v1948
        %v2999 = vsub.f32 %v2609, %v1949
        %v3000 = vand.u32 2147483647, %v2616
        %v3001 = vand.u32 2147483647, %v2617
        %v3002 = vand.u32 2147483647, %v2618
        %v3003 = vand.u32 2147483647, %v2619
        %v3004 = vand.u32 2147483647, %v2620
        %v3005 = vand.u32 2147483647, %v2621
        %v3006 = vand.u32 2147483647, %v2622
        %v3007 = vand.u32 2147483647, %v2623
        %v3008 = vand.u32 2147483647, %v2624
        %v3009 = vand.u32 2147483647, %v2625
        %v3010 = vand.u32 2147483647, %v2626
        %v3011 = vand.u32 2147483647, %v2627
        %v3012 = vand.u32 2147483647, %v2628
        %v3013 = vand.u32 2147483647, %v2629
        %v3014 = vand.u32 2147483647, %v2630
        %v3015 = vand.u32 2147483647, %v2631
        %v3016 = vand.u32 2147483647, %v2632
        %v3017 = vand.u32 2147483647, %v2633
        %v3018 = vand.u32 2147483647, %v2634
        %v3019 = vand.u32 2147483647, %v2635
        %v3020 = vand.u32 2147483647, %v2636
        %v3021 = vand.u32 2147483647, %v2637
        %v3022 = vand.u32 2147483647, %v2638
        %v3023 = vand.u32 2147483647, %v2639
        %v3024 = vand.u32 2147483647, %v2640
        %v3025 = vand.u32 2147483647, %v2641
        %v3026 = vand.u32 2147483647, %v2642
        %v3027 = vand.u32 2147483647, %v2643
        %v3028 = vand.u32 2147483647, %v2644
        %v3029 = vand.u32 2147483647, %v2645
        %v3030 = vand.u32 2147483647, %v2646
        %v3031 = vand.u32 2147483647, %v2647
        %v3032 = vand.u32 2147483647, %v2648
        %v3033 = vand.u32 2147483647, %v2649
        %v3034 = vand.u32 2147483647, %v2650
        %v3035 = vand.u32 2147483647, %v2651
        %v3036 = vand.u32 2147483647, %v2652
        %v3037 = vand.u32 2147483647, %v2653
        %v3038 = vand.u32 2147483647, %v2654
        %v3039 = vand.u32 2147483647, %v2655
        %v3040 = vand.u32 2147483647, %v2656
        %v3041 = vand.u32 2147483647, %v2657
        %v3042 = vand.u32 2147483647, %v2658
        %v3043 = vand.u32 2147483647, %v2659
        %v3044 = vand.u32 2147483647, %v2660
        %v3045 = vand.u32 2147483647, %v2661
        %v3046 = vand.u32 2147483647, %v2662
        %v3047 = vand.u32 2147483647, %v2663
        %v3048 = vand.u32 2147483647, %v2664
        %v3049 = vand.u32 2147483647, %v2665
        %v3050 = vand.u32 2147483647, %v2666
        %v3051 = vand.u32 2147483647, %v2667
        %v3052 = vand.u32 2147483647, %v2668
        %v3053 = vand.u32 2147483647, %v2669
        %v3054 = vand.u32 2147483647, %v2670
        %v3055 = vand.u32 2147483647, %v2671
        %v3056 = vand.u32 2147483647, %v2672
        %v3057 = vand.u32 2147483647, %v2673
        %v3058 = vand.u32 2147483647, %v2674
        %v3059 = vand.u32 2147483647, %v2675
        %v3060 = vand.u32 2147483647, %v2676
        %v3061 = vand.u32 2147483647, %v2677
        %v3062 = vand.u32 2147483647, %v2678
        %v3063 = vand.u32 2147483647, %v2679
        %v3064 = vand.u32 2147483647, %v2680
        %v3065 = vand.u32 2147483647, %v2681
        %v3066 = vand.u32 2147483647, %v2682
        %v3067 = vand.u32 2147483647, %v2683
        %v3068 = vand.u32 2147483647, %v2684
        %v3069 = vand.u32 2147483647, %v2685
        %v3070 = vand.u32 2147483647, %v2686
        %v3071 = vand.u32 2147483647, %v2687
        %v3072 = vand.u32 2147483647, %v2688
        %v3073 = vand.u32 2147483647, %v2689
        %v3074 = vand.u32 2147483647, %v2690
        %v3075 = vand.u32 2147483647, %v2691
        %v3076 = vand.u32 2147483647, %v2692
        %v3077 = vand.u32 2147483647, %v2693
        %v3078 = vand.u32 2147483647, %v2694
        %v3079 = vand.u32 2147483647, %v2695
        %v3080 = vand.u32 2147483647, %v2696
        %v3081 = vand.u32 2147483647, %v2697
        %v3082 = vand.u32 2147483647, %v2698
        %v3083 = vand.u32 2147483647, %v2699
        %v3084 = vand.u32 2147483647, %v2700
        %v3085 = vand.u32 2147483647, %v2701
        %v3086 = vand.u32 2147483647, %v2702
        %v3087 = vand.u32 2147483647, %v2703
        %v3088 = vand.u32 2147483647, %v2704
        %v3089 = vand.u32 2147483647, %v2705
        %v3090 = vand.u32 2147483647, %v2706
        %v3091 = vand.u32 2147483647, %v2707
        %v3092 = vand.u32 2147483647, %v2708
        %v3093 = vand.u32 2147483647, %v2709
        %v3094 = vand.u32 2147483647, %v2710
        %v3095 = vand.u32 2147483647, %v2711
        %v3096 = vand.u32 2147483647, %v2712
        %v3097 = vand.u32 2147483647, %v2713
        %v3098 = vand.u32 2147483647, %v2714
        %v3099 = vand.u32 2147483647, %v2715
        %v3100 = vand.u32 2147483647, %v2716
        %v3101 = vand.u32 2147483647, %v2717
        %v3102 = vand.u32 2147483647, %v2718
        %v3103 = vand.u32 2147483647, %v2719
        %v3104 = vand.u32 2147483647, %v2720
        %v3105 = vand.u32 2147483647, %v2721
        %v3106 = vand.u32 2147483647, %v2722
        %v3107 = vand.u32 2147483647, %v2723
        %v3108 = vand.u32 2147483647, %v2724
        %v3109 = vand.u32 2147483647, %v2725
        %v3110 = vand.u32 2147483647, %v2726
        %v3111 = vand.u32 2147483647, %v2727
        %v3112 = vand.u32 2147483647, %v2728
        %v3113 = vand.u32 2147483647, %v2729
        %v3114 = vand.u32 2147483647, %v2730
        %v3115 = vand.u32 2147483647, %v2731
        %v3116 = vand.u32 2147483647, %v2732
        %v3117 = vand.u32 2147483647, %v2733
        %v3118 = vand.u32 2147483647, %v2734
        %v3119 = vand.u32 2147483647, %v2735
        %v3120 = vand.u32 2147483647, %v2736
        %v3121 = vand.u32 2147483647, %v2737
        %v3122 = vand.u32 2147483647, %v2738
        %v3123 = vand.u32 2147483647, %v2739
        %v3124 = vand.u32 2147483647, %v2740
        %v3125 = vand.u32 2147483647, %v2741
        %v3126 = vand.u32 2147483647, %v2742
        %v3127 = vand.u32 2147483647, %v2743
        %v3128 = vand.u32 2147483647, %v2744
        %v3129 = vand.u32 2147483647, %v2745
        %v3130 = vand.u32 2147483647, %v2746
        %v3131 = vand.u32 2147483647, %v2747
        %v3132 = vand.u32 2147483647, %v2748
        %v3133 = vand.u32 2147483647, %v2749
        %v3134 = vand.u32 2147483647, %v2750
        %v3135 = vand.u32 2147483647, %v2751
        %v3136 = vand.u32 2147483647, %v2752
        %v3137 = vand.u32 2147483647, %v2753
        %v3138 = vand.u32 2147483647, %v2754
        %v3139 = vand.u32 2147483647, %v2755
        %v3140 = vand.u32 2147483647, %v2756
        %v3141 = vand.u32 2147483647, %v2757
        %v3142 = vand.u32 2147483647, %v2758
        %v3143 = vand.u32 2147483647, %v2759
        %v3144 = vand.u32 2147483647, %v2760
        %v3145 = vand.u32 2147483647, %v2761
        %v3146 = vand.u32 2147483647, %v2762
        %v3147 = vand.u32 2147483647, %v2763
        %v3148 = vand.u32 2147483647, %v2764
        %v3149 = vand.u32 2147483647, %v2765
        %v3150 = vand.u32 2147483647, %v2766
        %v3151 = vand.u32 2147483647, %v2767
        %v3152 = vand.u32 2147483647, %v2768
        %v3153 = vand.u32 2147483647, %v2769
        %v3154 = vand.u32 2147483647, %v2770
        %v3155 = vand.u32 2147483647, %v2771
        %v3156 = vand.u32 2147483647, %v2772
        %v3157 = vand.u32 2147483647, %v2773
        %v3158 = vand.u32 2147483647, %v2774
        %v3159 = vand.u32 2147483647, %v2775
        %v3160 = vand.u32 2147483647, %v2776
        %v3161 = vand.u32 2147483647, %v2777
        %v3162 = vand.u32 2147483647, %v2778
        %v3163 = vand.u32 2147483647, %v2779
        %v3164 = vand.u32 2147483647, %v2780
        %v3165 = vand.u32 2147483647, %v2781
        %v3166 = vand.u32 2147483647, %v2782
        %v3167 = vand.u32 2147483647, %v2783
        %v3168 = vand.u32 2147483647, %v2784
        %v3169 = vand.u32 2147483647, %v2785
        %v3170 = vand.u32 2147483647, %v2786
        %v3171 = vand.u32 2147483647, %v2787
        %v3172 = vand.u32 2147483647, %v2788
        %v3173 = vand.u32 2147483647, %v2789
        %v3174 = vand.u32 2147483647, %v2790
        %v3175 = vand.u32 2147483647, %v2791
        %v3176 = vand.u32 2147483647, %v2792
        %v3177 = vand.u32 2147483647, %v2793
        %v3178 = vand.u32 2147483647, %v2794
        %v3179 = vand.u32 2147483647, %v2795
        %v3180 = vand.u32 2147483647, %v2796
        %v3181 = vand.u32 2147483647, %v2797
        %v3182 = vand.u32 2147483647, %v2798
        %v3183 = vand.u32 2147483647, %v2799
        %v3184 = vand.u32 2147483647, %v2800
        %v3185 = vand.u32 2147483647, %v2801
        %v3186 = vand.u32 2147483647, %v2802
        %v3187 = vand.u32 2147483647, %v2803
        %v3188 = vand.u32 2147483647, %v2804
        %v3189 = vand.u32 2147483647, %v2805
        %v3190 = vand.u32 2147483647, %v2806
        %v3191 = vand.u32 2147483647, %v2807
        %v3192 = vand.u32 2147483647, %v2808
        %v3193 = vand.u32 2147483647, %v2809
        %v3194 = vand.u32 2147483647, %v2810
        %v3195 = vand.u32 2147483647, %v2811
        %v3196 = vand.u32 2147483647, %v2812
        %v3197 = vand.u32 2147483647, %v2813
        %v3198 = vand.u32 2147483647, %v2814
        %v3199 = vand.u32 2147483647, %v2815
        %v3200 = vand.u32 2147483647, %v2816
        %v3201 = vand.u32 2147483647, %v2817
        %v3202 = vand.u32 2147483647, %v2818
        %v3203 = vand.u32 2147483647, %v2819
        %v3204 = vand.u32 2147483647, %v2820
        %v3205 = vand.u32 2147483647, %v2821
        %v3206 = vand.u32 2147483647, %v2822
        %v3207 = vand.u32 2147483647, %v2823
        %v3208 = vand.u32 2147483647, %v2824
        %v3209 = vand.u32 2147483647, %v2825
        %v3210 = vand.u32 2147483647, %v2826
        %v3211 = vand.u32 2147483647, %v2827
        %v3212 = vand.u32 2147483647, %v2828
        %v3213 = vand.u32 2147483647, %v2829
        %v3214 = vand.u32 2147483647, %v2830
        %v3215 = vand.u32 2147483647, %v2831
        %v3216 = vand.u32 2147483647, %v2832
        %v3217 = vand.u32 2147483647, %v2833
        %v3218 = vand.u32 2147483647, %v2834
        %v3219 = vand.u32 2147483647, %v2835
        %v3220 = vand.u32 2147483647, %v2836
        %v3221 = vand.u32 2147483647, %v2837
        %v3222 = vand.u32 2147483647, %v2838
        %v3223 = vand.u32 2147483647, %v2839
        %v3224 = vand.u32 2147483647, %v2840
        %v3225 = vand.u32 2147483647, %v2841
        %v3226 = vand.u32 2147483647, %v2842
        %v3227 = vand.u32 2147483647, %v2843
        %v3228 = vand.u32 2147483647, %v2844
        %v3229 = vand.u32 2147483647, %v2845
        %v3230 = vand.u32 2147483647, %v2846
        %v3231 = vand.u32 2147483647, %v2847
        %v3232 = vand.u32 2147483647, %v2848
        %v3233 = vand.u32 2147483647, %v2849
        %v3234 = vand.u32 2147483647, %v2850
        %v3235 = vand.u32 2147483647, %v2851
        %v3236 = vand.u32 2147483647, %v2852
        %v3237 = vand.u32 2147483647, %v2853
        %v3238 = vand.u32 2147483647, %v2854
        %v3239 = vand.u32 2147483647, %v2855
        %v3240 = vand.u32 2147483647, %v2856
        %v3241 = vand.u32 2147483647, %v2857
        %v3242 = vand.u32 2147483647, %v2858
        %v3243 = vand.u32 2147483647, %v2859
        %v3244 = vand.u32 2147483647, %v2860
        %v3245 = vand.u32 2147483647, %v2861
        %v3246 = vand.u32 2147483647, %v2862
        %v3247 = vand.u32 2147483647, %v2863
        %v3248 = vand.u32 2147483647, %v2864
        %v3249 = vand.u32 2147483647, %v2865
        %v3250 = vand.u32 2147483647, %v2866
        %v3251 = vand.u32 2147483647, %v2867
        %v3252 = vand.u32 2147483647, %v2868
        %v3253 = vand.u32 2147483647, %v2869
        %v3254 = vand.u32 2147483647, %v2870
        %v3255 = vand.u32 2147483647, %v2871
        %v3256 = vand.u32 2147483647, %v2872
        %v3257 = vand.u32 2147483647, %v2873
        %v3258 = vand.u32 2147483647, %v2874
        %v3259 = vand.u32 2147483647, %v2875
        %v3260 = vand.u32 2147483647, %v2876
        %v3261 = vand.u32 2147483647, %v2877
        %v3262 = vand.u32 2147483647, %v2878
        %v3263 = vand.u32 2147483647, %v2879
        %v3264 = vand.u32 2147483647, %v2880
        %v3265 = vand.u32 2147483647, %v2881
        %v3266 = vand.u32 2147483647, %v2882
        %v3267 = vand.u32 2147483647, %v2883
        %v3268 = vand.u32 2147483647, %v2884
        %v3269 = vand.u32 2147483647, %v2885
        %v3270 = vand.u32 2147483647, %v2886
        %v3271 = vand.u32 2147483647, %v2887
        %v3272 = vand.u32 2147483647, %v2888
        %v3273 = vand.u32 2147483647, %v2889
        %v3274 = vand.u32 2147483647, %v2890
        %v3275 = vand.u32 2147483647, %v2891
        %v3276 = vand.u32 2147483647, %v2892
        %v3277 = vand.u32 2147483647, %v2893
        %v3278 = vand.u32 2147483647, %v2894
        %v3279 = vand.u32 2147483647, %v2895
        %v3280 = vand.u32 2147483647, %v2896
        %v3281 = vand.u32 2147483647, %v2897
        %v3282 = vand.u32 2147483647, %v2898
        %v3283 = vand.u32 2147483647, %v2899
        %v3284 = vand.u32 2147483647, %v2900
        %v3285 = vand.u32 2147483647, %v2901
        %v3286 = vand.u32 2147483647, %v2902
        %v3287 = vand.u32 2147483647, %v2903
        %v3288 = vand.u32 2147483647, %v2904
        %v3289 = vand.u32 2147483647, %v2905
        %v3290 = vand.u32 2147483647, %v2906
        %v3291 = vand.u32 2147483647, %v2907
        %v3292 = vand.u32 2147483647, %v2908
        %v3293 = vand.u32 2147483647, %v2909
        %v3294 = vand.u32 2147483647, %v2910
        %v3295 = vand.u32 2147483647, %v2911
        %v3296 = vand.u32 2147483647, %v2912
        %v3297 = vand.u32 2147483647, %v2913
        %v3298 = vand.u32 2147483647, %v2914
        %v3299 = vand.u32 2147483647, %v2915
        %v3300 = vand.u32 2147483647, %v2916
        %v3301 = vand.u32 2147483647, %v2917
        %v3302 = vand.u32 2147483647, %v2918
        %v3303 = vand.u32 2147483647, %v2919
        %v3304 = vand.u32 2147483647, %v2920
        %v3305 = vand.u32 2147483647, %v2921
        %v3306 = vand.u32 2147483647, %v2922
        %v3307 = vand.u32 2147483647, %v2923
        %v3308 = vand.u32 2147483647, %v2924
        %v3309 = vand.u32 2147483647, %v2925
        %v3310 = vand.u32 2147483647, %v2926
        %v3311 = vand.u32 2147483647, %v2927
        %v3312 = vand.u32 2147483647, %v2928
        %v3313 = vand.u32 2147483647, %v2929
        %v3314 = vand.u32 2147483647, %v2930
        %v3315 = vand.u32 2147483647, %v2931
        %v3316 = vand.u32 2147483647, %v2932
        %v3317 = vand.u32 2147483647, %v2933
        %v3318 = vand.u32 2147483647, %v2934
        %v3319 = vand.u32 2147483647, %v2935
        %v3320 = vand.u32 2147483647, %v2936
        %v3321 = vand.u32 2147483647, %v2937
        %v3322 = vand.u32 2147483647, %v2938
        %v3323 = vand.u32 2147483647, %v2939
        %v3324 = vand.u32 2147483647, %v2940
        %v3325 = vand.u32 2147483647, %v2941
        %v3326 = vand.u32 2147483647, %v2942
        %v3327 = vand.u32 2147483647, %v2943
        %v3328 = vand.u32 2147483647, %v2944
        %v3329 = vand.u32 2147483647, %v2945
        %v3330 = vand.u32 2147483647, %v2946
        %v3331 = vand.u32 2147483647, %v2947
        %v3332 = vand.u32 2147483647, %v2948
        %v3333 = vand.u32 2147483647, %v2949
        %v3334 = vand.u32 2147483647, %v2950
        %v3335 = vand.u32 2147483647, %v2951
        %v3336 = vand.u32 2147483647, %v2952
        %v3337 = vand.u32 2147483647, %v2953
        %v3338 = vand.u32 2147483647, %v2954
        %v3339 = vand.u32 2147483647, %v2955
        %v3340 = vand.u32 2147483647, %v2956
        %v3341 = vand.u32 2147483647, %v2957
        %v3342 = vand.u32 2147483647, %v2958
        %v3343 = vand.u32 2147483647, %v2959
        %v3344 = vand.u32 2147483647, %v2960
        %v3345 = vand.u32 2147483647, %v2961
        %v3346 = vand.u32 2147483647, %v2962
        %v3347 = vand.u32 2147483647, %v2963
        %v3348 = vand.u32 2147483647, %v2964
        %v3349 = vand.u32 2147483647, %v2965
        %v3350 = vand.u32 2147483647, %v2966
        %v3351 = vand.u32 2147483647, %v2967
        %v3352 = vand.u32 2147483647, %v2968
        %v3353 = vand.u32 2147483647, %v2969
        %v3354 = vand.u32 2147483647, %v2970
        %v3355 = vand.u32 2147483647, %v2971
        %v3356 = vand.u32 2147483647, %v2972
        %v3357 = vand.u32 2147483647, %v2973
        %v3358 = vand.u32 2147483647, %v2974
        %v3359 = vand.u32 2147483647, %v2975
        %v3360 = vand.u32 2147483647, %v2976
        %v3361 = vand.u32 2147483647, %v2977
        %v3362 = vand.u32 2147483647, %v2978
        %v3363 = vand.u32 2147483647, %v2979
        %v3364 = vand.u32 2147483647, %v2980
        %v3365 = vand.u32 2147483647, %v2981
        %v3366 = vand.u32 2147483647, %v2982
        %v3367 = vand.u32 2147483647, %v2983
        %v3368 = vand.u32 2147483647, %v2984
        %v3369 = vand.u32 2147483647, %v2985
        %v3370 = vand.u32 2147483647, %v2986
        %v3371 = vand.u32 2147483647, %v2987
        %v3372 = vand.u32 2147483647, %v2988
        %v3373 = vand.u32 2147483647, %v2989
        %v3374 = vand.u32 2147483647, %v2990
        %v3375 = vand.u32 2147483647, %v2991
        %v3376 = vand.u32 2147483647, %v2992
        %v3377 = vand.u32 2147483647, %v2993
        %v3378 = vand.u32 2147483647, %v2994
        %v3379 = vand.u32 2147483647, %v2995
        %v3380 = vand.u32 2147483647, %v2996
        %v3381 = vand.u32 2147483647, %v2997
        %v3382 = vand.u32 2147483647, %v2998
        %v3383 = vand.u32 2147483647, %v2999
        %v3384 = vsub.f32 1.0, %v3000
        %v3385 = vsub.f32 1.0, %v3001
        %v3386 = vsub.f32 1.0, %v3002
        %v3387 = vsub.f32 1.0, %v3003
        %v3388 = vsub.f32 1.0, %v3004
        %v3389 = vsub.f32 1.0, %v3005
        %v3390 = vsub.f32 1.0, %v3006
        %v3391 = vsub.f32 1.0, %v3007
        %v3392 = vsub.f32 1.0, %v3008
        %v3393 = vsub.f32 1.0, %v3009
        %v3394 = vsub.f32 1.0, %v3010
        %v3395 = vsub.f32 1.0, %v3011
        %v3396 = vsub.f32 1.0, %v3012
        %v3397 = vsub.f32 1.0, %v3013
        %v3398 = vsub.f32 1.0, %v3014
        %v3399 = vsub.f32 1.0, %v3015
        %v3400 = vsub.f32 1.0, %v3016
        %v3401 = vsub.f32 1.0, %v3017
        %v3402 = vsub.f32 1.0, %v3018
        %v3403 = vsub.f32 1.0, %v3019
        %v3404 = vsub.f32 1.0, %v3020
        %v3405 = vsub.f32 1.0, %v3021
        %v3406 = vsub.f32 1.0, %v3022
        %v3407 = vsub.f32 1.0, %v3023
        %v3408 = vsub.f32 1.0, %v3024
        %v3409 = vsub.f32 1.0, %v3025
        %v3410 = vsub.f32 1.0, %v3026
        %v3411 = vsub.f32 1.0, %v3027
        %v3412 = vsub.f32 1.0, %v3028
        %v3413 = vsub.f32 1.0, %v3029
        %v3414 = vsub.f32 1.0, %v3030
        %v3415 = vsub.f32 1.0, %v3031
        %v3416 = vsub.f32 1.0, %v3032
        %v3417 = vsub.f32 1.0, %v3033
        %v3418 = vsub.f32 1.0, %v3034
        %v3419 = vsub.f32 1.0, %v3035
        %v3420 = vsub.f32 1.0, %v3036
        %v3421 = vsub.f32 1.0, %v3037
        %v3422 = vsub.f32 1.0, %v3038
        %v3423 = vsub.f32 1.0, %v3039
        %v3424 = vsub.f32 1.0, %v3040
        %v3425 = vsub.f32 1.0, %v3041
        %v3426 = vsub.f32 1.0, %v3042
        %v3427 = vsub.f32 1.0, %v3043
        %v3428 = vsub.f32 1.0, %v3044
        %v3429 = vsub.f32 1.0, %v3045
        %v3430 = vsub.f32 1.0, %v3046
        %v3431 = vsub.f32 1.0, %v3047
        %v3432 = vsub.f32 1.0, %v3048
        %v3433 = vsub.f32 1.0, %v3049
        %v3434 = vsub.f32 1.0, %v3050
        %v3435 = vsub.f32 1.0, %v3051
        %v3436 = vsub.f32 1.0, %v3052
        %v3437 = vsub.f32 1.0, %v3053
        %v3438 = vsub.f32 1.0, %v3054
        %v3439 = vsub.f32 1.0, %v3055
        %v3440 = vsub.f32 1.0, %v3056
        %v3441 = vsub.f32 1.0, %v3057
        %v3442 = vsub.f32 1.0, %v3058
        %v3443 = vsub.f32 1.0, %v3059
        %v3444 = vsub.f32 1.0, %v3060
        %v3445 = vsub.f32 1.0, %v3061
        %v3446 = vsub.f32 1.0, %v3062
        %v3447 = vsub.f32 1.0, %v3063
        %v3448 = vsub.f32 1.0, %v3064
        %v3449 = vsub.f32 1.0, %v3065
        %v3450 = vsub.f32 1.0, %v3066
        %v3451 = vsub.f32 1.0, %v3067
        %v3452 = vsub.f32 1.0, %v3068
        %v3453 = vsub.f32 1.0, %v3069
        %v3454 = vsub.f32 1.0, %v3070
        %v3455 = vsub.f32 1.0, %v3071
        %v3456 = vsub.f32 1.0, %v3072
        %v3457 = vsub.f32 1.0, %v3073
        %v3458 = vsub.f32 1.0, %v3074
        %v3459 = vsub.f32 1.0, %v3075
        %v3460 = vsub.f32 1.0, %v3076
        %v3461 = vsub.f32 1.0, %v3077
        %v3462 = vsub.f32 1.0, %v3078
        %v3463 = vsub.f32 1.0, %v3079
        %v3464 = vsub.f32 1.0, %v3080
        %v3465 = vsub.f32 1.0, %v3081
        %v3466 = vsub.f32 1.0, %v3082
        %v3467 = vsub.f32 1.0, %v3083
        %v3468 = vsub.f32 1.0, %v3084
        %v3469 = vsub.f32 1.0, %v3085
        %v3470 = vsub.f32 1.0, %v3086
        %v3471 = vsub.f32 1.0, %v3087
        %v3472 = vsub.f32 1.0, %v3088
        %v3473 = vsub.f32 1.0, %v3089
        %v3474 = vsub.f32 1.0, %v3090
        %v3475 = vsub.f32 1.0, %v3091
        %v3476 = vsub.f32 1.0, %v3092
        %v3477 = vsub.f32 1.0, %v3093
        %v3478 = vsub.f32 1.0, %v3094
        %v3479 = vsub.f32 1.0, %v3095
        %v3480 = vsub.f32 1.0, %v3096
        %v3481 = vsub.f32 1.0, %v3097
        %v3482 = vsub.f32 1.0, %v3098
        %v3483 = vsub.f32 1.0, %v3099
        %v3484 = vsub.f32 1.0, %v3100
        %v3485 = vsub.f32 1.0, %v3101
        %v3486 = vsub.f32 1.0, %v3102
        %v3487 = vsub.f32 1.0, %v3103
        %v3488 = vsub.f32 1.0, %v3104
        %v3489 = vsub.f32 1.0, %v3105
        %v3490 = vsub.f32 1.0, %v3106
        %v3491 = vsub.f32 1.0, %v3107
        %v3492 = vsub.f32 1.0, %v3108
        %v3493 = vsub.f32 1.0, %v3109
        %v3494 = vsub.f32 1.0, %v3110
        %v3495 = vsub.f32 1.0, %v3111
        %v3496 = vsub.f32 1.0, %v3112
        %v3497 = vsub.f32 1.0, %v3113
        %v3498 = vsub.f32 1.0, %v3114
        %v3499 = vsub.f32 1.0, %v3115
        %v3500 = vsub.f32 1.0, %v3116
        %v3501 = vsub.f32 1.0, %v3117
        %v3502 = vsub.f32 1.0, %v3118
        %v3503 = vsub.f32 1.0, %v3119
        %v3504 = vsub.f32 1.0, %v3120
        %v3505 = vsub.f32 1.0, %v3121
        %v3506 = vsub.f32 1.0, %v3122
        %v3507 = vsub.f32 1.0, %v3123
        %v3508 = vsub.f32 1.0, %v3124
        %v3509 = vsub.f32 1.0, %v3125
        %v3510 = vsub.f32 1.0, %v3126
        %v3511 = vsub.f32 1.0, %v3127
        %v3512 = vsub.f32 1.0, %v3128
        %v3513 = vsub.f32 1.0, %v3129
        %v3514 = vsub.f32 1.0, %v3130
        %v3515 = vsub.f32 1.0, %v3131
        %v3516 = vsub.f32 1.0, %v3132
        %v3517 = vsub.f32 1.0, %v3133
        %v3518 = vsub.f32 1.0, %v3134
        %v3519 = vsub.f32 1.0, %v3135
        %v3520 = vsub.f32 1.0, %v3136
        %v3521 = vsub.f32 1.0, %v3137
        %v3522 = vsub.f32 1.0, %v3138
        %v3523 = vsub.f32 1.0, %v3139
        %v3524 = vsub.f32 1.0, %v3140
        %v3525 = vsub.f32 1.0, %v3141
        %v3526 = vsub.f32 1.0, %v3142
        %v3527 = vsub.f32 1.0, %v3143
        %v3528 = vsub.f32 1.0, %v3144
        %v3529 = vsub.f32 1.0, %v3145
        %v3530 = vsub.f32 1.0, %v3146
        %v3531 = vsub.f32 1.0, %v3147
        %v3532 = vsub.f32 1.0, %v3148
        %v3533 = vsub.f32 1.0, %v3149
        %v3534 = vsub.f32 1.0, %v3150
        %v3535 = vsub.f32 1.0, %v3151
        %v3536 = vsub.f32 1.0, %v3152
        %v3537 = vsub.f32 1.0, %v3153
        %v3538 = vsub.f32 1.0, %v3154
        %v3539 = vsub.f32 1.0, %v3155
        %v3540 = vsub.f32 1.0, %v3156
        %v3541 = vsub.f32 1.0, %v3157
        %v3542 = vsub.f32 1.0, %v3158
        %v3543 = vsub.f32 1.0, %v3159
        %v3544 = vsub.f32 1.0, %v3160
        %v3545 = vsub.f32 1.0, %v3161
        %v3546 = vsub.f32 1.0, %v3162
        %v3547 = vsub.f32 1.0, %v3163
        %v3548 = vsub.f32 1.0, %v3164
        %v3549 = vsub.f32 1.0, %v3165
        %v3550 = vsub.f32 1.0, %v3166
        %v3551 = vsub.f32 1.0, %v3167
        %v3552 = vsub.f32 1.0, %v3168
        %v3553 = vsub.f32 1.0, %v3169
        %v3554 = vsub.f32 1.0, %v3170
        %v3555 = vsub.f32 1.0, %v3171
        %v3556 = vsub.f32 1.0, %v3172
        %v3557 = vsub.f32 1.0, %v3173
        %v3558 = vsub.f32 1.0, %v3174
        %v3559 = vsub.f32 1.0, %v3175
        %v3560 = vsub.f32 1.0, %v3176
        %v3561 = vsub.f32 1.0, %v3177
        %v3562 = vsub.f32 1.0, %v3178
        %v3563 = vsub.f32 1.0, %v3179
        %v3564 = vsub.f32 1.0, %v3180
        %v3565 = vsub.f32 1.0, %v3181
        %v3566 = vsub.f32 1.0, %v3182
        %v3567 = vsub.f32 1.0, %v3183
        %v3568 = vsub.f32 1.0, %v3184
        %v3569 = vsub.f32 1.0, %v3185
        %v3570 = vsub.f32 1.0, %v3186
        %v3571 = vsub.f32 1.0, %v3187
        %v3572 = vsub.f32 1.0, %v3188
        %v3573 = vsub.f32 1.0, %v3189
        %v3574 = vsub.f32 1.0, %v3190
        %v3575 = vsub.f32 1.0, %v3191
        %v3576 = vsub.f32 1.0, %v3192
        %v3577 = vsub.f32 1.0, %v3193
        %v3578 = vsub.f32 1.0, %v3194
        %v3579 = vsub.f32 1.0, %v3195
        %v3580 = vsub.f32 1.0, %v3196
        %v3581 = vsub.f32 1.0, %v3197
        %v3582 = vsub.f32 1.0, %v3198
        %v3583 = vsub.f32 1.0, %v3199
        %v3584 = vsub.f32 1.0, %v3200
        %v3585 = vsub.f32 1.0, %v3201
        %v3586 = vsub.f32 1.0, %v3202
        %v3587 = vsub.f32 1.0, %v3203
        %v3588 = vsub.f32 1.0, %v3204
        %v3589 = vsub.f32 1.0, %v3205
        %v3590 = vsub.f32 1.0, %v3206
        %v3591 = vsub.f32 1.0, %v3207
        %v3592 = vsub.f32 1.0, %v3208
        %v3593 = vsub.f32 1.0, %v3209
        %v3594 = vsub.f32 1.0, %v3210
        %v3595 = vsub.f32 1.0, %v3211
        %v3596 = vsub.f32 1.0, %v3212
        %v3597 = vsub.f32 1.0, %v3213
        %v3598 = vsub.f32 1.0, %v3214
        %v3599 = vsub.f32 1.0, %v3215
        %v3600 = vsub.f32 1.0, %v3216
        %v3601 = vsub.f32 1.0, %v3217
        %v3602 = vsub.f32 1.0, %v3218
        %v3603 = vsub.f32 1.0, %v3219
        %v3604 = vsub.f32 1.0, %v3220
        %v3605 = vsub.f32 1.0, %v3221
        %v3606 = vsub.f32 1.0, %v3222
        %v3607 = vsub.f32 1.0, %v3223
        %v3608 = vsub.f32 1.0, %v3224
        %v3609 = vsub.f32 1.0, %v3225
        %v3610 = vsub.f32 1.0, %v3226
        %v3611 = vsub.f32 1.0, %v3227
        %v3612 = vsub.f32 1.0, %v3228
        %v3613 = vsub.f32 1.0, %v3229
        %v3614 = vsub.f32 1.0, %v3230
        %v3615 = vsub.f32 1.0, %v3231
        %v3616 = vsub.f32 1.0, %v3232
        %v3617 = vsub.f32 1.0, %v3233
        %v3618 = vsub.f32 1.0, %v3234
        %v3619 = vsub.f32 1.0, %v3235
        %v3620 = vsub.f32 1.0, %v3236
        %v3621 = vsub.f32 1.0, %v3237
        %v3622 = vsub.f32 1.0, %v3238
        %v3623 = vsub.f32 1.0, %v3239
        %v3624 = vsub.f32 1.0, %v3240
        %v3625 = vsub.f32 1.0, %v3241
        %v3626 = vsub.f32 1.0, %v3242
        %v3627 = vsub.f32 1.0, %v3243
        %v3628 = vsub.f32 1.0, %v3244
        %v3629 = vsub.f32 1.0, %v3245
        %v3630 = vsub.f32 1.0, %v3246
        %v3631 = vsub.f32 1.0, %v3247
        %v3632 = vsub.f32 1.0, %v3248
        %v3633 = vsub.f32 1.0, %v3249
        %v3634 = vsub.f32 1.0, %v3250
        %v3635 = vsub.f32 1.0, %v3251
        %v3636 = vsub.f32 1.0, %v3252
        %v3637 = vsub.f32 1.0, %v3253
        %v3638 = vsub.f32 1.0, %v3254
        %v3639 = vsub.f32 1.0, %v3255
        %v3640 = vsub.f32 1.0, %v3256
        %v3641 = vsub.f32 1.0, %v3257
        %v3642 = vsub.f32 1.0, %v3258
        %v3643 = vsub.f32 1.0, %v3259
        %v3644 = vsub.f32 1.0, %v3260
        %v3645 = vsub.f32 1.0, %v3261
        %v3646 = vsub.f32 1.0, %v3262
        %v3647 = vsub.f32 1.0, %v3263
        %v3648 = vsub.f32 1.0, %v3264
        %v3649 = vsub.f32 1.0, %v3265
        %v3650 = vsub.f32 1.0, %v3266
        %v3651 = vsub.f32 1.0, %v3267
        %v3652 = vsub.f32 1.0, %v3268
        %v3653 = vsub.f32 1.0, %v3269
        %v3654 = vsub.f32 1.0, %v3270
        %v3655 = vsub.f32 1.0, %v3271
        %v3656 = vsub.f32 1.0, %v3272
        %v3657 = vsub.f32 1.0, %v3273
        %v3658 = vsub.f32 1.0, %v3274
        %v3659 = vsub.f32 1.0, %v3275
        %v3660 = vsub.f32 1.0, %v3276
        %v3661 = vsub.f32 1.0, %v3277
        %v3662 = vsub.f32 1.0, %v3278
        %v3663 = vsub.f32 1.0, %v3279
        %v3664 = vsub.f32 1.0, %v3280
        %v3665 = vsub.f32 1.0, %v3281
        %v3666 = vsub.f32 1.0, %v3282
        %v3667 = vsub.f32 1.0, %v3283
        %v3668 = vsub.f32 1.0, %v3284
        %v3669 = vsub.f32 1.0, %v3285
        %v3670 = vsub.f32 1.0, %v3286
        %v3671 = vsub.f32 1.0, %v3287
        %v3672 = vsub.f32 1.0, %v3288
        %v3673 = vsub.f32 1.0, %v3289
        %v3674 = vsub.f32 1.0, %v3290
        %v3675 = vsub.f32 1.0, %v3291
        %v3676 = vsub.f32 1.0, %v3292
        %v3677 = vsub.f32 1.0, %v3293
        %v3678 = vsub.f32 1.0, %v3294
        %v3679 = vsub.f32 1.0, %v3295
        %v3680 = vsub.f32 1.0, %v3296
        %v3681 = vsub.f32 1.0, %v3297
        %v3682 = vsub.f32 1.0, %v3298
        %v3683 = vsub.f32 1.0, %v3299
        %v3684 = vsub.f32 1.0, %v3300
        %v3685 = vsub.f32 1.0, %v3301
        %v3686 = vsub.f32 1.0, %v3302
        %v3687 = vsub.f32 1.0, %v3303
        %v3688 = vsub.f32 1.0, %v3304
        %v3689 = vsub.f32 1.0, %v3305
        %v3690 = vsub.f32 1.0, %v3306
        %v3691 = vsub.f32 1.0, %v3307
        %v3692 = vsub.f32 1.0, %v3308
        %v3693 = vsub.f32 1.0, %v3309
        %v3694 = vsub.f32 1.0, %v3310
        %v3695 = vsub.f32 1.0, %v3311
        %v3696 = vsub.f32 1.0, %v3312
        %v3697 = vsub.f32 1.0, %v3313
        %v3698 = vsub.f32 1.0, %v3314
        %v3699 = vsub.f32 1.0, %v3315
        %v3700 = vsub.f32 1.0, %v3316
        %v3701 = vsub.f32 1.0, %v3317
        %v3702 = vsub.f32 1.0, %v3318
        %v3703 = vsub.f32 1.0, %v3319
        %v3704 = vsub.f32 1.0, %v3320
        %v3705 = vsub.f32 1.0, %v3321
        %v3706 = vsub.f32 1.0, %v3322
        %v3707 = vsub.f32 1.0, %v3323
        %v3708 = vsub.f32 1.0, %v3324
        %v3709 = vsub.f32 1.0, %v3325
        %v3710 = vsub.f32 1.0, %v3326
        %v3711 = vsub.f32 1.0, %v3327
        %v3712 = vsub.f32 1.0, %v3328
        %v3713 = vsub.f32 1.0, %v3329
        %v3714 = vsub.f32 1.0, %v3330
        %v3715 = vsub.f32 1.0, %v3331
        %v3716 = vsub.f32 1.0, %v3332
        %v3717 = vsub.f32 1.0, %v3333
        %v3718 = vsub.f32 1.0, %v3334
        %v3719 = vsub.f32 1.0, %v3335
        %v3720 = vsub.f32 1.0, %v3336
        %v3721 = vsub.f32 1.0, %v3337
        %v3722 = vsub.f32 1.0, %v3338
        %v3723 = vsub.f32 1.0, %v3339
        %v3724 = vsub.f32 1.0, %v3340
        %v3725 = vsub.f32 1.0, %v3341
        %v3726 = vsub.f32 1.0, %v3342
        %v3727 = vsub.f32 1.0, %v3343
        %v3728 = vsub.f32 1.0, %v3344
        %v3729 = vsub.f32 1.0, %v3345
        %v3730 = vsub.f32 1.0, %v3346
        %v3731 = vsub.f32 1.0, %v3347
        %v3732 = vsub.f32 1.0, %v3348
        %v3733 = vsub.f32 1.0, %v3349
        %v3734 = vsub.f32 1.0, %v3350
        %v3735 = vsub.f32 1.0, %v3351
        %v3736 = vsub.f32 1.0, %v3352
        %v3737 = vsub.f32 1.0, %v3353
        %v3738 = vsub.f32 1.0, %v3354
        %v3739 = vsub.f32 1.0, %v3355
        %v3740 = vsub.f32 1.0, %v3356
        %v3741 = vsub.f32 1.0, %v3357
        %v3742 = vsub.f32 1.0, %v3358
        %v3743 = vsub.f32 1.0, %v3359
        %v3744 = vsub.f32 1.0, %v3360
        %v3745 = vsub.f32 1.0, %v3361
        %v3746 = vsub.f32 1.0, %v3362
        %v3747 = vsub.f32 1.0, %v3363
        %v3748 = vsub.f32 1.0, %v3364
        %v3749 = vsub.f32 1.0, %v3365
        %v3750 = vsub.f32 1.0, %v3366
        %v3751 = vsub.f32 1.0, %v3367
        %v3752 = vsub.f32 1.0, %v3368
        %v3753 = vsub.f32 1.0, %v3369
        %v3754 = vsub.f32 1.0, %v3370
        %v3755 = vsub.f32 1.0, %v3371
        %v3756 = vsub.f32 1.0, %v3372
        %v3757 = vsub.f32 1.0, %v3373
        %v3758 = vsub.f32 1.0, %v3374
        %v3759 = vsub.f32 1.0, %v3375
        %v3760 = vsub.f32 1.0, %v3376
        %v3761 = vsub.f32 1.0, %v3377
        %v3762 = vsub.f32 1.0, %v3378
        %v3763 = vsub.f32 1.0, %v3379
        %v3764 = vsub.f32 1.0, %v3380
        %v3765 = vsub.f32 1.0, %v3381
        %v3766 = vsub.f32 1.0, %v3382
        %v3767 = vsub.f32 1.0, %v3383
        %v3768 = vmax.f32 %v3384, 0.0
        %v3769 = vmax.f32 %v3385, 0.0
        %v3770 = vmax.f32 %v3386, 0.0
        %v3771 = vmax.f32 %v3387, 0.0
        %v3772 = vmax.f32 %v3388, 0.0
        %v3773 = vmax.f32 %v3389, 0.0
        %v3774 = vmax.f32 %v3390, 0.0
        %v3775 = vmax.f32 %v3391, 0.0
        %v3776 = vmax.f32 %v3392, 0.0
        %v3777 = vmax.f32 %v3393, 0.0
        %v3778 = vmax.f32 %v3394, 0.0
        %v3779 = vmax.f32 %v3395, 0.0
        %v3780 = vmax.f32 %v3396, 0.0
        %v3781 = vmax.f32 %v3397, 0.0
        %v3782 = vmax.f32 %v3398, 0.0
        %v3783 = vmax.f32 %v3399, 0.0
        %v3784 = vmax.f32 %v3400, 0.0
        %v3785 = vmax.f32 %v3401, 0.0
        %v3786 = vmax.f32 %v3402, 0.0
        %v3787 = vmax.f32 %v3403, 0.0
        %v3788 = vmax.f32 %v3404, 0.0
        %v3789 = vmax.f32 %v3405, 0.0
        %v3790 = vmax.f32 %v3406, 0.0
        %v3791 = vmax.f32 %v3407, 0.0
        %v3792 = vmax.f32 %v3408, 0.0
        %v3793 = vmax.f32 %v3409, 0.0
        %v3794 = vmax.f32 %v3410, 0.0
        %v3795 = vmax.f32 %v3411, 0.0
        %v3796 = vmax.f32 %v3412, 0.0
        %v3797 = vmax.f32 %v3413, 0.0
        %v3798 = vmax.f32 %v3414, 0.0
        %v3799 = vmax.f32 %v3415, 0.0
        %v3800 = vmax.f32 %v3416, 0.0
        %v3801 = vmax.f32 %v3417, 0.0
        %v3802 = vmax.f32 %v3418, 0.0
        %v3803 = vmax.f32 %v3419, 0.0
        %v3804 = vmax.f32 %v3420, 0.0
        %v3805 = vmax.f32 %v3421, 0.0
        %v3806 = vmax.f32 %v3422, 0.0
        %v3807 = vmax.f32 %v3423, 0.0
        %v3808 = vmax.f32 %v3424, 0.0
        %v3809 = vmax.f32 %v3425, 0.0
        %v3810 = vmax.f32 %v3426, 0.0
        %v3811 = vmax.f32 %v3427, 0.0
        %v3812 = vmax.f32 %v3428, 0.0
        %v3813 = vmax.f32 %v3429, 0.0
        %v3814 = vmax.f32 %v3430, 0.0
        %v3815 = vmax.f32 %v3431, 0.0
        %v3816 = vmax.f32 %v3432, 0.0
        %v3817 = vmax.f32 %v3433, 0.0
        %v3818 = vmax.f32 %v3434, 0.0
        %v3819 = vmax.f32 %v3435, 0.0
        %v3820 = vmax.f32 %v3436, 0.0
        %v3821 = vmax.f32 %v3437, 0.0
        %v3822 = vmax.f32 %v3438, 0.0
        %v3823 = vmax.f32 %v3439, 0.0
        %v3824 = vmax.f32 %v3440, 0.0
        %v3825 = vmax.f32 %v3441, 0.0
        %v3826 = vmax.f32 %v3442, 0.0
        %v3827 = vmax.f32 %v3443, 0.0
        %v3828 = vmax.f32 %v3444, 0.0
        %v3829 = vmax.f32 %v3445, 0.0
        %v3830 = vmax.f32 %v3446, 0.0
        %v3831 = vmax.f32 %v3447, 0.0
        %v3832 = vmax.f32 %v3448, 0.0
        %v3833 = vmax.f32 %v3449, 0.0
        %v3834 = vmax.f32 %v3450, 0.0
        %v3835 = vmax.f32 %v3451, 0.0
        %v3836 = vmax.f32 %v3452, 0.0
        %v3837 = vmax.f32 %v3453, 0.0
        %v3838 = vmax.f32 %v3454, 0.0
        %v3839 = vmax.f32 %v3455, 0.0
        %v3840 = vmax.f32 %v3456, 0.0
        %v3841 = vmax.f32 %v3457, 0.0
        %v3842 = vmax.f32 %v3458, 0.0
        %v3843 = vmax.f32 %v3459, 0.0
        %v3844 = vmax.f32 %v3460, 0.0
        %v3845 = vmax.f32 %v3461, 0.0
        %v3846 = vmax.f32 %v3462, 0.0
        %v3847 = vmax.f32 %v3463, 0.0
        %v3848 = vmax.f32 %v3464, 0.0
        %v3849 = vmax.f32 %v3465, 0.0
        %v3850 = vmax.f32 %v3466, 0.0
        %v3851 = vmax.f32 %v3467, 0.0
        %v3852 = vmax.f32 %v3468, 0.0
        %v3853 = vmax.f32 %v3469, 0.0
        %v3854 = vmax.f32 %v3470, 0.0
        %v3855 = vmax.f32 %v3471, 0.0
        %v3856 = vmax.f32 %v3472, 0.0
        %v3857 = vmax.f32 %v3473, 0.0
        %v3858 = vmax.f32 %v3474, 0.0
        %v3859 = vmax.f32 %v3475, 0.0
        %v3860 = vmax.f32 %v3476, 0.0
        %v3861 = vmax.f32 %v3477, 0.0
        %v3862 = vmax.f32 %v3478, 0.0
        %v3863 = vmax.f32 %v3479, 0.0
        %v3864 = vmax.f32 %v3480, 0.0
        %v3865 = vmax.f32 %v3481, 0.0
        %v3866 = vmax.f32 %v3482, 0.0
        %v3867 = vmax.f32 %v3483, 0.0
        %v3868 = vmax.f32 %v3484, 0.0
        %v3869 = vmax.f32 %v3485, 0.0
        %v3870 = vmax.f32 %v3486, 0.0
        %v3871 = vmax.f32 %v3487, 0.0
        %v3872 = vmax.f32 %v3488, 0.0
        %v3873 = vmax.f32 %v3489, 0.0
        %v3874 = vmax.f32 %v3490, 0.0
        %v3875 = vmax.f32 %v3491, 0.0
        %v3876 = vmax.f32 %v3492, 0.0
        %v3877 = vmax.f32 %v3493, 0.0
        %v3878 = vmax.f32 %v3494, 0.0
        %v3879 = vmax.f32 %v3495, 0.0
        %v3880 = vmax.f32 %v3496, 0.0
        %v3881 = vmax.f32 %v3497, 0.0
        %v3882 = vmax.f32 %v3498, 0.0
        %v3883 = vmax.f32 %v3499, 0.0
        %v3884 = vmax.f32 %v3500, 0.0
        %v3885 = vmax.f32 %v3501, 0.0
        %v3886 = vmax.f32 %v3502, 0.0
        %v3887 = vmax.f32 %v3503, 0.0
        %v3888 = vmax.f32 %v3504, 0.0
        %v3889 = vmax.f32 %v3505, 0.0
        %v3890 = vmax.f32 %v3506, 0.0
        %v3891 = vmax.f32 %v3507, 0.0
        %v3892 = vmax.f32 %v3508, 0.0
        %v3893 = vmax.f32 %v3509, 0.0
        %v3894 = vmax.f32 %v3510, 0.0
        %v3895 = vmax.f32 %v3511, 0.0
        %v3896 = vmax.f32 %v3512, 0.0
        %v3897 = vmax.f32 %v3513, 0.0
        %v3898 = vmax.f32 %v3514, 0.0
        %v3899 = vmax.f32 %v3515, 0.0
        %v3900 = vmax.f32 %v3516, 0.0
        %v3901 = vmax.f32 %v3517, 0.0
        %v3902 = vmax.f32 %v3518, 0.0
        %v3903 = vmax.f32 %v3519, 0.0
        %v3904 = vmax.f32 %v3520, 0.0
        %v3905 = vmax.f32 %v3521, 0.0
        %v3906 = vmax.f32 %v3522, 0.0
        %v3907 = vmax.f32 %v3523, 0.0
        %v3908 = vmax.f32 %v3524, 0.0
        %v3909 = vmax.f32 %v3525, 0.0
        %v3910 = vmax.f32 %v3526, 0.0
        %v3911 = vmax.f32 %v3527, 0.0
        %v3912 = vmax.f32 %v3528, 0.0
        %v3913 = vmax.f32 %v3529, 0.0
        %v3914 = vmax.f32 %v3530, 0.0
        %v3915 = vmax.f32 %v3531, 0.0
        %v3916 = vmax.f32 %v3532, 0.0
        %v3917 = vmax.f32 %v3533, 0.0
        %v3918 = vmax.f32 %v3534, 0.0
        %v3919 = vmax.f32 %v3535, 0.0
        %v3920 = vmax.f32 %v3536, 0.0
        %v3921 = vmax.f32 %v3537, 0.0
        %v3922 = vmax.f32 %v3538, 0.0
        %v3923 = vmax.f32 %v3539, 0.0
        %v3924 = vmax.f32 %v3540, 0.0
        %v3925 = vmax.f32 %v3541, 0.0
        %v3926 = vmax.f32 %v3542, 0.0
        %v3927 = vmax.f32 %v3543, 0.0
        %v3928 = vmax.f32 %v3544, 0.0
        %v3929 = vmax.f32 %v3545, 0.0
        %v3930 = vmax.f32 %v3546, 0.0
        %v3931 = vmax.f32 %v3547, 0.0
        %v3932 = vmax.f32 %v3548, 0.0
        %v3933 = vmax.f32 %v3549, 0.0
        %v3934 = vmax.f32 %v3550, 0.0
        %v3935 = vmax.f32 %v3551, 0.0
        %v3936 = vmax.f32 %v3552, 0.0
        %v3937 = vmax.f32 %v3553, 0.0
        %v3938 = vmax.f32 %v3554, 0.0
        %v3939 = vmax.f32 %v3555, 0.0
        %v3940 = vmax.f32 %v3556, 0.0
        %v3941 = vmax.f32 %v3557, 0.0
        %v3942 = vmax.f32 %v3558, 0.0
        %v3943 = vmax.f32 %v3559, 0.0
        %v3944 = vmax.f32 %v3560, 0.0
        %v3945 = vmax.f32 %v3561, 0.0
        %v3946 = vmax.f32 %v3562, 0.0
        %v3947 = vmax.f32 %v3563, 0.0
        %v3948 = vmax.f32 %v3564, 0.0
        %v3949 = vmax.f32 %v3565, 0.0
        %v3950 = vmax.f32 %v3566, 0.0
        %v3951 = vmax.f32 %v3567, 0.0
        %v3952 = vmax.f32 %v3568, 0.0
        %v3953 = vmax.f32 %v3569, 0.0
        %v3954 = vmax.f32 %v3570, 0.0
        %v3955 = vmax.f32 %v3571, 0.0
        %v3956 = vmax.f32 %v3572, 0.0
        %v3957 = vmax.f32 %v3573, 0.0
        %v3958 = vmax.f32 %v3574, 0.0
        %v3959 = vmax.f32 %v3575, 0.0
        %v3960 = vmax.f32 %v3576, 0.0
        %v3961 = vmax.f32 %v3577, 0.0
        %v3962 = vmax.f32 %v3578, 0.0
        %v3963 = vmax.f32 %v3579, 0.0
        %v3964 = vmax.f32 %v3580, 0.0
        %v3965 = vmax.f32 %v3581, 0.0
        %v3966 = vmax.f32 %v3582, 0.0
        %v3967 = vmax.f32 %v3583, 0.0
        %v3968 = vmax.f32 %v3584, 0.0
        %v3969 = vmax.f32 %v3585, 0.0
        %v3970 = vmax.f32 %v3586, 0.0
        %v3971 = vmax.f32 %v3587, 0.0
        %v3972 = vmax.f32 %v3588, 0.0
        %v3973 = vmax.f32 %v3589, 0.0
        %v3974 = vmax.f32 %v3590, 0.0
        %v3975 = vmax.f32 %v3591, 0.0
        %v3976 = vmax.f32 %v3592, 0.0
        %v3977 = vmax.f32 %v3593, 0.0
        %v3978 = vmax.f32 %v3594, 0.0
        %v3979 = vmax.f32 %v3595, 0.0
        %v3980 = vmax.f32 %v3596, 0.0
        %v3981 = vmax.f32 %v3597, 0.0
        %v3982 = vmax.f32 %v3598, 0.0
        %v3983 = vmax.f32 %v3599, 0.0
        %v3984 = vmax.f32 %v3600, 0.0
        %v3985 = vmax.f32 %v3601, 0.0
        %v3986 = vmax.f32 %v3602, 0.0
        %v3987 = vmax.f32 %v3603, 0.0
        %v3988 = vmax.f32 %v3604, 0.0
        %v3989 = vmax.f32 %v3605, 0.0
        %v3990 = vmax.f32 %v3606, 0.0
        %v3991 = vmax.f32 %v3607, 0.0
        %v3992 = vmax.f32 %v3608, 0.0
        %v3993 = vmax.f32 %v3609, 0.0
        %v3994 = vmax.f32 %v3610, 0.0
        %v3995 = vmax.f32 %v3611, 0.0
        %v3996 = vmax.f32 %v3612, 0.0
        %v3997 = vmax.f32 %v3613, 0.0
        %v3998 = vmax.f32 %v3614, 0.0
        %v3999 = vmax.f32 %v3615, 0.0
        %v4000 = vmax.f32 %v3616, 0.0
        %v4001 = vmax.f32 %v3617, 0.0
        %v4002 = vmax.f32 %v3618, 0.0
        %v4003 = vmax.f32 %v3619, 0.0
        %v4004 = vmax.f32 %v3620, 0.0
        %v4005 = vmax.f32 %v3621, 0.0
        %v4006 = vmax.f32 %v3622, 0.0
        %v4007 = vmax.f32 %v3623, 0.0
        %v4008 = vmax.f32 %v3624, 0.0
        %v4009 = vmax.f32 %v3625, 0.0
        %v4010 = vmax.f32 %v3626, 0.0
        %v4011 = vmax.f32 %v3627, 0.0
        %v4012 = vmax.f32 %v3628, 0.0
        %v4013 = vmax.f32 %v3629, 0.0
        %v4014 = vmax.f32 %v3630, 0.0
        %v4015 = vmax.f32 %v3631, 0.0
        %v4016 = vmax.f32 %v3632, 0.0
        %v4017 = vmax.f32 %v3633, 0.0
        %v4018 = vmax.f32 %v3634, 0.0
        %v4019 = vmax.f32 %v3635, 0.0
        %v4020 = vmax.f32 %v3636, 0.0
        %v4021 = vmax.f32 %v3637, 0.0
        %v4022 = vmax.f32 %v3638, 0.0
        %v4023 = vmax.f32 %v3639, 0.0
        %v4024 = vmax.f32 %v3640, 0.0
        %v4025 = vmax.f32 %v3641, 0.0
        %v4026 = vmax.f32 %v3642, 0.0
        %v4027 = vmax.f32 %v3643, 0.0
        %v4028 = vmax.f32 %v3644, 0.0
        %v4029 = vmax.f32 %v3645, 0.0
        %v4030 = vmax.f32 %v3646, 0.0
        %v4031 = vmax.f32 %v3647, 0.0
        %v4032 = vmax.f32 %v3648, 0.0
        %v4033 = vmax.f32 %v3649, 0.0
        %v4034 = vmax.f32 %v3650, 0.0
        %v4035 = vmax.f32 %v3651, 0.0
        %v4036 = vmax.f32 %v3652, 0.0
        %v4037 = vmax.f32 %v3653, 0.0
        %v4038 = vmax.f32 %v3654, 0.0
        %v4039 = vmax.f32 %v3655, 0.0
        %v4040 = vmax.f32 %v3656, 0.0
        %v4041 = vmax.f32 %v3657, 0.0
        %v4042 = vmax.f32 %v3658, 0.0
        %v4043 = vmax.f32 %v3659, 0.0
        %v4044 = vmax.f32 %v3660, 0.0
        %v4045 = vmax.f32 %v3661, 0.0
        %v4046 = vmax.f32 %v3662, 0.0
        %v4047 = vmax.f32 %v3663, 0.0
        %v4048 = vmax.f32 %v3664, 0.0
        %v4049 = vmax.f32 %v3665, 0.0
        %v4050 = vmax.f32 %v3666, 0.0
        %v4051 = vmax.f32 %v3667, 0.0
        %v4052 = vmax.f32 %v3668, 0.0
        %v4053 = vmax.f32 %v3669, 0.0
        %v4054 = vmax.f32 %v3670, 0.0
        %v4055 = vmax.f32 %v3671, 0.0
        %v4056 = vmax.f32 %v3672, 0.0
        %v4057 = vmax.f32 %v3673, 0.0
        %v4058 = vmax.f32 %v3674, 0.0
        %v4059 = vmax.f32 %v3675, 0.0
        %v4060 = vmax.f32 %v3676, 0.0
        %v4061 = vmax.f32 %v3677, 0.0
        %v4062 = vmax.f32 %v3678, 0.0
        %v4063 = vmax.f32 %v3679, 0.0
        %v4064 = vmax.f32 %v3680, 0.0
        %v4065 = vmax.f32 %v3681, 0.0
        %v4066 = vmax.f32 %v3682, 0.0
        %v4067 = vmax.f32 %v3683, 0.0
        %v4068 = vmax.f32 %v3684, 0.0
        %v4069 = vmax.f32 %v3685, 0.0
        %v4070 = vmax.f32 %v3686, 0.0
        %v4071 = vmax.f32 %v3687, 0.0
        %v4072 = vmax.f32 %v3688, 0.0
        %v4073 = vmax.f32 %v3689, 0.0
        %v4074 = vmax.f32 %v3690, 0.0
        %v4075 = vmax.f32 %v3691, 0.0
        %v4076 = vmax.f32 %v3692, 0.0
        %v4077 = vmax.f32 %v3693, 0.0
        %v4078 = vmax.f32 %v3694, 0.0
        %v4079 = vmax.f32 %v3695, 0.0
        %v4080 = vmax.f32 %v3696, 0.0
        %v4081 = vmax.f32 %v3697, 0.0
        %v4082 = vmax.f32 %v3698, 0.0
        %v4083 = vmax.f32 %v3699, 0.0
        %v4084 = vmax.f32 %v3700, 0.0
        %v4085 = vmax.f32 %v3701, 0.0
        %v4086 = vmax.f32 %v3702, 0.0
        %v4087 = vmax.f32 %v3703, 0.0
        %v4088 = vmax.f32 %v3704, 0.0
        %v4089 = vmax.f32 %v3705, 0.0
        %v4090 = vmax.f32 %v3706, 0.0
        %v4091 = vmax.f32 %v3707, 0.0
        %v4092 = vmax.f32 %v3708, 0.0
        %v4093 = vmax.f32 %v3709, 0.0
        %v4094 = vmax.f32 %v3710, 0.0
        %v4095 = vmax.f32 %v3711, 0.0
        %v4096 = vmax.f32 %v3712, 0.0
        %v4097 = vmax.f32 %v3713, 0.0
        %v4098 = vmax.f32 %v3714, 0.0
        %v4099 = vmax.f32 %v3715, 0.0
        %v4100 = vmax.f32 %v3716, 0.0
        %v4101 = vmax.f32 %v3717, 0.0
        %v4102 = vmax.f32 %v3718, 0.0
        %v4103 = vmax.f32 %v3719, 0.0
        %v4104 = vmax.f32 %v3720, 0.0
        %v4105 = vmax.f32 %v3721, 0.0
        %v4106 = vmax.f32 %v3722, 0.0
        %v4107 = vmax.f32 %v3723, 0.0
        %v4108 = vmax.f32 %v3724, 0.0
        %v4109 = vmax.f32 %v3725, 0.0
        %v4110 = vmax.f32 %v3726, 0.0
        %v4111 = vmax.f32 %v3727, 0.0
        %v4112 = vmax.f32 %v3728, 0.0
        %v4113 = vmax.f32 %v3729, 0.0
        %v4114 = vmax.f32 %v3730, 0.0
        %v4115 = vmax.f32 %v3731, 0.0
        %v4116 = vmax.f32 %v3732, 0.0
        %v4117 = vmax.f32 %v3733, 0.0
        %v4118 = vmax.f32 %v3734, 0.0
        %v4119 = vmax.f32 %v3735, 0.0
        %v4120 = vmax.f32 %v3736, 0.0
        %v4121 = vmax.f32 %v3737, 0.0
        %v4122 = vmax.f32 %v3738, 0.0
        %v4123 = vmax.f32 %v3739, 0.0
        %v4124 = vmax.f32 %v3740, 0.0
        %v4125 = vmax.f32 %v3741, 0.0
        %v4126 = vmax.f32 %v3742, 0.0
        %v4127 = vmax.f32 %v3743, 0.0
        %v4128 = vmax.f32 %v3744, 0.0
        %v4129 = vmax.f32 %v3745, 0.0
        %v4130 = vmax.f32 %v3746, 0.0
        %v4131 = vmax.f32 %v3747, 0.0
        %v4132 = vmax.f32 %v3748, 0.0
        %v4133 = vmax.f32 %v3749, 0.0
        %v4134 = vmax.f32 %v3750, 0.0
        %v4135 = vmax.f32 %v3751, 0.0
        %v4136 = vmax.f32 %v3752, 0.0
        %v4137 = vmax.f32 %v3753, 0.0
        %v4138 = vmax.f32 %v3754, 0.0
        %v4139 = vmax.f32 %v3755, 0.0
        %v4140 = vmax.f32 %v3756, 0.0
        %v4141 = vmax.f32 %v3757, 0.0
        %v4142 = vmax.f32 %v3758, 0.0
        %v4143 = vmax.f32 %v3759, 0.0
        %v4144 = vmax.f32 %v3760, 0.0
        %v4145 = vmax.f32 %v3761, 0.0
        %v4146 = vmax.f32 %v3762, 0.0
        %v4147 = vmax.f32 %v3763, 0.0
        %v4148 = vmax.f32 %v3764, 0.0
        %v4149 = vmax.f32 %v3765, 0.0
        %v4150 = vmax.f32 %v3766, 0.0
        %v4151 = vmax.f32 %v3767, 0.0
        %v4153 = vperm.slane %v970, 0
        %v4154 = vperm.slane %v970, 1
        %v4155 = vperm.slane %v970, 2
        %v4156 = vperm.slane %v970, 3
        %v4157 = vperm.slane %v970, 4
        %v4158 = vperm.slane %v970, 5
        %v4165 = vsub.f32 %v4153, %v2219
        %v4166 = vsub.f32 %v4154, %v2220
        %v4167 = vsub.f32 %v4155, %v2221
        %v4168 = vsub.f32 %v4156, %v2222
        %v4169 = vsub.f32 %v4157, %v2223
        %v4170 = vsub.f32 %v4158, %v2224
        %v4171 = vsub.f32 %v4153, %v2225
        %v4172 = vsub.f32 %v4154, %v2226
        %v4173 = vsub.f32 %v4155, %v2227
        %v4174 = vsub.f32 %v4156, %v2228
        %v4175 = vsub.f32 %v4157, %v2229
        %v4176 = vsub.f32 %v4158, %v2230
        %v4177 = vsub.f32 %v4153, %v2231
        %v4178 = vsub.f32 %v4154, %v2232
        %v4179 = vsub.f32 %v4155, %v2233
        %v4180 = vsub.f32 %v4156, %v2234
        %v4181 = vsub.f32 %v4157, %v2235
        %v4182 = vsub.f32 %v4158, %v2236
        %v4183 = vsub.f32 %v4153, %v2237
        %v4184 = vsub.f32 %v4154, %v2238
        %v4185 = vsub.f32 %v4155, %v2239
        %v4186 = vsub.f32 %v4156, %v2240
        %v4187 = vsub.f32 %v4157, %v2241
        %v4188 = vsub.f32 %v4158, %v2242
        %v4189 = vsub.f32 %v4153, %v2243
        %v4190 = vsub.f32 %v4154, %v2244
        %v4191 = vsub.f32 %v4155, %v2245
        %v4192 = vsub.f32 %v4156, %v2246
        %v4193 = vsub.f32 %v4157, %v2247
        %v4194 = vsub.f32 %v4158, %v2248
        %v4195 = vsub.f32 %v4153, %v2249
        %v4196 = vsub.f32 %v4154, %v2250
        %v4197 = vsub.f32 %v4155, %v2251
        %v4198 = vsub.f32 %v4156, %v2252
        %v4199 = vsub.f32 %v4157, %v2253
        %v4200 = vsub.f32 %v4158, %v2254
        %v4201 = vsub.f32 %v4153, %v2255
        %v4202 = vsub.f32 %v4154, %v2256
        %v4203 = vsub.f32 %v4155, %v2257
        %v4204 = vsub.f32 %v4156, %v2258
        %v4205 = vsub.f32 %v4157, %v2259
        %v4206 = vsub.f32 %v4158, %v2260
        %v4207 = vsub.f32 %v4153, %v2261
        %v4208 = vsub.f32 %v4154, %v2262
        %v4209 = vsub.f32 %v4155, %v2263
        %v4210 = vsub.f32 %v4156, %v2264
        %v4211 = vsub.f32 %v4157, %v2265
        %v4212 = vsub.f32 %v4158, %v2266
        %v4213 = vsub.f32 %v4153, %v2267
        %v4214 = vsub.f32 %v4154, %v2268
        %v4215 = vsub.f32 %v4155, %v2269
        %v4216 = vsub.f32 %v4156, %v2270
        %v4217 = vsub.f32 %v4157, %v2271
        %v4218 = vsub.f32 %v4158, %v2272
        %v4219 = vsub.f32 %v4153, %v2273
        %v4220 = vsub.f32 %v4154, %v2274
        %v4221 = vsub.f32 %v4155, %v2275
        %v4222 = vsub.f32 %v4156, %v2276
        %v4223 = vsub.f32 %v4157, %v2277
        %v4224 = vsub.f32 %v4158, %v2278
        %v4225 = vsub.f32 %v4153, %v2279
        %v4226 = vsub.f32 %v4154, %v2280
        %v4227 = vsub.f32 %v4155, %v2281
        %v4228 = vsub.f32 %v4156, %v2282
        %v4229 = vsub.f32 %v4157, %v2283
        %v4230 = vsub.f32 %v4158, %v2284
        %v4231 = vsub.f32 %v4153, %v2285
        %v4232 = vsub.f32 %v4154, %v2286
        %v4233 = vsub.f32 %v4155, %v2287
        %v4234 = vsub.f32 %v4156, %v2288
        %v4235 = vsub.f32 %v4157, %v2289
        %v4236 = vsub.f32 %v4158, %v2290
        %v4237 = vsub.f32 %v4153, %v2291
        %v4238 = vsub.f32 %v4154, %v2292
        %v4239 = vsub.f32 %v4155, %v2293
        %v4240 = vsub.f32 %v4156, %v2294
        %v4241 = vsub.f32 %v4157, %v2295
        %v4242 = vsub.f32 %v4158, %v2296
        %v4243 = vsub.f32 %v4153, %v2297
        %v4244 = vsub.f32 %v4154, %v2298
        %v4245 = vsub.f32 %v4155, %v2299
        %v4246 = vsub.f32 %v4156, %v2300
        %v4247 = vsub.f32 %v4157, %v2301
        %v4248 = vsub.f32 %v4158, %v2302
        %v4249 = vsub.f32 %v4153, %v2303
        %v4250 = vsub.f32 %v4154, %v2304
        %v4251 = vsub.f32 %v4155, %v2305
        %v4252 = vsub.f32 %v4156, %v2306
        %v4253 = vsub.f32 %v4157, %v2307
        %v4254 = vsub.f32 %v4158, %v2308
        %v4255 = vsub.f32 %v4153, %v2309
        %v4256 = vsub.f32 %v4154, %v2310
        %v4257 = vsub.f32 %v4155, %v2311
        %v4258 = vsub.f32 %v4156, %v2312
        %v4259 = vsub.f32 %v4157, %v2313
        %v4260 = vsub.f32 %v4158, %v2314
        %v4261 = vsub.f32 %v4153, %v2315
        %v4262 = vsub.f32 %v4154, %v2316
        %v4263 = vsub.f32 %v4155, %v2317
        %v4264 = vsub.f32 %v4156, %v2318
        %v4265 = vsub.f32 %v4157, %v2319
        %v4266 = vsub.f32 %v4158, %v2320
        %v4267 = vsub.f32 %v4153, %v2321
        %v4268 = vsub.f32 %v4154, %v2322
        %v4269 = vsub.f32 %v4155, %v2323
        %v4270 = vsub.f32 %v4156, %v2324
        %v4271 = vsub.f32 %v4157, %v2325
        %v4272 = vsub.f32 %v4158, %v2326
        %v4273 = vsub.f32 %v4153, %v2327
        %v4274 = vsub.f32 %v4154, %v2328
        %v4275 = vsub.f32 %v4155, %v2329
        %v4276 = vsub.f32 %v4156, %v2330
        %v4277 = vsub.f32 %v4157, %v2331
        %v4278 = vsub.f32 %v4158, %v2332
        %v4279 = vsub.f32 %v4153, %v2333
        %v4280 = vsub.f32 %v4154, %v2334
        %v4281 = vsub.f32 %v4155, %v2335
        %v4282 = vsub.f32 %v4156, %v2336
        %v4283 = vsub.f32 %v4157, %v2337
        %v4284 = vsub.f32 %v4158, %v2338
        %v4285 = vsub.f32 %v4153, %v2339
        %v4286 = vsub.f32 %v4154, %v2340
        %v4287 = vsub.f32 %v4155, %v2341
        %v4288 = vsub.f32 %v4156, %v2342
        %v4289 = vsub.f32 %v4157, %v2343
        %v4290 = vsub.f32 %v4158, %v2344
        %v4291 = vsub.f32 %v4153, %v2345
        %v4292 = vsub.f32 %v4154, %v2346
        %v4293 = vsub.f32 %v4155, %v2347
        %v4294 = vsub.f32 %v4156, %v2348
        %v4295 = vsub.f32 %v4157, %v2349
        %v4296 = vsub.f32 %v4158, %v2350
        %v4297 = vsub.f32 %v4153, %v2351
        %v4298 = vsub.f32 %v4154, %v2352
        %v4299 = vsub.f32 %v4155, %v2353
        %v4300 = vsub.f32 %v4156, %v2354
        %v4301 = vsub.f32 %v4157, %v2355
        %v4302 = vsub.f32 %v4158, %v2356
        %v4303 = vsub.f32 %v4153, %v2357
        %v4304 = vsub.f32 %v4154, %v2358
        %v4305 = vsub.f32 %v4155, %v2359
        %v4306 = vsub.f32 %v4156, %v2360
        %v4307 = vsub.f32 %v4157, %v2361
        %v4308 = vsub.f32 %v4158, %v2362
        %v4309 = vsub.f32 %v4153, %v2363
        %v4310 = vsub.f32 %v4154, %v2364
        %v4311 = vsub.f32 %v4155, %v2365
        %v4312 = vsub.f32 %v4156, %v2366
        %v4313 = vsub.f32 %v4157, %v2367
        %v4314 = vsub.f32 %v4158, %v2368
        %v4315 = vsub.f32 %v4153, %v2369
        %v4316 = vsub.f32 %v4154, %v2370
        %v4317 = vsub.f32 %v4155, %v2371
        %v4318 = vsub.f32 %v4156, %v2372
        %v4319 = vsub.f32 %v4157, %v2373
        %v4320 = vsub.f32 %v4158, %v2374
        %v4321 = vsub.f32 %v4153, %v2375
        %v4322 = vsub.f32 %v4154, %v2376
        %v4323 = vsub.f32 %v4155, %v2377
        %v4324 = vsub.f32 %v4156, %v2378
        %v4325 = vsub.f32 %v4157, %v2379
        %v4326 = vsub.f32 %v4158, %v2380
        %v4327 = vsub.f32 %v4153, %v2381
        %v4328 = vsub.f32 %v4154, %v2382
        %v4329 = vsub.f32 %v4155, %v2383
        %v4330 = vsub.f32 %v4156, %v2384
        %v4331 = vsub.f32 %v4157, %v2385
        %v4332 = vsub.f32 %v4158, %v2386
        %v4333 = vsub.f32 %v4153, %v2387
        %v4334 = vsub.f32 %v4154, %v2388
        %v4335 = vsub.f32 %v4155, %v2389
        %v4336 = vsub.f32 %v4156, %v2390
        %v4337 = vsub.f32 %v4157, %v2391
        %v4338 = vsub.f32 %v4158, %v2392
        %v4339 = vsub.f32 %v4153, %v2393
        %v4340 = vsub.f32 %v4154, %v2394
        %v4341 = vsub.f32 %v4155, %v2395
        %v4342 = vsub.f32 %v4156, %v2396
        %v4343 = vsub.f32 %v4157, %v2397
        %v4344 = vsub.f32 %v4158, %v2398
        %v4345 = vsub.f32 %v4153, %v2399
        %v4346 = vsub.f32 %v4154, %v2400
        %v4347 = vsub.f32 %v4155, %v2401
        %v4348 = vsub.f32 %v4156, %v2402
        %v4349 = vsub.f32 %v4157, %v2403
        %v4350 = vsub.f32 %v4158, %v2404
        %v4351 = vsub.f32 %v4153, %v2405
        %v4352 = vsub.f32 %v4154, %v2406
        %v4353 = vsub.f32 %v4155, %v2407
        %v4354 = vsub.f32 %v4156, %v2408
        %v4355 = vsub.f32 %v4157, %v2409
        %v4356 = vsub.f32 %v4158, %v2410
        %v4357 = vsub.f32 %v4153, %v2411
        %v4358 = vsub.f32 %v4154, %v2412
        %v4359 = vsub.f32 %v4155, %v2413
        %v4360 = vsub.f32 %v4156, %v2414
        %v4361 = vsub.f32 %v4157, %v2415
        %v4362 = vsub.f32 %v4158, %v2416
        %v4363 = vsub.f32 %v4153, %v2417
        %v4364 = vsub.f32 %v4154, %v2418
        %v4365 = vsub.f32 %v4155, %v2419
        %v4366 = vsub.f32 %v4156, %v2420
        %v4367 = vsub.f32 %v4157, %v2421
        %v4368 = vsub.f32 %v4158, %v2422
        %v4369 = vsub.f32 %v4153, %v2423
        %v4370 = vsub.f32 %v4154, %v2424
        %v4371 = vsub.f32 %v4155, %v2425
        %v4372 = vsub.f32 %v4156, %v2426
        %v4373 = vsub.f32 %v4157, %v2427
        %v4374 = vsub.f32 %v4158, %v2428
        %v4375 = vsub.f32 %v4153, %v2429
        %v4376 = vsub.f32 %v4154, %v2430
        %v4377 = vsub.f32 %v4155, %v2431
        %v4378 = vsub.f32 %v4156, %v2432
        %v4379 = vsub.f32 %v4157, %v2433
        %v4380 = vsub.f32 %v4158, %v2434
        %v4381 = vsub.f32 %v4153, %v2435
        %v4382 = vsub.f32 %v4154, %v2436
        %v4383 = vsub.f32 %v4155, %v2437
        %v4384 = vsub.f32 %v4156, %v2438
        %v4385 = vsub.f32 %v4157, %v2439
        %v4386 = vsub.f32 %v4158, %v2440
        %v4387 = vsub.f32 %v4153, %v2441
        %v4388 = vsub.f32 %v4154, %v2442
        %v4389 = vsub.f32 %v4155, %v2443
        %v4390 = vsub.f32 %v4156, %v2444
        %v4391 = vsub.f32 %v4157, %v2445
        %v4392 = vsub.f32 %v4158, %v2446
        %v4393 = vsub.f32 %v4153, %v2447
        %v4394 = vsub.f32 %v4154, %v2448
        %v4395 = vsub.f32 %v4155, %v2449
        %v4396 = vsub.f32 %v4156, %v2450
        %v4397 = vsub.f32 %v4157, %v2451
        %v4398 = vsub.f32 %v4158, %v2452
        %v4399 = vsub.f32 %v4153, %v2453
        %v4400 = vsub.f32 %v4154, %v2454
        %v4401 = vsub.f32 %v4155, %v2455
        %v4402 = vsub.f32 %v4156, %v2456
        %v4403 = vsub.f32 %v4157, %v2457
        %v4404 = vsub.f32 %v4158, %v2458
        %v4405 = vsub.f32 %v4153, %v2459
        %v4406 = vsub.f32 %v4154, %v2460
        %v4407 = vsub.f32 %v4155, %v2461
        %v4408 = vsub.f32 %v4156, %v2462
        %v4409 = vsub.f32 %v4157, %v2463
        %v4410 = vsub.f32 %v4158, %v2464
        %v4411 = vsub.f32 %v4153, %v2465
        %v4412 = vsub.f32 %v4154, %v2466
        %v4413 = vsub.f32 %v4155, %v2467
        %v4414 = vsub.f32 %v4156, %v2468
        %v4415 = vsub.f32 %v4157, %v2469
        %v4416 = vsub.f32 %v4158, %v2470
        %v4417 = vsub.f32 %v4153, %v2471
        %v4418 = vsub.f32 %v4154, %v2472
        %v4419 = vsub.f32 %v4155, %v2473
        %v4420 = vsub.f32 %v4156, %v2474
        %v4421 = vsub.f32 %v4157, %v2475
        %v4422 = vsub.f32 %v4158, %v2476
        %v4423 = vsub.f32 %v4153, %v2477
        %v4424 = vsub.f32 %v4154, %v2478
        %v4425 = vsub.f32 %v4155, %v2479
        %v4426 = vsub.f32 %v4156, %v2480
        %v4427 = vsub.f32 %v4157, %v2481
        %v4428 = vsub.f32 %v4158, %v2482
        %v4429 = vsub.f32 %v4153, %v2483
        %v4430 = vsub.f32 %v4154, %v2484
        %v4431 = vsub.f32 %v4155, %v2485
        %v4432 = vsub.f32 %v4156, %v2486
        %v4433 = vsub.f32 %v4157, %v2487
        %v4434 = vsub.f32 %v4158, %v2488
        %v4435 = vsub.f32 %v4153, %v2489
        %v4436 = vsub.f32 %v4154, %v2490
        %v4437 = vsub.f32 %v4155, %v2491
        %v4438 = vsub.f32 %v4156, %v2492
        %v4439 = vsub.f32 %v4157, %v2493
        %v4440 = vsub.f32 %v4158, %v2494
        %v4441 = vsub.f32 %v4153, %v2495
        %v4442 = vsub.f32 %v4154, %v2496
        %v4443 = vsub.f32 %v4155, %v2497
        %v4444 = vsub.f32 %v4156, %v2498
        %v4445 = vsub.f32 %v4157, %v2499
        %v4446 = vsub.f32 %v4158, %v2500
        %v4447 = vsub.f32 %v4153, %v2501
        %v4448 = vsub.f32 %v4154, %v2502
        %v4449 = vsub.f32 %v4155, %v2503
        %v4450 = vsub.f32 %v4156, %v2504
        %v4451 = vsub.f32 %v4157, %v2505
        %v4452 = vsub.f32 %v4158, %v2506
        %v4453 = vsub.f32 %v4153, %v2507
        %v4454 = vsub.f32 %v4154, %v2508
        %v4455 = vsub.f32 %v4155, %v2509
        %v4456 = vsub.f32 %v4156, %v2510
        %v4457 = vsub.f32 %v4157, %v2511
        %v4458 = vsub.f32 %v4158, %v2512
        %v4459 = vsub.f32 %v4153, %v2513
        %v4460 = vsub.f32 %v4154, %v2514
        %v4461 = vsub.f32 %v4155, %v2515
        %v4462 = vsub.f32 %v4156, %v2516
        %v4463 = vsub.f32 %v4157, %v2517
        %v4464 = vsub.f32 %v4158, %v2518
        %v4465 = vsub.f32 %v4153, %v2519
        %v4466 = vsub.f32 %v4154, %v2520
        %v4467 = vsub.f32 %v4155, %v2521
        %v4468 = vsub.f32 %v4156, %v2522
        %v4469 = vsub.f32 %v4157, %v2523
        %v4470 = vsub.f32 %v4158, %v2524
        %v4471 = vsub.f32 %v4153, %v2525
        %v4472 = vsub.f32 %v4154, %v2526
        %v4473 = vsub.f32 %v4155, %v2527
        %v4474 = vsub.f32 %v4156, %v2528
        %v4475 = vsub.f32 %v4157, %v2529
        %v4476 = vsub.f32 %v4158, %v2530
        %v4477 = vsub.f32 %v4153, %v2531
        %v4478 = vsub.f32 %v4154, %v2532
        %v4479 = vsub.f32 %v4155, %v2533
        %v4480 = vsub.f32 %v4156, %v2534
        %v4481 = vsub.f32 %v4157, %v2535
        %v4482 = vsub.f32 %v4158, %v2536
        %v4483 = vsub.f32 %v4153, %v2537
        %v4484 = vsub.f32 %v4154, %v2538
        %v4485 = vsub.f32 %v4155, %v2539
        %v4486 = vsub.f32 %v4156, %v2540
        %v4487 = vsub.f32 %v4157, %v2541
        %v4488 = vsub.f32 %v4158, %v2542
        %v4489 = vsub.f32 %v4153, %v2543
        %v4490 = vsub.f32 %v4154, %v2544
        %v4491 = vsub.f32 %v4155, %v2545
        %v4492 = vsub.f32 %v4156, %v2546
        %v4493 = vsub.f32 %v4157, %v2547
        %v4494 = vsub.f32 %v4158, %v2548
        %v4495 = vsub.f32 %v4153, %v2549
        %v4496 = vsub.f32 %v4154, %v2550
        %v4497 = vsub.f32 %v4155, %v2551
        %v4498 = vsub.f32 %v4156, %v2552
        %v4499 = vsub.f32 %v4157, %v2553
        %v4500 = vsub.f32 %v4158, %v2554
        %v4501 = vsub.f32 %v4153, %v2555
        %v4502 = vsub.f32 %v4154, %v2556
        %v4503 = vsub.f32 %v4155, %v2557
        %v4504 = vsub.f32 %v4156, %v2558
        %v4505 = vsub.f32 %v4157, %v2559
        %v4506 = vsub.f32 %v4158, %v2560
        %v4507 = vsub.f32 %v4153, %v2561
        %v4508 = vsub.f32 %v4154, %v2562
        %v4509 = vsub.f32 %v4155, %v2563
        %v4510 = vsub.f32 %v4156, %v2564
        %v4511 = vsub.f32 %v4157, %v2565
        %v4512 = vsub.f32 %v4158, %v2566
        %v4513 = vsub.f32 %v4153, %v2567
        %v4514 = vsub.f32 %v4154, %v2568
        %v4515 = vsub.f32 %v4155, %v2569
        %v4516 = vsub.f32 %v4156, %v2570
        %v4517 = vsub.f32 %v4157, %v2571
        %v4518 = vsub.f32 %v4158, %v2572
        %v4519 = vsub.f32 %v4153, %v2573
        %v4520 = vsub.f32 %v4154, %v2574
        %v4521 = vsub.f32 %v4155, %v2575
        %v4522 = vsub.f32 %v4156, %v2576
        %v4523 = vsub.f32 %v4157, %v2577
        %v4524 = vsub.f32 %v4158, %v2578
        %v4525 = vsub.f32 %v4153, %v2579
        %v4526 = vsub.f32 %v4154, %v2580
        %v4527 = vsub.f32 %v4155, %v2581
        %v4528 = vsub.f32 %v4156, %v2582
        %v4529 = vsub.f32 %v4157, %v2583
        %v4530 = vsub.f32 %v4158, %v2584
        %v4531 = vsub.f32 %v4153, %v2585
        %v4532 = vsub.f32 %v4154, %v2586
        %v4533 = vsub.f32 %v4155, %v2587
        %v4534 = vsub.f32 %v4156, %v2588
        %v4535 = vsub.f32 %v4157, %v2589
        %v4536 = vsub.f32 %v4158, %v2590
        %v4537 = vsub.f32 %v4153, %v2591
        %v4538 = vsub.f32 %v4154, %v2592
        %v4539 = vsub.f32 %v4155, %v2593
        %v4540 = vsub.f32 %v4156, %v2594
        %v4541 = vsub.f32 %v4157, %v2595
        %v4542 = vsub.f32 %v4158, %v2596
        %v4543 = vsub.f32 %v4153, %v2597
        %v4544 = vsub.f32 %v4154, %v2598
        %v4545 = vsub.f32 %v4155, %v2599
        %v4546 = vsub.f32 %v4156, %v2600
        %v4547 = vsub.f32 %v4157, %v2601
        %v4548 = vsub.f32 %v4158, %v2602
        %v4549 = vand.u32 2147483647, %v4165
        %v4550 = vand.u32 2147483647, %v4166
        %v4551 = vand.u32 2147483647, %v4167
        %v4552 = vand.u32 2147483647, %v4168
        %v4553 = vand.u32 2147483647, %v4169
        %v4554 = vand.u32 2147483647, %v4170
        %v4555 = vand.u32 2147483647, %v4171
        %v4556 = vand.u32 2147483647, %v4172
        %v4557 = vand.u32 2147483647, %v4173
        %v4558 = vand.u32 2147483647, %v4174
        %v4559 = vand.u32 2147483647, %v4175
        %v4560 = vand.u32 2147483647, %v4176
        %v4561 = vand.u32 2147483647, %v4177
        %v4562 = vand.u32 2147483647, %v4178
        %v4563 = vand.u32 2147483647, %v4179
        %v4564 = vand.u32 2147483647, %v4180
        %v4565 = vand.u32 2147483647, %v4181
        %v4566 = vand.u32 2147483647, %v4182
        %v4567 = vand.u32 2147483647, %v4183
        %v4568 = vand.u32 2147483647, %v4184
        %v4569 = vand.u32 2147483647, %v4185
        %v4570 = vand.u32 2147483647, %v4186
        %v4571 = vand.u32 2147483647, %v4187
        %v4572 = vand.u32 2147483647, %v4188
        %v4573 = vand.u32 2147483647, %v4189
        %v4574 = vand.u32 2147483647, %v4190
        %v4575 = vand.u32 2147483647, %v4191
        %v4576 = vand.u32 2147483647, %v4192
        %v4577 = vand.u32 2147483647, %v4193
        %v4578 = vand.u32 2147483647, %v4194
        %v4579 = vand.u32 2147483647, %v4195
        %v4580 = vand.u32 2147483647, %v4196
        %v4581 = vand.u32 2147483647, %v4197
        %v4582 = vand.u32 2147483647, %v4198
        %v4583 = vand.u32 2147483647, %v4199
        %v4584 = vand.u32 2147483647, %v4200
        %v4585 = vand.u32 2147483647, %v4201
        %v4586 = vand.u32 2147483647, %v4202
        %v4587 = vand.u32 2147483647, %v4203
        %v4588 = vand.u32 2147483647, %v4204
        %v4589 = vand.u32 2147483647, %v4205
        %v4590 = vand.u32 2147483647, %v4206
        %v4591 = vand.u32 2147483647, %v4207
        %v4592 = vand.u32 2147483647, %v4208
        %v4593 = vand.u32 2147483647, %v4209
        %v4594 = vand.u32 2147483647, %v4210
        %v4595 = vand.u32 2147483647, %v4211
        %v4596 = vand.u32 2147483647, %v4212
        %v4597 = vand.u32 2147483647, %v4213
        %v4598 = vand.u32 2147483647, %v4214
        %v4599 = vand.u32 2147483647, %v4215
        %v4600 = vand.u32 2147483647, %v4216
        %v4601 = vand.u32 2147483647, %v4217
        %v4602 = vand.u32 2147483647, %v4218
        %v4603 = vand.u32 2147483647, %v4219
        %v4604 = vand.u32 2147483647, %v4220
        %v4605 = vand.u32 2147483647, %v4221
        %v4606 = vand.u32 2147483647, %v4222
        %v4607 = vand.u32 2147483647, %v4223
        %v4608 = vand.u32 2147483647, %v4224
        %v4609 = vand.u32 2147483647, %v4225
        %v4610 = vand.u32 2147483647, %v4226
        %v4611 = vand.u32 2147483647, %v4227
        %v4612 = vand.u32 2147483647, %v4228
        %v4613 = vand.u32 2147483647, %v4229
        %v4614 = vand.u32 2147483647, %v4230
        %v4615 = vand.u32 2147483647, %v4231
        %v4616 = vand.u32 2147483647, %v4232
        %v4617 = vand.u32 2147483647, %v4233
        %v4618 = vand.u32 2147483647, %v4234
        %v4619 = vand.u32 2147483647, %v4235
        %v4620 = vand.u32 2147483647, %v4236
        %v4621 = vand.u32 2147483647, %v4237
        %v4622 = vand.u32 2147483647, %v4238
        %v4623 = vand.u32 2147483647, %v4239
        %v4624 = vand.u32 2147483647, %v4240
        %v4625 = vand.u32 2147483647, %v4241
        %v4626 = vand.u32 2147483647, %v4242
        %v4627 = vand.u32 2147483647, %v4243
        %v4628 = vand.u32 2147483647, %v4244
        %v4629 = vand.u32 2147483647, %v4245
        %v4630 = vand.u32 2147483647, %v4246
        %v4631 = vand.u32 2147483647, %v4247
        %v4632 = vand.u32 2147483647, %v4248
        %v4633 = vand.u32 2147483647, %v4249
        %v4634 = vand.u32 2147483647, %v4250
        %v4635 = vand.u32 2147483647, %v4251
        %v4636 = vand.u32 2147483647, %v4252
        %v4637 = vand.u32 2147483647, %v4253
        %v4638 = vand.u32 2147483647, %v4254
        %v4639 = vand.u32 2147483647, %v4255
        %v4640 = vand.u32 2147483647, %v4256
        %v4641 = vand.u32 2147483647, %v4257
        %v4642 = vand.u32 2147483647, %v4258
        %v4643 = vand.u32 2147483647, %v4259
        %v4644 = vand.u32 2147483647, %v4260
        %v4645 = vand.u32 2147483647, %v4261
        %v4646 = vand.u32 2147483647, %v4262
        %v4647 = vand.u32 2147483647, %v4263
        %v4648 = vand.u32 2147483647, %v4264
        %v4649 = vand.u32 2147483647, %v4265
        %v4650 = vand.u32 2147483647, %v4266
        %v4651 = vand.u32 2147483647, %v4267
        %v4652 = vand.u32 2147483647, %v4268
        %v4653 = vand.u32 2147483647, %v4269
        %v4654 = vand.u32 2147483647, %v4270
        %v4655 = vand.u32 2147483647, %v4271
        %v4656 = vand.u32 2147483647, %v4272
        %v4657 = vand.u32 2147483647, %v4273
        %v4658 = vand.u32 2147483647, %v4274
        %v4659 = vand.u32 2147483647, %v4275
        %v4660 = vand.u32 2147483647, %v4276
        %v4661 = vand.u32 2147483647, %v4277
        %v4662 = vand.u32 2147483647, %v4278
        %v4663 = vand.u32 2147483647, %v4279
        %v4664 = vand.u32 2147483647, %v4280
        %v4665 = vand.u32 2147483647, %v4281
        %v4666 = vand.u32 2147483647, %v4282
        %v4667 = vand.u32 2147483647, %v4283
        %v4668 = vand.u32 2147483647, %v4284
        %v4669 = vand.u32 2147483647, %v4285
        %v4670 = vand.u32 2147483647, %v4286
        %v4671 = vand.u32 2147483647, %v4287
        %v4672 = vand.u32 2147483647, %v4288
        %v4673 = vand.u32 2147483647, %v4289
        %v4674 = vand.u32 2147483647, %v4290
        %v4675 = vand.u32 2147483647, %v4291
        %v4676 = vand.u32 2147483647, %v4292
        %v4677 = vand.u32 2147483647, %v4293
        %v4678 = vand.u32 2147483647, %v4294
        %v4679 = vand.u32 2147483647, %v4295
        %v4680 = vand.u32 2147483647, %v4296
        %v4681 = vand.u32 2147483647, %v4297
        %v4682 = vand.u32 2147483647, %v4298
        %v4683 = vand.u32 2147483647, %v4299
        %v4684 = vand.u32 2147483647, %v4300
        %v4685 = vand.u32 2147483647, %v4301
        %v4686 = vand.u32 2147483647, %v4302
        %v4687 = vand.u32 2147483647, %v4303
        %v4688 = vand.u32 2147483647, %v4304
        %v4689 = vand.u32 2147483647, %v4305
        %v4690 = vand.u32 2147483647, %v4306
        %v4691 = vand.u32 2147483647, %v4307
        %v4692 = vand.u32 2147483647, %v4308
        %v4693 = vand.u32 2147483647, %v4309
        %v4694 = vand.u32 2147483647, %v4310
        %v4695 = vand.u32 2147483647, %v4311
        %v4696 = vand.u32 2147483647, %v4312
        %v4697 = vand.u32 2147483647, %v4313
        %v4698 = vand.u32 2147483647, %v4314
        %v4699 = vand.u32 2147483647, %v4315
        %v4700 = vand.u32 2147483647, %v4316
        %v4701 = vand.u32 2147483647, %v4317
        %v4702 = vand.u32 2147483647, %v4318
        %v4703 = vand.u32 2147483647, %v4319
        %v4704 = vand.u32 2147483647, %v4320
        %v4705 = vand.u32 2147483647, %v4321
        %v4706 = vand.u32 2147483647, %v4322
        %v4707 = vand.u32 2147483647, %v4323
        %v4708 = vand.u32 2147483647, %v4324
        %v4709 = vand.u32 2147483647, %v4325
        %v4710 = vand.u32 2147483647, %v4326
        %v4711 = vand.u32 2147483647, %v4327
        %v4712 = vand.u32 2147483647, %v4328
        %v4713 = vand.u32 2147483647, %v4329
        %v4714 = vand.u32 2147483647, %v4330
        %v4715 = vand.u32 2147483647, %v4331
        %v4716 = vand.u32 2147483647, %v4332
        %v4717 = vand.u32 2147483647, %v4333
        %v4718 = vand.u32 2147483647, %v4334
        %v4719 = vand.u32 2147483647, %v4335
        %v4720 = vand.u32 2147483647, %v4336
        %v4721 = vand.u32 2147483647, %v4337
        %v4722 = vand.u32 2147483647, %v4338
        %v4723 = vand.u32 2147483647, %v4339
        %v4724 = vand.u32 2147483647, %v4340
        %v4725 = vand.u32 2147483647, %v4341
        %v4726 = vand.u32 2147483647, %v4342
        %v4727 = vand.u32 2147483647, %v4343
        %v4728 = vand.u32 2147483647, %v4344
        %v4729 = vand.u32 2147483647, %v4345
        %v4730 = vand.u32 2147483647, %v4346
        %v4731 = vand.u32 2147483647, %v4347
        %v4732 = vand.u32 2147483647, %v4348
        %v4733 = vand.u32 2147483647, %v4349
        %v4734 = vand.u32 2147483647, %v4350
        %v4735 = vand.u32 2147483647, %v4351
        %v4736 = vand.u32 2147483647, %v4352
        %v4737 = vand.u32 2147483647, %v4353
        %v4738 = vand.u32 2147483647, %v4354
        %v4739 = vand.u32 2147483647, %v4355
        %v4740 = vand.u32 2147483647, %v4356
        %v4741 = vand.u32 2147483647, %v4357
        %v4742 = vand.u32 2147483647, %v4358
        %v4743 = vand.u32 2147483647, %v4359
        %v4744 = vand.u32 2147483647, %v4360
        %v4745 = vand.u32 2147483647, %v4361
        %v4746 = vand.u32 2147483647, %v4362
        %v4747 = vand.u32 2147483647, %v4363
        %v4748 = vand.u32 2147483647, %v4364
        %v4749 = vand.u32 2147483647, %v4365
        %v4750 = vand.u32 2147483647, %v4366
        %v4751 = vand.u32 2147483647, %v4367
        %v4752 = vand.u32 2147483647, %v4368
        %v4753 = vand.u32 2147483647, %v4369
        %v4754 = vand.u32 2147483647, %v4370
        %v4755 = vand.u32 2147483647, %v4371
        %v4756 = vand.u32 2147483647, %v4372
        %v4757 = vand.u32 2147483647, %v4373
        %v4758 = vand.u32 2147483647, %v4374
        %v4759 = vand.u32 2147483647, %v4375
        %v4760 = vand.u32 2147483647, %v4376
        %v4761 = vand.u32 2147483647, %v4377
        %v4762 = vand.u32 2147483647, %v4378
        %v4763 = vand.u32 2147483647, %v4379
        %v4764 = vand.u32 2147483647, %v4380
        %v4765 = vand.u32 2147483647, %v4381
        %v4766 = vand.u32 2147483647, %v4382
        %v4767 = vand.u32 2147483647, %v4383
        %v4768 = vand.u32 2147483647, %v4384
        %v4769 = vand.u32 2147483647, %v4385
        %v4770 = vand.u32 2147483647, %v4386
        %v4771 = vand.u32 2147483647, %v4387
        %v4772 = vand.u32 2147483647, %v4388
        %v4773 = vand.u32 2147483647, %v4389
        %v4774 = vand.u32 2147483647, %v4390
        %v4775 = vand.u32 2147483647, %v4391
        %v4776 = vand.u32 2147483647, %v4392
        %v4777 = vand.u32 2147483647, %v4393
        %v4778 = vand.u32 2147483647, %v4394
        %v4779 = vand.u32 2147483647, %v4395
        %v4780 = vand.u32 2147483647, %v4396
        %v4781 = vand.u32 2147483647, %v4397
        %v4782 = vand.u32 2147483647, %v4398
        %v4783 = vand.u32 2147483647, %v4399
        %v4784 = vand.u32 2147483647, %v4400
        %v4785 = vand.u32 2147483647, %v4401
        %v4786 = vand.u32 2147483647, %v4402
        %v4787 = vand.u32 2147483647, %v4403
        %v4788 = vand.u32 2147483647, %v4404
        %v4789 = vand.u32 2147483647, %v4405
        %v4790 = vand.u32 2147483647, %v4406
        %v4791 = vand.u32 2147483647, %v4407
        %v4792 = vand.u32 2147483647, %v4408
        %v4793 = vand.u32 2147483647, %v4409
        %v4794 = vand.u32 2147483647, %v4410
        %v4795 = vand.u32 2147483647, %v4411
        %v4796 = vand.u32 2147483647, %v4412
        %v4797 = vand.u32 2147483647, %v4413
        %v4798 = vand.u32 2147483647, %v4414
        %v4799 = vand.u32 2147483647, %v4415
        %v4800 = vand.u32 2147483647, %v4416
        %v4801 = vand.u32 2147483647, %v4417
        %v4802 = vand.u32 2147483647, %v4418
        %v4803 = vand.u32 2147483647, %v4419
        %v4804 = vand.u32 2147483647, %v4420
        %v4805 = vand.u32 2147483647, %v4421
        %v4806 = vand.u32 2147483647, %v4422
        %v4807 = vand.u32 2147483647, %v4423
        %v4808 = vand.u32 2147483647, %v4424
        %v4809 = vand.u32 2147483647, %v4425
        %v4810 = vand.u32 2147483647, %v4426
        %v4811 = vand.u32 2147483647, %v4427
        %v4812 = vand.u32 2147483647, %v4428
        %v4813 = vand.u32 2147483647, %v4429
        %v4814 = vand.u32 2147483647, %v4430
        %v4815 = vand.u32 2147483647, %v4431
        %v4816 = vand.u32 2147483647, %v4432
        %v4817 = vand.u32 2147483647, %v4433
        %v4818 = vand.u32 2147483647, %v4434
        %v4819 = vand.u32 2147483647, %v4435
        %v4820 = vand.u32 2147483647, %v4436
        %v4821 = vand.u32 2147483647, %v4437
        %v4822 = vand.u32 2147483647, %v4438
        %v4823 = vand.u32 2147483647, %v4439
        %v4824 = vand.u32 2147483647, %v4440
        %v4825 = vand.u32 2147483647, %v4441
        %v4826 = vand.u32 2147483647, %v4442
        %v4827 = vand.u32 2147483647, %v4443
        %v4828 = vand.u32 2147483647, %v4444
        %v4829 = vand.u32 2147483647, %v4445
        %v4830 = vand.u32 2147483647, %v4446
        %v4831 = vand.u32 2147483647, %v4447
        %v4832 = vand.u32 2147483647, %v4448
        %v4833 = vand.u32 2147483647, %v4449
        %v4834 = vand.u32 2147483647, %v4450
        %v4835 = vand.u32 2147483647, %v4451
        %v4836 = vand.u32 2147483647, %v4452
        %v4837 = vand.u32 2147483647, %v4453
        %v4838 = vand.u32 2147483647, %v4454
        %v4839 = vand.u32 2147483647, %v4455
        %v4840 = vand.u32 2147483647, %v4456
        %v4841 = vand.u32 2147483647, %v4457
        %v4842 = vand.u32 2147483647, %v4458
        %v4843 = vand.u32 2147483647, %v4459
        %v4844 = vand.u32 2147483647, %v4460
        %v4845 = vand.u32 2147483647, %v4461
        %v4846 = vand.u32 2147483647, %v4462
        %v4847 = vand.u32 2147483647, %v4463
        %v4848 = vand.u32 2147483647, %v4464
        %v4849 = vand.u32 2147483647, %v4465
        %v4850 = vand.u32 2147483647, %v4466
        %v4851 = vand.u32 2147483647, %v4467
        %v4852 = vand.u32 2147483647, %v4468
        %v4853 = vand.u32 2147483647, %v4469
        %v4854 = vand.u32 2147483647, %v4470
        %v4855 = vand.u32 2147483647, %v4471
        %v4856 = vand.u32 2147483647, %v4472
        %v4857 = vand.u32 2147483647, %v4473
        %v4858 = vand.u32 2147483647, %v4474
        %v4859 = vand.u32 2147483647, %v4475
        %v4860 = vand.u32 2147483647, %v4476
        %v4861 = vand.u32 2147483647, %v4477
        %v4862 = vand.u32 2147483647, %v4478
        %v4863 = vand.u32 2147483647, %v4479
        %v4864 = vand.u32 2147483647, %v4480
        %v4865 = vand.u32 2147483647, %v4481
        %v4866 = vand.u32 2147483647, %v4482
        %v4867 = vand.u32 2147483647, %v4483
        %v4868 = vand.u32 2147483647, %v4484
        %v4869 = vand.u32 2147483647, %v4485
        %v4870 = vand.u32 2147483647, %v4486
        %v4871 = vand.u32 2147483647, %v4487
        %v4872 = vand.u32 2147483647, %v4488
        %v4873 = vand.u32 2147483647, %v4489
        %v4874 = vand.u32 2147483647, %v4490
        %v4875 = vand.u32 2147483647, %v4491
        %v4876 = vand.u32 2147483647, %v4492
        %v4877 = vand.u32 2147483647, %v4493
        %v4878 = vand.u32 2147483647, %v4494
        %v4879 = vand.u32 2147483647, %v4495
        %v4880 = vand.u32 2147483647, %v4496
        %v4881 = vand.u32 2147483647, %v4497
        %v4882 = vand.u32 2147483647, %v4498
        %v4883 = vand.u32 2147483647, %v4499
        %v4884 = vand.u32 2147483647, %v4500
        %v4885 = vand.u32 2147483647, %v4501
        %v4886 = vand.u32 2147483647, %v4502
        %v4887 = vand.u32 2147483647, %v4503
        %v4888 = vand.u32 2147483647, %v4504
        %v4889 = vand.u32 2147483647, %v4505
        %v4890 = vand.u32 2147483647, %v4506
        %v4891 = vand.u32 2147483647, %v4507
        %v4892 = vand.u32 2147483647, %v4508
        %v4893 = vand.u32 2147483647, %v4509
        %v4894 = vand.u32 2147483647, %v4510
        %v4895 = vand.u32 2147483647, %v4511
        %v4896 = vand.u32 2147483647, %v4512
        %v4897 = vand.u32 2147483647, %v4513
        %v4898 = vand.u32 2147483647, %v4514
        %v4899 = vand.u32 2147483647, %v4515
        %v4900 = vand.u32 2147483647, %v4516
        %v4901 = vand.u32 2147483647, %v4517
        %v4902 = vand.u32 2147483647, %v4518
        %v4903 = vand.u32 2147483647, %v4519
        %v4904 = vand.u32 2147483647, %v4520
        %v4905 = vand.u32 2147483647, %v4521
        %v4906 = vand.u32 2147483647, %v4522
        %v4907 = vand.u32 2147483647, %v4523
        %v4908 = vand.u32 2147483647, %v4524
        %v4909 = vand.u32 2147483647, %v4525
        %v4910 = vand.u32 2147483647, %v4526
        %v4911 = vand.u32 2147483647, %v4527
        %v4912 = vand.u32 2147483647, %v4528
        %v4913 = vand.u32 2147483647, %v4529
        %v4914 = vand.u32 2147483647, %v4530
        %v4915 = vand.u32 2147483647, %v4531
        %v4916 = vand.u32 2147483647, %v4532
        %v4917 = vand.u32 2147483647, %v4533
        %v4918 = vand.u32 2147483647, %v4534
        %v4919 = vand.u32 2147483647, %v4535
        %v4920 = vand.u32 2147483647, %v4536
        %v4921 = vand.u32 2147483647, %v4537
        %v4922 = vand.u32 2147483647, %v4538
        %v4923 = vand.u32 2147483647, %v4539
        %v4924 = vand.u32 2147483647, %v4540
        %v4925 = vand.u32 2147483647, %v4541
        %v4926 = vand.u32 2147483647, %v4542
        %v4927 = vand.u32 2147483647, %v4543
        %v4928 = vand.u32 2147483647, %v4544
        %v4929 = vand.u32 2147483647, %v4545
        %v4930 = vand.u32 2147483647, %v4546
        %v4931 = vand.u32 2147483647, %v4547
        %v4932 = vand.u32 2147483647, %v4548
        %v4933 = vsub.f32 1.0, %v4549
        %v4934 = vsub.f32 1.0, %v4550
        %v4935 = vsub.f32 1.0, %v4551
        %v4936 = vsub.f32 1.0, %v4552
        %v4937 = vsub.f32 1.0, %v4553
        %v4938 = vsub.f32 1.0, %v4554
        %v4939 = vsub.f32 1.0, %v4555
        %v4940 = vsub.f32 1.0, %v4556
        %v4941 = vsub.f32 1.0, %v4557
        %v4942 = vsub.f32 1.0, %v4558
        %v4943 = vsub.f32 1.0, %v4559
        %v4944 = vsub.f32 1.0, %v4560
        %v4945 = vsub.f32 1.0, %v4561
        %v4946 = vsub.f32 1.0, %v4562
        %v4947 = vsub.f32 1.0, %v4563
        %v4948 = vsub.f32 1.0, %v4564
        %v4949 = vsub.f32 1.0, %v4565
        %v4950 = vsub.f32 1.0, %v4566
        %v4951 = vsub.f32 1.0, %v4567
        %v4952 = vsub.f32 1.0, %v4568
        %v4953 = vsub.f32 1.0, %v4569
        %v4954 = vsub.f32 1.0, %v4570
        %v4955 = vsub.f32 1.0, %v4571
        %v4956 = vsub.f32 1.0, %v4572
        %v4957 = vsub.f32 1.0, %v4573
        %v4958 = vsub.f32 1.0, %v4574
        %v4959 = vsub.f32 1.0, %v4575
        %v4960 = vsub.f32 1.0, %v4576
        %v4961 = vsub.f32 1.0, %v4577
        %v4962 = vsub.f32 1.0, %v4578
        %v4963 = vsub.f32 1.0, %v4579
        %v4964 = vsub.f32 1.0, %v4580
        %v4965 = vsub.f32 1.0, %v4581
        %v4966 = vsub.f32 1.0, %v4582
        %v4967 = vsub.f32 1.0, %v4583
        %v4968 = vsub.f32 1.0, %v4584
        %v4969 = vsub.f32 1.0, %v4585
        %v4970 = vsub.f32 1.0, %v4586
        %v4971 = vsub.f32 1.0, %v4587
        %v4972 = vsub.f32 1.0, %v4588
        %v4973 = vsub.f32 1.0, %v4589
        %v4974 = vsub.f32 1.0, %v4590
        %v4975 = vsub.f32 1.0, %v4591
        %v4976 = vsub.f32 1.0, %v4592
        %v4977 = vsub.f32 1.0, %v4593
        %v4978 = vsub.f32 1.0, %v4594
        %v4979 = vsub.f32 1.0, %v4595
        %v4980 = vsub.f32 1.0, %v4596
        %v4981 = vsub.f32 1.0, %v4597
        %v4982 = vsub.f32 1.0, %v4598
        %v4983 = vsub.f32 1.0, %v4599
        %v4984 = vsub.f32 1.0, %v4600
        %v4985 = vsub.f32 1.0, %v4601
        %v4986 = vsub.f32 1.0, %v4602
        %v4987 = vsub.f32 1.0, %v4603
        %v4988 = vsub.f32 1.0, %v4604
        %v4989 = vsub.f32 1.0, %v4605
        %v4990 = vsub.f32 1.0, %v4606
        %v4991 = vsub.f32 1.0, %v4607
        %v4992 = vsub.f32 1.0, %v4608
        %v4993 = vsub.f32 1.0, %v4609
        %v4994 = vsub.f32 1.0, %v4610
        %v4995 = vsub.f32 1.0, %v4611
        %v4996 = vsub.f32 1.0, %v4612
        %v4997 = vsub.f32 1.0, %v4613
        %v4998 = vsub.f32 1.0, %v4614
        %v4999 = vsub.f32 1.0, %v4615
        %v5000 = vsub.f32 1.0, %v4616
        %v5001 = vsub.f32 1.0, %v4617
        %v5002 = vsub.f32 1.0, %v4618
        %v5003 = vsub.f32 1.0, %v4619
        %v5004 = vsub.f32 1.0, %v4620
        %v5005 = vsub.f32 1.0, %v4621
        %v5006 = vsub.f32 1.0, %v4622
        %v5007 = vsub.f32 1.0, %v4623
        %v5008 = vsub.f32 1.0, %v4624
        %v5009 = vsub.f32 1.0, %v4625
        %v5010 = vsub.f32 1.0, %v4626
        %v5011 = vsub.f32 1.0, %v4627
        %v5012 = vsub.f32 1.0, %v4628
        %v5013 = vsub.f32 1.0, %v4629
        %v5014 = vsub.f32 1.0, %v4630
        %v5015 = vsub.f32 1.0, %v4631
        %v5016 = vsub.f32 1.0, %v4632
        %v5017 = vsub.f32 1.0, %v4633
        %v5018 = vsub.f32 1.0, %v4634
        %v5019 = vsub.f32 1.0, %v4635
        %v5020 = vsub.f32 1.0, %v4636
        %v5021 = vsub.f32 1.0, %v4637
        %v5022 = vsub.f32 1.0, %v4638
        %v5023 = vsub.f32 1.0, %v4639
        %v5024 = vsub.f32 1.0, %v4640
        %v5025 = vsub.f32 1.0, %v4641
        %v5026 = vsub.f32 1.0, %v4642
        %v5027 = vsub.f32 1.0, %v4643
        %v5028 = vsub.f32 1.0, %v4644
        %v5029 = vsub.f32 1.0, %v4645
        %v5030 = vsub.f32 1.0, %v4646
        %v5031 = vsub.f32 1.0, %v4647
        %v5032 = vsub.f32 1.0, %v4648
        %v5033 = vsub.f32 1.0, %v4649
        %v5034 = vsub.f32 1.0, %v4650
        %v5035 = vsub.f32 1.0, %v4651
        %v5036 = vsub.f32 1.0, %v4652
        %v5037 = vsub.f32 1.0, %v4653
        %v5038 = vsub.f32 1.0, %v4654
        %v5039 = vsub.f32 1.0, %v4655
        %v5040 = vsub.f32 1.0, %v4656
        %v5041 = vsub.f32 1.0, %v4657
        %v5042 = vsub.f32 1.0, %v4658
        %v5043 = vsub.f32 1.0, %v4659
        %v5044 = vsub.f32 1.0, %v4660
        %v5045 = vsub.f32 1.0, %v4661
        %v5046 = vsub.f32 1.0, %v4662
        %v5047 = vsub.f32 1.0, %v4663
        %v5048 = vsub.f32 1.0, %v4664
        %v5049 = vsub.f32 1.0, %v4665
        %v5050 = vsub.f32 1.0, %v4666
        %v5051 = vsub.f32 1.0, %v4667
        %v5052 = vsub.f32 1.0, %v4668
        %v5053 = vsub.f32 1.0, %v4669
        %v5054 = vsub.f32 1.0, %v4670
        %v5055 = vsub.f32 1.0, %v4671
        %v5056 = vsub.f32 1.0, %v4672
        %v5057 = vsub.f32 1.0, %v4673
        %v5058 = vsub.f32 1.0, %v4674
        %v5059 = vsub.f32 1.0, %v4675
        %v5060 = vsub.f32 1.0, %v4676
        %v5061 = vsub.f32 1.0, %v4677
        %v5062 = vsub.f32 1.0, %v4678
        %v5063 = vsub.f32 1.0, %v4679
        %v5064 = vsub.f32 1.0, %v4680
        %v5065 = vsub.f32 1.0, %v4681
        %v5066 = vsub.f32 1.0, %v4682
        %v5067 = vsub.f32 1.0, %v4683
        %v5068 = vsub.f32 1.0, %v4684
        %v5069 = vsub.f32 1.0, %v4685
        %v5070 = vsub.f32 1.0, %v4686
        %v5071 = vsub.f32 1.0, %v4687
        %v5072 = vsub.f32 1.0, %v4688
        %v5073 = vsub.f32 1.0, %v4689
        %v5074 = vsub.f32 1.0, %v4690
        %v5075 = vsub.f32 1.0, %v4691
        %v5076 = vsub.f32 1.0, %v4692
        %v5077 = vsub.f32 1.0, %v4693
        %v5078 = vsub.f32 1.0, %v4694
        %v5079 = vsub.f32 1.0, %v4695
        %v5080 = vsub.f32 1.0, %v4696
        %v5081 = vsub.f32 1.0, %v4697
        %v5082 = vsub.f32 1.0, %v4698
        %v5083 = vsub.f32 1.0, %v4699
        %v5084 = vsub.f32 1.0, %v4700
        %v5085 = vsub.f32 1.0, %v4701
        %v5086 = vsub.f32 1.0, %v4702
        %v5087 = vsub.f32 1.0, %v4703
        %v5088 = vsub.f32 1.0, %v4704
        %v5089 = vsub.f32 1.0, %v4705
        %v5090 = vsub.f32 1.0, %v4706
        %v5091 = vsub.f32 1.0, %v4707
        %v5092 = vsub.f32 1.0, %v4708
        %v5093 = vsub.f32 1.0, %v4709
        %v5094 = vsub.f32 1.0, %v4710
        %v5095 = vsub.f32 1.0, %v4711
        %v5096 = vsub.f32 1.0, %v4712
        %v5097 = vsub.f32 1.0, %v4713
        %v5098 = vsub.f32 1.0, %v4714
        %v5099 = vsub.f32 1.0, %v4715
        %v5100 = vsub.f32 1.0, %v4716
        %v5101 = vsub.f32 1.0, %v4717
        %v5102 = vsub.f32 1.0, %v4718
        %v5103 = vsub.f32 1.0, %v4719
        %v5104 = vsub.f32 1.0, %v4720
        %v5105 = vsub.f32 1.0, %v4721
        %v5106 = vsub.f32 1.0, %v4722
        %v5107 = vsub.f32 1.0, %v4723
        %v5108 = vsub.f32 1.0, %v4724
        %v5109 = vsub.f32 1.0, %v4725
        %v5110 = vsub.f32 1.0, %v4726
        %v5111 = vsub.f32 1.0, %v4727
        %v5112 = vsub.f32 1.0, %v4728
        %v5113 = vsub.f32 1.0, %v4729
        %v5114 = vsub.f32 1.0, %v4730
        %v5115 = vsub.f32 1.0, %v4731
        %v5116 = vsub.f32 1.0, %v4732
        %v5117 = vsub.f32 1.0, %v4733
        %v5118 = vsub.f32 1.0, %v4734
        %v5119 = vsub.f32 1.0, %v4735
        %v5120 = vsub.f32 1.0, %v4736
        %v5121 = vsub.f32 1.0, %v4737
        %v5122 = vsub.f32 1.0, %v4738
        %v5123 = vsub.f32 1.0, %v4739
        %v5124 = vsub.f32 1.0, %v4740
        %v5125 = vsub.f32 1.0, %v4741
        %v5126 = vsub.f32 1.0, %v4742
        %v5127 = vsub.f32 1.0, %v4743
        %v5128 = vsub.f32 1.0, %v4744
        %v5129 = vsub.f32 1.0, %v4745
        %v5130 = vsub.f32 1.0, %v4746
        %v5131 = vsub.f32 1.0, %v4747
        %v5132 = vsub.f32 1.0, %v4748
        %v5133 = vsub.f32 1.0, %v4749
        %v5134 = vsub.f32 1.0, %v4750
        %v5135 = vsub.f32 1.0, %v4751
        %v5136 = vsub.f32 1.0, %v4752
        %v5137 = vsub.f32 1.0, %v4753
        %v5138 = vsub.f32 1.0, %v4754
        %v5139 = vsub.f32 1.0, %v4755
        %v5140 = vsub.f32 1.0, %v4756
        %v5141 = vsub.f32 1.0, %v4757
        %v5142 = vsub.f32 1.0, %v4758
        %v5143 = vsub.f32 1.0, %v4759
        %v5144 = vsub.f32 1.0, %v4760
        %v5145 = vsub.f32 1.0, %v4761
        %v5146 = vsub.f32 1.0, %v4762
        %v5147 = vsub.f32 1.0, %v4763
        %v5148 = vsub.f32 1.0, %v4764
        %v5149 = vsub.f32 1.0, %v4765
        %v5150 = vsub.f32 1.0, %v4766
        %v5151 = vsub.f32 1.0, %v4767
        %v5152 = vsub.f32 1.0, %v4768
        %v5153 = vsub.f32 1.0, %v4769
        %v5154 = vsub.f32 1.0, %v4770
        %v5155 = vsub.f32 1.0, %v4771
        %v5156 = vsub.f32 1.0, %v4772
        %v5157 = vsub.f32 1.0, %v4773
        %v5158 = vsub.f32 1.0, %v4774
        %v5159 = vsub.f32 1.0, %v4775
        %v5160 = vsub.f32 1.0, %v4776
        %v5161 = vsub.f32 1.0, %v4777
        %v5162 = vsub.f32 1.0, %v4778
        %v5163 = vsub.f32 1.0, %v4779
        %v5164 = vsub.f32 1.0, %v4780
        %v5165 = vsub.f32 1.0, %v4781
        %v5166 = vsub.f32 1.0, %v4782
        %v5167 = vsub.f32 1.0, %v4783
        %v5168 = vsub.f32 1.0, %v4784
        %v5169 = vsub.f32 1.0, %v4785
        %v5170 = vsub.f32 1.0, %v4786
        %v5171 = vsub.f32 1.0, %v4787
        %v5172 = vsub.f32 1.0, %v4788
        %v5173 = vsub.f32 1.0, %v4789
        %v5174 = vsub.f32 1.0, %v4790
        %v5175 = vsub.f32 1.0, %v4791
        %v5176 = vsub.f32 1.0, %v4792
        %v5177 = vsub.f32 1.0, %v4793
        %v5178 = vsub.f32 1.0, %v4794
        %v5179 = vsub.f32 1.0, %v4795
        %v5180 = vsub.f32 1.0, %v4796
        %v5181 = vsub.f32 1.0, %v4797
        %v5182 = vsub.f32 1.0, %v4798
        %v5183 = vsub.f32 1.0, %v4799
        %v5184 = vsub.f32 1.0, %v4800
        %v5185 = vsub.f32 1.0, %v4801
        %v5186 = vsub.f32 1.0, %v4802
        %v5187 = vsub.f32 1.0, %v4803
        %v5188 = vsub.f32 1.0, %v4804
        %v5189 = vsub.f32 1.0, %v4805
        %v5190 = vsub.f32 1.0, %v4806
        %v5191 = vsub.f32 1.0, %v4807
        %v5192 = vsub.f32 1.0, %v4808
        %v5193 = vsub.f32 1.0, %v4809
        %v5194 = vsub.f32 1.0, %v4810
        %v5195 = vsub.f32 1.0, %v4811
        %v5196 = vsub.f32 1.0, %v4812
        %v5197 = vsub.f32 1.0, %v4813
        %v5198 = vsub.f32 1.0, %v4814
        %v5199 = vsub.f32 1.0, %v4815
        %v5200 = vsub.f32 1.0, %v4816
        %v5201 = vsub.f32 1.0, %v4817
        %v5202 = vsub.f32 1.0, %v4818
        %v5203 = vsub.f32 1.0, %v4819
        %v5204 = vsub.f32 1.0, %v4820
        %v5205 = vsub.f32 1.0, %v4821
        %v5206 = vsub.f32 1.0, %v4822
        %v5207 = vsub.f32 1.0, %v4823
        %v5208 = vsub.f32 1.0, %v4824
        %v5209 = vsub.f32 1.0, %v4825
        %v5210 = vsub.f32 1.0, %v4826
        %v5211 = vsub.f32 1.0, %v4827
        %v5212 = vsub.f32 1.0, %v4828
        %v5213 = vsub.f32 1.0, %v4829
        %v5214 = vsub.f32 1.0, %v4830
        %v5215 = vsub.f32 1.0, %v4831
        %v5216 = vsub.f32 1.0, %v4832
        %v5217 = vsub.f32 1.0, %v4833
        %v5218 = vsub.f32 1.0, %v4834
        %v5219 = vsub.f32 1.0, %v4835
        %v5220 = vsub.f32 1.0, %v4836
        %v5221 = vsub.f32 1.0, %v4837
        %v5222 = vsub.f32 1.0, %v4838
        %v5223 = vsub.f32 1.0, %v4839
        %v5224 = vsub.f32 1.0, %v4840
        %v5225 = vsub.f32 1.0, %v4841
        %v5226 = vsub.f32 1.0, %v4842
        %v5227 = vsub.f32 1.0, %v4843
        %v5228 = vsub.f32 1.0, %v4844
        %v5229 = vsub.f32 1.0, %v4845
        %v5230 = vsub.f32 1.0, %v4846
        %v5231 = vsub.f32 1.0, %v4847
        %v5232 = vsub.f32 1.0, %v4848
        %v5233 = vsub.f32 1.0, %v4849
        %v5234 = vsub.f32 1.0, %v4850
        %v5235 = vsub.f32 1.0, %v4851
        %v5236 = vsub.f32 1.0, %v4852
        %v5237 = vsub.f32 1.0, %v4853
        %v5238 = vsub.f32 1.0, %v4854
        %v5239 = vsub.f32 1.0, %v4855
        %v5240 = vsub.f32 1.0, %v4856
        %v5241 = vsub.f32 1.0, %v4857
        %v5242 = vsub.f32 1.0, %v4858
        %v5243 = vsub.f32 1.0, %v4859
        %v5244 = vsub.f32 1.0, %v4860
        %v5245 = vsub.f32 1.0, %v4861
        %v5246 = vsub.f32 1.0, %v4862
        %v5247 = vsub.f32 1.0, %v4863
        %v5248 = vsub.f32 1.0, %v4864
        %v5249 = vsub.f32 1.0, %v4865
        %v5250 = vsub.f32 1.0, %v4866
        %v5251 = vsub.f32 1.0, %v4867
        %v5252 = vsub.f32 1.0, %v4868
        %v5253 = vsub.f32 1.0, %v4869
        %v5254 = vsub.f32 1.0, %v4870
        %v5255 = vsub.f32 1.0, %v4871
        %v5256 = vsub.f32 1.0, %v4872
        %v5257 = vsub.f32 1.0, %v4873
        %v5258 = vsub.f32 1.0, %v4874
        %v5259 = vsub.f32 1.0, %v4875
        %v5260 = vsub.f32 1.0, %v4876
        %v5261 = vsub.f32 1.0, %v4877
        %v5262 = vsub.f32 1.0, %v4878
        %v5263 = vsub.f32 1.0, %v4879
        %v5264 = vsub.f32 1.0, %v4880
        %v5265 = vsub.f32 1.0, %v4881
        %v5266 = vsub.f32 1.0, %v4882
        %v5267 = vsub.f32 1.0, %v4883
        %v5268 = vsub.f32 1.0, %v4884
        %v5269 = vsub.f32 1.0, %v4885
        %v5270 = vsub.f32 1.0, %v4886
        %v5271 = vsub.f32 1.0, %v4887
        %v5272 = vsub.f32 1.0, %v4888
        %v5273 = vsub.f32 1.0, %v4889
        %v5274 = vsub.f32 1.0, %v4890
        %v5275 = vsub.f32 1.0, %v4891
        %v5276 = vsub.f32 1.0, %v4892
        %v5277 = vsub.f32 1.0, %v4893
        %v5278 = vsub.f32 1.0, %v4894
        %v5279 = vsub.f32 1.0, %v4895
        %v5280 = vsub.f32 1.0, %v4896
        %v5281 = vsub.f32 1.0, %v4897
        %v5282 = vsub.f32 1.0, %v4898
        %v5283 = vsub.f32 1.0, %v4899
        %v5284 = vsub.f32 1.0, %v4900
        %v5285 = vsub.f32 1.0, %v4901
        %v5286 = vsub.f32 1.0, %v4902
        %v5287 = vsub.f32 1.0, %v4903
        %v5288 = vsub.f32 1.0, %v4904
        %v5289 = vsub.f32 1.0, %v4905
        %v5290 = vsub.f32 1.0, %v4906
        %v5291 = vsub.f32 1.0, %v4907
        %v5292 = vsub.f32 1.0, %v4908
        %v5293 = vsub.f32 1.0, %v4909
        %v5294 = vsub.f32 1.0, %v4910
        %v5295 = vsub.f32 1.0, %v4911
        %v5296 = vsub.f32 1.0, %v4912
        %v5297 = vsub.f32 1.0, %v4913
        %v5298 = vsub.f32 1.0, %v4914
        %v5299 = vsub.f32 1.0, %v4915
        %v5300 = vsub.f32 1.0, %v4916
        %v5301 = vsub.f32 1.0, %v4917
        %v5302 = vsub.f32 1.0, %v4918
        %v5303 = vsub.f32 1.0, %v4919
        %v5304 = vsub.f32 1.0, %v4920
        %v5305 = vsub.f32 1.0, %v4921
        %v5306 = vsub.f32 1.0, %v4922
        %v5307 = vsub.f32 1.0, %v4923
        %v5308 = vsub.f32 1.0, %v4924
        %v5309 = vsub.f32 1.0, %v4925
        %v5310 = vsub.f32 1.0, %v4926
        %v5311 = vsub.f32 1.0, %v4927
        %v5312 = vsub.f32 1.0, %v4928
        %v5313 = vsub.f32 1.0, %v4929
        %v5314 = vsub.f32 1.0, %v4930
        %v5315 = vsub.f32 1.0, %v4931
        %v5316 = vsub.f32 1.0, %v4932
        %v5317 = vmax.f32 %v4933, 0.0
        %v5318 = vmax.f32 %v4934, 0.0
        %v5319 = vmax.f32 %v4935, 0.0
        %v5320 = vmax.f32 %v4936, 0.0
        %v5321 = vmax.f32 %v4937, 0.0
        %v5322 = vmax.f32 %v4938, 0.0
        %v5323 = vmax.f32 %v4939, 0.0
        %v5324 = vmax.f32 %v4940, 0.0
        %v5325 = vmax.f32 %v4941, 0.0
        %v5326 = vmax.f32 %v4942, 0.0
        %v5327 = vmax.f32 %v4943, 0.0
        %v5328 = vmax.f32 %v4944, 0.0
        %v5329 = vmax.f32 %v4945, 0.0
        %v5330 = vmax.f32 %v4946, 0.0
        %v5331 = vmax.f32 %v4947, 0.0
        %v5332 = vmax.f32 %v4948, 0.0
        %v5333 = vmax.f32 %v4949, 0.0
        %v5334 = vmax.f32 %v4950, 0.0
        %v5335 = vmax.f32 %v4951, 0.0
        %v5336 = vmax.f32 %v4952, 0.0
        %v5337 = vmax.f32 %v4953, 0.0
        %v5338 = vmax.f32 %v4954, 0.0
        %v5339 = vmax.f32 %v4955, 0.0
        %v5340 = vmax.f32 %v4956, 0.0
        %v5341 = vmax.f32 %v4957, 0.0
        %v5342 = vmax.f32 %v4958, 0.0
        %v5343 = vmax.f32 %v4959, 0.0
        %v5344 = vmax.f32 %v4960, 0.0
        %v5345 = vmax.f32 %v4961, 0.0
        %v5346 = vmax.f32 %v4962, 0.0
        %v5347 = vmax.f32 %v4963, 0.0
        %v5348 = vmax.f32 %v4964, 0.0
        %v5349 = vmax.f32 %v4965, 0.0
        %v5350 = vmax.f32 %v4966, 0.0
        %v5351 = vmax.f32 %v4967, 0.0
        %v5352 = vmax.f32 %v4968, 0.0
        %v5353 = vmax.f32 %v4969, 0.0
        %v5354 = vmax.f32 %v4970, 0.0
        %v5355 = vmax.f32 %v4971, 0.0
        %v5356 = vmax.f32 %v4972, 0.0
        %v5357 = vmax.f32 %v4973, 0.0
        %v5358 = vmax.f32 %v4974, 0.0
        %v5359 = vmax.f32 %v4975, 0.0
        %v5360 = vmax.f32 %v4976, 0.0
        %v5361 = vmax.f32 %v4977, 0.0
        %v5362 = vmax.f32 %v4978, 0.0
        %v5363 = vmax.f32 %v4979, 0.0
        %v5364 = vmax.f32 %v4980, 0.0
        %v5365 = vmax.f32 %v4981, 0.0
        %v5366 = vmax.f32 %v4982, 0.0
        %v5367 = vmax.f32 %v4983, 0.0
        %v5368 = vmax.f32 %v4984, 0.0
        %v5369 = vmax.f32 %v4985, 0.0
        %v5370 = vmax.f32 %v4986, 0.0
        %v5371 = vmax.f32 %v4987, 0.0
        %v5372 = vmax.f32 %v4988, 0.0
        %v5373 = vmax.f32 %v4989, 0.0
        %v5374 = vmax.f32 %v4990, 0.0
        %v5375 = vmax.f32 %v4991, 0.0
        %v5376 = vmax.f32 %v4992, 0.0
        %v5377 = vmax.f32 %v4993, 0.0
        %v5378 = vmax.f32 %v4994, 0.0
        %v5379 = vmax.f32 %v4995, 0.0
        %v5380 = vmax.f32 %v4996, 0.0
        %v5381 = vmax.f32 %v4997, 0.0
        %v5382 = vmax.f32 %v4998, 0.0
        %v5383 = vmax.f32 %v4999, 0.0
        %v5384 = vmax.f32 %v5000, 0.0
        %v5385 = vmax.f32 %v5001, 0.0
        %v5386 = vmax.f32 %v5002, 0.0
        %v5387 = vmax.f32 %v5003, 0.0
        %v5388 = vmax.f32 %v5004, 0.0
        %v5389 = vmax.f32 %v5005, 0.0
        %v5390 = vmax.f32 %v5006, 0.0
        %v5391 = vmax.f32 %v5007, 0.0
        %v5392 = vmax.f32 %v5008, 0.0
        %v5393 = vmax.f32 %v5009, 0.0
        %v5394 = vmax.f32 %v5010, 0.0
        %v5395 = vmax.f32 %v5011, 0.0
        %v5396 = vmax.f32 %v5012, 0.0
        %v5397 = vmax.f32 %v5013, 0.0
        %v5398 = vmax.f32 %v5014, 0.0
        %v5399 = vmax.f32 %v5015, 0.0
        %v5400 = vmax.f32 %v5016, 0.0
        %v5401 = vmax.f32 %v5017, 0.0
        %v5402 = vmax.f32 %v5018, 0.0
        %v5403 = vmax.f32 %v5019, 0.0
        %v5404 = vmax.f32 %v5020, 0.0
        %v5405 = vmax.f32 %v5021, 0.0
        %v5406 = vmax.f32 %v5022, 0.0
        %v5407 = vmax.f32 %v5023, 0.0
        %v5408 = vmax.f32 %v5024, 0.0
        %v5409 = vmax.f32 %v5025, 0.0
        %v5410 = vmax.f32 %v5026, 0.0
        %v5411 = vmax.f32 %v5027, 0.0
        %v5412 = vmax.f32 %v5028, 0.0
        %v5413 = vmax.f32 %v5029, 0.0
        %v5414 = vmax.f32 %v5030, 0.0
        %v5415 = vmax.f32 %v5031, 0.0
        %v5416 = vmax.f32 %v5032, 0.0
        %v5417 = vmax.f32 %v5033, 0.0
        %v5418 = vmax.f32 %v5034, 0.0
        %v5419 = vmax.f32 %v5035, 0.0
        %v5420 = vmax.f32 %v5036, 0.0
        %v5421 = vmax.f32 %v5037, 0.0
        %v5422 = vmax.f32 %v5038, 0.0
        %v5423 = vmax.f32 %v5039, 0.0
        %v5424 = vmax.f32 %v5040, 0.0
        %v5425 = vmax.f32 %v5041, 0.0
        %v5426 = vmax.f32 %v5042, 0.0
        %v5427 = vmax.f32 %v5043, 0.0
        %v5428 = vmax.f32 %v5044, 0.0
        %v5429 = vmax.f32 %v5045, 0.0
        %v5430 = vmax.f32 %v5046, 0.0
        %v5431 = vmax.f32 %v5047, 0.0
        %v5432 = vmax.f32 %v5048, 0.0
        %v5433 = vmax.f32 %v5049, 0.0
        %v5434 = vmax.f32 %v5050, 0.0
        %v5435 = vmax.f32 %v5051, 0.0
        %v5436 = vmax.f32 %v5052, 0.0
        %v5437 = vmax.f32 %v5053, 0.0
        %v5438 = vmax.f32 %v5054, 0.0
        %v5439 = vmax.f32 %v5055, 0.0
        %v5440 = vmax.f32 %v5056, 0.0
        %v5441 = vmax.f32 %v5057, 0.0
        %v5442 = vmax.f32 %v5058, 0.0
        %v5443 = vmax.f32 %v5059, 0.0
        %v5444 = vmax.f32 %v5060, 0.0
        %v5445 = vmax.f32 %v5061, 0.0
        %v5446 = vmax.f32 %v5062, 0.0
        %v5447 = vmax.f32 %v5063, 0.0
        %v5448 = vmax.f32 %v5064, 0.0
        %v5449 = vmax.f32 %v5065, 0.0
        %v5450 = vmax.f32 %v5066, 0.0
        %v5451 = vmax.f32 %v5067, 0.0
        %v5452 = vmax.f32 %v5068, 0.0
        %v5453 = vmax.f32 %v5069, 0.0
        %v5454 = vmax.f32 %v5070, 0.0
        %v5455 = vmax.f32 %v5071, 0.0
        %v5456 = vmax.f32 %v5072, 0.0
        %v5457 = vmax.f32 %v5073, 0.0
        %v5458 = vmax.f32 %v5074, 0.0
        %v5459 = vmax.f32 %v5075, 0.0
        %v5460 = vmax.f32 %v5076, 0.0
        %v5461 = vmax.f32 %v5077, 0.0
        %v5462 = vmax.f32 %v5078, 0.0
        %v5463 = vmax.f32 %v5079, 0.0
        %v5464 = vmax.f32 %v5080, 0.0
        %v5465 = vmax.f32 %v5081, 0.0
        %v5466 = vmax.f32 %v5082, 0.0
        %v5467 = vmax.f32 %v5083, 0.0
        %v5468 = vmax.f32 %v5084, 0.0
        %v5469 = vmax.f32 %v5085, 0.0
        %v5470 = vmax.f32 %v5086, 0.0
        %v5471 = vmax.f32 %v5087, 0.0
        %v5472 = vmax.f32 %v5088, 0.0
        %v5473 = vmax.f32 %v5089, 0.0
        %v5474 = vmax.f32 %v5090, 0.0
        %v5475 = vmax.f32 %v5091, 0.0
        %v5476 = vmax.f32 %v5092, 0.0
        %v5477 = vmax.f32 %v5093, 0.0
        %v5478 = vmax.f32 %v5094, 0.0
        %v5479 = vmax.f32 %v5095, 0.0
        %v5480 = vmax.f32 %v5096, 0.0
        %v5481 = vmax.f32 %v5097, 0.0
        %v5482 = vmax.f32 %v5098, 0.0
        %v5483 = vmax.f32 %v5099, 0.0
        %v5484 = vmax.f32 %v5100, 0.0
        %v5485 = vmax.f32 %v5101, 0.0
        %v5486 = vmax.f32 %v5102, 0.0
        %v5487 = vmax.f32 %v5103, 0.0
        %v5488 = vmax.f32 %v5104, 0.0
        %v5489 = vmax.f32 %v5105, 0.0
        %v5490 = vmax.f32 %v5106, 0.0
        %v5491 = vmax.f32 %v5107, 0.0
        %v5492 = vmax.f32 %v5108, 0.0
        %v5493 = vmax.f32 %v5109, 0.0
        %v5494 = vmax.f32 %v5110, 0.0
        %v5495 = vmax.f32 %v5111, 0.0
        %v5496 = vmax.f32 %v5112, 0.0
        %v5497 = vmax.f32 %v5113, 0.0
        %v5498 = vmax.f32 %v5114, 0.0
        %v5499 = vmax.f32 %v5115, 0.0
        %v5500 = vmax.f32 %v5116, 0.0
        %v5501 = vmax.f32 %v5117, 0.0
        %v5502 = vmax.f32 %v5118, 0.0
        %v5503 = vmax.f32 %v5119, 0.0
        %v5504 = vmax.f32 %v5120, 0.0
        %v5505 = vmax.f32 %v5121, 0.0
        %v5506 = vmax.f32 %v5122, 0.0
        %v5507 = vmax.f32 %v5123, 0.0
        %v5508 = vmax.f32 %v5124, 0.0
        %v5509 = vmax.f32 %v5125, 0.0
        %v5510 = vmax.f32 %v5126, 0.0
        %v5511 = vmax.f32 %v5127, 0.0
        %v5512 = vmax.f32 %v5128, 0.0
        %v5513 = vmax.f32 %v5129, 0.0
        %v5514 = vmax.f32 %v5130, 0.0
        %v5515 = vmax.f32 %v5131, 0.0
        %v5516 = vmax.f32 %v5132, 0.0
        %v5517 = vmax.f32 %v5133, 0.0
        %v5518 = vmax.f32 %v5134, 0.0
        %v5519 = vmax.f32 %v5135, 0.0
        %v5520 = vmax.f32 %v5136, 0.0
        %v5521 = vmax.f32 %v5137, 0.0
        %v5522 = vmax.f32 %v5138, 0.0
        %v5523 = vmax.f32 %v5139, 0.0
        %v5524 = vmax.f32 %v5140, 0.0
        %v5525 = vmax.f32 %v5141, 0.0
        %v5526 = vmax.f32 %v5142, 0.0
        %v5527 = vmax.f32 %v5143, 0.0
        %v5528 = vmax.f32 %v5144, 0.0
        %v5529 = vmax.f32 %v5145, 0.0
        %v5530 = vmax.f32 %v5146, 0.0
        %v5531 = vmax.f32 %v5147, 0.0
        %v5532 = vmax.f32 %v5148, 0.0
        %v5533 = vmax.f32 %v5149, 0.0
        %v5534 = vmax.f32 %v5150, 0.0
        %v5535 = vmax.f32 %v5151, 0.0
        %v5536 = vmax.f32 %v5152, 0.0
        %v5537 = vmax.f32 %v5153, 0.0
        %v5538 = vmax.f32 %v5154, 0.0
        %v5539 = vmax.f32 %v5155, 0.0
        %v5540 = vmax.f32 %v5156, 0.0
        %v5541 = vmax.f32 %v5157, 0.0
        %v5542 = vmax.f32 %v5158, 0.0
        %v5543 = vmax.f32 %v5159, 0.0
        %v5544 = vmax.f32 %v5160, 0.0
        %v5545 = vmax.f32 %v5161, 0.0
        %v5546 = vmax.f32 %v5162, 0.0
        %v5547 = vmax.f32 %v5163, 0.0
        %v5548 = vmax.f32 %v5164, 0.0
        %v5549 = vmax.f32 %v5165, 0.0
        %v5550 = vmax.f32 %v5166, 0.0
        %v5551 = vmax.f32 %v5167, 0.0
        %v5552 = vmax.f32 %v5168, 0.0
        %v5553 = vmax.f32 %v5169, 0.0
        %v5554 = vmax.f32 %v5170, 0.0
        %v5555 = vmax.f32 %v5171, 0.0
        %v5556 = vmax.f32 %v5172, 0.0
        %v5557 = vmax.f32 %v5173, 0.0
        %v5558 = vmax.f32 %v5174, 0.0
        %v5559 = vmax.f32 %v5175, 0.0
        %v5560 = vmax.f32 %v5176, 0.0
        %v5561 = vmax.f32 %v5177, 0.0
        %v5562 = vmax.f32 %v5178, 0.0
        %v5563 = vmax.f32 %v5179, 0.0
        %v5564 = vmax.f32 %v5180, 0.0
        %v5565 = vmax.f32 %v5181, 0.0
        %v5566 = vmax.f32 %v5182, 0.0
        %v5567 = vmax.f32 %v5183, 0.0
        %v5568 = vmax.f32 %v5184, 0.0
        %v5569 = vmax.f32 %v5185, 0.0
        %v5570 = vmax.f32 %v5186, 0.0
        %v5571 = vmax.f32 %v5187, 0.0
        %v5572 = vmax.f32 %v5188, 0.0
        %v5573 = vmax.f32 %v5189, 0.0
        %v5574 = vmax.f32 %v5190, 0.0
        %v5575 = vmax.f32 %v5191, 0.0
        %v5576 = vmax.f32 %v5192, 0.0
        %v5577 = vmax.f32 %v5193, 0.0
        %v5578 = vmax.f32 %v5194, 0.0
        %v5579 = vmax.f32 %v5195, 0.0
        %v5580 = vmax.f32 %v5196, 0.0
        %v5581 = vmax.f32 %v5197, 0.0
        %v5582 = vmax.f32 %v5198, 0.0
        %v5583 = vmax.f32 %v5199, 0.0
        %v5584 = vmax.f32 %v5200, 0.0
        %v5585 = vmax.f32 %v5201, 0.0
        %v5586 = vmax.f32 %v5202, 0.0
        %v5587 = vmax.f32 %v5203, 0.0
        %v5588 = vmax.f32 %v5204, 0.0
        %v5589 = vmax.f32 %v5205, 0.0
        %v5590 = vmax.f32 %v5206, 0.0
        %v5591 = vmax.f32 %v5207, 0.0
        %v5592 = vmax.f32 %v5208, 0.0
        %v5593 = vmax.f32 %v5209, 0.0
        %v5594 = vmax.f32 %v5210, 0.0
        %v5595 = vmax.f32 %v5211, 0.0
        %v5596 = vmax.f32 %v5212, 0.0
        %v5597 = vmax.f32 %v5213, 0.0
        %v5598 = vmax.f32 %v5214, 0.0
        %v5599 = vmax.f32 %v5215, 0.0
        %v5600 = vmax.f32 %v5216, 0.0
        %v5601 = vmax.f32 %v5217, 0.0
        %v5602 = vmax.f32 %v5218, 0.0
        %v5603 = vmax.f32 %v5219, 0.0
        %v5604 = vmax.f32 %v5220, 0.0
        %v5605 = vmax.f32 %v5221, 0.0
        %v5606 = vmax.f32 %v5222, 0.0
        %v5607 = vmax.f32 %v5223, 0.0
        %v5608 = vmax.f32 %v5224, 0.0
        %v5609 = vmax.f32 %v5225, 0.0
        %v5610 = vmax.f32 %v5226, 0.0
        %v5611 = vmax.f32 %v5227, 0.0
        %v5612 = vmax.f32 %v5228, 0.0
        %v5613 = vmax.f32 %v5229, 0.0
        %v5614 = vmax.f32 %v5230, 0.0
        %v5615 = vmax.f32 %v5231, 0.0
        %v5616 = vmax.f32 %v5232, 0.0
        %v5617 = vmax.f32 %v5233, 0.0
        %v5618 = vmax.f32 %v5234, 0.0
        %v5619 = vmax.f32 %v5235, 0.0
        %v5620 = vmax.f32 %v5236, 0.0
        %v5621 = vmax.f32 %v5237, 0.0
        %v5622 = vmax.f32 %v5238, 0.0
        %v5623 = vmax.f32 %v5239, 0.0
        %v5624 = vmax.f32 %v5240, 0.0
        %v5625 = vmax.f32 %v5241, 0.0
        %v5626 = vmax.f32 %v5242, 0.0
        %v5627 = vmax.f32 %v5243, 0.0
        %v5628 = vmax.f32 %v5244, 0.0
        %v5629 = vmax.f32 %v5245, 0.0
        %v5630 = vmax.f32 %v5246, 0.0
        %v5631 = vmax.f32 %v5247, 0.0
        %v5632 = vmax.f32 %v5248, 0.0
        %v5633 = vmax.f32 %v5249, 0.0
        %v5634 = vmax.f32 %v5250, 0.0
        %v5635 = vmax.f32 %v5251, 0.0
        %v5636 = vmax.f32 %v5252, 0.0
        %v5637 = vmax.f32 %v5253, 0.0
        %v5638 = vmax.f32 %v5254, 0.0
        %v5639 = vmax.f32 %v5255, 0.0
        %v5640 = vmax.f32 %v5256, 0.0
        %v5641 = vmax.f32 %v5257, 0.0
        %v5642 = vmax.f32 %v5258, 0.0
        %v5643 = vmax.f32 %v5259, 0.0
        %v5644 = vmax.f32 %v5260, 0.0
        %v5645 = vmax.f32 %v5261, 0.0
        %v5646 = vmax.f32 %v5262, 0.0
        %v5647 = vmax.f32 %v5263, 0.0
        %v5648 = vmax.f32 %v5264, 0.0
        %v5649 = vmax.f32 %v5265, 0.0
        %v5650 = vmax.f32 %v5266, 0.0
        %v5651 = vmax.f32 %v5267, 0.0
        %v5652 = vmax.f32 %v5268, 0.0
        %v5653 = vmax.f32 %v5269, 0.0
        %v5654 = vmax.f32 %v5270, 0.0
        %v5655 = vmax.f32 %v5271, 0.0
        %v5656 = vmax.f32 %v5272, 0.0
        %v5657 = vmax.f32 %v5273, 0.0
        %v5658 = vmax.f32 %v5274, 0.0
        %v5659 = vmax.f32 %v5275, 0.0
        %v5660 = vmax.f32 %v5276, 0.0
        %v5661 = vmax.f32 %v5277, 0.0
        %v5662 = vmax.f32 %v5278, 0.0
        %v5663 = vmax.f32 %v5279, 0.0
        %v5664 = vmax.f32 %v5280, 0.0
        %v5665 = vmax.f32 %v5281, 0.0
        %v5666 = vmax.f32 %v5282, 0.0
        %v5667 = vmax.f32 %v5283, 0.0
        %v5668 = vmax.f32 %v5284, 0.0
        %v5669 = vmax.f32 %v5285, 0.0
        %v5670 = vmax.f32 %v5286, 0.0
        %v5671 = vmax.f32 %v5287, 0.0
        %v5672 = vmax.f32 %v5288, 0.0
        %v5673 = vmax.f32 %v5289, 0.0
        %v5674 = vmax.f32 %v5290, 0.0
        %v5675 = vmax.f32 %v5291, 0.0
        %v5676 = vmax.f32 %v5292, 0.0
        %v5677 = vmax.f32 %v5293, 0.0
        %v5678 = vmax.f32 %v5294, 0.0
        %v5679 = vmax.f32 %v5295, 0.0
        %v5680 = vmax.f32 %v5296, 0.0
        %v5681 = vmax.f32 %v5297, 0.0
        %v5682 = vmax.f32 %v5298, 0.0
        %v5683 = vmax.f32 %v5299, 0.0
        %v5684 = vmax.f32 %v5300, 0.0
        %v5685 = vmax.f32 %v5301, 0.0
        %v5686 = vmax.f32 %v5302, 0.0
        %v5687 = vmax.f32 %v5303, 0.0
        %v5688 = vmax.f32 %v5304, 0.0
        %v5689 = vmax.f32 %v5305, 0.0
        %v5690 = vmax.f32 %v5306, 0.0
        %v5691 = vmax.f32 %v5307, 0.0
        %v5692 = vmax.f32 %v5308, 0.0
        %v5693 = vmax.f32 %v5309, 0.0
        %v5694 = vmax.f32 %v5310, 0.0
        %v5695 = vmax.f32 %v5311, 0.0
        %v5696 = vmax.f32 %v5312, 0.0
        %v5697 = vmax.f32 %v5313, 0.0
        %v5698 = vmax.f32 %v5314, 0.0
        %v5699 = vmax.f32 %v5315, 0.0
        %v5700 = vmax.f32 %v5316, 0.0
        %v5701 = vmul.f32 %v3768, %v5317
        %v5702 = vmul.f32 %v3769, %v5318
        %v5703 = vmul.f32 %v3770, %v5319
        %v5704 = vmul.f32 %v3771, %v5320
        %v5705 = vmul.f32 %v3772, %v5321
        %v5706 = vmul.f32 %v3773, %v5322
        %v5707 = vmul.f32 %v3774, %v5323
        %v5708 = vmul.f32 %v3775, %v5324
        %v5709 = vmul.f32 %v3776, %v5325
        %v5710 = vmul.f32 %v3777, %v5326
        %v5711 = vmul.f32 %v3778, %v5327
        %v5712 = vmul.f32 %v3779, %v5328
        %v5713 = vmul.f32 %v3780, %v5329
        %v5714 = vmul.f32 %v3781, %v5330
        %v5715 = vmul.f32 %v3782, %v5331
        %v5716 = vmul.f32 %v3783, %v5332
        %v5717 = vmul.f32 %v3784, %v5333
        %v5718 = vmul.f32 %v3785, %v5334
        %v5719 = vmul.f32 %v3786, %v5335
        %v5720 = vmul.f32 %v3787, %v5336
        %v5721 = vmul.f32 %v3788, %v5337
        %v5722 = vmul.f32 %v3789, %v5338
        %v5723 = vmul.f32 %v3790, %v5339
        %v5724 = vmul.f32 %v3791, %v5340
        %v5725 = vmul.f32 %v3792, %v5341
        %v5726 = vmul.f32 %v3793, %v5342
        %v5727 = vmul.f32 %v3794, %v5343
        %v5728 = vmul.f32 %v3795, %v5344
        %v5729 = vmul.f32 %v3796, %v5345
        %v5730 = vmul.f32 %v3797, %v5346
        %v5731 = vmul.f32 %v3798, %v5347
        %v5732 = vmul.f32 %v3799, %v5348
        %v5733 = vmul.f32 %v3800, %v5349
        %v5734 = vmul.f32 %v3801, %v5350
        %v5735 = vmul.f32 %v3802, %v5351
        %v5736 = vmul.f32 %v3803, %v5352
        %v5737 = vmul.f32 %v3804, %v5353
        %v5738 = vmul.f32 %v3805, %v5354
        %v5739 = vmul.f32 %v3806, %v5355
        %v5740 = vmul.f32 %v3807, %v5356
        %v5741 = vmul.f32 %v3808, %v5357
        %v5742 = vmul.f32 %v3809, %v5358
        %v5743 = vmul.f32 %v3810, %v5359
        %v5744 = vmul.f32 %v3811, %v5360
        %v5745 = vmul.f32 %v3812, %v5361
        %v5746 = vmul.f32 %v3813, %v5362
        %v5747 = vmul.f32 %v3814, %v5363
        %v5748 = vmul.f32 %v3815, %v5364
        %v5749 = vmul.f32 %v3816, %v5365
        %v5750 = vmul.f32 %v3817, %v5366
        %v5751 = vmul.f32 %v3818, %v5367
        %v5752 = vmul.f32 %v3819, %v5368
        %v5753 = vmul.f32 %v3820, %v5369
        %v5754 = vmul.f32 %v3821, %v5370
        %v5755 = vmul.f32 %v3822, %v5371
        %v5756 = vmul.f32 %v3823, %v5372
        %v5757 = vmul.f32 %v3824, %v5373
        %v5758 = vmul.f32 %v3825, %v5374
        %v5759 = vmul.f32 %v3826, %v5375
        %v5760 = vmul.f32 %v3827, %v5376
        %v5761 = vmul.f32 %v3828, %v5377
        %v5762 = vmul.f32 %v3829, %v5378
        %v5763 = vmul.f32 %v3830, %v5379
        %v5764 = vmul.f32 %v3831, %v5380
        %v5765 = vmul.f32 %v3832, %v5381
        %v5766 = vmul.f32 %v3833, %v5382
        %v5767 = vmul.f32 %v3834, %v5383
        %v5768 = vmul.f32 %v3835, %v5384
        %v5769 = vmul.f32 %v3836, %v5385
        %v5770 = vmul.f32 %v3837, %v5386
        %v5771 = vmul.f32 %v3838, %v5387
        %v5772 = vmul.f32 %v3839, %v5388
        %v5773 = vmul.f32 %v3840, %v5389
        %v5774 = vmul.f32 %v3841, %v5390
        %v5775 = vmul.f32 %v3842, %v5391
        %v5776 = vmul.f32 %v3843, %v5392
        %v5777 = vmul.f32 %v3844, %v5393
        %v5778 = vmul.f32 %v3845, %v5394
        %v5779 = vmul.f32 %v3846, %v5395
        %v5780 = vmul.f32 %v3847, %v5396
        %v5781 = vmul.f32 %v3848, %v5397
        %v5782 = vmul.f32 %v3849, %v5398
        %v5783 = vmul.f32 %v3850, %v5399
        %v5784 = vmul.f32 %v3851, %v5400
        %v5785 = vmul.f32 %v3852, %v5401
        %v5786 = vmul.f32 %v3853, %v5402
        %v5787 = vmul.f32 %v3854, %v5403
        %v5788 = vmul.f32 %v3855, %v5404
        %v5789 = vmul.f32 %v3856, %v5405
        %v5790 = vmul.f32 %v3857, %v5406
        %v5791 = vmul.f32 %v3858, %v5407
        %v5792 = vmul.f32 %v3859, %v5408
        %v5793 = vmul.f32 %v3860, %v5409
        %v5794 = vmul.f32 %v3861, %v5410
        %v5795 = vmul.f32 %v3862, %v5411
        %v5796 = vmul.f32 %v3863, %v5412
        %v5797 = vmul.f32 %v3864, %v5413
        %v5798 = vmul.f32 %v3865, %v5414
        %v5799 = vmul.f32 %v3866, %v5415
        %v5800 = vmul.f32 %v3867, %v5416
        %v5801 = vmul.f32 %v3868, %v5417
        %v5802 = vmul.f32 %v3869, %v5418
        %v5803 = vmul.f32 %v3870, %v5419
        %v5804 = vmul.f32 %v3871, %v5420
        %v5805 = vmul.f32 %v3872, %v5421
        %v5806 = vmul.f32 %v3873, %v5422
        %v5807 = vmul.f32 %v3874, %v5423
        %v5808 = vmul.f32 %v3875, %v5424
        %v5809 = vmul.f32 %v3876, %v5425
        %v5810 = vmul.f32 %v3877, %v5426
        %v5811 = vmul.f32 %v3878, %v5427
        %v5812 = vmul.f32 %v3879, %v5428
        %v5813 = vmul.f32 %v3880, %v5429
        %v5814 = vmul.f32 %v3881, %v5430
        %v5815 = vmul.f32 %v3882, %v5431
        %v5816 = vmul.f32 %v3883, %v5432
        %v5817 = vmul.f32 %v3884, %v5433
        %v5818 = vmul.f32 %v3885, %v5434
        %v5819 = vmul.f32 %v3886, %v5435
        %v5820 = vmul.f32 %v3887, %v5436
        %v5821 = vmul.f32 %v3888, %v5437
        %v5822 = vmul.f32 %v3889, %v5438
        %v5823 = vmul.f32 %v3890, %v5439
        %v5824 = vmul.f32 %v3891, %v5440
        %v5825 = vmul.f32 %v3892, %v5441
        %v5826 = vmul.f32 %v3893, %v5442
        %v5827 = vmul.f32 %v3894, %v5443
        %v5828 = vmul.f32 %v3895, %v5444
        %v5829 = vmul.f32 %v3896, %v5445
        %v5830 = vmul.f32 %v3897, %v5446
        %v5831 = vmul.f32 %v3898, %v5447
        %v5832 = vmul.f32 %v3899, %v5448
        %v5833 = vmul.f32 %v3900, %v5449
        %v5834 = vmul.f32 %v3901, %v5450
        %v5835 = vmul.f32 %v3902, %v5451
        %v5836 = vmul.f32 %v3903, %v5452
        %v5837 = vmul.f32 %v3904, %v5453
        %v5838 = vmul.f32 %v3905, %v5454
        %v5839 = vmul.f32 %v3906, %v5455
        %v5840 = vmul.f32 %v3907, %v5456
        %v5841 = vmul.f32 %v3908, %v5457
        %v5842 = vmul.f32 %v3909, %v5458
        %v5843 = vmul.f32 %v3910, %v5459
        %v5844 = vmul.f32 %v3911, %v5460
        %v5845 = vmul.f32 %v3912, %v5461
        %v5846 = vmul.f32 %v3913, %v5462
        %v5847 = vmul.f32 %v3914, %v5463
        %v5848 = vmul.f32 %v3915, %v5464
        %v5849 = vmul.f32 %v3916, %v5465
        %v5850 = vmul.f32 %v3917, %v5466
        %v5851 = vmul.f32 %v3918, %v5467
        %v5852 = vmul.f32 %v3919, %v5468
        %v5853 = vmul.f32 %v3920, %v5469
        %v5854 = vmul.f32 %v3921, %v5470
        %v5855 = vmul.f32 %v3922, %v5471
        %v5856 = vmul.f32 %v3923, %v5472
        %v5857 = vmul.f32 %v3924, %v5473
        %v5858 = vmul.f32 %v3925, %v5474
        %v5859 = vmul.f32 %v3926, %v5475
        %v5860 = vmul.f32 %v3927, %v5476
        %v5861 = vmul.f32 %v3928, %v5477
        %v5862 = vmul.f32 %v3929, %v5478
        %v5863 = vmul.f32 %v3930, %v5479
        %v5864 = vmul.f32 %v3931, %v5480
        %v5865 = vmul.f32 %v3932, %v5481
        %v5866 = vmul.f32 %v3933, %v5482
        %v5867 = vmul.f32 %v3934, %v5483
        %v5868 = vmul.f32 %v3935, %v5484
        %v5869 = vmul.f32 %v3936, %v5485
        %v5870 = vmul.f32 %v3937, %v5486
        %v5871 = vmul.f32 %v3938, %v5487
        %v5872 = vmul.f32 %v3939, %v5488
        %v5873 = vmul.f32 %v3940, %v5489
        %v5874 = vmul.f32 %v3941, %v5490
        %v5875 = vmul.f32 %v3942, %v5491
        %v5876 = vmul.f32 %v3943, %v5492
        %v5877 = vmul.f32 %v3944, %v5493
        %v5878 = vmul.f32 %v3945, %v5494
        %v5879 = vmul.f32 %v3946, %v5495
        %v5880 = vmul.f32 %v3947, %v5496
        %v5881 = vmul.f32 %v3948, %v5497
        %v5882 = vmul.f32 %v3949, %v5498
        %v5883 = vmul.f32 %v3950, %v5499
        %v5884 = vmul.f32 %v3951, %v5500
        %v5885 = vmul.f32 %v3952, %v5501
        %v5886 = vmul.f32 %v3953, %v5502
        %v5887 = vmul.f32 %v3954, %v5503
        %v5888 = vmul.f32 %v3955, %v5504
        %v5889 = vmul.f32 %v3956, %v5505
        %v5890 = vmul.f32 %v3957, %v5506
        %v5891 = vmul.f32 %v3958, %v5507
        %v5892 = vmul.f32 %v3959, %v5508
        %v5893 = vmul.f32 %v3960, %v5509
        %v5894 = vmul.f32 %v3961, %v5510
        %v5895 = vmul.f32 %v3962, %v5511
        %v5896 = vmul.f32 %v3963, %v5512
        %v5897 = vmul.f32 %v3964, %v5513
        %v5898 = vmul.f32 %v3965, %v5514
        %v5899 = vmul.f32 %v3966, %v5515
        %v5900 = vmul.f32 %v3967, %v5516
        %v5901 = vmul.f32 %v3968, %v5517
        %v5902 = vmul.f32 %v3969, %v5518
        %v5903 = vmul.f32 %v3970, %v5519
        %v5904 = vmul.f32 %v3971, %v5520
        %v5905 = vmul.f32 %v3972, %v5521
        %v5906 = vmul.f32 %v3973, %v5522
        %v5907 = vmul.f32 %v3974, %v5523
        %v5908 = vmul.f32 %v3975, %v5524
        %v5909 = vmul.f32 %v3976, %v5525
        %v5910 = vmul.f32 %v3977, %v5526
        %v5911 = vmul.f32 %v3978, %v5527
        %v5912 = vmul.f32 %v3979, %v5528
        %v5913 = vmul.f32 %v3980, %v5529
        %v5914 = vmul.f32 %v3981, %v5530
        %v5915 = vmul.f32 %v3982, %v5531
        %v5916 = vmul.f32 %v3983, %v5532
        %v5917 = vmul.f32 %v3984, %v5533
        %v5918 = vmul.f32 %v3985, %v5534
        %v5919 = vmul.f32 %v3986, %v5535
        %v5920 = vmul.f32 %v3987, %v5536
        %v5921 = vmul.f32 %v3988, %v5537
        %v5922 = vmul.f32 %v3989, %v5538
        %v5923 = vmul.f32 %v3990, %v5539
        %v5924 = vmul.f32 %v3991, %v5540
        %v5925 = vmul.f32 %v3992, %v5541
        %v5926 = vmul.f32 %v3993, %v5542
        %v5927 = vmul.f32 %v3994, %v5543
        %v5928 = vmul.f32 %v3995, %v5544
        %v5929 = vmul.f32 %v3996, %v5545
        %v5930 = vmul.f32 %v3997, %v5546
        %v5931 = vmul.f32 %v3998, %v5547
        %v5932 = vmul.f32 %v3999, %v5548
        %v5933 = vmul.f32 %v4000, %v5549
        %v5934 = vmul.f32 %v4001, %v5550
        %v5935 = vmul.f32 %v4002, %v5551
        %v5936 = vmul.f32 %v4003, %v5552
        %v5937 = vmul.f32 %v4004, %v5553
        %v5938 = vmul.f32 %v4005, %v5554
        %v5939 = vmul.f32 %v4006, %v5555
        %v5940 = vmul.f32 %v4007, %v5556
        %v5941 = vmul.f32 %v4008, %v5557
        %v5942 = vmul.f32 %v4009, %v5558
        %v5943 = vmul.f32 %v4010, %v5559
        %v5944 = vmul.f32 %v4011, %v5560
        %v5945 = vmul.f32 %v4012, %v5561
        %v5946 = vmul.f32 %v4013, %v5562
        %v5947 = vmul.f32 %v4014, %v5563
        %v5948 = vmul.f32 %v4015, %v5564
        %v5949 = vmul.f32 %v4016, %v5565
        %v5950 = vmul.f32 %v4017, %v5566
        %v5951 = vmul.f32 %v4018, %v5567
        %v5952 = vmul.f32 %v4019, %v5568
        %v5953 = vmul.f32 %v4020, %v5569
        %v5954 = vmul.f32 %v4021, %v5570
        %v5955 = vmul.f32 %v4022, %v5571
        %v5956 = vmul.f32 %v4023, %v5572
        %v5957 = vmul.f32 %v4024, %v5573
        %v5958 = vmul.f32 %v4025, %v5574
        %v5959 = vmul.f32 %v4026, %v5575
        %v5960 = vmul.f32 %v4027, %v5576
        %v5961 = vmul.f32 %v4028, %v5577
        %v5962 = vmul.f32 %v4029, %v5578
        %v5963 = vmul.f32 %v4030, %v5579
        %v5964 = vmul.f32 %v4031, %v5580
        %v5965 = vmul.f32 %v4032, %v5581
        %v5966 = vmul.f32 %v4033, %v5582
        %v5967 = vmul.f32 %v4034, %v5583
        %v5968 = vmul.f32 %v4035, %v5584
        %v5969 = vmul.f32 %v4036, %v5585
        %v5970 = vmul.f32 %v4037, %v5586
        %v5971 = vmul.f32 %v4038, %v5587
        %v5972 = vmul.f32 %v4039, %v5588
        %v5973 = vmul.f32 %v4040, %v5589
        %v5974 = vmul.f32 %v4041, %v5590
        %v5975 = vmul.f32 %v4042, %v5591
        %v5976 = vmul.f32 %v4043, %v5592
        %v5977 = vmul.f32 %v4044, %v5593
        %v5978 = vmul.f32 %v4045, %v5594
        %v5979 = vmul.f32 %v4046, %v5595
        %v5980 = vmul.f32 %v4047, %v5596
        %v5981 = vmul.f32 %v4048, %v5597
        %v5982 = vmul.f32 %v4049, %v5598
        %v5983 = vmul.f32 %v4050, %v5599
        %v5984 = vmul.f32 %v4051, %v5600
        %v5985 = vmul.f32 %v4052, %v5601
        %v5986 = vmul.f32 %v4053, %v5602
        %v5987 = vmul.f32 %v4054, %v5603
        %v5988 = vmul.f32 %v4055, %v5604
        %v5989 = vmul.f32 %v4056, %v5605
        %v5990 = vmul.f32 %v4057, %v5606
        %v5991 = vmul.f32 %v4058, %v5607
        %v5992 = vmul.f32 %v4059, %v5608
        %v5993 = vmul.f32 %v4060, %v5609
        %v5994 = vmul.f32 %v4061, %v5610
        %v5995 = vmul.f32 %v4062, %v5611
        %v5996 = vmul.f32 %v4063, %v5612
        %v5997 = vmul.f32 %v4064, %v5613
        %v5998 = vmul.f32 %v4065, %v5614
        %v5999 = vmul.f32 %v4066, %v5615
        %v6000 = vmul.f32 %v4067, %v5616
        %v6001 = vmul.f32 %v4068, %v5617
        %v6002 = vmul.f32 %v4069, %v5618
        %v6003 = vmul.f32 %v4070, %v5619
        %v6004 = vmul.f32 %v4071, %v5620
        %v6005 = vmul.f32 %v4072, %v5621
        %v6006 = vmul.f32 %v4073, %v5622
        %v6007 = vmul.f32 %v4074, %v5623
        %v6008 = vmul.f32 %v4075, %v5624
        %v6009 = vmul.f32 %v4076, %v5625
        %v6010 = vmul.f32 %v4077, %v5626
        %v6011 = vmul.f32 %v4078, %v5627
        %v6012 = vmul.f32 %v4079, %v5628
        %v6013 = vmul.f32 %v4080, %v5629
        %v6014 = vmul.f32 %v4081, %v5630
        %v6015 = vmul.f32 %v4082, %v5631
        %v6016 = vmul.f32 %v4083, %v5632
        %v6017 = vmul.f32 %v4084, %v5633
        %v6018 = vmul.f32 %v4085, %v5634
        %v6019 = vmul.f32 %v4086, %v5635
        %v6020 = vmul.f32 %v4087, %v5636
        %v6021 = vmul.f32 %v4088, %v5637
        %v6022 = vmul.f32 %v4089, %v5638
        %v6023 = vmul.f32 %v4090, %v5639
        %v6024 = vmul.f32 %v4091, %v5640
        %v6025 = vmul.f32 %v4092, %v5641
        %v6026 = vmul.f32 %v4093, %v5642
        %v6027 = vmul.f32 %v4094, %v5643
        %v6028 = vmul.f32 %v4095, %v5644
        %v6029 = vmul.f32 %v4096, %v5645
        %v6030 = vmul.f32 %v4097, %v5646
        %v6031 = vmul.f32 %v4098, %v5647
        %v6032 = vmul.f32 %v4099, %v5648
        %v6033 = vmul.f32 %v4100, %v5649
        %v6034 = vmul.f32 %v4101, %v5650
        %v6035 = vmul.f32 %v4102, %v5651
        %v6036 = vmul.f32 %v4103, %v5652
        %v6037 = vmul.f32 %v4104, %v5653
        %v6038 = vmul.f32 %v4105, %v5654
        %v6039 = vmul.f32 %v4106, %v5655
        %v6040 = vmul.f32 %v4107, %v5656
        %v6041 = vmul.f32 %v4108, %v5657
        %v6042 = vmul.f32 %v4109, %v5658
        %v6043 = vmul.f32 %v4110, %v5659
        %v6044 = vmul.f32 %v4111, %v5660
        %v6045 = vmul.f32 %v4112, %v5661
        %v6046 = vmul.f32 %v4113, %v5662
        %v6047 = vmul.f32 %v4114, %v5663
        %v6048 = vmul.f32 %v4115, %v5664
        %v6049 = vmul.f32 %v4116, %v5665
        %v6050 = vmul.f32 %v4117, %v5666
        %v6051 = vmul.f32 %v4118, %v5667
        %v6052 = vmul.f32 %v4119, %v5668
        %v6053 = vmul.f32 %v4120, %v5669
        %v6054 = vmul.f32 %v4121, %v5670
        %v6055 = vmul.f32 %v4122, %v5671
        %v6056 = vmul.f32 %v4123, %v5672
        %v6057 = vmul.f32 %v4124, %v5673
        %v6058 = vmul.f32 %v4125, %v5674
        %v6059 = vmul.f32 %v4126, %v5675
        %v6060 = vmul.f32 %v4127, %v5676
        %v6061 = vmul.f32 %v4128, %v5677
        %v6062 = vmul.f32 %v4129, %v5678
        %v6063 = vmul.f32 %v4130, %v5679
        %v6064 = vmul.f32 %v4131, %v5680
        %v6065 = vmul.f32 %v4132, %v5681
        %v6066 = vmul.f32 %v4133, %v5682
        %v6067 = vmul.f32 %v4134, %v5683
        %v6068 = vmul.f32 %v4135, %v5684
        %v6069 = vmul.f32 %v4136, %v5685
        %v6070 = vmul.f32 %v4137, %v5686
        %v6071 = vmul.f32 %v4138, %v5687
        %v6072 = vmul.f32 %v4139, %v5688
        %v6073 = vmul.f32 %v4140, %v5689
        %v6074 = vmul.f32 %v4141, %v5690
        %v6075 = vmul.f32 %v4142, %v5691
        %v6076 = vmul.f32 %v4143, %v5692
        %v6077 = vmul.f32 %v4144, %v5693
        %v6078 = vmul.f32 %v4145, %v5694
        %v6079 = vmul.f32 %v4146, %v5695
        %v6080 = vmul.f32 %v4147, %v5696
        %v6081 = vmul.f32 %v4148, %v5697
        %v6082 = vmul.f32 %v4149, %v5698
        %v6083 = vmul.f32 %v4150, %v5699
        %v6084 = vmul.f32 %v4151, %v5700
        %v6085 = vpack.c.bf16 %v5707, %v5701
        %v6086 = vpack.c.bf16 %v5708, %v5702
        %v6087 = vpack.c.bf16 %v5709, %v5703
        %v6088 = vpack.c.bf16 %v5710, %v5704
        %v6089 = vpack.c.bf16 %v5711, %v5705
        %v6090 = vpack.c.bf16 %v5712, %v5706
        %v6091 = vpack.c.bf16 %v5719, %v5713
        %v6092 = vpack.c.bf16 %v5720, %v5714
        %v6093 = vpack.c.bf16 %v5721, %v5715
        %v6094 = vpack.c.bf16 %v5722, %v5716
        %v6095 = vpack.c.bf16 %v5723, %v5717
        %v6096 = vpack.c.bf16 %v5724, %v5718
        %v6097 = vpack.c.bf16 %v5731, %v5725
        %v6098 = vpack.c.bf16 %v5732, %v5726
        %v6099 = vpack.c.bf16 %v5733, %v5727
        %v6100 = vpack.c.bf16 %v5734, %v5728
        %v6101 = vpack.c.bf16 %v5735, %v5729
        %v6102 = vpack.c.bf16 %v5736, %v5730
        %v6103 = vpack.c.bf16 %v5743, %v5737
        %v6104 = vpack.c.bf16 %v5744, %v5738
        %v6105 = vpack.c.bf16 %v5745, %v5739
        %v6106 = vpack.c.bf16 %v5746, %v5740
        %v6107 = vpack.c.bf16 %v5747, %v5741
        %v6108 = vpack.c.bf16 %v5748, %v5742
        %v6109 = vpack.c.bf16 %v5755, %v5749
        %v6110 = vpack.c.bf16 %v5756, %v5750
        %v6111 = vpack.c.bf16 %v5757, %v5751
        %v6112 = vpack.c.bf16 %v5758, %v5752
        %v6113 = vpack.c.bf16 %v5759, %v5753
        %v6114 = vpack.c.bf16 %v5760, %v5754
        %v6115 = vpack.c.bf16 %v5767, %v5761
        %v6116 = vpack.c.bf16 %v5768, %v5762
        %v6117 = vpack.c.bf16 %v5769, %v5763
        %v6118 = vpack.c.bf16 %v5770, %v5764
        %v6119 = vpack.c.bf16 %v5771, %v5765
        %v6120 = vpack.c.bf16 %v5772, %v5766
        %v6121 = vpack.c.bf16 %v5779, %v5773
        %v6122 = vpack.c.bf16 %v5780, %v5774
        %v6123 = vpack.c.bf16 %v5781, %v5775
        %v6124 = vpack.c.bf16 %v5782, %v5776
        %v6125 = vpack.c.bf16 %v5783, %v5777
        %v6126 = vpack.c.bf16 %v5784, %v5778
        %v6127 = vpack.c.bf16 %v5791, %v5785
        %v6128 = vpack.c.bf16 %v5792, %v5786
        %v6129 = vpack.c.bf16 %v5793, %v5787
        %v6130 = vpack.c.bf16 %v5794, %v5788
        %v6131 = vpack.c.bf16 %v5795, %v5789
        %v6132 = vpack.c.bf16 %v5796, %v5790
        %v6133 = vpack.c.bf16 %v5803, %v5797
        %v6134 = vpack.c.bf16 %v5804, %v5798
        %v6135 = vpack.c.bf16 %v5805, %v5799
        %v6136 = vpack.c.bf16 %v5806, %v5800
        %v6137 = vpack.c.bf16 %v5807, %v5801
        %v6138 = vpack.c.bf16 %v5808, %v5802
        %v6139 = vpack.c.bf16 %v5815, %v5809
        %v6140 = vpack.c.bf16 %v5816, %v5810
        %v6141 = vpack.c.bf16 %v5817, %v5811
        %v6142 = vpack.c.bf16 %v5818, %v5812
        %v6143 = vpack.c.bf16 %v5819, %v5813
        %v6144 = vpack.c.bf16 %v5820, %v5814
        %v6145 = vpack.c.bf16 %v5827, %v5821
        %v6146 = vpack.c.bf16 %v5828, %v5822
        %v6147 = vpack.c.bf16 %v5829, %v5823
        %v6148 = vpack.c.bf16 %v5830, %v5824
        %v6149 = vpack.c.bf16 %v5831, %v5825
        %v6150 = vpack.c.bf16 %v5832, %v5826
        %v6151 = vpack.c.bf16 %v5839, %v5833
        %v6152 = vpack.c.bf16 %v5840, %v5834
        %v6153 = vpack.c.bf16 %v5841, %v5835
        %v6154 = vpack.c.bf16 %v5842, %v5836
        %v6155 = vpack.c.bf16 %v5843, %v5837
        %v6156 = vpack.c.bf16 %v5844, %v5838
        %v6157 = vpack.c.bf16 %v5851, %v5845
        %v6158 = vpack.c.bf16 %v5852, %v5846
        %v6159 = vpack.c.bf16 %v5853, %v5847
        %v6160 = vpack.c.bf16 %v5854, %v5848
        %v6161 = vpack.c.bf16 %v5855, %v5849
        %v6162 = vpack.c.bf16 %v5856, %v5850
        %v6163 = vpack.c.bf16 %v5863, %v5857
        %v6164 = vpack.c.bf16 %v5864, %v5858
        %v6165 = vpack.c.bf16 %v5865, %v5859
        %v6166 = vpack.c.bf16 %v5866, %v5860
        %v6167 = vpack.c.bf16 %v5867, %v5861
        %v6168 = vpack.c.bf16 %v5868, %v5862
        %v6169 = vpack.c.bf16 %v5875, %v5869
        %v6170 = vpack.c.bf16 %v5876, %v5870
        %v6171 = vpack.c.bf16 %v5877, %v5871
        %v6172 = vpack.c.bf16 %v5878, %v5872
        %v6173 = vpack.c.bf16 %v5879, %v5873
        %v6174 = vpack.c.bf16 %v5880, %v5874
        %v6175 = vpack.c.bf16 %v5887, %v5881
        %v6176 = vpack.c.bf16 %v5888, %v5882
        %v6177 = vpack.c.bf16 %v5889, %v5883
        %v6178 = vpack.c.bf16 %v5890, %v5884
        %v6179 = vpack.c.bf16 %v5891, %v5885
        %v6180 = vpack.c.bf16 %v5892, %v5886
        %v6181 = vpack.c.bf16 %v5899, %v5893
        %v6182 = vpack.c.bf16 %v5900, %v5894
        %v6183 = vpack.c.bf16 %v5901, %v5895
        %v6184 = vpack.c.bf16 %v5902, %v5896
        %v6185 = vpack.c.bf16 %v5903, %v5897
        %v6186 = vpack.c.bf16 %v5904, %v5898
        %v6187 = vpack.c.bf16 %v5911, %v5905
        %v6188 = vpack.c.bf16 %v5912, %v5906
        %v6189 = vpack.c.bf16 %v5913, %v5907
        %v6190 = vpack.c.bf16 %v5914, %v5908
        %v6191 = vpack.c.bf16 %v5915, %v5909
        %v6192 = vpack.c.bf16 %v5916, %v5910
        %v6193 = vpack.c.bf16 %v5923, %v5917
        %v6194 = vpack.c.bf16 %v5924, %v5918
        %v6195 = vpack.c.bf16 %v5925, %v5919
        %v6196 = vpack.c.bf16 %v5926, %v5920
        %v6197 = vpack.c.bf16 %v5927, %v5921
        %v6198 = vpack.c.bf16 %v5928, %v5922
        %v6199 = vpack.c.bf16 %v5935, %v5929
        %v6200 = vpack.c.bf16 %v5936, %v5930
        %v6201 = vpack.c.bf16 %v5937, %v5931
        %v6202 = vpack.c.bf16 %v5938, %v5932
        %v6203 = vpack.c.bf16 %v5939, %v5933
        %v6204 = vpack.c.bf16 %v5940, %v5934
        %v6205 = vpack.c.bf16 %v5947, %v5941
        %v6206 = vpack.c.bf16 %v5948, %v5942
        %v6207 = vpack.c.bf16 %v5949, %v5943
        %v6208 = vpack.c.bf16 %v5950, %v5944
        %v6209 = vpack.c.bf16 %v5951, %v5945
        %v6210 = vpack.c.bf16 %v5952, %v5946
        %v6211 = vpack.c.bf16 %v5959, %v5953
        %v6212 = vpack.c.bf16 %v5960, %v5954
        %v6213 = vpack.c.bf16 %v5961, %v5955
        %v6214 = vpack.c.bf16 %v5962, %v5956
        %v6215 = vpack.c.bf16 %v5963, %v5957
        %v6216 = vpack.c.bf16 %v5964, %v5958
        %v6217 = vpack.c.bf16 %v5971, %v5965
        %v6218 = vpack.c.bf16 %v5972, %v5966
        %v6219 = vpack.c.bf16 %v5973, %v5967
        %v6220 = vpack.c.bf16 %v5974, %v5968
        %v6221 = vpack.c.bf16 %v5975, %v5969
        %v6222 = vpack.c.bf16 %v5976, %v5970
        %v6223 = vpack.c.bf16 %v5983, %v5977
        %v6224 = vpack.c.bf16 %v5984, %v5978
        %v6225 = vpack.c.bf16 %v5985, %v5979
        %v6226 = vpack.c.bf16 %v5986, %v5980
        %v6227 = vpack.c.bf16 %v5987, %v5981
        %v6228 = vpack.c.bf16 %v5988, %v5982
        %v6229 = vpack.c.bf16 %v5995, %v5989
        %v6230 = vpack.c.bf16 %v5996, %v5990
        %v6231 = vpack.c.bf16 %v5997, %v5991
        %v6232 = vpack.c.bf16 %v5998, %v5992
        %v6233 = vpack.c.bf16 %v5999, %v5993
        %v6234 = vpack.c.bf16 %v6000, %v5994
        %v6235 = vpack.c.bf16 %v6007, %v6001
        %v6236 = vpack.c.bf16 %v6008, %v6002
        %v6237 = vpack.c.bf16 %v6009, %v6003
        %v6238 = vpack.c.bf16 %v6010, %v6004
        %v6239 = vpack.c.bf16 %v6011, %v6005
        %v6240 = vpack.c.bf16 %v6012, %v6006
        %v6241 = vpack.c.bf16 %v6019, %v6013
        %v6242 = vpack.c.bf16 %v6020, %v6014
        %v6243 = vpack.c.bf16 %v6021, %v6015
        %v6244 = vpack.c.bf16 %v6022, %v6016
        %v6245 = vpack.c.bf16 %v6023, %v6017
        %v6246 = vpack.c.bf16 %v6024, %v6018
        %v6247 = vpack.c.bf16 %v6031, %v6025
        %v6248 = vpack.c.bf16 %v6032, %v6026
        %v6249 = vpack.c.bf16 %v6033, %v6027
        %v6250 = vpack.c.bf16 %v6034, %v6028
        %v6251 = vpack.c.bf16 %v6035, %v6029
        %v6252 = vpack.c.bf16 %v6036, %v6030
        %v6253 = vpack.c.bf16 %v6043, %v6037
        %v6254 = vpack.c.bf16 %v6044, %v6038
        %v6255 = vpack.c.bf16 %v6045, %v6039
        %v6256 = vpack.c.bf16 %v6046, %v6040
        %v6257 = vpack.c.bf16 %v6047, %v6041
        %v6258 = vpack.c.bf16 %v6048, %v6042
        %v6259 = vpack.c.bf16 %v6055, %v6049
        %v6260 = vpack.c.bf16 %v6056, %v6050
        %v6261 = vpack.c.bf16 %v6057, %v6051
        %v6262 = vpack.c.bf16 %v6058, %v6052
        %v6263 = vpack.c.bf16 %v6059, %v6053
        %v6264 = vpack.c.bf16 %v6060, %v6054
        %v6265 = vpack.c.bf16 %v6067, %v6061
        %v6266 = vpack.c.bf16 %v6068, %v6062
        %v6267 = vpack.c.bf16 %v6069, %v6063
        %v6268 = vpack.c.bf16 %v6070, %v6064
        %v6269 = vpack.c.bf16 %v6071, %v6065
        %v6270 = vpack.c.bf16 %v6072, %v6066
        %v6271 = vpack.c.bf16 %v6079, %v6073
        %v6272 = vpack.c.bf16 %v6080, %v6074
        %v6273 = vpack.c.bf16 %v6081, %v6075
        %v6274 = vpack.c.bf16 %v6082, %v6076
        %v6275 = vpack.c.bf16 %v6083, %v6077
        %v6276 = vpack.c.bf16 %v6084, %v6078
        %v6277 = vld [vmem:[%s3] sm:$0xf]
        %v6278 = vld [vmem:[%s3 + $0x4] sm:$0xf]
        %v6279 = vld [vmem:[%s3 + $0x8] sm:$0xf]
        %v6280 = vld [vmem:[%s3 + $0xc] sm:$0xf]
        %v6281 = vld [vmem:[%s3 + $0x10] sm:$0xf]
        %v6282 = vld [vmem:[%s3 + $0x14] sm:$0xf]
        %v6283 = vld [vmem:[%s3 + $0x18] sm:$0xf]
        %v6284 = vld [vmem:[%s3 + $0x1c] sm:$0xf]
        %v6285 = vld [vmem:[%s3 + $0x20] sm:$0xf]
        %v6286 = vld [vmem:[%s3 + $0x24] sm:$0xf]
        %v6287 = vld [vmem:[%s3 + $0x28] sm:$0xf]
        %v6288 = vld [vmem:[%s3 + $0x2c] sm:$0xf]
        %v6289 = vld [vmem:[%s3 + $0x30] sm:$0xf]
        %v6290 = vld [vmem:[%s3 + $0x34] sm:$0xf]
        %v6291 = vld [vmem:[%s3 + $0x38] sm:$0xf]
        %v6292 = vld [vmem:[%s3 + $0x3c] sm:$0xf]
        %v6293 = vld [vmem:[%s3 + $0x40] sm:$0xf]
        %v6294 = vld [vmem:[%s3 + $0x44] sm:$0xf]
        %v6295 = vld [vmem:[%s3 + $0x48] sm:$0xf]
        %v6296 = vld [vmem:[%s3 + $0x4c] sm:$0xf]
        %v6297 = vld [vmem:[%s3 + $0x50] sm:$0xf]
        %v6298 = vld [vmem:[%s3 + $0x54] sm:$0xf]
        %v6299 = vld [vmem:[%s3 + $0x58] sm:$0xf]
        %v6300 = vld [vmem:[%s3 + $0x5c] sm:$0xf]
        %v6301 = vld [vmem:[%s3 + $0x60] sm:$0xf]
        %v6302 = vld [vmem:[%s3 + $0x64] sm:$0xf]
        %v6303 = vld [vmem:[%s3 + $0x68] sm:$0xf]
        %v6304 = vld [vmem:[%s3 + $0x6c] sm:$0xf]
        %v6305 = vld [vmem:[%s3 + $0x70] sm:$0xf]
        %v6306 = vld [vmem:[%s3 + $0x74] sm:$0xf]
        %v6307 = vld [vmem:[%s3 + $0x78] sm:$0xf]
        %v6308 = vld [vmem:[%s3 + $0x7c] sm:$0xf]
        %v6309 = vld [vmem:[%s3 + $0x80] sm:$0xf]
        %v6310 = vld [vmem:[%s3 + $0x84] sm:$0xf]
        %v6311 = vld [vmem:[%s3 + $0x88] sm:$0xf]
        %v6312 = vld [vmem:[%s3 + $0x8c] sm:$0xf]
        %v6313 = vld [vmem:[%s3 + $0x90] sm:$0xf]
        %v6314 = vld [vmem:[%s3 + $0x94] sm:$0xf]
        %v6315 = vld [vmem:[%s3 + $0x98] sm:$0xf]
        %v6316 = vld [vmem:[%s3 + $0x9c] sm:$0xf]
        %v6317 = vld [vmem:[%s3 + $0xa0] sm:$0xf]
        %v6318 = vld [vmem:[%s3 + $0xa4] sm:$0xf]
        %v6319 = vld [vmem:[%s3 + $0xa8] sm:$0xf]
        %v6320 = vld [vmem:[%s3 + $0xac] sm:$0xf]
        %v6321 = vld [vmem:[%s3 + $0xb0] sm:$0xf]
        %v6322 = vld [vmem:[%s3 + $0xb4] sm:$0xf]
        %v6323 = vld [vmem:[%s3 + $0xb8] sm:$0xf]
        %v6324 = vld [vmem:[%s3 + $0xbc] sm:$0xf]
        %v6325 = vld [vmem:[%s3 + $0xc0] sm:$0xf]
        %v6326 = vld [vmem:[%s3 + $0xc4] sm:$0xf]
        %v6327 = vld [vmem:[%s3 + $0xc8] sm:$0xf]
        %v6328 = vld [vmem:[%s3 + $0xcc] sm:$0xf]
        %v6329 = vld [vmem:[%s3 + $0xd0] sm:$0xf]
        %v6330 = vld [vmem:[%s3 + $0xd4] sm:$0xf]
        %v6331 = vld [vmem:[%s3 + $0xd8] sm:$0xf]
        %v6332 = vld [vmem:[%s3 + $0xdc] sm:$0xf]
        %v6333 = vld [vmem:[%s3 + $0xe0] sm:$0xf]
        %v6334 = vld [vmem:[%s3 + $0xe4] sm:$0xf]
        %v6335 = vld [vmem:[%s3 + $0xe8] sm:$0xf]
        %v6336 = vld [vmem:[%s3 + $0xec] sm:$0xf]
        %v6337 = vld [vmem:[%s3 + $0xf0] sm:$0xf]
        %v6338 = vld [vmem:[%s3 + $0xf4] sm:$0xf]
        %v6339 = vld [vmem:[%s3 + $0xf8] sm:$0xf]
        %v6340 = vld [vmem:[%s3 + $0xfc] sm:$0xf]
        %v6341 = vld [vmem:[%s3 + $0x100] sm:$0xf]
        %v6342 = vld [vmem:[%s3 + $0x104] sm:$0xf]
        %v6343 = vld [vmem:[%s3 + $0x108] sm:$0xf]
        %v6344 = vld [vmem:[%s3 + $0x10c] sm:$0xf]
        %v6345 = vld [vmem:[%s3 + $0x110] sm:$0xf]
        %v6346 = vld [vmem:[%s3 + $0x114] sm:$0xf]
        %v6347 = vld [vmem:[%s3 + $0x118] sm:$0xf]
        %v6348 = vld [vmem:[%s3 + $0x11c] sm:$0xf]
        %v6349 = vld [vmem:[%s3 + $0x120] sm:$0xf]
        %v6350 = vld [vmem:[%s3 + $0x124] sm:$0xf]
        %v6351 = vld [vmem:[%s3 + $0x128] sm:$0xf]
        %v6352 = vld [vmem:[%s3 + $0x12c] sm:$0xf]
        %v6353 = vld [vmem:[%s3 + $0x130] sm:$0xf]
        %v6354 = vld [vmem:[%s3 + $0x134] sm:$0xf]
        %v6355 = vld [vmem:[%s3 + $0x138] sm:$0xf]
        %v6356 = vld [vmem:[%s3 + $0x13c] sm:$0xf]
        %v6357 = vld [vmem:[%s3 + $0x140] sm:$0xf]
        %v6358 = vld [vmem:[%s3 + $0x144] sm:$0xf]
        %v6359 = vld [vmem:[%s3 + $0x148] sm:$0xf]
        %v6360 = vld [vmem:[%s3 + $0x14c] sm:$0xf]
        %v6361 = vld [vmem:[%s3 + $0x150] sm:$0xf]
        %v6362 = vld [vmem:[%s3 + $0x154] sm:$0xf]
        %v6363 = vld [vmem:[%s3 + $0x158] sm:$0xf]
        %v6364 = vld [vmem:[%s3 + $0x15c] sm:$0xf]
        %v6365 = vld [vmem:[%s3 + $0x160] sm:$0xf]
        %v6366 = vld [vmem:[%s3 + $0x164] sm:$0xf]
        %v6367 = vld [vmem:[%s3 + $0x168] sm:$0xf]
        %v6368 = vld [vmem:[%s3 + $0x16c] sm:$0xf]
        %v6369 = vld [vmem:[%s3 + $0x170] sm:$0xf]
        %v6370 = vld [vmem:[%s3 + $0x174] sm:$0xf]
        %v6371 = vld [vmem:[%s3 + $0x178] sm:$0xf]
        %v6372 = vld [vmem:[%s3 + $0x17c] sm:$0xf]
        %v6373 = vld [vmem:[%s4] sm:$0x1]
        %v6375 = vperm.slane %v6373, 0
        %v6473 = vunpack.c.l.b16 %v6277
        %v6474 = vunpack.c.l.b16 %v6278
        %v6475 = vunpack.c.l.b16 %v6279
        %v6476 = vunpack.c.l.b16 %v6280
        %v6477 = vunpack.c.l.b16 %v6281
        %v6478 = vunpack.c.l.b16 %v6282
        %v6479 = vunpack.c.l.b16 %v6283
        %v6480 = vunpack.c.l.b16 %v6284
        %v6481 = vunpack.c.l.b16 %v6285
        %v6482 = vunpack.c.l.b16 %v6286
        %v6483 = vunpack.c.l.b16 %v6287
        %v6484 = vunpack.c.l.b16 %v6288
        %v6485 = vunpack.c.l.b16 %v6289
        %v6486 = vunpack.c.l.b16 %v6290
        %v6487 = vunpack.c.l.b16 %v6291
        %v6488 = vunpack.c.l.b16 %v6292
        %v6489 = vunpack.c.l.b16 %v6293
        %v6490 = vunpack.c.l.b16 %v6294
        %v6491 = vunpack.c.l.b16 %v6295
        %v6492 = vunpack.c.l.b16 %v6296
        %v6493 = vunpack.c.l.b16 %v6297
        %v6494 = vunpack.c.l.b16 %v6298
        %v6495 = vunpack.c.l.b16 %v6299
        %v6496 = vunpack.c.l.b16 %v6300
        %v6497 = vunpack.c.l.b16 %v6301
        %v6498 = vunpack.c.l.b16 %v6302
        %v6499 = vunpack.c.l.b16 %v6303
        %v6500 = vunpack.c.l.b16 %v6304
        %v6501 = vunpack.c.l.b16 %v6305
        %v6502 = vunpack.c.l.b16 %v6306
        %v6503 = vunpack.c.l.b16 %v6307
        %v6504 = vunpack.c.l.b16 %v6308
        %v6505 = vunpack.c.l.b16 %v6309
        %v6506 = vunpack.c.l.b16 %v6310
        %v6507 = vunpack.c.l.b16 %v6311
        %v6508 = vunpack.c.l.b16 %v6312
        %v6509 = vunpack.c.l.b16 %v6313
        %v6510 = vunpack.c.l.b16 %v6314
        %v6511 = vunpack.c.l.b16 %v6315
        %v6512 = vunpack.c.l.b16 %v6316
        %v6513 = vunpack.c.l.b16 %v6317
        %v6514 = vunpack.c.l.b16 %v6318
        %v6515 = vunpack.c.l.b16 %v6319
        %v6516 = vunpack.c.l.b16 %v6320
        %v6517 = vunpack.c.l.b16 %v6321
        %v6518 = vunpack.c.l.b16 %v6322
        %v6519 = vunpack.c.l.b16 %v6323
        %v6520 = vunpack.c.l.b16 %v6324
        %v6521 = vunpack.c.l.b16 %v6325
        %v6522 = vunpack.c.l.b16 %v6326
        %v6523 = vunpack.c.l.b16 %v6327
        %v6524 = vunpack.c.l.b16 %v6328
        %v6525 = vunpack.c.l.b16 %v6329
        %v6526 = vunpack.c.l.b16 %v6330
        %v6527 = vunpack.c.l.b16 %v6331
        %v6528 = vunpack.c.l.b16 %v6332
        %v6529 = vunpack.c.l.b16 %v6333
        %v6530 = vunpack.c.l.b16 %v6334
        %v6531 = vunpack.c.l.b16 %v6335
        %v6532 = vunpack.c.l.b16 %v6336
        %v6533 = vunpack.c.l.b16 %v6337
        %v6534 = vunpack.c.l.b16 %v6338
        %v6535 = vunpack.c.l.b16 %v6339
        %v6536 = vunpack.c.l.b16 %v6340
        %v6537 = vunpack.c.l.b16 %v6341
        %v6538 = vunpack.c.l.b16 %v6342
        %v6539 = vunpack.c.l.b16 %v6343
        %v6540 = vunpack.c.l.b16 %v6344
        %v6541 = vunpack.c.l.b16 %v6345
        %v6542 = vunpack.c.l.b16 %v6346
        %v6543 = vunpack.c.l.b16 %v6347
        %v6544 = vunpack.c.l.b16 %v6348
        %v6545 = vunpack.c.l.b16 %v6349
        %v6546 = vunpack.c.l.b16 %v6350
        %v6547 = vunpack.c.l.b16 %v6351
        %v6548 = vunpack.c.l.b16 %v6352
        %v6549 = vunpack.c.l.b16 %v6353
        %v6550 = vunpack.c.l.b16 %v6354
        %v6551 = vunpack.c.l.b16 %v6355
        %v6552 = vunpack.c.l.b16 %v6356
        %v6553 = vunpack.c.l.b16 %v6357
        %v6554 = vunpack.c.l.b16 %v6358
        %v6555 = vunpack.c.l.b16 %v6359
        %v6556 = vunpack.c.l.b16 %v6360
        %v6557 = vunpack.c.l.b16 %v6361
        %v6558 = vunpack.c.l.b16 %v6362
        %v6559 = vunpack.c.l.b16 %v6363
        %v6560 = vunpack.c.l.b16 %v6364
        %v6561 = vunpack.c.l.b16 %v6365
        %v6562 = vunpack.c.l.b16 %v6366
        %v6563 = vunpack.c.l.b16 %v6367
        %v6564 = vunpack.c.l.b16 %v6368
        %v6565 = vunpack.c.l.b16 %v6369
        %v6566 = vunpack.c.l.b16 %v6370
        %v6567 = vunpack.c.l.b16 %v6371
        %v6568 = vunpack.c.l.b16 %v6372
        %v6569 = vpack.c.b16 %v6474, %v6473
        %v6570 = vpack.c.b16 %v6476, %v6475
        %v6571 = vpack.c.b16 %v6478, %v6477
        %v6572 = vpack.c.b16 %v6480, %v6479
        %v6573 = vpack.c.b16 %v6482, %v6481
        %v6574 = vpack.c.b16 %v6484, %v6483
        %v6575 = vpack.c.b16 %v6486, %v6485
        %v6576 = vpack.c.b16 %v6488, %v6487
        %v6577 = vpack.c.b16 %v6490, %v6489
        %v6578 = vpack.c.b16 %v6492, %v6491
        %v6579 = vpack.c.b16 %v6494, %v6493
        %v6580 = vpack.c.b16 %v6496, %v6495
        %v6581 = vpack.c.b16 %v6498, %v6497
        %v6582 = vpack.c.b16 %v6500, %v6499
        %v6583 = vpack.c.b16 %v6502, %v6501
        %v6584 = vpack.c.b16 %v6504, %v6503
        %v6585 = vpack.c.b16 %v6506, %v6505
        %v6586 = vpack.c.b16 %v6508, %v6507
        %v6587 = vpack.c.b16 %v6510, %v6509
        %v6588 = vpack.c.b16 %v6512, %v6511
        %v6589 = vpack.c.b16 %v6514, %v6513
        %v6590 = vpack.c.b16 %v6516, %v6515
        %v6591 = vpack.c.b16 %v6518, %v6517
        %v6592 = vpack.c.b16 %v6520, %v6519
        %v6593 = vpack.c.b16 %v6522, %v6521
        %v6594 = vpack.c.b16 %v6524, %v6523
        %v6595 = vpack.c.b16 %v6526, %v6525
        %v6596 = vpack.c.b16 %v6528, %v6527
        %v6597 = vpack.c.b16 %v6530, %v6529
        %v6598 = vpack.c.b16 %v6532, %v6531
        %v6599 = vpack.c.b16 %v6534, %v6533
        %v6600 = vpack.c.b16 %v6536, %v6535
        %v6601 = vpack.c.b16 %v6538, %v6537
        %v6602 = vpack.c.b16 %v6540, %v6539
        %v6603 = vpack.c.b16 %v6542, %v6541
        %v6604 = vpack.c.b16 %v6544, %v6543
        %v6605 = vpack.c.b16 %v6546, %v6545
        %v6606 = vpack.c.b16 %v6548, %v6547
        %v6607 = vpack.c.b16 %v6550, %v6549
        %v6608 = vpack.c.b16 %v6552, %v6551
        %v6609 = vpack.c.b16 %v6554, %v6553
        %v6610 = vpack.c.b16 %v6556, %v6555
        %v6611 = vpack.c.b16 %v6558, %v6557
        %v6612 = vpack.c.b16 %v6560, %v6559
        %v6613 = vpack.c.b16 %v6562, %v6561
        %v6614 = vpack.c.b16 %v6564, %v6563
        %v6615 = vpack.c.b16 %v6566, %v6565
        %v6616 = vpack.c.b16 %v6568, %v6567
        %6665 = vmatpush.bf16.msra.mxu0 %v6576
        %6666 = vmatpush.bf16.msra.mxu0 %v6575
        %6667 = vmatpush.bf16.msra.mxu0 %v6574
        %6668 = vmatpush.bf16.msra.mxu0 %v6573
        %6669 = vmatpush.bf16.msra.mxu0 %v6572
        %6670 = vmatpush.bf16.msra.mxu0 %v6571
        %6671 = vmatpush.bf16.msra.mxu0 %v6570
        %6672 = vmatpush.bf16.msra.mxu0 %v6569
        %6673 = vmatmul.bf16.gmra.mxu0 %v6085
        %v6674 = vpop.f32.mrf.mxu0
        %v6675 = vadd.f32 %v6375, %v6674
        %v6676 = vpop.f32.mrf.mxu0
        %v6677 = vadd.f32 %v6375, %v6676
        %6678 = vmatmul.bf16.gmra.mxu0 %v6091
        %v6679 = vpop.f32.mrf.mxu0
        %v6680 = vadd.f32 %v6375, %v6679
        %v6681 = vpop.f32.mrf.mxu0
        %v6682 = vadd.f32 %v6375, %v6681
        %6683 = vmatmul.bf16.gmra.mxu0 %v6097
        %v6684 = vpop.f32.mrf.mxu0
        %v6685 = vadd.f32 %v6375, %v6684
        %v6686 = vpop.f32.mrf.mxu0
        %v6687 = vadd.f32 %v6375, %v6686
        %6688 = vmatmul.bf16.gmra.mxu0 %v6103
        %v6689 = vpop.f32.mrf.mxu0
        %v6690 = vadd.f32 %v6375, %v6689
        %v6691 = vpop.f32.mrf.mxu0
        %v6692 = vadd.f32 %v6375, %v6691
        %6693 = vmatmul.bf16.gmra.mxu0 %v6109
        %v6694 = vpop.f32.mrf.mxu0
        %v6695 = vadd.f32 %v6375, %v6694
        %v6696 = vpop.f32.mrf.mxu0
        %v6697 = vadd.f32 %v6375, %v6696
        %6698 = vmatmul.bf16.gmra.mxu0 %v6115
        %v6699 = vpop.f32.mrf.mxu0
        %v6700 = vadd.f32 %v6375, %v6699
        %v6701 = vpop.f32.mrf.mxu0
        %v6702 = vadd.f32 %v6375, %v6701
        %6703 = vmatmul.bf16.gmra.mxu0 %v6121
        %v6704 = vpop.f32.mrf.mxu0
        %v6705 = vadd.f32 %v6375, %v6704
        %v6706 = vpop.f32.mrf.mxu0
        %v6707 = vadd.f32 %v6375, %v6706
        %6708 = vmatmul.bf16.gmra.mxu0 %v6127
        %v6709 = vpop.f32.mrf.mxu0
        %v6710 = vadd.f32 %v6375, %v6709
        %v6711 = vpop.f32.mrf.mxu0
        %v6712 = vadd.f32 %v6375, %v6711
        %6713 = vmatmul.bf16.gmra.mxu0 %v6133
        %v6714 = vpop.f32.mrf.mxu0
        %v6715 = vadd.f32 %v6375, %v6714
        %v6716 = vpop.f32.mrf.mxu0
        %v6717 = vadd.f32 %v6375, %v6716
        %6718 = vmatmul.bf16.gmra.mxu0 %v6139
        %v6719 = vpop.f32.mrf.mxu0
        %v6720 = vadd.f32 %v6375, %v6719
        %v6721 = vpop.f32.mrf.mxu0
        %v6722 = vadd.f32 %v6375, %v6721
        %6723 = vmatmul.bf16.gmra.mxu0 %v6145
        %v6724 = vpop.f32.mrf.mxu0
        %v6725 = vadd.f32 %v6375, %v6724
        %v6726 = vpop.f32.mrf.mxu0
        %v6727 = vadd.f32 %v6375, %v6726
        %6728 = vmatmul.bf16.gmra.mxu0 %v6151
        %v6729 = vpop.f32.mrf.mxu0
        %v6730 = vadd.f32 %v6375, %v6729
        %v6731 = vpop.f32.mrf.mxu0
        %v6732 = vadd.f32 %v6375, %v6731
        %6733 = vmatmul.bf16.gmra.mxu0 %v6157
        %v6734 = vpop.f32.mrf.mxu0
        %v6735 = vadd.f32 %v6375, %v6734
        %v6736 = vpop.f32.mrf.mxu0
        %v6737 = vadd.f32 %v6375, %v6736
        %6738 = vmatmul.bf16.gmra.mxu0 %v6163
        %v6739 = vpop.f32.mrf.mxu0
        %v6740 = vadd.f32 %v6375, %v6739
        %v6741 = vpop.f32.mrf.mxu0
        %v6742 = vadd.f32 %v6375, %v6741
        %6743 = vmatmul.bf16.gmra.mxu0 %v6169
        %v6744 = vpop.f32.mrf.mxu0
        %v6745 = vadd.f32 %v6375, %v6744
        %v6746 = vpop.f32.mrf.mxu0
        %v6747 = vadd.f32 %v6375, %v6746
        %6748 = vmatmul.bf16.gmra.mxu0 %v6175
        %v6749 = vpop.f32.mrf.mxu0
        %v6750 = vadd.f32 %v6375, %v6749
        %v6751 = vpop.f32.mrf.mxu0
        %v6752 = vadd.f32 %v6375, %v6751
        %6753 = vmatmul.bf16.gmra.mxu0 %v6181
        %v6754 = vpop.f32.mrf.mxu0
        %v6755 = vadd.f32 %v6375, %v6754
        %v6756 = vpop.f32.mrf.mxu0
        %v6757 = vadd.f32 %v6375, %v6756
        %6758 = vmatmul.bf16.gmra.mxu0 %v6187
        %v6759 = vpop.f32.mrf.mxu0
        %v6760 = vadd.f32 %v6375, %v6759
        %v6761 = vpop.f32.mrf.mxu0
        %v6762 = vadd.f32 %v6375, %v6761
        %6763 = vmatmul.bf16.gmra.mxu0 %v6193
        %v6764 = vpop.f32.mrf.mxu0
        %v6765 = vadd.f32 %v6375, %v6764
        %v6766 = vpop.f32.mrf.mxu0
        %v6767 = vadd.f32 %v6375, %v6766
        %6768 = vmatmul.bf16.gmra.mxu0 %v6199
        %v6769 = vpop.f32.mrf.mxu0
        %v6770 = vadd.f32 %v6375, %v6769
        %v6771 = vpop.f32.mrf.mxu0
        %v6772 = vadd.f32 %v6375, %v6771
        %6773 = vmatmul.bf16.gmra.mxu0 %v6205
        %v6774 = vpop.f32.mrf.mxu0
        %v6775 = vadd.f32 %v6375, %v6774
        %v6776 = vpop.f32.mrf.mxu0
        %v6777 = vadd.f32 %v6375, %v6776
        %6778 = vmatmul.bf16.gmra.mxu0 %v6211
        %v6779 = vpop.f32.mrf.mxu0
        %v6780 = vadd.f32 %v6375, %v6779
        %v6781 = vpop.f32.mrf.mxu0
        %v6782 = vadd.f32 %v6375, %v6781
        %6783 = vmatmul.bf16.gmra.mxu0 %v6217
        %v6784 = vpop.f32.mrf.mxu0
        %v6785 = vadd.f32 %v6375, %v6784
        %v6786 = vpop.f32.mrf.mxu0
        %v6787 = vadd.f32 %v6375, %v6786
        %6788 = vmatmul.bf16.gmra.mxu0 %v6223
        %v6789 = vpop.f32.mrf.mxu0
        %v6790 = vadd.f32 %v6375, %v6789
        %v6791 = vpop.f32.mrf.mxu0
        %v6792 = vadd.f32 %v6375, %v6791
        %6793 = vmatmul.bf16.gmra.mxu0 %v6229
        %v6794 = vpop.f32.mrf.mxu0
        %v6795 = vadd.f32 %v6375, %v6794
        %v6796 = vpop.f32.mrf.mxu0
        %v6797 = vadd.f32 %v6375, %v6796
        %6798 = vmatmul.bf16.gmra.mxu0 %v6235
        %v6799 = vpop.f32.mrf.mxu0
        %v6800 = vadd.f32 %v6375, %v6799
        %v6801 = vpop.f32.mrf.mxu0
        %v6802 = vadd.f32 %v6375, %v6801
        %6803 = vmatmul.bf16.gmra.mxu0 %v6241
        %v6804 = vpop.f32.mrf.mxu0
        %v6805 = vadd.f32 %v6375, %v6804
        %v6806 = vpop.f32.mrf.mxu0
        %v6807 = vadd.f32 %v6375, %v6806
        %6808 = vmatmul.bf16.gmra.mxu0 %v6247
        %v6809 = vpop.f32.mrf.mxu0
        %v6810 = vadd.f32 %v6375, %v6809
        %v6811 = vpop.f32.mrf.mxu0
        %v6812 = vadd.f32 %v6375, %v6811
        %6813 = vmatmul.bf16.gmra.mxu0 %v6253
        %v6814 = vpop.f32.mrf.mxu0
        %v6815 = vadd.f32 %v6375, %v6814
        %v6816 = vpop.f32.mrf.mxu0
        %v6817 = vadd.f32 %v6375, %v6816
        %6818 = vmatmul.bf16.gmra.mxu0 %v6259
        %v6819 = vpop.f32.mrf.mxu0
        %v6820 = vadd.f32 %v6375, %v6819
        %v6821 = vpop.f32.mrf.mxu0
        %v6822 = vadd.f32 %v6375, %v6821
        %6823 = vmatmul.bf16.gmra.mxu0 %v6265
        %v6824 = vpop.f32.mrf.mxu0
        %v6825 = vadd.f32 %v6375, %v6824
        %v6826 = vpop.f32.mrf.mxu0
        %v6827 = vadd.f32 %v6375, %v6826
        %6828 = vmatmul.bf16.gmra.mxu0 %v6271
        %v6829 = vpop.f32.mrf.mxu0
        %v6830 = vadd.f32 %v6375, %v6829
        %v6831 = vpop.f32.mrf.mxu0
        %v6832 = vadd.f32 %v6375, %v6831
        %6833 = vdwg.mxu0
        %6834 = vmatpush.bf16.msra.mxu0 %v6584
        %6835 = vmatpush.bf16.msra.mxu0 %v6583
        %6836 = vmatpush.bf16.msra.mxu0 %v6582
        %6837 = vmatpush.bf16.msra.mxu0 %v6581
        %6838 = vmatpush.bf16.msra.mxu0 %v6580
        %6839 = vmatpush.bf16.msra.mxu0 %v6579
        %6840 = vmatpush.bf16.msra.mxu0 %v6578
        %6841 = vmatpush.bf16.msra.mxu0 %v6577
        %6842 = vmatmul.bf16.gmra.mxu0 %v6086
        %v6843 = vpop.f32.mrf.mxu0
        %v6844 = vadd.f32 %v6675, %v6843
        %v6845 = vpop.f32.mrf.mxu0
        %v6846 = vadd.f32 %v6677, %v6845
        %6847 = vmatmul.bf16.gmra.mxu0 %v6092
        %v6848 = vpop.f32.mrf.mxu0
        %v6849 = vadd.f32 %v6680, %v6848
        %v6850 = vpop.f32.mrf.mxu0
        %v6851 = vadd.f32 %v6682, %v6850
        %6852 = vmatmul.bf16.gmra.mxu0 %v6098
        %v6853 = vpop.f32.mrf.mxu0
        %v6854 = vadd.f32 %v6685, %v6853
        %v6855 = vpop.f32.mrf.mxu0
        %v6856 = vadd.f32 %v6687, %v6855
        %6857 = vmatmul.bf16.gmra.mxu0 %v6104
        %v6858 = vpop.f32.mrf.mxu0
        %v6859 = vadd.f32 %v6690, %v6858
        %v6860 = vpop.f32.mrf.mxu0
        %v6861 = vadd.f32 %v6692, %v6860
        %6862 = vmatmul.bf16.gmra.mxu0 %v6110
        %v6863 = vpop.f32.mrf.mxu0
        %v6864 = vadd.f32 %v6695, %v6863
        %v6865 = vpop.f32.mrf.mxu0
        %v6866 = vadd.f32 %v6697, %v6865
        %6867 = vmatmul.bf16.gmra.mxu0 %v6116
        %v6868 = vpop.f32.mrf.mxu0
        %v6869 = vadd.f32 %v6700, %v6868
        %v6870 = vpop.f32.mrf.mxu0
        %v6871 = vadd.f32 %v6702, %v6870
        %6872 = vmatmul.bf16.gmra.mxu0 %v6122
        %v6873 = vpop.f32.mrf.mxu0
        %v6874 = vadd.f32 %v6705, %v6873
        %v6875 = vpop.f32.mrf.mxu0
        %v6876 = vadd.f32 %v6707, %v6875
        %6877 = vmatmul.bf16.gmra.mxu0 %v6128
        %v6878 = vpop.f32.mrf.mxu0
        %v6879 = vadd.f32 %v6710, %v6878
        %v6880 = vpop.f32.mrf.mxu0
        %v6881 = vadd.f32 %v6712, %v6880
        %6882 = vmatmul.bf16.gmra.mxu0 %v6134
        %v6883 = vpop.f32.mrf.mxu0
        %v6884 = vadd.f32 %v6715, %v6883
        %v6885 = vpop.f32.mrf.mxu0
        %v6886 = vadd.f32 %v6717, %v6885
        %6887 = vmatmul.bf16.gmra.mxu0 %v6140
        %v6888 = vpop.f32.mrf.mxu0
        %v6889 = vadd.f32 %v6720, %v6888
        %v6890 = vpop.f32.mrf.mxu0
        %v6891 = vadd.f32 %v6722, %v6890
        %6892 = vmatmul.bf16.gmra.mxu0 %v6146
        %v6893 = vpop.f32.mrf.mxu0
        %v6894 = vadd.f32 %v6725, %v6893
        %v6895 = vpop.f32.mrf.mxu0
        %v6896 = vadd.f32 %v6727, %v6895
        %6897 = vmatmul.bf16.gmra.mxu0 %v6152
        %v6898 = vpop.f32.mrf.mxu0
        %v6899 = vadd.f32 %v6730, %v6898
        %v6900 = vpop.f32.mrf.mxu0
        %v6901 = vadd.f32 %v6732, %v6900
        %6902 = vmatmul.bf16.gmra.mxu0 %v6158
        %v6903 = vpop.f32.mrf.mxu0
        %v6904 = vadd.f32 %v6735, %v6903
        %v6905 = vpop.f32.mrf.mxu0
        %v6906 = vadd.f32 %v6737, %v6905
        %6907 = vmatmul.bf16.gmra.mxu0 %v6164
        %v6908 = vpop.f32.mrf.mxu0
        %v6909 = vadd.f32 %v6740, %v6908
        %v6910 = vpop.f32.mrf.mxu0
        %v6911 = vadd.f32 %v6742, %v6910
        %6912 = vmatmul.bf16.gmra.mxu0 %v6170
        %v6913 = vpop.f32.mrf.mxu0
        %v6914 = vadd.f32 %v6745, %v6913
        %v6915 = vpop.f32.mrf.mxu0
        %v6916 = vadd.f32 %v6747, %v6915
        %6917 = vmatmul.bf16.gmra.mxu0 %v6176
        %v6918 = vpop.f32.mrf.mxu0
        %v6919 = vadd.f32 %v6750, %v6918
        %v6920 = vpop.f32.mrf.mxu0
        %v6921 = vadd.f32 %v6752, %v6920
        %6922 = vmatmul.bf16.gmra.mxu0 %v6182
        %v6923 = vpop.f32.mrf.mxu0
        %v6924 = vadd.f32 %v6755, %v6923
        %v6925 = vpop.f32.mrf.mxu0
        %v6926 = vadd.f32 %v6757, %v6925
        %6927 = vmatmul.bf16.gmra.mxu0 %v6188
        %v6928 = vpop.f32.mrf.mxu0
        %v6929 = vadd.f32 %v6760, %v6928
        %v6930 = vpop.f32.mrf.mxu0
        %v6931 = vadd.f32 %v6762, %v6930
        %6932 = vmatmul.bf16.gmra.mxu0 %v6194
        %v6933 = vpop.f32.mrf.mxu0
        %v6934 = vadd.f32 %v6765, %v6933
        %v6935 = vpop.f32.mrf.mxu0
        %v6936 = vadd.f32 %v6767, %v6935
        %6937 = vmatmul.bf16.gmra.mxu0 %v6200
        %v6938 = vpop.f32.mrf.mxu0
        %v6939 = vadd.f32 %v6770, %v6938
        %v6940 = vpop.f32.mrf.mxu0
        %v6941 = vadd.f32 %v6772, %v6940
        %6942 = vmatmul.bf16.gmra.mxu0 %v6206
        %v6943 = vpop.f32.mrf.mxu0
        %v6944 = vadd.f32 %v6775, %v6943
        %v6945 = vpop.f32.mrf.mxu0
        %v6946 = vadd.f32 %v6777, %v6945
        %6947 = vmatmul.bf16.gmra.mxu0 %v6212
        %v6948 = vpop.f32.mrf.mxu0
        %v6949 = vadd.f32 %v6780, %v6948
        %v6950 = vpop.f32.mrf.mxu0
        %v6951 = vadd.f32 %v6782, %v6950
        %6952 = vmatmul.bf16.gmra.mxu0 %v6218
        %v6953 = vpop.f32.mrf.mxu0
        %v6954 = vadd.f32 %v6785, %v6953
        %v6955 = vpop.f32.mrf.mxu0
        %v6956 = vadd.f32 %v6787, %v6955
        %6957 = vmatmul.bf16.gmra.mxu0 %v6224
        %v6958 = vpop.f32.mrf.mxu0
        %v6959 = vadd.f32 %v6790, %v6958
        %v6960 = vpop.f32.mrf.mxu0
        %v6961 = vadd.f32 %v6792, %v6960
        %6962 = vmatmul.bf16.gmra.mxu0 %v6230
        %v6963 = vpop.f32.mrf.mxu0
        %v6964 = vadd.f32 %v6795, %v6963
        %v6965 = vpop.f32.mrf.mxu0
        %v6966 = vadd.f32 %v6797, %v6965
        %6967 = vmatmul.bf16.gmra.mxu0 %v6236
        %v6968 = vpop.f32.mrf.mxu0
        %v6969 = vadd.f32 %v6800, %v6968
        %v6970 = vpop.f32.mrf.mxu0
        %v6971 = vadd.f32 %v6802, %v6970
        %6972 = vmatmul.bf16.gmra.mxu0 %v6242
        %v6973 = vpop.f32.mrf.mxu0
        %v6974 = vadd.f32 %v6805, %v6973
        %v6975 = vpop.f32.mrf.mxu0
        %v6976 = vadd.f32 %v6807, %v6975
        %6977 = vmatmul.bf16.gmra.mxu0 %v6248
        %v6978 = vpop.f32.mrf.mxu0
        %v6979 = vadd.f32 %v6810, %v6978
        %v6980 = vpop.f32.mrf.mxu0
        %v6981 = vadd.f32 %v6812, %v6980
        %6982 = vmatmul.bf16.gmra.mxu0 %v6254
        %v6983 = vpop.f32.mrf.mxu0
        %v6984 = vadd.f32 %v6815, %v6983
        %v6985 = vpop.f32.mrf.mxu0
        %v6986 = vadd.f32 %v6817, %v6985
        %6987 = vmatmul.bf16.gmra.mxu0 %v6260
        %v6988 = vpop.f32.mrf.mxu0
        %v6989 = vadd.f32 %v6820, %v6988
        %v6990 = vpop.f32.mrf.mxu0
        %v6991 = vadd.f32 %v6822, %v6990
        %6992 = vmatmul.bf16.gmra.mxu0 %v6266
        %v6993 = vpop.f32.mrf.mxu0
        %v6994 = vadd.f32 %v6825, %v6993
        %v6995 = vpop.f32.mrf.mxu0
        %v6996 = vadd.f32 %v6827, %v6995
        %6997 = vmatmul.bf16.gmra.mxu0 %v6272
        %v6998 = vpop.f32.mrf.mxu0
        %v6999 = vadd.f32 %v6830, %v6998
        %v7000 = vpop.f32.mrf.mxu0
        %v7001 = vadd.f32 %v6832, %v7000
        %7002 = vdwg.mxu0
        %7003 = vmatpush.bf16.msra.mxu0 %v6592
        %7004 = vmatpush.bf16.msra.mxu0 %v6591
        %7005 = vmatpush.bf16.msra.mxu0 %v6590
        %7006 = vmatpush.bf16.msra.mxu0 %v6589
        %7007 = vmatpush.bf16.msra.mxu0 %v6588
        %7008 = vmatpush.bf16.msra.mxu0 %v6587
        %7009 = vmatpush.bf16.msra.mxu0 %v6586
        %7010 = vmatpush.bf16.msra.mxu0 %v6585
        %7011 = vmatmul.bf16.gmra.mxu0 %v6087
        %v7012 = vpop.f32.mrf.mxu0
        %v7013 = vadd.f32 %v6844, %v7012
        %v7014 = vpop.f32.mrf.mxu0
        %v7015 = vadd.f32 %v6846, %v7014
        %7016 = vmatmul.bf16.gmra.mxu0 %v6093
        %v7017 = vpop.f32.mrf.mxu0
        %v7018 = vadd.f32 %v6849, %v7017
        %v7019 = vpop.f32.mrf.mxu0
        %v7020 = vadd.f32 %v6851, %v7019
        %7021 = vmatmul.bf16.gmra.mxu0 %v6099
        %v7022 = vpop.f32.mrf.mxu0
        %v7023 = vadd.f32 %v6854, %v7022
        %v7024 = vpop.f32.mrf.mxu0
        %v7025 = vadd.f32 %v6856, %v7024
        %7026 = vmatmul.bf16.gmra.mxu0 %v6105
        %v7027 = vpop.f32.mrf.mxu0
        %v7028 = vadd.f32 %v6859, %v7027
        %v7029 = vpop.f32.mrf.mxu0
        %v7030 = vadd.f32 %v6861, %v7029
        %7031 = vmatmul.bf16.gmra.mxu0 %v6111
        %v7032 = vpop.f32.mrf.mxu0
        %v7033 = vadd.f32 %v6864, %v7032
        %v7034 = vpop.f32.mrf.mxu0
        %v7035 = vadd.f32 %v6866, %v7034
        %7036 = vmatmul.bf16.gmra.mxu0 %v6117
        %v7037 = vpop.f32.mrf.mxu0
        %v7038 = vadd.f32 %v6869, %v7037
        %v7039 = vpop.f32.mrf.mxu0
        %v7040 = vadd.f32 %v6871, %v7039
        %7041 = vmatmul.bf16.gmra.mxu0 %v6123
        %v7042 = vpop.f32.mrf.mxu0
        %v7043 = vadd.f32 %v6874, %v7042
        %v7044 = vpop.f32.mrf.mxu0
        %v7045 = vadd.f32 %v6876, %v7044
        %7046 = vmatmul.bf16.gmra.mxu0 %v6129
        %v7047 = vpop.f32.mrf.mxu0
        %v7048 = vadd.f32 %v6879, %v7047
        %v7049 = vpop.f32.mrf.mxu0
        %v7050 = vadd.f32 %v6881, %v7049
        %7051 = vmatmul.bf16.gmra.mxu0 %v6135
        %v7052 = vpop.f32.mrf.mxu0
        %v7053 = vadd.f32 %v6884, %v7052
        %v7054 = vpop.f32.mrf.mxu0
        %v7055 = vadd.f32 %v6886, %v7054
        %7056 = vmatmul.bf16.gmra.mxu0 %v6141
        %v7057 = vpop.f32.mrf.mxu0
        %v7058 = vadd.f32 %v6889, %v7057
        %v7059 = vpop.f32.mrf.mxu0
        %v7060 = vadd.f32 %v6891, %v7059
        %7061 = vmatmul.bf16.gmra.mxu0 %v6147
        %v7062 = vpop.f32.mrf.mxu0
        %v7063 = vadd.f32 %v6894, %v7062
        %v7064 = vpop.f32.mrf.mxu0
        %v7065 = vadd.f32 %v6896, %v7064
        %7066 = vmatmul.bf16.gmra.mxu0 %v6153
        %v7067 = vpop.f32.mrf.mxu0
        %v7068 = vadd.f32 %v6899, %v7067
        %v7069 = vpop.f32.mrf.mxu0
        %v7070 = vadd.f32 %v6901, %v7069
        %7071 = vmatmul.bf16.gmra.mxu0 %v6159
        %v7072 = vpop.f32.mrf.mxu0
        %v7073 = vadd.f32 %v6904, %v7072
        %v7074 = vpop.f32.mrf.mxu0
        %v7075 = vadd.f32 %v6906, %v7074
        %7076 = vmatmul.bf16.gmra.mxu0 %v6165
        %v7077 = vpop.f32.mrf.mxu0
        %v7078 = vadd.f32 %v6909, %v7077
        %v7079 = vpop.f32.mrf.mxu0
        %v7080 = vadd.f32 %v6911, %v7079
        %7081 = vmatmul.bf16.gmra.mxu0 %v6171
        %v7082 = vpop.f32.mrf.mxu0
        %v7083 = vadd.f32 %v6914, %v7082
        %v7084 = vpop.f32.mrf.mxu0
        %v7085 = vadd.f32 %v6916, %v7084
        %7086 = vmatmul.bf16.gmra.mxu0 %v6177
        %v7087 = vpop.f32.mrf.mxu0
        %v7088 = vadd.f32 %v6919, %v7087
        %v7089 = vpop.f32.mrf.mxu0
        %v7090 = vadd.f32 %v6921, %v7089
        %7091 = vmatmul.bf16.gmra.mxu0 %v6183
        %v7092 = vpop.f32.mrf.mxu0
        %v7093 = vadd.f32 %v6924, %v7092
        %v7094 = vpop.f32.mrf.mxu0
        %v7095 = vadd.f32 %v6926, %v7094
        %7096 = vmatmul.bf16.gmra.mxu0 %v6189
        %v7097 = vpop.f32.mrf.mxu0
        %v7098 = vadd.f32 %v6929, %v7097
        %v7099 = vpop.f32.mrf.mxu0
        %v7100 = vadd.f32 %v6931, %v7099
        %7101 = vmatmul.bf16.gmra.mxu0 %v6195
        %v7102 = vpop.f32.mrf.mxu0
        %v7103 = vadd.f32 %v6934, %v7102
        %v7104 = vpop.f32.mrf.mxu0
        %v7105 = vadd.f32 %v6936, %v7104
        %7106 = vmatmul.bf16.gmra.mxu0 %v6201
        %v7107 = vpop.f32.mrf.mxu0
        %v7108 = vadd.f32 %v6939, %v7107
        %v7109 = vpop.f32.mrf.mxu0
        %v7110 = vadd.f32 %v6941, %v7109
        %7111 = vmatmul.bf16.gmra.mxu0 %v6207
        %v7112 = vpop.f32.mrf.mxu0
        %v7113 = vadd.f32 %v6944, %v7112
        %v7114 = vpop.f32.mrf.mxu0
        %v7115 = vadd.f32 %v6946, %v7114
        %7116 = vmatmul.bf16.gmra.mxu0 %v6213
        %v7117 = vpop.f32.mrf.mxu0
        %v7118 = vadd.f32 %v6949, %v7117
        %v7119 = vpop.f32.mrf.mxu0
        %v7120 = vadd.f32 %v6951, %v7119
        %7121 = vmatmul.bf16.gmra.mxu0 %v6219
        %v7122 = vpop.f32.mrf.mxu0
        %v7123 = vadd.f32 %v6954, %v7122
        %v7124 = vpop.f32.mrf.mxu0
        %v7125 = vadd.f32 %v6956, %v7124
        %7126 = vmatmul.bf16.gmra.mxu0 %v6225
        %v7127 = vpop.f32.mrf.mxu0
        %v7128 = vadd.f32 %v6959, %v7127
        %v7129 = vpop.f32.mrf.mxu0
        %v7130 = vadd.f32 %v6961, %v7129
        %7131 = vmatmul.bf16.gmra.mxu0 %v6231
        %v7132 = vpop.f32.mrf.mxu0
        %v7133 = vadd.f32 %v6964, %v7132
        %v7134 = vpop.f32.mrf.mxu0
        %v7135 = vadd.f32 %v6966, %v7134
        %7136 = vmatmul.bf16.gmra.mxu0 %v6237
        %v7137 = vpop.f32.mrf.mxu0
        %v7138 = vadd.f32 %v6969, %v7137
        %v7139 = vpop.f32.mrf.mxu0
        %v7140 = vadd.f32 %v6971, %v7139
        %7141 = vmatmul.bf16.gmra.mxu0 %v6243
        %v7142 = vpop.f32.mrf.mxu0
        %v7143 = vadd.f32 %v6974, %v7142
        %v7144 = vpop.f32.mrf.mxu0
        %v7145 = vadd.f32 %v6976, %v7144
        %7146 = vmatmul.bf16.gmra.mxu0 %v6249
        %v7147 = vpop.f32.mrf.mxu0
        %v7148 = vadd.f32 %v6979, %v7147
        %v7149 = vpop.f32.mrf.mxu0
        %v7150 = vadd.f32 %v6981, %v7149
        %7151 = vmatmul.bf16.gmra.mxu0 %v6255
        %v7152 = vpop.f32.mrf.mxu0
        %v7153 = vadd.f32 %v6984, %v7152
        %v7154 = vpop.f32.mrf.mxu0
        %v7155 = vadd.f32 %v6986, %v7154
        %7156 = vmatmul.bf16.gmra.mxu0 %v6261
        %v7157 = vpop.f32.mrf.mxu0
        %v7158 = vadd.f32 %v6989, %v7157
        %v7159 = vpop.f32.mrf.mxu0
        %v7160 = vadd.f32 %v6991, %v7159
        %7161 = vmatmul.bf16.gmra.mxu0 %v6267
        %v7162 = vpop.f32.mrf.mxu0
        %v7163 = vadd.f32 %v6994, %v7162
        %v7164 = vpop.f32.mrf.mxu0
        %v7165 = vadd.f32 %v6996, %v7164
        %7166 = vmatmul.bf16.gmra.mxu0 %v6273
        %v7167 = vpop.f32.mrf.mxu0
        %v7168 = vadd.f32 %v6999, %v7167
        %v7169 = vpop.f32.mrf.mxu0
        %v7170 = vadd.f32 %v7001, %v7169
        %7171 = vdwg.mxu0
        %7172 = vmatpush.bf16.msra.mxu0 %v6600
        %7173 = vmatpush.bf16.msra.mxu0 %v6599
        %7174 = vmatpush.bf16.msra.mxu0 %v6598
        %7175 = vmatpush.bf16.msra.mxu0 %v6597
        %7176 = vmatpush.bf16.msra.mxu0 %v6596
        %7177 = vmatpush.bf16.msra.mxu0 %v6595
        %7178 = vmatpush.bf16.msra.mxu0 %v6594
        %7179 = vmatpush.bf16.msra.mxu0 %v6593
        %7180 = vmatmul.bf16.gmra.mxu0 %v6088
        %v7181 = vpop.f32.mrf.mxu0
        %v7182 = vadd.f32 %v7013, %v7181
        %v7183 = vpop.f32.mrf.mxu0
        %v7184 = vadd.f32 %v7015, %v7183
        %7185 = vmatmul.bf16.gmra.mxu0 %v6094
        %v7186 = vpop.f32.mrf.mxu0
        %v7187 = vadd.f32 %v7018, %v7186
        %v7188 = vpop.f32.mrf.mxu0
        %v7189 = vadd.f32 %v7020, %v7188
        %7190 = vmatmul.bf16.gmra.mxu0 %v6100
        %v7191 = vpop.f32.mrf.mxu0
        %v7192 = vadd.f32 %v7023, %v7191
        %v7193 = vpop.f32.mrf.mxu0
        %v7194 = vadd.f32 %v7025, %v7193
        %7195 = vmatmul.bf16.gmra.mxu0 %v6106
        %v7196 = vpop.f32.mrf.mxu0
        %v7197 = vadd.f32 %v7028, %v7196
        %v7198 = vpop.f32.mrf.mxu0
        %v7199 = vadd.f32 %v7030, %v7198
        %7200 = vmatmul.bf16.gmra.mxu0 %v6112
        %v7201 = vpop.f32.mrf.mxu0
        %v7202 = vadd.f32 %v7033, %v7201
        %v7203 = vpop.f32.mrf.mxu0
        %v7204 = vadd.f32 %v7035, %v7203
        %7205 = vmatmul.bf16.gmra.mxu0 %v6118
        %v7206 = vpop.f32.mrf.mxu0
        %v7207 = vadd.f32 %v7038, %v7206
        %v7208 = vpop.f32.mrf.mxu0
        %v7209 = vadd.f32 %v7040, %v7208
        %7210 = vmatmul.bf16.gmra.mxu0 %v6124
        %v7211 = vpop.f32.mrf.mxu0
        %v7212 = vadd.f32 %v7043, %v7211
        %v7213 = vpop.f32.mrf.mxu0
        %v7214 = vadd.f32 %v7045, %v7213
        %7215 = vmatmul.bf16.gmra.mxu0 %v6130
        %v7216 = vpop.f32.mrf.mxu0
        %v7217 = vadd.f32 %v7048, %v7216
        %v7218 = vpop.f32.mrf.mxu0
        %v7219 = vadd.f32 %v7050, %v7218
        %7220 = vmatmul.bf16.gmra.mxu0 %v6136
        %v7221 = vpop.f32.mrf.mxu0
        %v7222 = vadd.f32 %v7053, %v7221
        %v7223 = vpop.f32.mrf.mxu0
        %v7224 = vadd.f32 %v7055, %v7223
        %7225 = vmatmul.bf16.gmra.mxu0 %v6142
        %v7226 = vpop.f32.mrf.mxu0
        %v7227 = vadd.f32 %v7058, %v7226
        %v7228 = vpop.f32.mrf.mxu0
        %v7229 = vadd.f32 %v7060, %v7228
        %7230 = vmatmul.bf16.gmra.mxu0 %v6148
        %v7231 = vpop.f32.mrf.mxu0
        %v7232 = vadd.f32 %v7063, %v7231
        %v7233 = vpop.f32.mrf.mxu0
        %v7234 = vadd.f32 %v7065, %v7233
        %7235 = vmatmul.bf16.gmra.mxu0 %v6154
        %v7236 = vpop.f32.mrf.mxu0
        %v7237 = vadd.f32 %v7068, %v7236
        %v7238 = vpop.f32.mrf.mxu0
        %v7239 = vadd.f32 %v7070, %v7238
        %7240 = vmatmul.bf16.gmra.mxu0 %v6160
        %v7241 = vpop.f32.mrf.mxu0
        %v7242 = vadd.f32 %v7073, %v7241
        %v7243 = vpop.f32.mrf.mxu0
        %v7244 = vadd.f32 %v7075, %v7243
        %7245 = vmatmul.bf16.gmra.mxu0 %v6166
        %v7246 = vpop.f32.mrf.mxu0
        %v7247 = vadd.f32 %v7078, %v7246
        %v7248 = vpop.f32.mrf.mxu0
        %v7249 = vadd.f32 %v7080, %v7248
        %7250 = vmatmul.bf16.gmra.mxu0 %v6172
        %v7251 = vpop.f32.mrf.mxu0
        %v7252 = vadd.f32 %v7083, %v7251
        %v7253 = vpop.f32.mrf.mxu0
        %v7254 = vadd.f32 %v7085, %v7253
        %7255 = vmatmul.bf16.gmra.mxu0 %v6178
        %v7256 = vpop.f32.mrf.mxu0
        %v7257 = vadd.f32 %v7088, %v7256
        %v7258 = vpop.f32.mrf.mxu0
        %v7259 = vadd.f32 %v7090, %v7258
        %7260 = vmatmul.bf16.gmra.mxu0 %v6184
        %v7261 = vpop.f32.mrf.mxu0
        %v7262 = vadd.f32 %v7093, %v7261
        %v7263 = vpop.f32.mrf.mxu0
        %v7264 = vadd.f32 %v7095, %v7263
        %7265 = vmatmul.bf16.gmra.mxu0 %v6190
        %v7266 = vpop.f32.mrf.mxu0
        %v7267 = vadd.f32 %v7098, %v7266
        %v7268 = vpop.f32.mrf.mxu0
        %v7269 = vadd.f32 %v7100, %v7268
        %7270 = vmatmul.bf16.gmra.mxu0 %v6196
        %v7271 = vpop.f32.mrf.mxu0
        %v7272 = vadd.f32 %v7103, %v7271
        %v7273 = vpop.f32.mrf.mxu0
        %v7274 = vadd.f32 %v7105, %v7273
        %7275 = vmatmul.bf16.gmra.mxu0 %v6202
        %v7276 = vpop.f32.mrf.mxu0
        %v7277 = vadd.f32 %v7108, %v7276
        %v7278 = vpop.f32.mrf.mxu0
        %v7279 = vadd.f32 %v7110, %v7278
        %7280 = vmatmul.bf16.gmra.mxu0 %v6208
        %v7281 = vpop.f32.mrf.mxu0
        %v7282 = vadd.f32 %v7113, %v7281
        %v7283 = vpop.f32.mrf.mxu0
        %v7284 = vadd.f32 %v7115, %v7283
        %7285 = vmatmul.bf16.gmra.mxu0 %v6214
        %v7286 = vpop.f32.mrf.mxu0
        %v7287 = vadd.f32 %v7118, %v7286
        %v7288 = vpop.f32.mrf.mxu0
        %v7289 = vadd.f32 %v7120, %v7288
        %7290 = vmatmul.bf16.gmra.mxu0 %v6220
        %v7291 = vpop.f32.mrf.mxu0
        %v7292 = vadd.f32 %v7123, %v7291
        %v7293 = vpop.f32.mrf.mxu0
        %v7294 = vadd.f32 %v7125, %v7293
        %7295 = vmatmul.bf16.gmra.mxu0 %v6226
        %v7296 = vpop.f32.mrf.mxu0
        %v7297 = vadd.f32 %v7128, %v7296
        %v7298 = vpop.f32.mrf.mxu0
        %v7299 = vadd.f32 %v7130, %v7298
        %7300 = vmatmul.bf16.gmra.mxu0 %v6232
        %v7301 = vpop.f32.mrf.mxu0
        %v7302 = vadd.f32 %v7133, %v7301
        %v7303 = vpop.f32.mrf.mxu0
        %v7304 = vadd.f32 %v7135, %v7303
        %7305 = vmatmul.bf16.gmra.mxu0 %v6238
        %v7306 = vpop.f32.mrf.mxu0
        %v7307 = vadd.f32 %v7138, %v7306
        %v7308 = vpop.f32.mrf.mxu0
        %v7309 = vadd.f32 %v7140, %v7308
        %7310 = vmatmul.bf16.gmra.mxu0 %v6244
        %v7311 = vpop.f32.mrf.mxu0
        %v7312 = vadd.f32 %v7143, %v7311
        %v7313 = vpop.f32.mrf.mxu0
        %v7314 = vadd.f32 %v7145, %v7313
        %7315 = vmatmul.bf16.gmra.mxu0 %v6250
        %v7316 = vpop.f32.mrf.mxu0
        %v7317 = vadd.f32 %v7148, %v7316
        %v7318 = vpop.f32.mrf.mxu0
        %v7319 = vadd.f32 %v7150, %v7318
        %7320 = vmatmul.bf16.gmra.mxu0 %v6256
        %v7321 = vpop.f32.mrf.mxu0
        %v7322 = vadd.f32 %v7153, %v7321
        %v7323 = vpop.f32.mrf.mxu0
        %v7324 = vadd.f32 %v7155, %v7323
        %7325 = vmatmul.bf16.gmra.mxu0 %v6262
        %v7326 = vpop.f32.mrf.mxu0
        %v7327 = vadd.f32 %v7158, %v7326
        %v7328 = vpop.f32.mrf.mxu0
        %v7329 = vadd.f32 %v7160, %v7328
        %7330 = vmatmul.bf16.gmra.mxu0 %v6268
        %v7331 = vpop.f32.mrf.mxu0
        %v7332 = vadd.f32 %v7163, %v7331
        %v7333 = vpop.f32.mrf.mxu0
        %v7334 = vadd.f32 %v7165, %v7333
        %7335 = vmatmul.bf16.gmra.mxu0 %v6274
        %v7336 = vpop.f32.mrf.mxu0
        %v7337 = vadd.f32 %v7168, %v7336
        %v7338 = vpop.f32.mrf.mxu0
        %v7339 = vadd.f32 %v7170, %v7338
        %7340 = vdwg.mxu0
        %7341 = vmatpush.bf16.msra.mxu0 %v6608
        %7342 = vmatpush.bf16.msra.mxu0 %v6607
        %7343 = vmatpush.bf16.msra.mxu0 %v6606
        %7344 = vmatpush.bf16.msra.mxu0 %v6605
        %7345 = vmatpush.bf16.msra.mxu0 %v6604
        %7346 = vmatpush.bf16.msra.mxu0 %v6603
        %7347 = vmatpush.bf16.msra.mxu0 %v6602
        %7348 = vmatpush.bf16.msra.mxu0 %v6601
        %7349 = vmatmul.bf16.gmra.mxu0 %v6089
        %v7350 = vpop.f32.mrf.mxu0
        %v7351 = vadd.f32 %v7182, %v7350
        %v7352 = vpop.f32.mrf.mxu0
        %v7353 = vadd.f32 %v7184, %v7352
        %7354 = vmatmul.bf16.gmra.mxu0 %v6095
        %v7355 = vpop.f32.mrf.mxu0
        %v7356 = vadd.f32 %v7187, %v7355
        %v7357 = vpop.f32.mrf.mxu0
        %v7358 = vadd.f32 %v7189, %v7357
        %7359 = vmatmul.bf16.gmra.mxu0 %v6101
        %v7360 = vpop.f32.mrf.mxu0
        %v7361 = vadd.f32 %v7192, %v7360
        %v7362 = vpop.f32.mrf.mxu0
        %v7363 = vadd.f32 %v7194, %v7362
        %7364 = vmatmul.bf16.gmra.mxu0 %v6107
        %v7365 = vpop.f32.mrf.mxu0
        %v7366 = vadd.f32 %v7197, %v7365
        %v7367 = vpop.f32.mrf.mxu0
        %v7368 = vadd.f32 %v7199, %v7367
        %7369 = vmatmul.bf16.gmra.mxu0 %v6113
        %v7370 = vpop.f32.mrf.mxu0
        %v7371 = vadd.f32 %v7202, %v7370
        %v7372 = vpop.f32.mrf.mxu0
        %v7373 = vadd.f32 %v7204, %v7372
        %7374 = vmatmul.bf16.gmra.mxu0 %v6119
        %v7375 = vpop.f32.mrf.mxu0
        %v7376 = vadd.f32 %v7207, %v7375
        %v7377 = vpop.f32.mrf.mxu0
        %v7378 = vadd.f32 %v7209, %v7377
        %7379 = vmatmul.bf16.gmra.mxu0 %v6125
        %v7380 = vpop.f32.mrf.mxu0
        %v7381 = vadd.f32 %v7212, %v7380
        %v7382 = vpop.f32.mrf.mxu0
        %v7383 = vadd.f32 %v7214, %v7382
        %7384 = vmatmul.bf16.gmra.mxu0 %v6131
        %v7385 = vpop.f32.mrf.mxu0
        %v7386 = vadd.f32 %v7217, %v7385
        %v7387 = vpop.f32.mrf.mxu0
        %v7388 = vadd.f32 %v7219, %v7387
        %7389 = vmatmul.bf16.gmra.mxu0 %v6137
        %v7390 = vpop.f32.mrf.mxu0
        %v7391 = vadd.f32 %v7222, %v7390
        %v7392 = vpop.f32.mrf.mxu0
        %v7393 = vadd.f32 %v7224, %v7392
        %7394 = vmatmul.bf16.gmra.mxu0 %v6143
        %v7395 = vpop.f32.mrf.mxu0
        %v7396 = vadd.f32 %v7227, %v7395
        %v7397 = vpop.f32.mrf.mxu0
        %v7398 = vadd.f32 %v7229, %v7397
        %7399 = vmatmul.bf16.gmra.mxu0 %v6149
        %v7400 = vpop.f32.mrf.mxu0
        %v7401 = vadd.f32 %v7232, %v7400
        %v7402 = vpop.f32.mrf.mxu0
        %v7403 = vadd.f32 %v7234, %v7402
        %7404 = vmatmul.bf16.gmra.mxu0 %v6155
        %v7405 = vpop.f32.mrf.mxu0
        %v7406 = vadd.f32 %v7237, %v7405
        %v7407 = vpop.f32.mrf.mxu0
        %v7408 = vadd.f32 %v7239, %v7407
        %7409 = vmatmul.bf16.gmra.mxu0 %v6161
        %v7410 = vpop.f32.mrf.mxu0
        %v7411 = vadd.f32 %v7242, %v7410
        %v7412 = vpop.f32.mrf.mxu0
        %v7413 = vadd.f32 %v7244, %v7412
        %7414 = vmatmul.bf16.gmra.mxu0 %v6167
        %v7415 = vpop.f32.mrf.mxu0
        %v7416 = vadd.f32 %v7247, %v7415
        %v7417 = vpop.f32.mrf.mxu0
        %v7418 = vadd.f32 %v7249, %v7417
        %7419 = vmatmul.bf16.gmra.mxu0 %v6173
        %v7420 = vpop.f32.mrf.mxu0
        %v7421 = vadd.f32 %v7252, %v7420
        %v7422 = vpop.f32.mrf.mxu0
        %v7423 = vadd.f32 %v7254, %v7422
        %7424 = vmatmul.bf16.gmra.mxu0 %v6179
        %v7425 = vpop.f32.mrf.mxu0
        %v7426 = vadd.f32 %v7257, %v7425
        %v7427 = vpop.f32.mrf.mxu0
        %v7428 = vadd.f32 %v7259, %v7427
        %7429 = vmatmul.bf16.gmra.mxu0 %v6185
        %v7430 = vpop.f32.mrf.mxu0
        %v7431 = vadd.f32 %v7262, %v7430
        %v7432 = vpop.f32.mrf.mxu0
        %v7433 = vadd.f32 %v7264, %v7432
        %7434 = vmatmul.bf16.gmra.mxu0 %v6191
        %v7435 = vpop.f32.mrf.mxu0
        %v7436 = vadd.f32 %v7267, %v7435
        %v7437 = vpop.f32.mrf.mxu0
        %v7438 = vadd.f32 %v7269, %v7437
        %7439 = vmatmul.bf16.gmra.mxu0 %v6197
        %v7440 = vpop.f32.mrf.mxu0
        %v7441 = vadd.f32 %v7272, %v7440
        %v7442 = vpop.f32.mrf.mxu0
        %v7443 = vadd.f32 %v7274, %v7442
        %7444 = vmatmul.bf16.gmra.mxu0 %v6203
        %v7445 = vpop.f32.mrf.mxu0
        %v7446 = vadd.f32 %v7277, %v7445
        %v7447 = vpop.f32.mrf.mxu0
        %v7448 = vadd.f32 %v7279, %v7447
        %7449 = vmatmul.bf16.gmra.mxu0 %v6209
        %v7450 = vpop.f32.mrf.mxu0
        %v7451 = vadd.f32 %v7282, %v7450
        %v7452 = vpop.f32.mrf.mxu0
        %v7453 = vadd.f32 %v7284, %v7452
        %7454 = vmatmul.bf16.gmra.mxu0 %v6215
        %v7455 = vpop.f32.mrf.mxu0
        %v7456 = vadd.f32 %v7287, %v7455
        %v7457 = vpop.f32.mrf.mxu0
        %v7458 = vadd.f32 %v7289, %v7457
        %7459 = vmatmul.bf16.gmra.mxu0 %v6221
        %v7460 = vpop.f32.mrf.mxu0
        %v7461 = vadd.f32 %v7292, %v7460
        %v7462 = vpop.f32.mrf.mxu0
        %v7463 = vadd.f32 %v7294, %v7462
        %7464 = vmatmul.bf16.gmra.mxu0 %v6227
        %v7465 = vpop.f32.mrf.mxu0
        %v7466 = vadd.f32 %v7297, %v7465
        %v7467 = vpop.f32.mrf.mxu0
        %v7468 = vadd.f32 %v7299, %v7467
        %7469 = vmatmul.bf16.gmra.mxu0 %v6233
        %v7470 = vpop.f32.mrf.mxu0
        %v7471 = vadd.f32 %v7302, %v7470
        %v7472 = vpop.f32.mrf.mxu0
        %v7473 = vadd.f32 %v7304, %v7472
        %7474 = vmatmul.bf16.gmra.mxu0 %v6239
        %v7475 = vpop.f32.mrf.mxu0
        %v7476 = vadd.f32 %v7307, %v7475
        %v7477 = vpop.f32.mrf.mxu0
        %v7478 = vadd.f32 %v7309, %v7477
        %7479 = vmatmul.bf16.gmra.mxu0 %v6245
        %v7480 = vpop.f32.mrf.mxu0
        %v7481 = vadd.f32 %v7312, %v7480
        %v7482 = vpop.f32.mrf.mxu0
        %v7483 = vadd.f32 %v7314, %v7482
        %7484 = vmatmul.bf16.gmra.mxu0 %v6251
        %v7485 = vpop.f32.mrf.mxu0
        %v7486 = vadd.f32 %v7317, %v7485
        %v7487 = vpop.f32.mrf.mxu0
        %v7488 = vadd.f32 %v7319, %v7487
        %7489 = vmatmul.bf16.gmra.mxu0 %v6257
        %v7490 = vpop.f32.mrf.mxu0
        %v7491 = vadd.f32 %v7322, %v7490
        %v7492 = vpop.f32.mrf.mxu0
        %v7493 = vadd.f32 %v7324, %v7492
        %7494 = vmatmul.bf16.gmra.mxu0 %v6263
        %v7495 = vpop.f32.mrf.mxu0
        %v7496 = vadd.f32 %v7327, %v7495
        %v7497 = vpop.f32.mrf.mxu0
        %v7498 = vadd.f32 %v7329, %v7497
        %7499 = vmatmul.bf16.gmra.mxu0 %v6269
        %v7500 = vpop.f32.mrf.mxu0
        %v7501 = vadd.f32 %v7332, %v7500
        %v7502 = vpop.f32.mrf.mxu0
        %v7503 = vadd.f32 %v7334, %v7502
        %7504 = vmatmul.bf16.gmra.mxu0 %v6275
        %v7505 = vpop.f32.mrf.mxu0
        %v7506 = vadd.f32 %v7337, %v7505
        %v7507 = vpop.f32.mrf.mxu0
        %v7508 = vadd.f32 %v7339, %v7507
        %7509 = vdwg.mxu0
        %7510 = vmatpush.bf16.msra.mxu0 %v6616
        %7511 = vmatpush.bf16.msra.mxu0 %v6615
        %7512 = vmatpush.bf16.msra.mxu0 %v6614
        %7513 = vmatpush.bf16.msra.mxu0 %v6613
        %7514 = vmatpush.bf16.msra.mxu0 %v6612
        %7515 = vmatpush.bf16.msra.mxu0 %v6611
        %7516 = vmatpush.bf16.msra.mxu0 %v6610
        %7517 = vmatpush.bf16.msra.mxu0 %v6609
        %7518 = vmatmul.bf16.gmra.mxu0 %v6090
        %v7519 = vpop.f32.mrf.mxu0
        %v7520 = vadd.f32 %v7351, %v7519
        %v7521 = vpop.f32.mrf.mxu0
        %v7522 = vadd.f32 %v7353, %v7521
        %7523 = vmatmul.bf16.gmra.mxu0 %v6096
        %v7524 = vpop.f32.mrf.mxu0
        %v7525 = vadd.f32 %v7356, %v7524
        %v7526 = vpop.f32.mrf.mxu0
        %v7527 = vadd.f32 %v7358, %v7526
        %7528 = vmatmul.bf16.gmra.mxu0 %v6102
        %v7529 = vpop.f32.mrf.mxu0
        %v7530 = vadd.f32 %v7361, %v7529
        %v7531 = vpop.f32.mrf.mxu0
        %v7532 = vadd.f32 %v7363, %v7531
        %7533 = vmatmul.bf16.gmra.mxu0 %v6108
        %v7534 = vpop.f32.mrf.mxu0
        %v7535 = vadd.f32 %v7366, %v7534
        %v7536 = vpop.f32.mrf.mxu0
        %v7537 = vadd.f32 %v7368, %v7536
        %7538 = vmatmul.bf16.gmra.mxu0 %v6114
        %v7539 = vpop.f32.mrf.mxu0
        %v7540 = vadd.f32 %v7371, %v7539
        %v7541 = vpop.f32.mrf.mxu0
        %v7542 = vadd.f32 %v7373, %v7541
        %7543 = vmatmul.bf16.gmra.mxu0 %v6120
        %v7544 = vpop.f32.mrf.mxu0
        %v7545 = vadd.f32 %v7376, %v7544
        %v7546 = vpop.f32.mrf.mxu0
        %v7547 = vadd.f32 %v7378, %v7546
        %7548 = vmatmul.bf16.gmra.mxu0 %v6126
        %v7549 = vpop.f32.mrf.mxu0
        %v7550 = vadd.f32 %v7381, %v7549
        %v7551 = vpop.f32.mrf.mxu0
        %v7552 = vadd.f32 %v7383, %v7551
        %7553 = vmatmul.bf16.gmra.mxu0 %v6132
        %v7554 = vpop.f32.mrf.mxu0
        %v7555 = vadd.f32 %v7386, %v7554
        %v7556 = vpop.f32.mrf.mxu0
        %v7557 = vadd.f32 %v7388, %v7556
        %7558 = vmatmul.bf16.gmra.mxu0 %v6138
        %v7559 = vpop.f32.mrf.mxu0
        %v7560 = vadd.f32 %v7391, %v7559
        %v7561 = vpop.f32.mrf.mxu0
        %v7562 = vadd.f32 %v7393, %v7561
        %7563 = vmatmul.bf16.gmra.mxu0 %v6144
        %v7564 = vpop.f32.mrf.mxu0
        %v7565 = vadd.f32 %v7396, %v7564
        %v7566 = vpop.f32.mrf.mxu0
        %v7567 = vadd.f32 %v7398, %v7566
        %7568 = vmatmul.bf16.gmra.mxu0 %v6150
        %v7569 = vpop.f32.mrf.mxu0
        %v7570 = vadd.f32 %v7401, %v7569
        %v7571 = vpop.f32.mrf.mxu0
        %v7572 = vadd.f32 %v7403, %v7571
        %7573 = vmatmul.bf16.gmra.mxu0 %v6156
        %v7574 = vpop.f32.mrf.mxu0
        %v7575 = vadd.f32 %v7406, %v7574
        %v7576 = vpop.f32.mrf.mxu0
        %v7577 = vadd.f32 %v7408, %v7576
        %7578 = vmatmul.bf16.gmra.mxu0 %v6162
        %v7579 = vpop.f32.mrf.mxu0
        %v7580 = vadd.f32 %v7411, %v7579
        %v7581 = vpop.f32.mrf.mxu0
        %v7582 = vadd.f32 %v7413, %v7581
        %7583 = vmatmul.bf16.gmra.mxu0 %v6168
        %v7584 = vpop.f32.mrf.mxu0
        %v7585 = vadd.f32 %v7416, %v7584
        %v7586 = vpop.f32.mrf.mxu0
        %v7587 = vadd.f32 %v7418, %v7586
        %7588 = vmatmul.bf16.gmra.mxu0 %v6174
        %v7589 = vpop.f32.mrf.mxu0
        %v7590 = vadd.f32 %v7421, %v7589
        %v7591 = vpop.f32.mrf.mxu0
        %v7592 = vadd.f32 %v7423, %v7591
        %7593 = vmatmul.bf16.gmra.mxu0 %v6180
        %v7594 = vpop.f32.mrf.mxu0
        %v7595 = vadd.f32 %v7426, %v7594
        %v7596 = vpop.f32.mrf.mxu0
        %v7597 = vadd.f32 %v7428, %v7596
        %7598 = vmatmul.bf16.gmra.mxu0 %v6186
        %v7599 = vpop.f32.mrf.mxu0
        %v7600 = vadd.f32 %v7431, %v7599
        %v7601 = vpop.f32.mrf.mxu0
        %v7602 = vadd.f32 %v7433, %v7601
        %7603 = vmatmul.bf16.gmra.mxu0 %v6192
        %v7604 = vpop.f32.mrf.mxu0
        %v7605 = vadd.f32 %v7436, %v7604
        %v7606 = vpop.f32.mrf.mxu0
        %v7607 = vadd.f32 %v7438, %v7606
        %7608 = vmatmul.bf16.gmra.mxu0 %v6198
        %v7609 = vpop.f32.mrf.mxu0
        %v7610 = vadd.f32 %v7441, %v7609
        %v7611 = vpop.f32.mrf.mxu0
        %v7612 = vadd.f32 %v7443, %v7611
        %7613 = vmatmul.bf16.gmra.mxu0 %v6204
        %v7614 = vpop.f32.mrf.mxu0
        %v7615 = vadd.f32 %v7446, %v7614
        %v7616 = vpop.f32.mrf.mxu0
        %v7617 = vadd.f32 %v7448, %v7616
        %7618 = vmatmul.bf16.gmra.mxu0 %v6210
        %v7619 = vpop.f32.mrf.mxu0
        %v7620 = vadd.f32 %v7451, %v7619
        %v7621 = vpop.f32.mrf.mxu0
        %v7622 = vadd.f32 %v7453, %v7621
        %7623 = vmatmul.bf16.gmra.mxu0 %v6216
        %v7624 = vpop.f32.mrf.mxu0
        %v7625 = vadd.f32 %v7456, %v7624
        %v7626 = vpop.f32.mrf.mxu0
        %v7627 = vadd.f32 %v7458, %v7626
        %7628 = vmatmul.bf16.gmra.mxu0 %v6222
        %v7629 = vpop.f32.mrf.mxu0
        %v7630 = vadd.f32 %v7461, %v7629
        %v7631 = vpop.f32.mrf.mxu0
        %v7632 = vadd.f32 %v7463, %v7631
        %7633 = vmatmul.bf16.gmra.mxu0 %v6228
        %v7634 = vpop.f32.mrf.mxu0
        %v7635 = vadd.f32 %v7466, %v7634
        %v7636 = vpop.f32.mrf.mxu0
        %v7637 = vadd.f32 %v7468, %v7636
        %7638 = vmatmul.bf16.gmra.mxu0 %v6234
        %v7639 = vpop.f32.mrf.mxu0
        %v7640 = vadd.f32 %v7471, %v7639
        %v7641 = vpop.f32.mrf.mxu0
        %v7642 = vadd.f32 %v7473, %v7641
        %7643 = vmatmul.bf16.gmra.mxu0 %v6240
        %v7644 = vpop.f32.mrf.mxu0
        %v7645 = vadd.f32 %v7476, %v7644
        %v7646 = vpop.f32.mrf.mxu0
        %v7647 = vadd.f32 %v7478, %v7646
        %7648 = vmatmul.bf16.gmra.mxu0 %v6246
        %v7649 = vpop.f32.mrf.mxu0
        %v7650 = vadd.f32 %v7481, %v7649
        %v7651 = vpop.f32.mrf.mxu0
        %v7652 = vadd.f32 %v7483, %v7651
        %7653 = vmatmul.bf16.gmra.mxu0 %v6252
        %v7654 = vpop.f32.mrf.mxu0
        %v7655 = vadd.f32 %v7486, %v7654
        %v7656 = vpop.f32.mrf.mxu0
        %v7657 = vadd.f32 %v7488, %v7656
        %7658 = vmatmul.bf16.gmra.mxu0 %v6258
        %v7659 = vpop.f32.mrf.mxu0
        %v7660 = vadd.f32 %v7491, %v7659
        %v7661 = vpop.f32.mrf.mxu0
        %v7662 = vadd.f32 %v7493, %v7661
        %7663 = vmatmul.bf16.gmra.mxu0 %v6264
        %v7664 = vpop.f32.mrf.mxu0
        %v7665 = vadd.f32 %v7496, %v7664
        %v7666 = vpop.f32.mrf.mxu0
        %v7667 = vadd.f32 %v7498, %v7666
        %7668 = vmatmul.bf16.gmra.mxu0 %v6270
        %v7669 = vpop.f32.mrf.mxu0
        %v7670 = vadd.f32 %v7501, %v7669
        %v7671 = vpop.f32.mrf.mxu0
        %v7672 = vadd.f32 %v7503, %v7671
        %7673 = vmatmul.bf16.gmra.mxu0 %v6276
        %v7674 = vpop.f32.mrf.mxu0
        %v7675 = vadd.f32 %v7506, %v7674
        %v7676 = vpop.f32.mrf.mxu0
        %v7677 = vadd.f32 %v7508, %v7676
        %7678 = vdwg.mxu0
        %v7679 = vmax.f32 %v7520, 0.0
        %v7680 = vmax.f32 %v7522, 0.0
        %v7681 = vmax.f32 %v7525, 0.0
        %v7682 = vmax.f32 %v7527, 0.0
        %v7683 = vmax.f32 %v7530, 0.0
        %v7684 = vmax.f32 %v7532, 0.0
        %v7685 = vmax.f32 %v7535, 0.0
        %v7686 = vmax.f32 %v7537, 0.0
        %v7687 = vmax.f32 %v7540, 0.0
        %v7688 = vmax.f32 %v7542, 0.0
        %v7689 = vmax.f32 %v7545, 0.0
        %v7690 = vmax.f32 %v7547, 0.0
        %v7691 = vmax.f32 %v7550, 0.0
        %v7692 = vmax.f32 %v7552, 0.0
        %v7693 = vmax.f32 %v7555, 0.0
        %v7694 = vmax.f32 %v7557, 0.0
        %v7695 = vmax.f32 %v7560, 0.0
        %v7696 = vmax.f32 %v7562, 0.0
        %v7697 = vmax.f32 %v7565, 0.0
        %v7698 = vmax.f32 %v7567, 0.0
        %v7699 = vmax.f32 %v7570, 0.0
        %v7700 = vmax.f32 %v7572, 0.0
        %v7701 = vmax.f32 %v7575, 0.0
        %v7702 = vmax.f32 %v7577, 0.0
        %v7703 = vmax.f32 %v7580, 0.0
        %v7704 = vmax.f32 %v7582, 0.0
        %v7705 = vmax.f32 %v7585, 0.0
        %v7706 = vmax.f32 %v7587, 0.0
        %v7707 = vmax.f32 %v7590, 0.0
        %v7708 = vmax.f32 %v7592, 0.0
        %v7709 = vmax.f32 %v7595, 0.0
        %v7710 = vmax.f32 %v7597, 0.0
        %v7711 = vmax.f32 %v7600, 0.0
        %v7712 = vmax.f32 %v7602, 0.0
        %v7713 = vmax.f32 %v7605, 0.0
        %v7714 = vmax.f32 %v7607, 0.0
        %v7715 = vmax.f32 %v7610, 0.0
        %v7716 = vmax.f32 %v7612, 0.0
        %v7717 = vmax.f32 %v7615, 0.0
        %v7718 = vmax.f32 %v7617, 0.0
        %v7719 = vmax.f32 %v7620, 0.0
        %v7720 = vmax.f32 %v7622, 0.0
        %v7721 = vmax.f32 %v7625, 0.0
        %v7722 = vmax.f32 %v7627, 0.0
        %v7723 = vmax.f32 %v7630, 0.0
        %v7724 = vmax.f32 %v7632, 0.0
        %v7725 = vmax.f32 %v7635, 0.0
        %v7726 = vmax.f32 %v7637, 0.0
        %v7727 = vmax.f32 %v7640, 0.0
        %v7728 = vmax.f32 %v7642, 0.0
        %v7729 = vmax.f32 %v7645, 0.0
        %v7730 = vmax.f32 %v7647, 0.0
        %v7731 = vmax.f32 %v7650, 0.0
        %v7732 = vmax.f32 %v7652, 0.0
        %v7733 = vmax.f32 %v7655, 0.0
        %v7734 = vmax.f32 %v7657, 0.0
        %v7735 = vmax.f32 %v7660, 0.0
        %v7736 = vmax.f32 %v7662, 0.0
        %v7737 = vmax.f32 %v7665, 0.0
        %v7738 = vmax.f32 %v7667, 0.0
        %v7739 = vmax.f32 %v7670, 0.0
        %v7740 = vmax.f32 %v7672, 0.0
        %v7741 = vmax.f32 %v7675, 0.0
        %v7742 = vmax.f32 %v7677, 0.0
        %v7743 = vld [vmem:[%s5] sm:$0xff]
        %v7744 = vld [vmem:[%s5 + $0x8] sm:$0xff]
        %v7745 = vld [vmem:[%s5 + $0x10] sm:$0xff]
        %v7746 = vld [vmem:[%s5 + $0x18] sm:$0xff]
        %v7747 = vld [vmem:[%s5 + $0x20] sm:$0xff]
        %v7748 = vld [vmem:[%s5 + $0x28] sm:$0xff]
        %v7749 = vld [vmem:[%s5 + $0x30] sm:$0xff]
        %v7750 = vld [vmem:[%s5 + $0x38] sm:$0xff]
        %v7751 = vld [vmem:[%s6] sm:$0x1]
        %v7753 = vperm.slane %v7751, 0
        %vm7755 = vcmask 523264
        %v7757 = vsel %vm7755, %v7679, 0
        %v7760 = vsel %vm7755, %v7680, 0
        %v7763 = vsel %vm7755, %v7681, 0
        %v7766 = vsel %vm7755, %v7682, 0
        %v7769 = vsel %vm7755, %v7683, 0
        %v7772 = vsel %vm7755, %v7684, 0
        %v7775 = vsel %vm7755, %v7685, 0
        %v7778 = vsel %vm7755, %v7686, 0
        %v7781 = vsel %vm7755, %v7687, 0
        %v7784 = vsel %vm7755, %v7688, 0
        %v7787 = vsel %vm7755, %v7689, 0
        %v7790 = vsel %vm7755, %v7690, 0
        %v7793 = vsel %vm7755, %v7691, 0
        %v7796 = vsel %vm7755, %v7692, 0
        %v7799 = vsel %vm7755, %v7693, 0
        %v7802 = vsel %vm7755, %v7694, 0
        %v7805 = vsel %vm7755, %v7695, 0
        %v7808 = vsel %vm7755, %v7696, 0
        %v7811 = vsel %vm7755, %v7697, 0
        %v7814 = vsel %vm7755, %v7698, 0
        %v7817 = vsel %vm7755, %v7699, 0
        %v7820 = vsel %vm7755, %v7700, 0
        %v7823 = vsel %vm7755, %v7701, 0
        %v7826 = vsel %vm7755, %v7702, 0
        %v7829 = vsel %vm7755, %v7703, 0
        %v7832 = vsel %vm7755, %v7704, 0
        %v7835 = vsel %vm7755, %v7705, 0
        %v7838 = vsel %vm7755, %v7706, 0
        %v7841 = vsel %vm7755, %v7707, 0
        %v7844 = vsel %vm7755, %v7708, 0
        %v7847 = vsel %vm7755, %v7709, 0
        %v7850 = vsel %vm7755, %v7710, 0
        %v7853 = vsel %vm7755, %v7711, 0
        %v7856 = vsel %vm7755, %v7712, 0
        %v7859 = vsel %vm7755, %v7713, 0
        %v7862 = vsel %vm7755, %v7714, 0
        %v7865 = vsel %vm7755, %v7715, 0
        %v7868 = vsel %vm7755, %v7716, 0
        %v7871 = vsel %vm7755, %v7717, 0
        %v7874 = vsel %vm7755, %v7718, 0
        %v7877 = vsel %vm7755, %v7719, 0
        %v7880 = vsel %vm7755, %v7720, 0
        %v7883 = vsel %vm7755, %v7721, 0
        %v7886 = vsel %vm7755, %v7722, 0
        %v7889 = vsel %vm7755, %v7723, 0
        %v7892 = vsel %vm7755, %v7724, 0
        %v7895 = vsel %vm7755, %v7725, 0
        %v7898 = vsel %vm7755, %v7726, 0
        %v7901 = vsel %vm7755, %v7727, 0
        %v7904 = vsel %vm7755, %v7728, 0
        %v7907 = vsel %vm7755, %v7729, 0
        %v7910 = vsel %vm7755, %v7730, 0
        %v7913 = vsel %vm7755, %v7731, 0
        %v7916 = vsel %vm7755, %v7732, 0
        %v7919 = vsel %vm7755, %v7733, 0
        %v7922 = vsel %vm7755, %v7734, 0
        %v7925 = vsel %vm7755, %v7735, 0
        %v7928 = vsel %vm7755, %v7736, 0
        %v7931 = vsel %vm7755, %v7737, 0
        %v7934 = vsel %vm7755, %v7738, 0
        %v7937 = vsel %vm7755, %v7739, 0
        %v7940 = vsel %vm7755, %v7740, 0
        %v7943 = vsel %vm7755, %v7741, 0
        %v7946 = vsel %vm7755, %v7742, 0
        %7948 = vmatpush.msra.mxu0 0.0
        %7949 = vmatpush.msra.mxu0 0.0
        %7950 = vmatpush.msra.mxu0 0.0
        %7951 = vmatpush.msra.mxu0 0.0
        %7952 = vmatpush.msra.mxu0 0.0
        %7953 = vmatpush.msra.mxu0 0.0
        %7954 = vmatpush.msra.mxu0 0.0
        %7955 = vmatpush.msra.mxu0 0.0
        %7956 = vmatpush.msra.mxu0 %v7750
        %7957 = vmatpush.msra.mxu0 %v7749
        %7958 = vmatpush.msra.mxu0 %v7748
        %7959 = vmatpush.msra.mxu0 %v7747
        %7960 = vmatpush.msra.mxu0 %v7746
        %7961 = vmatpush.msra.mxu0 %v7745
        %7962 = vmatpush.msra.mxu0 %v7744
        %7963 = vmatpush.msra.mxu0 %v7743
        %7964 = vmatmul.f32.gmra.mxu0 %v7757
        %v7965 = vpop.f32.mrf.mxu0
        %v7966 = vadd.f32 %v7753, %v7965
        %7967 = vmatmul.f32.gmra.mxu0 %v7760
        %v7968 = vpop.f32.mrf.mxu0
        %v7969 = vadd.f32 %v7753, %v7968
        %7970 = vmatmul.f32.gmra.mxu0 %v7763
        %v7971 = vpop.f32.mrf.mxu0
        %v7972 = vadd.f32 %v7753, %v7971
        %7973 = vmatmul.f32.gmra.mxu0 %v7766
        %v7974 = vpop.f32.mrf.mxu0
        %v7975 = vadd.f32 %v7753, %v7974
        %7976 = vmatmul.f32.gmra.mxu0 %v7769
        %v7977 = vpop.f32.mrf.mxu0
        %v7978 = vadd.f32 %v7753, %v7977
        %7979 = vmatmul.f32.gmra.mxu0 %v7772
        %v7980 = vpop.f32.mrf.mxu0
        %v7981 = vadd.f32 %v7753, %v7980
        %7982 = vmatmul.f32.gmra.mxu0 %v7775
        %v7983 = vpop.f32.mrf.mxu0
        %v7984 = vadd.f32 %v7753, %v7983
        %7985 = vmatmul.f32.gmra.mxu0 %v7778
        %v7986 = vpop.f32.mrf.mxu0
        %v7987 = vadd.f32 %v7753, %v7986
        %7988 = vmatmul.f32.gmra.mxu0 %v7781
        %v7989 = vpop.f32.mrf.mxu0
        %v7990 = vadd.f32 %v7753, %v7989
        %7991 = vmatmul.f32.gmra.mxu0 %v7784
        %v7992 = vpop.f32.mrf.mxu0
        %v7993 = vadd.f32 %v7753, %v7992
        %7994 = vmatmul.f32.gmra.mxu0 %v7787
        %v7995 = vpop.f32.mrf.mxu0
        %v7996 = vadd.f32 %v7753, %v7995
        %7997 = vmatmul.f32.gmra.mxu0 %v7790
        %v7998 = vpop.f32.mrf.mxu0
        %v7999 = vadd.f32 %v7753, %v7998
        %8000 = vmatmul.f32.gmra.mxu0 %v7793
        %v8001 = vpop.f32.mrf.mxu0
        %v8002 = vadd.f32 %v7753, %v8001
        %8003 = vmatmul.f32.gmra.mxu0 %v7796
        %v8004 = vpop.f32.mrf.mxu0
        %v8005 = vadd.f32 %v7753, %v8004
        %8006 = vmatmul.f32.gmra.mxu0 %v7799
        %v8007 = vpop.f32.mrf.mxu0
        %v8008 = vadd.f32 %v7753, %v8007
        %8009 = vmatmul.f32.gmra.mxu0 %v7802
        %v8010 = vpop.f32.mrf.mxu0
        %v8011 = vadd.f32 %v7753, %v8010
        %8012 = vmatmul.f32.gmra.mxu0 %v7805
        %v8013 = vpop.f32.mrf.mxu0
        %v8014 = vadd.f32 %v7753, %v8013
        %8015 = vmatmul.f32.gmra.mxu0 %v7808
        %v8016 = vpop.f32.mrf.mxu0
        %v8017 = vadd.f32 %v7753, %v8016
        %8018 = vmatmul.f32.gmra.mxu0 %v7811
        %v8019 = vpop.f32.mrf.mxu0
        %v8020 = vadd.f32 %v7753, %v8019
        %8021 = vmatmul.f32.gmra.mxu0 %v7814
        %v8022 = vpop.f32.mrf.mxu0
        %v8023 = vadd.f32 %v7753, %v8022
        %8024 = vmatmul.f32.gmra.mxu0 %v7817
        %v8025 = vpop.f32.mrf.mxu0
        %v8026 = vadd.f32 %v7753, %v8025
        %8027 = vmatmul.f32.gmra.mxu0 %v7820
        %v8028 = vpop.f32.mrf.mxu0
        %v8029 = vadd.f32 %v7753, %v8028
        %8030 = vmatmul.f32.gmra.mxu0 %v7823
        %v8031 = vpop.f32.mrf.mxu0
        %v8032 = vadd.f32 %v7753, %v8031
        %8033 = vmatmul.f32.gmra.mxu0 %v7826
        %v8034 = vpop.f32.mrf.mxu0
        %v8035 = vadd.f32 %v7753, %v8034
        %8036 = vmatmul.f32.gmra.mxu0 %v7829
        %v8037 = vpop.f32.mrf.mxu0
        %v8038 = vadd.f32 %v7753, %v8037
        %8039 = vmatmul.f32.gmra.mxu0 %v7832
        %v8040 = vpop.f32.mrf.mxu0
        %v8041 = vadd.f32 %v7753, %v8040
        %8042 = vmatmul.f32.gmra.mxu0 %v7835
        %v8043 = vpop.f32.mrf.mxu0
        %v8044 = vadd.f32 %v7753, %v8043
        %8045 = vmatmul.f32.gmra.mxu0 %v7838
        %v8046 = vpop.f32.mrf.mxu0
        %v8047 = vadd.f32 %v7753, %v8046
        %8048 = vmatmul.f32.gmra.mxu0 %v7841
        %v8049 = vpop.f32.mrf.mxu0
        %v8050 = vadd.f32 %v7753, %v8049
        %8051 = vmatmul.f32.gmra.mxu0 %v7844
        %v8052 = vpop.f32.mrf.mxu0
        %v8053 = vadd.f32 %v7753, %v8052
        %8054 = vmatmul.f32.gmra.mxu0 %v7847
        %v8055 = vpop.f32.mrf.mxu0
        %v8056 = vadd.f32 %v7753, %v8055
        %8057 = vmatmul.f32.gmra.mxu0 %v7850
        %v8058 = vpop.f32.mrf.mxu0
        %v8059 = vadd.f32 %v7753, %v8058
        %8060 = vmatmul.f32.gmra.mxu0 %v7853
        %v8061 = vpop.f32.mrf.mxu0
        %v8062 = vadd.f32 %v7753, %v8061
        %8063 = vmatmul.f32.gmra.mxu0 %v7856
        %v8064 = vpop.f32.mrf.mxu0
        %v8065 = vadd.f32 %v7753, %v8064
        %8066 = vmatmul.f32.gmra.mxu0 %v7859
        %v8067 = vpop.f32.mrf.mxu0
        %v8068 = vadd.f32 %v7753, %v8067
        %8069 = vmatmul.f32.gmra.mxu0 %v7862
        %v8070 = vpop.f32.mrf.mxu0
        %v8071 = vadd.f32 %v7753, %v8070
        %8072 = vmatmul.f32.gmra.mxu0 %v7865
        %v8073 = vpop.f32.mrf.mxu0
        %v8074 = vadd.f32 %v7753, %v8073
        %8075 = vmatmul.f32.gmra.mxu0 %v7868
        %v8076 = vpop.f32.mrf.mxu0
        %v8077 = vadd.f32 %v7753, %v8076
        %8078 = vmatmul.f32.gmra.mxu0 %v7871
        %v8079 = vpop.f32.mrf.mxu0
        %v8080 = vadd.f32 %v7753, %v8079
        %8081 = vmatmul.f32.gmra.mxu0 %v7874
        %v8082 = vpop.f32.mrf.mxu0
        %v8083 = vadd.f32 %v7753, %v8082
        %8084 = vmatmul.f32.gmra.mxu0 %v7877
        %v8085 = vpop.f32.mrf.mxu0
        %v8086 = vadd.f32 %v7753, %v8085
        %8087 = vmatmul.f32.gmra.mxu0 %v7880
        %v8088 = vpop.f32.mrf.mxu0
        %v8089 = vadd.f32 %v7753, %v8088
        %8090 = vmatmul.f32.gmra.mxu0 %v7883
        %v8091 = vpop.f32.mrf.mxu0
        %v8092 = vadd.f32 %v7753, %v8091
        %8093 = vmatmul.f32.gmra.mxu0 %v7886
        %v8094 = vpop.f32.mrf.mxu0
        %v8095 = vadd.f32 %v7753, %v8094
        %8096 = vmatmul.f32.gmra.mxu0 %v7889
        %v8097 = vpop.f32.mrf.mxu0
        %v8098 = vadd.f32 %v7753, %v8097
        %8099 = vmatmul.f32.gmra.mxu0 %v7892
        %v8100 = vpop.f32.mrf.mxu0
        %v8101 = vadd.f32 %v7753, %v8100
        %8102 = vmatmul.f32.gmra.mxu0 %v7895
        %v8103 = vpop.f32.mrf.mxu0
        %v8104 = vadd.f32 %v7753, %v8103
        %8105 = vmatmul.f32.gmra.mxu0 %v7898
        %v8106 = vpop.f32.mrf.mxu0
        %v8107 = vadd.f32 %v7753, %v8106
        %8108 = vmatmul.f32.gmra.mxu0 %v7901
        %v8109 = vpop.f32.mrf.mxu0
        %v8110 = vadd.f32 %v7753, %v8109
        %8111 = vmatmul.f32.gmra.mxu0 %v7904
        %v8112 = vpop.f32.mrf.mxu0
        %v8113 = vadd.f32 %v7753, %v8112
        %8114 = vmatmul.f32.gmra.mxu0 %v7907
        %v8115 = vpop.f32.mrf.mxu0
        %v8116 = vadd.f32 %v7753, %v8115
        %8117 = vmatmul.f32.gmra.mxu0 %v7910
        %v8118 = vpop.f32.mrf.mxu0
        %v8119 = vadd.f32 %v7753, %v8118
        %8120 = vmatmul.f32.gmra.mxu0 %v7913
        %v8121 = vpop.f32.mrf.mxu0
        %v8122 = vadd.f32 %v7753, %v8121
        %8123 = vmatmul.f32.gmra.mxu0 %v7916
        %v8124 = vpop.f32.mrf.mxu0
        %v8125 = vadd.f32 %v7753, %v8124
        %8126 = vmatmul.f32.gmra.mxu0 %v7919
        %v8127 = vpop.f32.mrf.mxu0
        %v8128 = vadd.f32 %v7753, %v8127
        %8129 = vmatmul.f32.gmra.mxu0 %v7922
        %v8130 = vpop.f32.mrf.mxu0
        %v8131 = vadd.f32 %v7753, %v8130
        %8132 = vmatmul.f32.gmra.mxu0 %v7925
        %v8133 = vpop.f32.mrf.mxu0
        %v8134 = vadd.f32 %v7753, %v8133
        %8135 = vmatmul.f32.gmra.mxu0 %v7928
        %v8136 = vpop.f32.mrf.mxu0
        %v8137 = vadd.f32 %v7753, %v8136
        %8138 = vmatmul.f32.gmra.mxu0 %v7931
        %v8139 = vpop.f32.mrf.mxu0
        %v8140 = vadd.f32 %v7753, %v8139
        %8141 = vmatmul.f32.gmra.mxu0 %v7934
        %v8142 = vpop.f32.mrf.mxu0
        %v8143 = vadd.f32 %v7753, %v8142
        %8144 = vmatmul.f32.gmra.mxu0 %v7937
        %v8145 = vpop.f32.mrf.mxu0
        %v8146 = vadd.f32 %v7753, %v8145
        %8147 = vmatmul.f32.gmra.mxu0 %v7940
        %v8148 = vpop.f32.mrf.mxu0
        %v8149 = vadd.f32 %v7753, %v8148
        %8150 = vmatmul.f32.gmra.mxu0 %v7943
        %v8151 = vpop.f32.mrf.mxu0
        %v8152 = vadd.f32 %v7753, %v8151
        %8153 = vmatmul.f32.gmra.mxu0 %v7946
        %v8154 = vpop.f32.mrf.mxu0
        %v8155 = vadd.f32 %v7753, %v8154
        %8156 = vdwg.mxu0
        %vm8157 = vcmask 23552
        %v8158 = vsel %vm8157, %v7966, -inf
        %8159 = vmax.xlane.f32.xlu0 %v8158
        %v8160 = vpop.xlane.xlu0 %8159
        %v8161 = vsel %vm8157, %v7969, -inf
        %8162 = vmax.xlane.f32.xlu0 %v8161
        %v8163 = vpop.xlane.xlu0 %8162
        %v8164 = vsel %vm8157, %v7972, -inf
        %8165 = vmax.xlane.f32.xlu0 %v8164
        %v8166 = vpop.xlane.xlu0 %8165
        %v8167 = vsel %vm8157, %v7975, -inf
        %8168 = vmax.xlane.f32.xlu0 %v8167
        %v8169 = vpop.xlane.xlu0 %8168
        %v8170 = vsel %vm8157, %v7978, -inf
        %8171 = vmax.xlane.f32.xlu0 %v8170
        %v8172 = vpop.xlane.xlu0 %8171
        %v8173 = vsel %vm8157, %v7981, -inf
        %8174 = vmax.xlane.f32.xlu0 %v8173
        %v8175 = vpop.xlane.xlu0 %8174
        %v8176 = vsel %vm8157, %v7984, -inf
        %8177 = vmax.xlane.f32.xlu0 %v8176
        %v8178 = vpop.xlane.xlu0 %8177
        %v8179 = vsel %vm8157, %v7987, -inf
        %8180 = vmax.xlane.f32.xlu0 %v8179
        %v8181 = vpop.xlane.xlu0 %8180
        %v8182 = vsel %vm8157, %v7990, -inf
        %8183 = vmax.xlane.f32.xlu0 %v8182
        %v8184 = vpop.xlane.xlu0 %8183
        %v8185 = vsel %vm8157, %v7993, -inf
        %8186 = vmax.xlane.f32.xlu0 %v8185
        %v8187 = vpop.xlane.xlu0 %8186
        %v8188 = vsel %vm8157, %v7996, -inf
        %8189 = vmax.xlane.f32.xlu0 %v8188
        %v8190 = vpop.xlane.xlu0 %8189
        %v8191 = vsel %vm8157, %v7999, -inf
        %8192 = vmax.xlane.f32.xlu0 %v8191
        %v8193 = vpop.xlane.xlu0 %8192
        %v8194 = vsel %vm8157, %v8002, -inf
        %8195 = vmax.xlane.f32.xlu0 %v8194
        %v8196 = vpop.xlane.xlu0 %8195
        %v8197 = vsel %vm8157, %v8005, -inf
        %8198 = vmax.xlane.f32.xlu0 %v8197
        %v8199 = vpop.xlane.xlu0 %8198
        %v8200 = vsel %vm8157, %v8008, -inf
        %8201 = vmax.xlane.f32.xlu0 %v8200
        %v8202 = vpop.xlane.xlu0 %8201
        %v8203 = vsel %vm8157, %v8011, -inf
        %8204 = vmax.xlane.f32.xlu0 %v8203
        %v8205 = vpop.xlane.xlu0 %8204
        %v8206 = vsel %vm8157, %v8014, -inf
        %8207 = vmax.xlane.f32.xlu0 %v8206
        %v8208 = vpop.xlane.xlu0 %8207
        %v8209 = vsel %vm8157, %v8017, -inf
        %8210 = vmax.xlane.f32.xlu0 %v8209
        %v8211 = vpop.xlane.xlu0 %8210
        %v8212 = vsel %vm8157, %v8020, -inf
        %8213 = vmax.xlane.f32.xlu0 %v8212
        %v8214 = vpop.xlane.xlu0 %8213
        %v8215 = vsel %vm8157, %v8023, -inf
        %8216 = vmax.xlane.f32.xlu0 %v8215
        %v8217 = vpop.xlane.xlu0 %8216
        %v8218 = vsel %vm8157, %v8026, -inf
        %8219 = vmax.xlane.f32.xlu0 %v8218
        %v8220 = vpop.xlane.xlu0 %8219
        %v8221 = vsel %vm8157, %v8029, -inf
        %8222 = vmax.xlane.f32.xlu0 %v8221
        %v8223 = vpop.xlane.xlu0 %8222
        %v8224 = vsel %vm8157, %v8032, -inf
        %8225 = vmax.xlane.f32.xlu0 %v8224
        %v8226 = vpop.xlane.xlu0 %8225
        %v8227 = vsel %vm8157, %v8035, -inf
        %8228 = vmax.xlane.f32.xlu0 %v8227
        %v8229 = vpop.xlane.xlu0 %8228
        %v8230 = vsel %vm8157, %v8038, -inf
        %8231 = vmax.xlane.f32.xlu0 %v8230
        %v8232 = vpop.xlane.xlu0 %8231
        %v8233 = vsel %vm8157, %v8041, -inf
        %8234 = vmax.xlane.f32.xlu0 %v8233
        %v8235 = vpop.xlane.xlu0 %8234
        %v8236 = vsel %vm8157, %v8044, -inf
        %8237 = vmax.xlane.f32.xlu0 %v8236
        %v8238 = vpop.xlane.xlu0 %8237
        %v8239 = vsel %vm8157, %v8047, -inf
        %8240 = vmax.xlane.f32.xlu0 %v8239
        %v8241 = vpop.xlane.xlu0 %8240
        %v8242 = vsel %vm8157, %v8050, -inf
        %8243 = vmax.xlane.f32.xlu0 %v8242
        %v8244 = vpop.xlane.xlu0 %8243
        %v8245 = vsel %vm8157, %v8053, -inf
        %8246 = vmax.xlane.f32.xlu0 %v8245
        %v8247 = vpop.xlane.xlu0 %8246
        %v8248 = vsel %vm8157, %v8056, -inf
        %8249 = vmax.xlane.f32.xlu0 %v8248
        %v8250 = vpop.xlane.xlu0 %8249
        %v8251 = vsel %vm8157, %v8059, -inf
        %8252 = vmax.xlane.f32.xlu0 %v8251
        %v8253 = vpop.xlane.xlu0 %8252
        %v8254 = vsel %vm8157, %v8062, -inf
        %8255 = vmax.xlane.f32.xlu0 %v8254
        %v8256 = vpop.xlane.xlu0 %8255
        %v8257 = vsel %vm8157, %v8065, -inf
        %8258 = vmax.xlane.f32.xlu0 %v8257
        %v8259 = vpop.xlane.xlu0 %8258
        %v8260 = vsel %vm8157, %v8068, -inf
        %8261 = vmax.xlane.f32.xlu0 %v8260
        %v8262 = vpop.xlane.xlu0 %8261
        %v8263 = vsel %vm8157, %v8071, -inf
        %8264 = vmax.xlane.f32.xlu0 %v8263
        %v8265 = vpop.xlane.xlu0 %8264
        %v8266 = vsel %vm8157, %v8074, -inf
        %8267 = vmax.xlane.f32.xlu0 %v8266
        %v8268 = vpop.xlane.xlu0 %8267
        %v8269 = vsel %vm8157, %v8077, -inf
        %8270 = vmax.xlane.f32.xlu0 %v8269
        %v8271 = vpop.xlane.xlu0 %8270
        %v8272 = vsel %vm8157, %v8080, -inf
        %8273 = vmax.xlane.f32.xlu0 %v8272
        %v8274 = vpop.xlane.xlu0 %8273
        %v8275 = vsel %vm8157, %v8083, -inf
        %8276 = vmax.xlane.f32.xlu0 %v8275
        %v8277 = vpop.xlane.xlu0 %8276
        %v8278 = vsel %vm8157, %v8086, -inf
        %8279 = vmax.xlane.f32.xlu0 %v8278
        %v8280 = vpop.xlane.xlu0 %8279
        %v8281 = vsel %vm8157, %v8089, -inf
        %8282 = vmax.xlane.f32.xlu0 %v8281
        %v8283 = vpop.xlane.xlu0 %8282
        %v8284 = vsel %vm8157, %v8092, -inf
        %8285 = vmax.xlane.f32.xlu0 %v8284
        %v8286 = vpop.xlane.xlu0 %8285
        %v8287 = vsel %vm8157, %v8095, -inf
        %8288 = vmax.xlane.f32.xlu0 %v8287
        %v8289 = vpop.xlane.xlu0 %8288
        %v8290 = vsel %vm8157, %v8098, -inf
        %8291 = vmax.xlane.f32.xlu0 %v8290
        %v8292 = vpop.xlane.xlu0 %8291
        %v8293 = vsel %vm8157, %v8101, -inf
        %8294 = vmax.xlane.f32.xlu0 %v8293
        %v8295 = vpop.xlane.xlu0 %8294
        %v8296 = vsel %vm8157, %v8104, -inf
        %8297 = vmax.xlane.f32.xlu0 %v8296
        %v8298 = vpop.xlane.xlu0 %8297
        %v8299 = vsel %vm8157, %v8107, -inf
        %8300 = vmax.xlane.f32.xlu0 %v8299
        %v8301 = vpop.xlane.xlu0 %8300
        %v8302 = vsel %vm8157, %v8110, -inf
        %8303 = vmax.xlane.f32.xlu0 %v8302
        %v8304 = vpop.xlane.xlu0 %8303
        %v8305 = vsel %vm8157, %v8113, -inf
        %8306 = vmax.xlane.f32.xlu0 %v8305
        %v8307 = vpop.xlane.xlu0 %8306
        %v8308 = vsel %vm8157, %v8116, -inf
        %8309 = vmax.xlane.f32.xlu0 %v8308
        %v8310 = vpop.xlane.xlu0 %8309
        %v8311 = vsel %vm8157, %v8119, -inf
        %8312 = vmax.xlane.f32.xlu0 %v8311
        %v8313 = vpop.xlane.xlu0 %8312
        %v8314 = vsel %vm8157, %v8122, -inf
        %8315 = vmax.xlane.f32.xlu0 %v8314
        %v8316 = vpop.xlane.xlu0 %8315
        %v8317 = vsel %vm8157, %v8125, -inf
        %8318 = vmax.xlane.f32.xlu0 %v8317
        %v8319 = vpop.xlane.xlu0 %8318
        %v8320 = vsel %vm8157, %v8128, -inf
        %8321 = vmax.xlane.f32.xlu0 %v8320
        %v8322 = vpop.xlane.xlu0 %8321
        %v8323 = vsel %vm8157, %v8131, -inf
        %8324 = vmax.xlane.f32.xlu0 %v8323
        %v8325 = vpop.xlane.xlu0 %8324
        %v8326 = vsel %vm8157, %v8134, -inf
        %8327 = vmax.xlane.f32.xlu0 %v8326
        %v8328 = vpop.xlane.xlu0 %8327
        %v8329 = vsel %vm8157, %v8137, -inf
        %8330 = vmax.xlane.f32.xlu0 %v8329
        %v8331 = vpop.xlane.xlu0 %8330
        %v8332 = vsel %vm8157, %v8140, -inf
        %8333 = vmax.xlane.f32.xlu0 %v8332
        %v8334 = vpop.xlane.xlu0 %8333
        %v8335 = vsel %vm8157, %v8143, -inf
        %8336 = vmax.xlane.f32.xlu0 %v8335
        %v8337 = vpop.xlane.xlu0 %8336
        %v8338 = vsel %vm8157, %v8146, -inf
        %8339 = vmax.xlane.f32.xlu0 %v8338
        %v8340 = vpop.xlane.xlu0 %8339
        %v8341 = vsel %vm8157, %v8149, -inf
        %8342 = vmax.xlane.f32.xlu0 %v8341
        %v8343 = vpop.xlane.xlu0 %8342
        %v8344 = vsel %vm8157, %v8152, -inf
        %8345 = vmax.xlane.f32.xlu0 %v8344
        %v8346 = vpop.xlane.xlu0 %8345
        %v8347 = vsel %vm8157, %v8155, -inf
        %8348 = vmax.xlane.f32.xlu0 %v8347
        %v8349 = vpop.xlane.xlu0 %8348
        %v8350 = vsub.f32 %v7966, %v8160
        %v8351 = vsub.f32 %v7969, %v8163
        %v8352 = vsub.f32 %v7972, %v8166
        %v8353 = vsub.f32 %v7975, %v8169
        %v8354 = vsub.f32 %v7978, %v8172
        %v8355 = vsub.f32 %v7981, %v8175
        %v8356 = vsub.f32 %v7984, %v8178
        %v8357 = vsub.f32 %v7987, %v8181
        %v8358 = vsub.f32 %v7990, %v8184
        %v8359 = vsub.f32 %v7993, %v8187
        %v8360 = vsub.f32 %v7996, %v8190
        %v8361 = vsub.f32 %v7999, %v8193
        %v8362 = vsub.f32 %v8002, %v8196
        %v8363 = vsub.f32 %v8005, %v8199
        %v8364 = vsub.f32 %v8008, %v8202
        %v8365 = vsub.f32 %v8011, %v8205
        %v8366 = vsub.f32 %v8014, %v8208
        %v8367 = vsub.f32 %v8017, %v8211
        %v8368 = vsub.f32 %v8020, %v8214
        %v8369 = vsub.f32 %v8023, %v8217
        %v8370 = vsub.f32 %v8026, %v8220
        %v8371 = vsub.f32 %v8029, %v8223
        %v8372 = vsub.f32 %v8032, %v8226
        %v8373 = vsub.f32 %v8035, %v8229
        %v8374 = vsub.f32 %v8038, %v8232
        %v8375 = vsub.f32 %v8041, %v8235
        %v8376 = vsub.f32 %v8044, %v8238
        %v8377 = vsub.f32 %v8047, %v8241
        %v8378 = vsub.f32 %v8050, %v8244
        %v8379 = vsub.f32 %v8053, %v8247
        %v8380 = vsub.f32 %v8056, %v8250
        %v8381 = vsub.f32 %v8059, %v8253
        %v8382 = vsub.f32 %v8062, %v8256
        %v8383 = vsub.f32 %v8065, %v8259
        %v8384 = vsub.f32 %v8068, %v8262
        %v8385 = vsub.f32 %v8071, %v8265
        %v8386 = vsub.f32 %v8074, %v8268
        %v8387 = vsub.f32 %v8077, %v8271
        %v8388 = vsub.f32 %v8080, %v8274
        %v8389 = vsub.f32 %v8083, %v8277
        %v8390 = vsub.f32 %v8086, %v8280
        %v8391 = vsub.f32 %v8089, %v8283
        %v8392 = vsub.f32 %v8092, %v8286
        %v8393 = vsub.f32 %v8095, %v8289
        %v8394 = vsub.f32 %v8098, %v8292
        %v8395 = vsub.f32 %v8101, %v8295
        %v8396 = vsub.f32 %v8104, %v8298
        %v8397 = vsub.f32 %v8107, %v8301
        %v8398 = vsub.f32 %v8110, %v8304
        %v8399 = vsub.f32 %v8113, %v8307
        %v8400 = vsub.f32 %v8116, %v8310
        %v8401 = vsub.f32 %v8119, %v8313
        %v8402 = vsub.f32 %v8122, %v8316
        %v8403 = vsub.f32 %v8125, %v8319
        %v8404 = vsub.f32 %v8128, %v8322
        %v8405 = vsub.f32 %v8131, %v8325
        %v8406 = vsub.f32 %v8134, %v8328
        %v8407 = vsub.f32 %v8137, %v8331
        %v8408 = vsub.f32 %v8140, %v8334
        %v8409 = vsub.f32 %v8143, %v8337
        %v8410 = vsub.f32 %v8146, %v8340
        %v8411 = vsub.f32 %v8149, %v8343
        %v8412 = vsub.f32 %v8152, %v8346
        %v8413 = vsub.f32 %v8155, %v8349
        %v8414 = vmul.f32 %v8350, 1.442695
        %v8415 = vpow.pop %v8414
        %v8416 = vmul.f32 %v8351, 1.442695
        %v8417 = vpow.pop %v8416
        %v8418 = vmul.f32 %v8352, 1.442695
        %v8419 = vpow.pop %v8418
        %v8420 = vmul.f32 %v8353, 1.442695
        %v8421 = vpow.pop %v8420
        %v8422 = vmul.f32 %v8354, 1.442695
        %v8423 = vpow.pop %v8422
        %v8424 = vmul.f32 %v8355, 1.442695
        %v8425 = vpow.pop %v8424
        %v8426 = vmul.f32 %v8356, 1.442695
        %v8427 = vpow.pop %v8426
        %v8428 = vmul.f32 %v8357, 1.442695
        %v8429 = vpow.pop %v8428
        %v8430 = vmul.f32 %v8358, 1.442695
        %v8431 = vpow.pop %v8430
        %v8432 = vmul.f32 %v8359, 1.442695
        %v8433 = vpow.pop %v8432
        %v8434 = vmul.f32 %v8360, 1.442695
        %v8435 = vpow.pop %v8434
        %v8436 = vmul.f32 %v8361, 1.442695
        %v8437 = vpow.pop %v8436
        %v8438 = vmul.f32 %v8362, 1.442695
        %v8439 = vpow.pop %v8438
        %v8440 = vmul.f32 %v8363, 1.442695
        %v8441 = vpow.pop %v8440
        %v8442 = vmul.f32 %v8364, 1.442695
        %v8443 = vpow.pop %v8442
        %v8444 = vmul.f32 %v8365, 1.442695
        %v8445 = vpow.pop %v8444
        %v8446 = vmul.f32 %v8366, 1.442695
        %v8447 = vpow.pop %v8446
        %v8448 = vmul.f32 %v8367, 1.442695
        %v8449 = vpow.pop %v8448
        %v8450 = vmul.f32 %v8368, 1.442695
        %v8451 = vpow.pop %v8450
        %v8452 = vmul.f32 %v8369, 1.442695
        %v8453 = vpow.pop %v8452
        %v8454 = vmul.f32 %v8370, 1.442695
        %v8455 = vpow.pop %v8454
        %v8456 = vmul.f32 %v8371, 1.442695
        %v8457 = vpow.pop %v8456
        %v8458 = vmul.f32 %v8372, 1.442695
        %v8459 = vpow.pop %v8458
        %v8460 = vmul.f32 %v8373, 1.442695
        %v8461 = vpow.pop %v8460
        %v8462 = vmul.f32 %v8374, 1.442695
        %v8463 = vpow.pop %v8462
        %v8464 = vmul.f32 %v8375, 1.442695
        %v8465 = vpow.pop %v8464
        %v8466 = vmul.f32 %v8376, 1.442695
        %v8467 = vpow.pop %v8466
        %v8468 = vmul.f32 %v8377, 1.442695
        %v8469 = vpow.pop %v8468
        %v8470 = vmul.f32 %v8378, 1.442695
        %v8471 = vpow.pop %v8470
        %v8472 = vmul.f32 %v8379, 1.442695
        %v8473 = vpow.pop %v8472
        %v8474 = vmul.f32 %v8380, 1.442695
        %v8475 = vpow.pop %v8474
        %v8476 = vmul.f32 %v8381, 1.442695
        %v8477 = vpow.pop %v8476
        %v8478 = vmul.f32 %v8382, 1.442695
        %v8479 = vpow.pop %v8478
        %v8480 = vmul.f32 %v8383, 1.442695
        %v8481 = vpow.pop %v8480
        %v8482 = vmul.f32 %v8384, 1.442695
        %v8483 = vpow.pop %v8482
        %v8484 = vmul.f32 %v8385, 1.442695
        %v8485 = vpow.pop %v8484
        %v8486 = vmul.f32 %v8386, 1.442695
        %v8487 = vpow.pop %v8486
        %v8488 = vmul.f32 %v8387, 1.442695
        %v8489 = vpow.pop %v8488
        %v8490 = vmul.f32 %v8388, 1.442695
        %v8491 = vpow.pop %v8490
        %v8492 = vmul.f32 %v8389, 1.442695
        %v8493 = vpow.pop %v8492
        %v8494 = vmul.f32 %v8390, 1.442695
        %v8495 = vpow.pop %v8494
        %v8496 = vmul.f32 %v8391, 1.442695
        %v8497 = vpow.pop %v8496
        %v8498 = vmul.f32 %v8392, 1.442695
        %v8499 = vpow.pop %v8498
        %v8500 = vmul.f32 %v8393, 1.442695
        %v8501 = vpow.pop %v8500
        %v8502 = vmul.f32 %v8394, 1.442695
        %v8503 = vpow.pop %v8502
        %v8504 = vmul.f32 %v8395, 1.442695
        %v8505 = vpow.pop %v8504
        %v8506 = vmul.f32 %v8396, 1.442695
        %v8507 = vpow.pop %v8506
        %v8508 = vmul.f32 %v8397, 1.442695
        %v8509 = vpow.pop %v8508
        %v8510 = vmul.f32 %v8398, 1.442695
        %v8511 = vpow.pop %v8510
        %v8512 = vmul.f32 %v8399, 1.442695
        %v8513 = vpow.pop %v8512
        %v8514 = vmul.f32 %v8400, 1.442695
        %v8515 = vpow.pop %v8514
        %v8516 = vmul.f32 %v8401, 1.442695
        %v8517 = vpow.pop %v8516
        %v8518 = vmul.f32 %v8402, 1.442695
        %v8519 = vpow.pop %v8518
        %v8520 = vmul.f32 %v8403, 1.442695
        %v8521 = vpow.pop %v8520
        %v8522 = vmul.f32 %v8404, 1.442695
        %v8523 = vpow.pop %v8522
        %v8524 = vmul.f32 %v8405, 1.442695
        %v8525 = vpow.pop %v8524
        %v8526 = vmul.f32 %v8406, 1.442695
        %v8527 = vpow.pop %v8526
        %v8528 = vmul.f32 %v8407, 1.442695
        %v8529 = vpow.pop %v8528
        %v8530 = vmul.f32 %v8408, 1.442695
        %v8531 = vpow.pop %v8530
        %v8532 = vmul.f32 %v8409, 1.442695
        %v8533 = vpow.pop %v8532
        %v8534 = vmul.f32 %v8410, 1.442695
        %v8535 = vpow.pop %v8534
        %v8536 = vmul.f32 %v8411, 1.442695
        %v8537 = vpow.pop %v8536
        %v8538 = vmul.f32 %v8412, 1.442695
        %v8539 = vpow.pop %v8538
        %v8540 = vmul.f32 %v8413, 1.442695
        %v8541 = vpow.pop %v8540
        %v8542 = vsel %vm8157, %v8415, 0.0
        %8543 = vadd.xlane.f32.xlu0 %v8542
        %v8544 = vpop.xlane.xlu0 %8543
        %v8545 = vsel %vm8157, %v8417, 0.0
        %8546 = vadd.xlane.f32.xlu0 %v8545
        %v8547 = vpop.xlane.xlu0 %8546
        %v8548 = vsel %vm8157, %v8419, 0.0
        %8549 = vadd.xlane.f32.xlu0 %v8548
        %v8550 = vpop.xlane.xlu0 %8549
        %v8551 = vsel %vm8157, %v8421, 0.0
        %8552 = vadd.xlane.f32.xlu0 %v8551
        %v8553 = vpop.xlane.xlu0 %8552
        %v8554 = vsel %vm8157, %v8423, 0.0
        %8555 = vadd.xlane.f32.xlu0 %v8554
        %v8556 = vpop.xlane.xlu0 %8555
        %v8557 = vsel %vm8157, %v8425, 0.0
        %8558 = vadd.xlane.f32.xlu0 %v8557
        %v8559 = vpop.xlane.xlu0 %8558
        %v8560 = vsel %vm8157, %v8427, 0.0
        %8561 = vadd.xlane.f32.xlu0 %v8560
        %v8562 = vpop.xlane.xlu0 %8561
        %v8563 = vsel %vm8157, %v8429, 0.0
        %8564 = vadd.xlane.f32.xlu0 %v8563
        %v8565 = vpop.xlane.xlu0 %8564
        %v8566 = vsel %vm8157, %v8431, 0.0
        %8567 = vadd.xlane.f32.xlu0 %v8566
        %v8568 = vpop.xlane.xlu0 %8567
        %v8569 = vsel %vm8157, %v8433, 0.0
        %8570 = vadd.xlane.f32.xlu0 %v8569
        %v8571 = vpop.xlane.xlu0 %8570
        %v8572 = vsel %vm8157, %v8435, 0.0
        %8573 = vadd.xlane.f32.xlu0 %v8572
        %v8574 = vpop.xlane.xlu0 %8573
        %v8575 = vsel %vm8157, %v8437, 0.0
        %8576 = vadd.xlane.f32.xlu0 %v8575
        %v8577 = vpop.xlane.xlu0 %8576
        %v8578 = vsel %vm8157, %v8439, 0.0
        %8579 = vadd.xlane.f32.xlu0 %v8578
        %v8580 = vpop.xlane.xlu0 %8579
        %v8581 = vsel %vm8157, %v8441, 0.0
        %8582 = vadd.xlane.f32.xlu0 %v8581
        %v8583 = vpop.xlane.xlu0 %8582
        %v8584 = vsel %vm8157, %v8443, 0.0
        %8585 = vadd.xlane.f32.xlu0 %v8584
        %v8586 = vpop.xlane.xlu0 %8585
        %v8587 = vsel %vm8157, %v8445, 0.0
        %8588 = vadd.xlane.f32.xlu0 %v8587
        %v8589 = vpop.xlane.xlu0 %8588
        %v8590 = vsel %vm8157, %v8447, 0.0
        %8591 = vadd.xlane.f32.xlu0 %v8590
        %v8592 = vpop.xlane.xlu0 %8591
        %v8593 = vsel %vm8157, %v8449, 0.0
        %8594 = vadd.xlane.f32.xlu0 %v8593
        %v8595 = vpop.xlane.xlu0 %8594
        %v8596 = vsel %vm8157, %v8451, 0.0
        %8597 = vadd.xlane.f32.xlu0 %v8596
        %v8598 = vpop.xlane.xlu0 %8597
        %v8599 = vsel %vm8157, %v8453, 0.0
        %8600 = vadd.xlane.f32.xlu0 %v8599
        %v8601 = vpop.xlane.xlu0 %8600
        %v8602 = vsel %vm8157, %v8455, 0.0
        %8603 = vadd.xlane.f32.xlu0 %v8602
        %v8604 = vpop.xlane.xlu0 %8603
        %v8605 = vsel %vm8157, %v8457, 0.0
        %8606 = vadd.xlane.f32.xlu0 %v8605
        %v8607 = vpop.xlane.xlu0 %8606
        %v8608 = vsel %vm8157, %v8459, 0.0
        %8609 = vadd.xlane.f32.xlu0 %v8608
        %v8610 = vpop.xlane.xlu0 %8609
        %v8611 = vsel %vm8157, %v8461, 0.0
        %8612 = vadd.xlane.f32.xlu0 %v8611
        %v8613 = vpop.xlane.xlu0 %8612
        %v8614 = vsel %vm8157, %v8463, 0.0
        %8615 = vadd.xlane.f32.xlu0 %v8614
        %v8616 = vpop.xlane.xlu0 %8615
        %v8617 = vsel %vm8157, %v8465, 0.0
        %8618 = vadd.xlane.f32.xlu0 %v8617
        %v8619 = vpop.xlane.xlu0 %8618
        %v8620 = vsel %vm8157, %v8467, 0.0
        %8621 = vadd.xlane.f32.xlu0 %v8620
        %v8622 = vpop.xlane.xlu0 %8621
        %v8623 = vsel %vm8157, %v8469, 0.0
        %8624 = vadd.xlane.f32.xlu0 %v8623
        %v8625 = vpop.xlane.xlu0 %8624
        %v8626 = vsel %vm8157, %v8471, 0.0
        %8627 = vadd.xlane.f32.xlu0 %v8626
        %v8628 = vpop.xlane.xlu0 %8627
        %v8629 = vsel %vm8157, %v8473, 0.0
        %8630 = vadd.xlane.f32.xlu0 %v8629
        %v8631 = vpop.xlane.xlu0 %8630
        %v8632 = vsel %vm8157, %v8475, 0.0
        %8633 = vadd.xlane.f32.xlu0 %v8632
        %v8634 = vpop.xlane.xlu0 %8633
        %v8635 = vsel %vm8157, %v8477, 0.0
        %8636 = vadd.xlane.f32.xlu0 %v8635
        %v8637 = vpop.xlane.xlu0 %8636
        %v8638 = vsel %vm8157, %v8479, 0.0
        %8639 = vadd.xlane.f32.xlu0 %v8638
        %v8640 = vpop.xlane.xlu0 %8639
        %v8641 = vsel %vm8157, %v8481, 0.0
        %8642 = vadd.xlane.f32.xlu0 %v8641
        %v8643 = vpop.xlane.xlu0 %8642
        %v8644 = vsel %vm8157, %v8483, 0.0
        %8645 = vadd.xlane.f32.xlu0 %v8644
        %v8646 = vpop.xlane.xlu0 %8645
        %v8647 = vsel %vm8157, %v8485, 0.0
        %8648 = vadd.xlane.f32.xlu0 %v8647
        %v8649 = vpop.xlane.xlu0 %8648
        %v8650 = vsel %vm8157, %v8487, 0.0
        %8651 = vadd.xlane.f32.xlu0 %v8650
        %v8652 = vpop.xlane.xlu0 %8651
        %v8653 = vsel %vm8157, %v8489, 0.0
        %8654 = vadd.xlane.f32.xlu0 %v8653
        %v8655 = vpop.xlane.xlu0 %8654
        %v8656 = vsel %vm8157, %v8491, 0.0
        %8657 = vadd.xlane.f32.xlu0 %v8656
        %v8658 = vpop.xlane.xlu0 %8657
        %v8659 = vsel %vm8157, %v8493, 0.0
        %8660 = vadd.xlane.f32.xlu0 %v8659
        %v8661 = vpop.xlane.xlu0 %8660
        %v8662 = vsel %vm8157, %v8495, 0.0
        %8663 = vadd.xlane.f32.xlu0 %v8662
        %v8664 = vpop.xlane.xlu0 %8663
        %v8665 = vsel %vm8157, %v8497, 0.0
        %8666 = vadd.xlane.f32.xlu0 %v8665
        %v8667 = vpop.xlane.xlu0 %8666
        %v8668 = vsel %vm8157, %v8499, 0.0
        %8669 = vadd.xlane.f32.xlu0 %v8668
        %v8670 = vpop.xlane.xlu0 %8669
        %v8671 = vsel %vm8157, %v8501, 0.0
        %8672 = vadd.xlane.f32.xlu0 %v8671
        %v8673 = vpop.xlane.xlu0 %8672
        %v8674 = vsel %vm8157, %v8503, 0.0
        %8675 = vadd.xlane.f32.xlu0 %v8674
        %v8676 = vpop.xlane.xlu0 %8675
        %v8677 = vsel %vm8157, %v8505, 0.0
        %8678 = vadd.xlane.f32.xlu0 %v8677
        %v8679 = vpop.xlane.xlu0 %8678
        %v8680 = vsel %vm8157, %v8507, 0.0
        %8681 = vadd.xlane.f32.xlu0 %v8680
        %v8682 = vpop.xlane.xlu0 %8681
        %v8683 = vsel %vm8157, %v8509, 0.0
        %8684 = vadd.xlane.f32.xlu0 %v8683
        %v8685 = vpop.xlane.xlu0 %8684
        %v8686 = vsel %vm8157, %v8511, 0.0
        %8687 = vadd.xlane.f32.xlu0 %v8686
        %v8688 = vpop.xlane.xlu0 %8687
        %v8689 = vsel %vm8157, %v8513, 0.0
        %8690 = vadd.xlane.f32.xlu0 %v8689
        %v8691 = vpop.xlane.xlu0 %8690
        %v8692 = vsel %vm8157, %v8515, 0.0
        %8693 = vadd.xlane.f32.xlu0 %v8692
        %v8694 = vpop.xlane.xlu0 %8693
        %v8695 = vsel %vm8157, %v8517, 0.0
        %8696 = vadd.xlane.f32.xlu0 %v8695
        %v8697 = vpop.xlane.xlu0 %8696
        %v8698 = vsel %vm8157, %v8519, 0.0
        %8699 = vadd.xlane.f32.xlu0 %v8698
        %v8700 = vpop.xlane.xlu0 %8699
        %v8701 = vsel %vm8157, %v8521, 0.0
        %8702 = vadd.xlane.f32.xlu0 %v8701
        %v8703 = vpop.xlane.xlu0 %8702
        %v8704 = vsel %vm8157, %v8523, 0.0
        %8705 = vadd.xlane.f32.xlu0 %v8704
        %v8706 = vpop.xlane.xlu0 %8705
        %v8707 = vsel %vm8157, %v8525, 0.0
        %8708 = vadd.xlane.f32.xlu0 %v8707
        %v8709 = vpop.xlane.xlu0 %8708
        %v8710 = vsel %vm8157, %v8527, 0.0
        %8711 = vadd.xlane.f32.xlu0 %v8710
        %v8712 = vpop.xlane.xlu0 %8711
        %v8713 = vsel %vm8157, %v8529, 0.0
        %8714 = vadd.xlane.f32.xlu0 %v8713
        %v8715 = vpop.xlane.xlu0 %8714
        %v8716 = vsel %vm8157, %v8531, 0.0
        %8717 = vadd.xlane.f32.xlu0 %v8716
        %v8718 = vpop.xlane.xlu0 %8717
        %v8719 = vsel %vm8157, %v8533, 0.0
        %8720 = vadd.xlane.f32.xlu0 %v8719
        %v8721 = vpop.xlane.xlu0 %8720
        %v8722 = vsel %vm8157, %v8535, 0.0
        %8723 = vadd.xlane.f32.xlu0 %v8722
        %v8724 = vpop.xlane.xlu0 %8723
        %v8725 = vsel %vm8157, %v8537, 0.0
        %8726 = vadd.xlane.f32.xlu0 %v8725
        %v8727 = vpop.xlane.xlu0 %8726
        %v8728 = vsel %vm8157, %v8539, 0.0
        %8729 = vadd.xlane.f32.xlu0 %v8728
        %v8730 = vpop.xlane.xlu0 %8729
        %v8731 = vsel %vm8157, %v8541, 0.0
        %8732 = vadd.xlane.f32.xlu0 %v8731
        %v8733 = vpop.xlane.xlu0 %8732
        %v8734 = vrcp.pop %v8544
        %v8735 = vmul.f32 %v8544, %v8734
        %v8736 = vsub.f32 1.0, %v8735
        %v8737 = vmul.f32 %v8734, %v8736
        %v8738 = vadd.f32 %v8734, %v8737
        %vm8739 = vweird.f32 %v8544
        %vm8740 = vweird.f32 %v8734
        %vm8741 = vmor %vm8739, %vm8740
        %v8742 = vsel %vm8741, %v8734, %v8738
        %v8743 = vand.u32 2147483647, %v8544
        %vm8744 = vcmp.eq.f32.partialorder %v8743, 8.507059e+37
        %v8745 = vand.u32 %v8544, 2147483648
        %v8746 = vor.u32 1.1754944e-38, %v8745
        %v8747 = vsel %vm8744, %v8746, %v8742
        %v8748 = vmul.f32 %v8415, %v8747
        %v8749 = vrcp.pop %v8547
        %v8750 = vmul.f32 %v8547, %v8749
        %v8751 = vsub.f32 1.0, %v8750
        %v8752 = vmul.f32 %v8749, %v8751
        %v8753 = vadd.f32 %v8749, %v8752
        %vm8754 = vweird.f32 %v8547
        %vm8755 = vweird.f32 %v8749
        %vm8756 = vmor %vm8754, %vm8755
        %v8757 = vsel %vm8756, %v8749, %v8753
        %v8758 = vand.u32 2147483647, %v8547
        %vm8759 = vcmp.eq.f32.partialorder %v8758, 8.507059e+37
        %v8760 = vand.u32 %v8547, 2147483648
        %v8761 = vor.u32 1.1754944e-38, %v8760
        %v8762 = vsel %vm8759, %v8761, %v8757
        %v8763 = vmul.f32 %v8417, %v8762
        %v8764 = vrcp.pop %v8550
        %v8765 = vmul.f32 %v8550, %v8764
        %v8766 = vsub.f32 1.0, %v8765
        %v8767 = vmul.f32 %v8764, %v8766
        %v8768 = vadd.f32 %v8764, %v8767
        %vm8769 = vweird.f32 %v8550
        %vm8770 = vweird.f32 %v8764
        %vm8771 = vmor %vm8769, %vm8770
        %v8772 = vsel %vm8771, %v8764, %v8768
        %v8773 = vand.u32 2147483647, %v8550
        %vm8774 = vcmp.eq.f32.partialorder %v8773, 8.507059e+37
        %v8775 = vand.u32 %v8550, 2147483648
        %v8776 = vor.u32 1.1754944e-38, %v8775
        %v8777 = vsel %vm8774, %v8776, %v8772
        %v8778 = vmul.f32 %v8419, %v8777
        %v8779 = vrcp.pop %v8553
        %v8780 = vmul.f32 %v8553, %v8779
        %v8781 = vsub.f32 1.0, %v8780
        %v8782 = vmul.f32 %v8779, %v8781
        %v8783 = vadd.f32 %v8779, %v8782
        %vm8784 = vweird.f32 %v8553
        %vm8785 = vweird.f32 %v8779
        %vm8786 = vmor %vm8784, %vm8785
        %v8787 = vsel %vm8786, %v8779, %v8783
        %v8788 = vand.u32 2147483647, %v8553
        %vm8789 = vcmp.eq.f32.partialorder %v8788, 8.507059e+37
        %v8790 = vand.u32 %v8553, 2147483648
        %v8791 = vor.u32 1.1754944e-38, %v8790
        %v8792 = vsel %vm8789, %v8791, %v8787
        %v8793 = vmul.f32 %v8421, %v8792
        %v8794 = vrcp.pop %v8556
        %v8795 = vmul.f32 %v8556, %v8794
        %v8796 = vsub.f32 1.0, %v8795
        %v8797 = vmul.f32 %v8794, %v8796
        %v8798 = vadd.f32 %v8794, %v8797
        %vm8799 = vweird.f32 %v8556
        %vm8800 = vweird.f32 %v8794
        %vm8801 = vmor %vm8799, %vm8800
        %v8802 = vsel %vm8801, %v8794, %v8798
        %v8803 = vand.u32 2147483647, %v8556
        %vm8804 = vcmp.eq.f32.partialorder %v8803, 8.507059e+37
        %v8805 = vand.u32 %v8556, 2147483648
        %v8806 = vor.u32 1.1754944e-38, %v8805
        %v8807 = vsel %vm8804, %v8806, %v8802
        %v8808 = vmul.f32 %v8423, %v8807
        %v8809 = vrcp.pop %v8559
        %v8810 = vmul.f32 %v8559, %v8809
        %v8811 = vsub.f32 1.0, %v8810
        %v8812 = vmul.f32 %v8809, %v8811
        %v8813 = vadd.f32 %v8809, %v8812
        %vm8814 = vweird.f32 %v8559
        %vm8815 = vweird.f32 %v8809
        %vm8816 = vmor %vm8814, %vm8815
        %v8817 = vsel %vm8816, %v8809, %v8813
        %v8818 = vand.u32 2147483647, %v8559
        %vm8819 = vcmp.eq.f32.partialorder %v8818, 8.507059e+37
        %v8820 = vand.u32 %v8559, 2147483648
        %v8821 = vor.u32 1.1754944e-38, %v8820
        %v8822 = vsel %vm8819, %v8821, %v8817
        %v8823 = vmul.f32 %v8425, %v8822
        %v8824 = vrcp.pop %v8562
        %v8825 = vmul.f32 %v8562, %v8824
        %v8826 = vsub.f32 1.0, %v8825
        %v8827 = vmul.f32 %v8824, %v8826
        %v8828 = vadd.f32 %v8824, %v8827
        %vm8829 = vweird.f32 %v8562
        %vm8830 = vweird.f32 %v8824
        %vm8831 = vmor %vm8829, %vm8830
        %v8832 = vsel %vm8831, %v8824, %v8828
        %v8833 = vand.u32 2147483647, %v8562
        %vm8834 = vcmp.eq.f32.partialorder %v8833, 8.507059e+37
        %v8835 = vand.u32 %v8562, 2147483648
        %v8836 = vor.u32 1.1754944e-38, %v8835
        %v8837 = vsel %vm8834, %v8836, %v8832
        %v8838 = vmul.f32 %v8427, %v8837
        %v8839 = vrcp.pop %v8565
        %v8840 = vmul.f32 %v8565, %v8839
        %v8841 = vsub.f32 1.0, %v8840
        %v8842 = vmul.f32 %v8839, %v8841
        %v8843 = vadd.f32 %v8839, %v8842
        %vm8844 = vweird.f32 %v8565
        %vm8845 = vweird.f32 %v8839
        %vm8846 = vmor %vm8844, %vm8845
        %v8847 = vsel %vm8846, %v8839, %v8843
        %v8848 = vand.u32 2147483647, %v8565
        %vm8849 = vcmp.eq.f32.partialorder %v8848, 8.507059e+37
        %v8850 = vand.u32 %v8565, 2147483648
        %v8851 = vor.u32 1.1754944e-38, %v8850
        %v8852 = vsel %vm8849, %v8851, %v8847
        %v8853 = vmul.f32 %v8429, %v8852
        %v8854 = vrcp.pop %v8568
        %v8855 = vmul.f32 %v8568, %v8854
        %v8856 = vsub.f32 1.0, %v8855
        %v8857 = vmul.f32 %v8854, %v8856
        %v8858 = vadd.f32 %v8854, %v8857
        %vm8859 = vweird.f32 %v8568
        %vm8860 = vweird.f32 %v8854
        %vm8861 = vmor %vm8859, %vm8860
        %v8862 = vsel %vm8861, %v8854, %v8858
        %v8863 = vand.u32 2147483647, %v8568
        %vm8864 = vcmp.eq.f32.partialorder %v8863, 8.507059e+37
        %v8865 = vand.u32 %v8568, 2147483648
        %v8866 = vor.u32 1.1754944e-38, %v8865
        %v8867 = vsel %vm8864, %v8866, %v8862
        %v8868 = vmul.f32 %v8431, %v8867
        %v8869 = vrcp.pop %v8571
        %v8870 = vmul.f32 %v8571, %v8869
        %v8871 = vsub.f32 1.0, %v8870
        %v8872 = vmul.f32 %v8869, %v8871
        %v8873 = vadd.f32 %v8869, %v8872
        %vm8874 = vweird.f32 %v8571
        %vm8875 = vweird.f32 %v8869
        %vm8876 = vmor %vm8874, %vm8875
        %v8877 = vsel %vm8876, %v8869, %v8873
        %v8878 = vand.u32 2147483647, %v8571
        %vm8879 = vcmp.eq.f32.partialorder %v8878, 8.507059e+37
        %v8880 = vand.u32 %v8571, 2147483648
        %v8881 = vor.u32 1.1754944e-38, %v8880
        %v8882 = vsel %vm8879, %v8881, %v8877
        %v8883 = vmul.f32 %v8433, %v8882
        %v8884 = vrcp.pop %v8574
        %v8885 = vmul.f32 %v8574, %v8884
        %v8886 = vsub.f32 1.0, %v8885
        %v8887 = vmul.f32 %v8884, %v8886
        %v8888 = vadd.f32 %v8884, %v8887
        %vm8889 = vweird.f32 %v8574
        %vm8890 = vweird.f32 %v8884
        %vm8891 = vmor %vm8889, %vm8890
        %v8892 = vsel %vm8891, %v8884, %v8888
        %v8893 = vand.u32 2147483647, %v8574
        %vm8894 = vcmp.eq.f32.partialorder %v8893, 8.507059e+37
        %v8895 = vand.u32 %v8574, 2147483648
        %v8896 = vor.u32 1.1754944e-38, %v8895
        %v8897 = vsel %vm8894, %v8896, %v8892
        %v8898 = vmul.f32 %v8435, %v8897
        %v8899 = vrcp.pop %v8577
        %v8900 = vmul.f32 %v8577, %v8899
        %v8901 = vsub.f32 1.0, %v8900
        %v8902 = vmul.f32 %v8899, %v8901
        %v8903 = vadd.f32 %v8899, %v8902
        %vm8904 = vweird.f32 %v8577
        %vm8905 = vweird.f32 %v8899
        %vm8906 = vmor %vm8904, %vm8905
        %v8907 = vsel %vm8906, %v8899, %v8903
        %v8908 = vand.u32 2147483647, %v8577
        %vm8909 = vcmp.eq.f32.partialorder %v8908, 8.507059e+37
        %v8910 = vand.u32 %v8577, 2147483648
        %v8911 = vor.u32 1.1754944e-38, %v8910
        %v8912 = vsel %vm8909, %v8911, %v8907
        %v8913 = vmul.f32 %v8437, %v8912
        %v8914 = vrcp.pop %v8580
        %v8915 = vmul.f32 %v8580, %v8914
        %v8916 = vsub.f32 1.0, %v8915
        %v8917 = vmul.f32 %v8914, %v8916
        %v8918 = vadd.f32 %v8914, %v8917
        %vm8919 = vweird.f32 %v8580
        %vm8920 = vweird.f32 %v8914
        %vm8921 = vmor %vm8919, %vm8920
        %v8922 = vsel %vm8921, %v8914, %v8918
        %v8923 = vand.u32 2147483647, %v8580
        %vm8924 = vcmp.eq.f32.partialorder %v8923, 8.507059e+37
        %v8925 = vand.u32 %v8580, 2147483648
        %v8926 = vor.u32 1.1754944e-38, %v8925
        %v8927 = vsel %vm8924, %v8926, %v8922
        %v8928 = vmul.f32 %v8439, %v8927
        %v8929 = vrcp.pop %v8583
        %v8930 = vmul.f32 %v8583, %v8929
        %v8931 = vsub.f32 1.0, %v8930
        %v8932 = vmul.f32 %v8929, %v8931
        %v8933 = vadd.f32 %v8929, %v8932
        %vm8934 = vweird.f32 %v8583
        %vm8935 = vweird.f32 %v8929
        %vm8936 = vmor %vm8934, %vm8935
        %v8937 = vsel %vm8936, %v8929, %v8933
        %v8938 = vand.u32 2147483647, %v8583
        %vm8939 = vcmp.eq.f32.partialorder %v8938, 8.507059e+37
        %v8940 = vand.u32 %v8583, 2147483648
        %v8941 = vor.u32 1.1754944e-38, %v8940
        %v8942 = vsel %vm8939, %v8941, %v8937
        %v8943 = vmul.f32 %v8441, %v8942
        %v8944 = vrcp.pop %v8586
        %v8945 = vmul.f32 %v8586, %v8944
        %v8946 = vsub.f32 1.0, %v8945
        %v8947 = vmul.f32 %v8944, %v8946
        %v8948 = vadd.f32 %v8944, %v8947
        %vm8949 = vweird.f32 %v8586
        %vm8950 = vweird.f32 %v8944
        %vm8951 = vmor %vm8949, %vm8950
        %v8952 = vsel %vm8951, %v8944, %v8948
        %v8953 = vand.u32 2147483647, %v8586
        %vm8954 = vcmp.eq.f32.partialorder %v8953, 8.507059e+37
        %v8955 = vand.u32 %v8586, 2147483648
        %v8956 = vor.u32 1.1754944e-38, %v8955
        %v8957 = vsel %vm8954, %v8956, %v8952
        %v8958 = vmul.f32 %v8443, %v8957
        %v8959 = vrcp.pop %v8589
        %v8960 = vmul.f32 %v8589, %v8959
        %v8961 = vsub.f32 1.0, %v8960
        %v8962 = vmul.f32 %v8959, %v8961
        %v8963 = vadd.f32 %v8959, %v8962
        %vm8964 = vweird.f32 %v8589
        %vm8965 = vweird.f32 %v8959
        %vm8966 = vmor %vm8964, %vm8965
        %v8967 = vsel %vm8966, %v8959, %v8963
        %v8968 = vand.u32 2147483647, %v8589
        %vm8969 = vcmp.eq.f32.partialorder %v8968, 8.507059e+37
        %v8970 = vand.u32 %v8589, 2147483648
        %v8971 = vor.u32 1.1754944e-38, %v8970
        %v8972 = vsel %vm8969, %v8971, %v8967
        %v8973 = vmul.f32 %v8445, %v8972
        %v8974 = vrcp.pop %v8592
        %v8975 = vmul.f32 %v8592, %v8974
        %v8976 = vsub.f32 1.0, %v8975
        %v8977 = vmul.f32 %v8974, %v8976
        %v8978 = vadd.f32 %v8974, %v8977
        %vm8979 = vweird.f32 %v8592
        %vm8980 = vweird.f32 %v8974
        %vm8981 = vmor %vm8979, %vm8980
        %v8982 = vsel %vm8981, %v8974, %v8978
        %v8983 = vand.u32 2147483647, %v8592
        %vm8984 = vcmp.eq.f32.partialorder %v8983, 8.507059e+37
        %v8985 = vand.u32 %v8592, 2147483648
        %v8986 = vor.u32 1.1754944e-38, %v8985
        %v8987 = vsel %vm8984, %v8986, %v8982
        %v8988 = vmul.f32 %v8447, %v8987
        %v8989 = vrcp.pop %v8595
        %v8990 = vmul.f32 %v8595, %v8989
        %v8991 = vsub.f32 1.0, %v8990
        %v8992 = vmul.f32 %v8989, %v8991
        %v8993 = vadd.f32 %v8989, %v8992
        %vm8994 = vweird.f32 %v8595
        %vm8995 = vweird.f32 %v8989
        %vm8996 = vmor %vm8994, %vm8995
        %v8997 = vsel %vm8996, %v8989, %v8993
        %v8998 = vand.u32 2147483647, %v8595
        %vm8999 = vcmp.eq.f32.partialorder %v8998, 8.507059e+37
        %v9000 = vand.u32 %v8595, 2147483648
        %v9001 = vor.u32 1.1754944e-38, %v9000
        %v9002 = vsel %vm8999, %v9001, %v8997
        %v9003 = vmul.f32 %v8449, %v9002
        %v9004 = vrcp.pop %v8598
        %v9005 = vmul.f32 %v8598, %v9004
        %v9006 = vsub.f32 1.0, %v9005
        %v9007 = vmul.f32 %v9004, %v9006
        %v9008 = vadd.f32 %v9004, %v9007
        %vm9009 = vweird.f32 %v8598
        %vm9010 = vweird.f32 %v9004
        %vm9011 = vmor %vm9009, %vm9010
        %v9012 = vsel %vm9011, %v9004, %v9008
        %v9013 = vand.u32 2147483647, %v8598
        %vm9014 = vcmp.eq.f32.partialorder %v9013, 8.507059e+37
        %v9015 = vand.u32 %v8598, 2147483648
        %v9016 = vor.u32 1.1754944e-38, %v9015
        %v9017 = vsel %vm9014, %v9016, %v9012
        %v9018 = vmul.f32 %v8451, %v9017
        %v9019 = vrcp.pop %v8601
        %v9020 = vmul.f32 %v8601, %v9019
        %v9021 = vsub.f32 1.0, %v9020
        %v9022 = vmul.f32 %v9019, %v9021
        %v9023 = vadd.f32 %v9019, %v9022
        %vm9024 = vweird.f32 %v8601
        %vm9025 = vweird.f32 %v9019
        %vm9026 = vmor %vm9024, %vm9025
        %v9027 = vsel %vm9026, %v9019, %v9023
        %v9028 = vand.u32 2147483647, %v8601
        %vm9029 = vcmp.eq.f32.partialorder %v9028, 8.507059e+37
        %v9030 = vand.u32 %v8601, 2147483648
        %v9031 = vor.u32 1.1754944e-38, %v9030
        %v9032 = vsel %vm9029, %v9031, %v9027
        %v9033 = vmul.f32 %v8453, %v9032
        %v9034 = vrcp.pop %v8604
        %v9035 = vmul.f32 %v8604, %v9034
        %v9036 = vsub.f32 1.0, %v9035
        %v9037 = vmul.f32 %v9034, %v9036
        %v9038 = vadd.f32 %v9034, %v9037
        %vm9039 = vweird.f32 %v8604
        %vm9040 = vweird.f32 %v9034
        %vm9041 = vmor %vm9039, %vm9040
        %v9042 = vsel %vm9041, %v9034, %v9038
        %v9043 = vand.u32 2147483647, %v8604
        %vm9044 = vcmp.eq.f32.partialorder %v9043, 8.507059e+37
        %v9045 = vand.u32 %v8604, 2147483648
        %v9046 = vor.u32 1.1754944e-38, %v9045
        %v9047 = vsel %vm9044, %v9046, %v9042
        %v9048 = vmul.f32 %v8455, %v9047
        %v9049 = vrcp.pop %v8607
        %v9050 = vmul.f32 %v8607, %v9049
        %v9051 = vsub.f32 1.0, %v9050
        %v9052 = vmul.f32 %v9049, %v9051
        %v9053 = vadd.f32 %v9049, %v9052
        %vm9054 = vweird.f32 %v8607
        %vm9055 = vweird.f32 %v9049
        %vm9056 = vmor %vm9054, %vm9055
        %v9057 = vsel %vm9056, %v9049, %v9053
        %v9058 = vand.u32 2147483647, %v8607
        %vm9059 = vcmp.eq.f32.partialorder %v9058, 8.507059e+37
        %v9060 = vand.u32 %v8607, 2147483648
        %v9061 = vor.u32 1.1754944e-38, %v9060
        %v9062 = vsel %vm9059, %v9061, %v9057
        %v9063 = vmul.f32 %v8457, %v9062
        %v9064 = vrcp.pop %v8610
        %v9065 = vmul.f32 %v8610, %v9064
        %v9066 = vsub.f32 1.0, %v9065
        %v9067 = vmul.f32 %v9064, %v9066
        %v9068 = vadd.f32 %v9064, %v9067
        %vm9069 = vweird.f32 %v8610
        %vm9070 = vweird.f32 %v9064
        %vm9071 = vmor %vm9069, %vm9070
        %v9072 = vsel %vm9071, %v9064, %v9068
        %v9073 = vand.u32 2147483647, %v8610
        %vm9074 = vcmp.eq.f32.partialorder %v9073, 8.507059e+37
        %v9075 = vand.u32 %v8610, 2147483648
        %v9076 = vor.u32 1.1754944e-38, %v9075
        %v9077 = vsel %vm9074, %v9076, %v9072
        %v9078 = vmul.f32 %v8459, %v9077
        %v9079 = vrcp.pop %v8613
        %v9080 = vmul.f32 %v8613, %v9079
        %v9081 = vsub.f32 1.0, %v9080
        %v9082 = vmul.f32 %v9079, %v9081
        %v9083 = vadd.f32 %v9079, %v9082
        %vm9084 = vweird.f32 %v8613
        %vm9085 = vweird.f32 %v9079
        %vm9086 = vmor %vm9084, %vm9085
        %v9087 = vsel %vm9086, %v9079, %v9083
        %v9088 = vand.u32 2147483647, %v8613
        %vm9089 = vcmp.eq.f32.partialorder %v9088, 8.507059e+37
        %v9090 = vand.u32 %v8613, 2147483648
        %v9091 = vor.u32 1.1754944e-38, %v9090
        %v9092 = vsel %vm9089, %v9091, %v9087
        %v9093 = vmul.f32 %v8461, %v9092
        %v9094 = vrcp.pop %v8616
        %v9095 = vmul.f32 %v8616, %v9094
        %v9096 = vsub.f32 1.0, %v9095
        %v9097 = vmul.f32 %v9094, %v9096
        %v9098 = vadd.f32 %v9094, %v9097
        %vm9099 = vweird.f32 %v8616
        %vm9100 = vweird.f32 %v9094
        %vm9101 = vmor %vm9099, %vm9100
        %v9102 = vsel %vm9101, %v9094, %v9098
        %v9103 = vand.u32 2147483647, %v8616
        %vm9104 = vcmp.eq.f32.partialorder %v9103, 8.507059e+37
        %v9105 = vand.u32 %v8616, 2147483648
        %v9106 = vor.u32 1.1754944e-38, %v9105
        %v9107 = vsel %vm9104, %v9106, %v9102
        %v9108 = vmul.f32 %v8463, %v9107
        %v9109 = vrcp.pop %v8619
        %v9110 = vmul.f32 %v8619, %v9109
        %v9111 = vsub.f32 1.0, %v9110
        %v9112 = vmul.f32 %v9109, %v9111
        %v9113 = vadd.f32 %v9109, %v9112
        %vm9114 = vweird.f32 %v8619
        %vm9115 = vweird.f32 %v9109
        %vm9116 = vmor %vm9114, %vm9115
        %v9117 = vsel %vm9116, %v9109, %v9113
        %v9118 = vand.u32 2147483647, %v8619
        %vm9119 = vcmp.eq.f32.partialorder %v9118, 8.507059e+37
        %v9120 = vand.u32 %v8619, 2147483648
        %v9121 = vor.u32 1.1754944e-38, %v9120
        %v9122 = vsel %vm9119, %v9121, %v9117
        %v9123 = vmul.f32 %v8465, %v9122
        %v9124 = vrcp.pop %v8622
        %v9125 = vmul.f32 %v8622, %v9124
        %v9126 = vsub.f32 1.0, %v9125
        %v9127 = vmul.f32 %v9124, %v9126
        %v9128 = vadd.f32 %v9124, %v9127
        %vm9129 = vweird.f32 %v8622
        %vm9130 = vweird.f32 %v9124
        %vm9131 = vmor %vm9129, %vm9130
        %v9132 = vsel %vm9131, %v9124, %v9128
        %v9133 = vand.u32 2147483647, %v8622
        %vm9134 = vcmp.eq.f32.partialorder %v9133, 8.507059e+37
        %v9135 = vand.u32 %v8622, 2147483648
        %v9136 = vor.u32 1.1754944e-38, %v9135
        %v9137 = vsel %vm9134, %v9136, %v9132
        %v9138 = vmul.f32 %v8467, %v9137
        %v9139 = vrcp.pop %v8625
        %v9140 = vmul.f32 %v8625, %v9139
        %v9141 = vsub.f32 1.0, %v9140
        %v9142 = vmul.f32 %v9139, %v9141
        %v9143 = vadd.f32 %v9139, %v9142
        %vm9144 = vweird.f32 %v8625
        %vm9145 = vweird.f32 %v9139
        %vm9146 = vmor %vm9144, %vm9145
        %v9147 = vsel %vm9146, %v9139, %v9143
        %v9148 = vand.u32 2147483647, %v8625
        %vm9149 = vcmp.eq.f32.partialorder %v9148, 8.507059e+37
        %v9150 = vand.u32 %v8625, 2147483648
        %v9151 = vor.u32 1.1754944e-38, %v9150
        %v9152 = vsel %vm9149, %v9151, %v9147
        %v9153 = vmul.f32 %v8469, %v9152
        %v9154 = vrcp.pop %v8628
        %v9155 = vmul.f32 %v8628, %v9154
        %v9156 = vsub.f32 1.0, %v9155
        %v9157 = vmul.f32 %v9154, %v9156
        %v9158 = vadd.f32 %v9154, %v9157
        %vm9159 = vweird.f32 %v8628
        %vm9160 = vweird.f32 %v9154
        %vm9161 = vmor %vm9159, %vm9160
        %v9162 = vsel %vm9161, %v9154, %v9158
        %v9163 = vand.u32 2147483647, %v8628
        %vm9164 = vcmp.eq.f32.partialorder %v9163, 8.507059e+37
        %v9165 = vand.u32 %v8628, 2147483648
        %v9166 = vor.u32 1.1754944e-38, %v9165
        %v9167 = vsel %vm9164, %v9166, %v9162
        %v9168 = vmul.f32 %v8471, %v9167
        %v9169 = vrcp.pop %v8631
        %v9170 = vmul.f32 %v8631, %v9169
        %v9171 = vsub.f32 1.0, %v9170
        %v9172 = vmul.f32 %v9169, %v9171
        %v9173 = vadd.f32 %v9169, %v9172
        %vm9174 = vweird.f32 %v8631
        %vm9175 = vweird.f32 %v9169
        %vm9176 = vmor %vm9174, %vm9175
        %v9177 = vsel %vm9176, %v9169, %v9173
        %v9178 = vand.u32 2147483647, %v8631
        %vm9179 = vcmp.eq.f32.partialorder %v9178, 8.507059e+37
        %v9180 = vand.u32 %v8631, 2147483648
        %v9181 = vor.u32 1.1754944e-38, %v9180
        %v9182 = vsel %vm9179, %v9181, %v9177
        %v9183 = vmul.f32 %v8473, %v9182
        %v9184 = vrcp.pop %v8634
        %v9185 = vmul.f32 %v8634, %v9184
        %v9186 = vsub.f32 1.0, %v9185
        %v9187 = vmul.f32 %v9184, %v9186
        %v9188 = vadd.f32 %v9184, %v9187
        %vm9189 = vweird.f32 %v8634
        %vm9190 = vweird.f32 %v9184
        %vm9191 = vmor %vm9189, %vm9190
        %v9192 = vsel %vm9191, %v9184, %v9188
        %v9193 = vand.u32 2147483647, %v8634
        %vm9194 = vcmp.eq.f32.partialorder %v9193, 8.507059e+37
        %v9195 = vand.u32 %v8634, 2147483648
        %v9196 = vor.u32 1.1754944e-38, %v9195
        %v9197 = vsel %vm9194, %v9196, %v9192
        %v9198 = vmul.f32 %v8475, %v9197
        %v9199 = vrcp.pop %v8637
        %v9200 = vmul.f32 %v8637, %v9199
        %v9201 = vsub.f32 1.0, %v9200
        %v9202 = vmul.f32 %v9199, %v9201
        %v9203 = vadd.f32 %v9199, %v9202
        %vm9204 = vweird.f32 %v8637
        %vm9205 = vweird.f32 %v9199
        %vm9206 = vmor %vm9204, %vm9205
        %v9207 = vsel %vm9206, %v9199, %v9203
        %v9208 = vand.u32 2147483647, %v8637
        %vm9209 = vcmp.eq.f32.partialorder %v9208, 8.507059e+37
        %v9210 = vand.u32 %v8637, 2147483648
        %v9211 = vor.u32 1.1754944e-38, %v9210
        %v9212 = vsel %vm9209, %v9211, %v9207
        %v9213 = vmul.f32 %v8477, %v9212
        %v9214 = vrcp.pop %v8640
        %v9215 = vmul.f32 %v8640, %v9214
        %v9216 = vsub.f32 1.0, %v9215
        %v9217 = vmul.f32 %v9214, %v9216
        %v9218 = vadd.f32 %v9214, %v9217
        %vm9219 = vweird.f32 %v8640
        %vm9220 = vweird.f32 %v9214
        %vm9221 = vmor %vm9219, %vm9220
        %v9222 = vsel %vm9221, %v9214, %v9218
        %v9223 = vand.u32 2147483647, %v8640
        %vm9224 = vcmp.eq.f32.partialorder %v9223, 8.507059e+37
        %v9225 = vand.u32 %v8640, 2147483648
        %v9226 = vor.u32 1.1754944e-38, %v9225
        %v9227 = vsel %vm9224, %v9226, %v9222
        %v9228 = vmul.f32 %v8479, %v9227
        %v9229 = vrcp.pop %v8643
        %v9230 = vmul.f32 %v8643, %v9229
        %v9231 = vsub.f32 1.0, %v9230
        %v9232 = vmul.f32 %v9229, %v9231
        %v9233 = vadd.f32 %v9229, %v9232
        %vm9234 = vweird.f32 %v8643
        %vm9235 = vweird.f32 %v9229
        %vm9236 = vmor %vm9234, %vm9235
        %v9237 = vsel %vm9236, %v9229, %v9233
        %v9238 = vand.u32 2147483647, %v8643
        %vm9239 = vcmp.eq.f32.partialorder %v9238, 8.507059e+37
        %v9240 = vand.u32 %v8643, 2147483648
        %v9241 = vor.u32 1.1754944e-38, %v9240
        %v9242 = vsel %vm9239, %v9241, %v9237
        %v9243 = vmul.f32 %v8481, %v9242
        %v9244 = vrcp.pop %v8646
        %v9245 = vmul.f32 %v8646, %v9244
        %v9246 = vsub.f32 1.0, %v9245
        %v9247 = vmul.f32 %v9244, %v9246
        %v9248 = vadd.f32 %v9244, %v9247
        %vm9249 = vweird.f32 %v8646
        %vm9250 = vweird.f32 %v9244
        %vm9251 = vmor %vm9249, %vm9250
        %v9252 = vsel %vm9251, %v9244, %v9248
        %v9253 = vand.u32 2147483647, %v8646
        %vm9254 = vcmp.eq.f32.partialorder %v9253, 8.507059e+37
        %v9255 = vand.u32 %v8646, 2147483648
        %v9256 = vor.u32 1.1754944e-38, %v9255
        %v9257 = vsel %vm9254, %v9256, %v9252
        %v9258 = vmul.f32 %v8483, %v9257
        %v9259 = vrcp.pop %v8649
        %v9260 = vmul.f32 %v8649, %v9259
        %v9261 = vsub.f32 1.0, %v9260
        %v9262 = vmul.f32 %v9259, %v9261
        %v9263 = vadd.f32 %v9259, %v9262
        %vm9264 = vweird.f32 %v8649
        %vm9265 = vweird.f32 %v9259
        %vm9266 = vmor %vm9264, %vm9265
        %v9267 = vsel %vm9266, %v9259, %v9263
        %v9268 = vand.u32 2147483647, %v8649
        %vm9269 = vcmp.eq.f32.partialorder %v9268, 8.507059e+37
        %v9270 = vand.u32 %v8649, 2147483648
        %v9271 = vor.u32 1.1754944e-38, %v9270
        %v9272 = vsel %vm9269, %v9271, %v9267
        %v9273 = vmul.f32 %v8485, %v9272
        %v9274 = vrcp.pop %v8652
        %v9275 = vmul.f32 %v8652, %v9274
        %v9276 = vsub.f32 1.0, %v9275
        %v9277 = vmul.f32 %v9274, %v9276
        %v9278 = vadd.f32 %v9274, %v9277
        %vm9279 = vweird.f32 %v8652
        %vm9280 = vweird.f32 %v9274
        %vm9281 = vmor %vm9279, %vm9280
        %v9282 = vsel %vm9281, %v9274, %v9278
        %v9283 = vand.u32 2147483647, %v8652
        %vm9284 = vcmp.eq.f32.partialorder %v9283, 8.507059e+37
        %v9285 = vand.u32 %v8652, 2147483648
        %v9286 = vor.u32 1.1754944e-38, %v9285
        %v9287 = vsel %vm9284, %v9286, %v9282
        %v9288 = vmul.f32 %v8487, %v9287
        %v9289 = vrcp.pop %v8655
        %v9290 = vmul.f32 %v8655, %v9289
        %v9291 = vsub.f32 1.0, %v9290
        %v9292 = vmul.f32 %v9289, %v9291
        %v9293 = vadd.f32 %v9289, %v9292
        %vm9294 = vweird.f32 %v8655
        %vm9295 = vweird.f32 %v9289
        %vm9296 = vmor %vm9294, %vm9295
        %v9297 = vsel %vm9296, %v9289, %v9293
        %v9298 = vand.u32 2147483647, %v8655
        %vm9299 = vcmp.eq.f32.partialorder %v9298, 8.507059e+37
        %v9300 = vand.u32 %v8655, 2147483648
        %v9301 = vor.u32 1.1754944e-38, %v9300
        %v9302 = vsel %vm9299, %v9301, %v9297
        %v9303 = vmul.f32 %v8489, %v9302
        %v9304 = vrcp.pop %v8658
        %v9305 = vmul.f32 %v8658, %v9304
        %v9306 = vsub.f32 1.0, %v9305
        %v9307 = vmul.f32 %v9304, %v9306
        %v9308 = vadd.f32 %v9304, %v9307
        %vm9309 = vweird.f32 %v8658
        %vm9310 = vweird.f32 %v9304
        %vm9311 = vmor %vm9309, %vm9310
        %v9312 = vsel %vm9311, %v9304, %v9308
        %v9313 = vand.u32 2147483647, %v8658
        %vm9314 = vcmp.eq.f32.partialorder %v9313, 8.507059e+37
        %v9315 = vand.u32 %v8658, 2147483648
        %v9316 = vor.u32 1.1754944e-38, %v9315
        %v9317 = vsel %vm9314, %v9316, %v9312
        %v9318 = vmul.f32 %v8491, %v9317
        %v9319 = vrcp.pop %v8661
        %v9320 = vmul.f32 %v8661, %v9319
        %v9321 = vsub.f32 1.0, %v9320
        %v9322 = vmul.f32 %v9319, %v9321
        %v9323 = vadd.f32 %v9319, %v9322
        %vm9324 = vweird.f32 %v8661
        %vm9325 = vweird.f32 %v9319
        %vm9326 = vmor %vm9324, %vm9325
        %v9327 = vsel %vm9326, %v9319, %v9323
        %v9328 = vand.u32 2147483647, %v8661
        %vm9329 = vcmp.eq.f32.partialorder %v9328, 8.507059e+37
        %v9330 = vand.u32 %v8661, 2147483648
        %v9331 = vor.u32 1.1754944e-38, %v9330
        %v9332 = vsel %vm9329, %v9331, %v9327
        %v9333 = vmul.f32 %v8493, %v9332
        %v9334 = vrcp.pop %v8664
        %v9335 = vmul.f32 %v8664, %v9334
        %v9336 = vsub.f32 1.0, %v9335
        %v9337 = vmul.f32 %v9334, %v9336
        %v9338 = vadd.f32 %v9334, %v9337
        %vm9339 = vweird.f32 %v8664
        %vm9340 = vweird.f32 %v9334
        %vm9341 = vmor %vm9339, %vm9340
        %v9342 = vsel %vm9341, %v9334, %v9338
        %v9343 = vand.u32 2147483647, %v8664
        %vm9344 = vcmp.eq.f32.partialorder %v9343, 8.507059e+37
        %v9345 = vand.u32 %v8664, 2147483648
        %v9346 = vor.u32 1.1754944e-38, %v9345
        %v9347 = vsel %vm9344, %v9346, %v9342
        %v9348 = vmul.f32 %v8495, %v9347
        %v9349 = vrcp.pop %v8667
        %v9350 = vmul.f32 %v8667, %v9349
        %v9351 = vsub.f32 1.0, %v9350
        %v9352 = vmul.f32 %v9349, %v9351
        %v9353 = vadd.f32 %v9349, %v9352
        %vm9354 = vweird.f32 %v8667
        %vm9355 = vweird.f32 %v9349
        %vm9356 = vmor %vm9354, %vm9355
        %v9357 = vsel %vm9356, %v9349, %v9353
        %v9358 = vand.u32 2147483647, %v8667
        %vm9359 = vcmp.eq.f32.partialorder %v9358, 8.507059e+37
        %v9360 = vand.u32 %v8667, 2147483648
        %v9361 = vor.u32 1.1754944e-38, %v9360
        %v9362 = vsel %vm9359, %v9361, %v9357
        %v9363 = vmul.f32 %v8497, %v9362
        %v9364 = vrcp.pop %v8670
        %v9365 = vmul.f32 %v8670, %v9364
        %v9366 = vsub.f32 1.0, %v9365
        %v9367 = vmul.f32 %v9364, %v9366
        %v9368 = vadd.f32 %v9364, %v9367
        %vm9369 = vweird.f32 %v8670
        %vm9370 = vweird.f32 %v9364
        %vm9371 = vmor %vm9369, %vm9370
        %v9372 = vsel %vm9371, %v9364, %v9368
        %v9373 = vand.u32 2147483647, %v8670
        %vm9374 = vcmp.eq.f32.partialorder %v9373, 8.507059e+37
        %v9375 = vand.u32 %v8670, 2147483648
        %v9376 = vor.u32 1.1754944e-38, %v9375
        %v9377 = vsel %vm9374, %v9376, %v9372
        %v9378 = vmul.f32 %v8499, %v9377
        %v9379 = vrcp.pop %v8673
        %v9380 = vmul.f32 %v8673, %v9379
        %v9381 = vsub.f32 1.0, %v9380
        %v9382 = vmul.f32 %v9379, %v9381
        %v9383 = vadd.f32 %v9379, %v9382
        %vm9384 = vweird.f32 %v8673
        %vm9385 = vweird.f32 %v9379
        %vm9386 = vmor %vm9384, %vm9385
        %v9387 = vsel %vm9386, %v9379, %v9383
        %v9388 = vand.u32 2147483647, %v8673
        %vm9389 = vcmp.eq.f32.partialorder %v9388, 8.507059e+37
        %v9390 = vand.u32 %v8673, 2147483648
        %v9391 = vor.u32 1.1754944e-38, %v9390
        %v9392 = vsel %vm9389, %v9391, %v9387
        %v9393 = vmul.f32 %v8501, %v9392
        %v9394 = vrcp.pop %v8676
        %v9395 = vmul.f32 %v8676, %v9394
        %v9396 = vsub.f32 1.0, %v9395
        %v9397 = vmul.f32 %v9394, %v9396
        %v9398 = vadd.f32 %v9394, %v9397
        %vm9399 = vweird.f32 %v8676
        %vm9400 = vweird.f32 %v9394
        %vm9401 = vmor %vm9399, %vm9400
        %v9402 = vsel %vm9401, %v9394, %v9398
        %v9403 = vand.u32 2147483647, %v8676
        %vm9404 = vcmp.eq.f32.partialorder %v9403, 8.507059e+37
        %v9405 = vand.u32 %v8676, 2147483648
        %v9406 = vor.u32 1.1754944e-38, %v9405
        %v9407 = vsel %vm9404, %v9406, %v9402
        %v9408 = vmul.f32 %v8503, %v9407
        %v9409 = vrcp.pop %v8679
        %v9410 = vmul.f32 %v8679, %v9409
        %v9411 = vsub.f32 1.0, %v9410
        %v9412 = vmul.f32 %v9409, %v9411
        %v9413 = vadd.f32 %v9409, %v9412
        %vm9414 = vweird.f32 %v8679
        %vm9415 = vweird.f32 %v9409
        %vm9416 = vmor %vm9414, %vm9415
        %v9417 = vsel %vm9416, %v9409, %v9413
        %v9418 = vand.u32 2147483647, %v8679
        %vm9419 = vcmp.eq.f32.partialorder %v9418, 8.507059e+37
        %v9420 = vand.u32 %v8679, 2147483648
        %v9421 = vor.u32 1.1754944e-38, %v9420
        %v9422 = vsel %vm9419, %v9421, %v9417
        %v9423 = vmul.f32 %v8505, %v9422
        %v9424 = vrcp.pop %v8682
        %v9425 = vmul.f32 %v8682, %v9424
        %v9426 = vsub.f32 1.0, %v9425
        %v9427 = vmul.f32 %v9424, %v9426
        %v9428 = vadd.f32 %v9424, %v9427
        %vm9429 = vweird.f32 %v8682
        %vm9430 = vweird.f32 %v9424
        %vm9431 = vmor %vm9429, %vm9430
        %v9432 = vsel %vm9431, %v9424, %v9428
        %v9433 = vand.u32 2147483647, %v8682
        %vm9434 = vcmp.eq.f32.partialorder %v9433, 8.507059e+37
        %v9435 = vand.u32 %v8682, 2147483648
        %v9436 = vor.u32 1.1754944e-38, %v9435
        %v9437 = vsel %vm9434, %v9436, %v9432
        %v9438 = vmul.f32 %v8507, %v9437
        %v9439 = vrcp.pop %v8685
        %v9440 = vmul.f32 %v8685, %v9439
        %v9441 = vsub.f32 1.0, %v9440
        %v9442 = vmul.f32 %v9439, %v9441
        %v9443 = vadd.f32 %v9439, %v9442
        %vm9444 = vweird.f32 %v8685
        %vm9445 = vweird.f32 %v9439
        %vm9446 = vmor %vm9444, %vm9445
        %v9447 = vsel %vm9446, %v9439, %v9443
        %v9448 = vand.u32 2147483647, %v8685
        %vm9449 = vcmp.eq.f32.partialorder %v9448, 8.507059e+37
        %v9450 = vand.u32 %v8685, 2147483648
        %v9451 = vor.u32 1.1754944e-38, %v9450
        %v9452 = vsel %vm9449, %v9451, %v9447
        %v9453 = vmul.f32 %v8509, %v9452
        %v9454 = vrcp.pop %v8688
        %v9455 = vmul.f32 %v8688, %v9454
        %v9456 = vsub.f32 1.0, %v9455
        %v9457 = vmul.f32 %v9454, %v9456
        %v9458 = vadd.f32 %v9454, %v9457
        %vm9459 = vweird.f32 %v8688
        %vm9460 = vweird.f32 %v9454
        %vm9461 = vmor %vm9459, %vm9460
        %v9462 = vsel %vm9461, %v9454, %v9458
        %v9463 = vand.u32 2147483647, %v8688
        %vm9464 = vcmp.eq.f32.partialorder %v9463, 8.507059e+37
        %v9465 = vand.u32 %v8688, 2147483648
        %v9466 = vor.u32 1.1754944e-38, %v9465
        %v9467 = vsel %vm9464, %v9466, %v9462
        %v9468 = vmul.f32 %v8511, %v9467
        %v9469 = vrcp.pop %v8691
        %v9470 = vmul.f32 %v8691, %v9469
        %v9471 = vsub.f32 1.0, %v9470
        %v9472 = vmul.f32 %v9469, %v9471
        %v9473 = vadd.f32 %v9469, %v9472
        %vm9474 = vweird.f32 %v8691
        %vm9475 = vweird.f32 %v9469
        %vm9476 = vmor %vm9474, %vm9475
        %v9477 = vsel %vm9476, %v9469, %v9473
        %v9478 = vand.u32 2147483647, %v8691
        %vm9479 = vcmp.eq.f32.partialorder %v9478, 8.507059e+37
        %v9480 = vand.u32 %v8691, 2147483648
        %v9481 = vor.u32 1.1754944e-38, %v9480
        %v9482 = vsel %vm9479, %v9481, %v9477
        %v9483 = vmul.f32 %v8513, %v9482
        %v9484 = vrcp.pop %v8694
        %v9485 = vmul.f32 %v8694, %v9484
        %v9486 = vsub.f32 1.0, %v9485
        %v9487 = vmul.f32 %v9484, %v9486
        %v9488 = vadd.f32 %v9484, %v9487
        %vm9489 = vweird.f32 %v8694
        %vm9490 = vweird.f32 %v9484
        %vm9491 = vmor %vm9489, %vm9490
        %v9492 = vsel %vm9491, %v9484, %v9488
        %v9493 = vand.u32 2147483647, %v8694
        %vm9494 = vcmp.eq.f32.partialorder %v9493, 8.507059e+37
        %v9495 = vand.u32 %v8694, 2147483648
        %v9496 = vor.u32 1.1754944e-38, %v9495
        %v9497 = vsel %vm9494, %v9496, %v9492
        %v9498 = vmul.f32 %v8515, %v9497
        %v9499 = vrcp.pop %v8697
        %v9500 = vmul.f32 %v8697, %v9499
        %v9501 = vsub.f32 1.0, %v9500
        %v9502 = vmul.f32 %v9499, %v9501
        %v9503 = vadd.f32 %v9499, %v9502
        %vm9504 = vweird.f32 %v8697
        %vm9505 = vweird.f32 %v9499
        %vm9506 = vmor %vm9504, %vm9505
        %v9507 = vsel %vm9506, %v9499, %v9503
        %v9508 = vand.u32 2147483647, %v8697
        %vm9509 = vcmp.eq.f32.partialorder %v9508, 8.507059e+37
        %v9510 = vand.u32 %v8697, 2147483648
        %v9511 = vor.u32 1.1754944e-38, %v9510
        %v9512 = vsel %vm9509, %v9511, %v9507
        %v9513 = vmul.f32 %v8517, %v9512
        %v9514 = vrcp.pop %v8700
        %v9515 = vmul.f32 %v8700, %v9514
        %v9516 = vsub.f32 1.0, %v9515
        %v9517 = vmul.f32 %v9514, %v9516
        %v9518 = vadd.f32 %v9514, %v9517
        %vm9519 = vweird.f32 %v8700
        %vm9520 = vweird.f32 %v9514
        %vm9521 = vmor %vm9519, %vm9520
        %v9522 = vsel %vm9521, %v9514, %v9518
        %v9523 = vand.u32 2147483647, %v8700
        %vm9524 = vcmp.eq.f32.partialorder %v9523, 8.507059e+37
        %v9525 = vand.u32 %v8700, 2147483648
        %v9526 = vor.u32 1.1754944e-38, %v9525
        %v9527 = vsel %vm9524, %v9526, %v9522
        %v9528 = vmul.f32 %v8519, %v9527
        %v9529 = vrcp.pop %v8703
        %v9530 = vmul.f32 %v8703, %v9529
        %v9531 = vsub.f32 1.0, %v9530
        %v9532 = vmul.f32 %v9529, %v9531
        %v9533 = vadd.f32 %v9529, %v9532
        %vm9534 = vweird.f32 %v8703
        %vm9535 = vweird.f32 %v9529
        %vm9536 = vmor %vm9534, %vm9535
        %v9537 = vsel %vm9536, %v9529, %v9533
        %v9538 = vand.u32 2147483647, %v8703
        %vm9539 = vcmp.eq.f32.partialorder %v9538, 8.507059e+37
        %v9540 = vand.u32 %v8703, 2147483648
        %v9541 = vor.u32 1.1754944e-38, %v9540
        %v9542 = vsel %vm9539, %v9541, %v9537
        %v9543 = vmul.f32 %v8521, %v9542
        %v9544 = vrcp.pop %v8706
        %v9545 = vmul.f32 %v8706, %v9544
        %v9546 = vsub.f32 1.0, %v9545
        %v9547 = vmul.f32 %v9544, %v9546
        %v9548 = vadd.f32 %v9544, %v9547
        %vm9549 = vweird.f32 %v8706
        %vm9550 = vweird.f32 %v9544
        %vm9551 = vmor %vm9549, %vm9550
        %v9552 = vsel %vm9551, %v9544, %v9548
        %v9553 = vand.u32 2147483647, %v8706
        %vm9554 = vcmp.eq.f32.partialorder %v9553, 8.507059e+37
        %v9555 = vand.u32 %v8706, 2147483648
        %v9556 = vor.u32 1.1754944e-38, %v9555
        %v9557 = vsel %vm9554, %v9556, %v9552
        %v9558 = vmul.f32 %v8523, %v9557
        %v9559 = vrcp.pop %v8709
        %v9560 = vmul.f32 %v8709, %v9559
        %v9561 = vsub.f32 1.0, %v9560
        %v9562 = vmul.f32 %v9559, %v9561
        %v9563 = vadd.f32 %v9559, %v9562
        %vm9564 = vweird.f32 %v8709
        %vm9565 = vweird.f32 %v9559
        %vm9566 = vmor %vm9564, %vm9565
        %v9567 = vsel %vm9566, %v9559, %v9563
        %v9568 = vand.u32 2147483647, %v8709
        %vm9569 = vcmp.eq.f32.partialorder %v9568, 8.507059e+37
        %v9570 = vand.u32 %v8709, 2147483648
        %v9571 = vor.u32 1.1754944e-38, %v9570
        %v9572 = vsel %vm9569, %v9571, %v9567
        %v9573 = vmul.f32 %v8525, %v9572
        %v9574 = vrcp.pop %v8712
        %v9575 = vmul.f32 %v8712, %v9574
        %v9576 = vsub.f32 1.0, %v9575
        %v9577 = vmul.f32 %v9574, %v9576
        %v9578 = vadd.f32 %v9574, %v9577
        %vm9579 = vweird.f32 %v8712
        %vm9580 = vweird.f32 %v9574
        %vm9581 = vmor %vm9579, %vm9580
        %v9582 = vsel %vm9581, %v9574, %v9578
        %v9583 = vand.u32 2147483647, %v8712
        %vm9584 = vcmp.eq.f32.partialorder %v9583, 8.507059e+37
        %v9585 = vand.u32 %v8712, 2147483648
        %v9586 = vor.u32 1.1754944e-38, %v9585
        %v9587 = vsel %vm9584, %v9586, %v9582
        %v9588 = vmul.f32 %v8527, %v9587
        %v9589 = vrcp.pop %v8715
        %v9590 = vmul.f32 %v8715, %v9589
        %v9591 = vsub.f32 1.0, %v9590
        %v9592 = vmul.f32 %v9589, %v9591
        %v9593 = vadd.f32 %v9589, %v9592
        %vm9594 = vweird.f32 %v8715
        %vm9595 = vweird.f32 %v9589
        %vm9596 = vmor %vm9594, %vm9595
        %v9597 = vsel %vm9596, %v9589, %v9593
        %v9598 = vand.u32 2147483647, %v8715
        %vm9599 = vcmp.eq.f32.partialorder %v9598, 8.507059e+37
        %v9600 = vand.u32 %v8715, 2147483648
        %v9601 = vor.u32 1.1754944e-38, %v9600
        %v9602 = vsel %vm9599, %v9601, %v9597
        %v9603 = vmul.f32 %v8529, %v9602
        %v9604 = vrcp.pop %v8718
        %v9605 = vmul.f32 %v8718, %v9604
        %v9606 = vsub.f32 1.0, %v9605
        %v9607 = vmul.f32 %v9604, %v9606
        %v9608 = vadd.f32 %v9604, %v9607
        %vm9609 = vweird.f32 %v8718
        %vm9610 = vweird.f32 %v9604
        %vm9611 = vmor %vm9609, %vm9610
        %v9612 = vsel %vm9611, %v9604, %v9608
        %v9613 = vand.u32 2147483647, %v8718
        %vm9614 = vcmp.eq.f32.partialorder %v9613, 8.507059e+37
        %v9615 = vand.u32 %v8718, 2147483648
        %v9616 = vor.u32 1.1754944e-38, %v9615
        %v9617 = vsel %vm9614, %v9616, %v9612
        %v9618 = vmul.f32 %v8531, %v9617
        %v9619 = vrcp.pop %v8721
        %v9620 = vmul.f32 %v8721, %v9619
        %v9621 = vsub.f32 1.0, %v9620
        %v9622 = vmul.f32 %v9619, %v9621
        %v9623 = vadd.f32 %v9619, %v9622
        %vm9624 = vweird.f32 %v8721
        %vm9625 = vweird.f32 %v9619
        %vm9626 = vmor %vm9624, %vm9625
        %v9627 = vsel %vm9626, %v9619, %v9623
        %v9628 = vand.u32 2147483647, %v8721
        %vm9629 = vcmp.eq.f32.partialorder %v9628, 8.507059e+37
        %v9630 = vand.u32 %v8721, 2147483648
        %v9631 = vor.u32 1.1754944e-38, %v9630
        %v9632 = vsel %vm9629, %v9631, %v9627
        %v9633 = vmul.f32 %v8533, %v9632
        %v9634 = vrcp.pop %v8724
        %v9635 = vmul.f32 %v8724, %v9634
        %v9636 = vsub.f32 1.0, %v9635
        %v9637 = vmul.f32 %v9634, %v9636
        %v9638 = vadd.f32 %v9634, %v9637
        %vm9639 = vweird.f32 %v8724
        %vm9640 = vweird.f32 %v9634
        %vm9641 = vmor %vm9639, %vm9640
        %v9642 = vsel %vm9641, %v9634, %v9638
        %v9643 = vand.u32 2147483647, %v8724
        %vm9644 = vcmp.eq.f32.partialorder %v9643, 8.507059e+37
        %v9645 = vand.u32 %v8724, 2147483648
        %v9646 = vor.u32 1.1754944e-38, %v9645
        %v9647 = vsel %vm9644, %v9646, %v9642
        %v9648 = vmul.f32 %v8535, %v9647
        %v9649 = vrcp.pop %v8727
        %v9650 = vmul.f32 %v8727, %v9649
        %v9651 = vsub.f32 1.0, %v9650
        %v9652 = vmul.f32 %v9649, %v9651
        %v9653 = vadd.f32 %v9649, %v9652
        %vm9654 = vweird.f32 %v8727
        %vm9655 = vweird.f32 %v9649
        %vm9656 = vmor %vm9654, %vm9655
        %v9657 = vsel %vm9656, %v9649, %v9653
        %v9658 = vand.u32 2147483647, %v8727
        %vm9659 = vcmp.eq.f32.partialorder %v9658, 8.507059e+37
        %v9660 = vand.u32 %v8727, 2147483648
        %v9661 = vor.u32 1.1754944e-38, %v9660
        %v9662 = vsel %vm9659, %v9661, %v9657
        %v9663 = vmul.f32 %v8537, %v9662
        %v9664 = vrcp.pop %v8730
        %v9665 = vmul.f32 %v8730, %v9664
        %v9666 = vsub.f32 1.0, %v9665
        %v9667 = vmul.f32 %v9664, %v9666
        %v9668 = vadd.f32 %v9664, %v9667
        %vm9669 = vweird.f32 %v8730
        %vm9670 = vweird.f32 %v9664
        %vm9671 = vmor %vm9669, %vm9670
        %v9672 = vsel %vm9671, %v9664, %v9668
        %v9673 = vand.u32 2147483647, %v8730
        %vm9674 = vcmp.eq.f32.partialorder %v9673, 8.507059e+37
        %v9675 = vand.u32 %v8730, 2147483648
        %v9676 = vor.u32 1.1754944e-38, %v9675
        %v9677 = vsel %vm9674, %v9676, %v9672
        %v9678 = vmul.f32 %v8539, %v9677
        %v9679 = vrcp.pop %v8733
        %v9680 = vmul.f32 %v8733, %v9679
        %v9681 = vsub.f32 1.0, %v9680
        %v9682 = vmul.f32 %v9679, %v9681
        %v9683 = vadd.f32 %v9679, %v9682
        %vm9684 = vweird.f32 %v8733
        %vm9685 = vweird.f32 %v9679
        %vm9686 = vmor %vm9684, %vm9685
        %v9687 = vsel %vm9686, %v9679, %v9683
        %v9688 = vand.u32 2147483647, %v8733
        %vm9689 = vcmp.eq.f32.partialorder %v9688, 8.507059e+37
        %v9690 = vand.u32 %v8733, 2147483648
        %v9691 = vor.u32 1.1754944e-38, %v9690
        %v9692 = vsel %vm9689, %v9691, %v9687
        %v9693 = vmul.f32 %v8541, %v9692
        %v9694 = vld [vmem:[%s7] sm:$0x7]
        %v9696 = vsel %vm8157, %v8748, 0
        %v9699 = vsel %vm8157, %v8763, 0
        %v9702 = vsel %vm8157, %v8778, 0
        %v9705 = vsel %vm8157, %v8793, 0
        %v9708 = vsel %vm8157, %v8808, 0
        %v9711 = vsel %vm8157, %v8823, 0
        %v9714 = vsel %vm8157, %v8838, 0
        %v9717 = vsel %vm8157, %v8853, 0
        %v9720 = vsel %vm8157, %v8868, 0
        %v9723 = vsel %vm8157, %v8883, 0
        %v9726 = vsel %vm8157, %v8898, 0
        %v9729 = vsel %vm8157, %v8913, 0
        %v9732 = vsel %vm8157, %v8928, 0
        %v9735 = vsel %vm8157, %v8943, 0
        %v9738 = vsel %vm8157, %v8958, 0
        %v9741 = vsel %vm8157, %v8973, 0
        %v9744 = vsel %vm8157, %v8988, 0
        %v9747 = vsel %vm8157, %v9003, 0
        %v9750 = vsel %vm8157, %v9018, 0
        %v9753 = vsel %vm8157, %v9033, 0
        %v9756 = vsel %vm8157, %v9048, 0
        %v9759 = vsel %vm8157, %v9063, 0
        %v9762 = vsel %vm8157, %v9078, 0
        %v9765 = vsel %vm8157, %v9093, 0
        %v9768 = vsel %vm8157, %v9108, 0
        %v9771 = vsel %vm8157, %v9123, 0
        %v9774 = vsel %vm8157, %v9138, 0
        %v9777 = vsel %vm8157, %v9153, 0
        %v9780 = vsel %vm8157, %v9168, 0
        %v9783 = vsel %vm8157, %v9183, 0
        %v9786 = vsel %vm8157, %v9198, 0
        %v9789 = vsel %vm8157, %v9213, 0
        %v9792 = vsel %vm8157, %v9228, 0
        %v9795 = vsel %vm8157, %v9243, 0
        %v9798 = vsel %vm8157, %v9258, 0
        %v9801 = vsel %vm8157, %v9273, 0
        %v9804 = vsel %vm8157, %v9288, 0
        %v9807 = vsel %vm8157, %v9303, 0
        %v9810 = vsel %vm8157, %v9318, 0
        %v9813 = vsel %vm8157, %v9333, 0
        %v9816 = vsel %vm8157, %v9348, 0
        %v9819 = vsel %vm8157, %v9363, 0
        %v9822 = vsel %vm8157, %v9378, 0
        %v9825 = vsel %vm8157, %v9393, 0
        %v9828 = vsel %vm8157, %v9408, 0
        %v9831 = vsel %vm8157, %v9423, 0
        %v9834 = vsel %vm8157, %v9438, 0
        %v9837 = vsel %vm8157, %v9453, 0
        %v9840 = vsel %vm8157, %v9468, 0
        %v9843 = vsel %vm8157, %v9483, 0
        %v9846 = vsel %vm8157, %v9498, 0
        %v9849 = vsel %vm8157, %v9513, 0
        %v9852 = vsel %vm8157, %v9528, 0
        %v9855 = vsel %vm8157, %v9543, 0
        %v9858 = vsel %vm8157, %v9558, 0
        %v9861 = vsel %vm8157, %v9573, 0
        %v9864 = vsel %vm8157, %v9588, 0
        %v9867 = vsel %vm8157, %v9603, 0
        %v9870 = vsel %vm8157, %v9618, 0
        %v9873 = vsel %vm8157, %v9633, 0
        %v9876 = vsel %vm8157, %v9648, 0
        %v9879 = vsel %vm8157, %v9663, 0
        %v9882 = vsel %vm8157, %v9678, 0
        %v9885 = vsel %vm8157, %v9693, 0
        %vm9887 = vcmask 1042432
        %v9889 = vsel %vm9887, %v9694, 0
        %9891 = vmatpush.msra.mxu0 0.0
        %9892 = vmatpush.msra.mxu0 0.0
        %9893 = vmatpush.msra.mxu0 0.0
        %9894 = vmatpush.msra.mxu0 0.0
        %9895 = vmatpush.msra.mxu0 0.0
        %9896 = vmatpush.msra.mxu0 0.0
        %9897 = vmatpush.msra.mxu0 0.0
        %9898 = vmatpush.msra.mxu0 0.0
        %9899 = vmatpush.msra.mxu0 0.0
        %9900 = vmatpush.msra.mxu0 0.0
        %9901 = vmatpush.msra.mxu0 0.0
        %9902 = vmatpush.msra.mxu0 0.0
        %9903 = vmatpush.msra.mxu0 0.0
        %9904 = vmatpush.msra.mxu0 0.0
        %9905 = vmatpush.msra.mxu0 0.0
        %9906 = vmatpush.msra.mxu0 %v9889
        %9907 = vmatmul.f32.gmra.mxu0 %v9696
        %v9908 = vpop.f32.mrf.mxu0
        %v9909 = vadd.f32 0.0, %v9908
        %9910 = vmatmul.f32.gmra.mxu0 %v9699
        %v9911 = vpop.f32.mrf.mxu0
        %v9912 = vadd.f32 0.0, %v9911
        %9913 = vmatmul.f32.gmra.mxu0 %v9702
        %v9914 = vpop.f32.mrf.mxu0
        %v9915 = vadd.f32 0.0, %v9914
        %9916 = vmatmul.f32.gmra.mxu0 %v9705
        %v9917 = vpop.f32.mrf.mxu0
        %v9918 = vadd.f32 0.0, %v9917
        %9919 = vmatmul.f32.gmra.mxu0 %v9708
        %v9920 = vpop.f32.mrf.mxu0
        %v9921 = vadd.f32 0.0, %v9920
        %9922 = vmatmul.f32.gmra.mxu0 %v9711
        %v9923 = vpop.f32.mrf.mxu0
        %v9924 = vadd.f32 0.0, %v9923
        %9925 = vmatmul.f32.gmra.mxu0 %v9714
        %v9926 = vpop.f32.mrf.mxu0
        %v9927 = vadd.f32 0.0, %v9926
        %9928 = vmatmul.f32.gmra.mxu0 %v9717
        %v9929 = vpop.f32.mrf.mxu0
        %v9930 = vadd.f32 0.0, %v9929
        %9931 = vmatmul.f32.gmra.mxu0 %v9720
        %v9932 = vpop.f32.mrf.mxu0
        %v9933 = vadd.f32 0.0, %v9932
        %9934 = vmatmul.f32.gmra.mxu0 %v9723
        %v9935 = vpop.f32.mrf.mxu0
        %v9936 = vadd.f32 0.0, %v9935
        %9937 = vmatmul.f32.gmra.mxu0 %v9726
        %v9938 = vpop.f32.mrf.mxu0
        %v9939 = vadd.f32 0.0, %v9938
        %9940 = vmatmul.f32.gmra.mxu0 %v9729
        %v9941 = vpop.f32.mrf.mxu0
        %v9942 = vadd.f32 0.0, %v9941
        %9943 = vmatmul.f32.gmra.mxu0 %v9732
        %v9944 = vpop.f32.mrf.mxu0
        %v9945 = vadd.f32 0.0, %v9944
        %9946 = vmatmul.f32.gmra.mxu0 %v9735
        %v9947 = vpop.f32.mrf.mxu0
        %v9948 = vadd.f32 0.0, %v9947
        %9949 = vmatmul.f32.gmra.mxu0 %v9738
        %v9950 = vpop.f32.mrf.mxu0
        %v9951 = vadd.f32 0.0, %v9950
        %9952 = vmatmul.f32.gmra.mxu0 %v9741
        %v9953 = vpop.f32.mrf.mxu0
        %v9954 = vadd.f32 0.0, %v9953
        %9955 = vmatmul.f32.gmra.mxu0 %v9744
        %v9956 = vpop.f32.mrf.mxu0
        %v9957 = vadd.f32 0.0, %v9956
        %9958 = vmatmul.f32.gmra.mxu0 %v9747
        %v9959 = vpop.f32.mrf.mxu0
        %v9960 = vadd.f32 0.0, %v9959
        %9961 = vmatmul.f32.gmra.mxu0 %v9750
        %v9962 = vpop.f32.mrf.mxu0
        %v9963 = vadd.f32 0.0, %v9962
        %9964 = vmatmul.f32.gmra.mxu0 %v9753
        %v9965 = vpop.f32.mrf.mxu0
        %v9966 = vadd.f32 0.0, %v9965
        %9967 = vmatmul.f32.gmra.mxu0 %v9756
        %v9968 = vpop.f32.mrf.mxu0
        %v9969 = vadd.f32 0.0, %v9968
        %9970 = vmatmul.f32.gmra.mxu0 %v9759
        %v9971 = vpop.f32.mrf.mxu0
        %v9972 = vadd.f32 0.0, %v9971
        %9973 = vmatmul.f32.gmra.mxu0 %v9762
        %v9974 = vpop.f32.mrf.mxu0
        %v9975 = vadd.f32 0.0, %v9974
        %9976 = vmatmul.f32.gmra.mxu0 %v9765
        %v9977 = vpop.f32.mrf.mxu0
        %v9978 = vadd.f32 0.0, %v9977
        %9979 = vmatmul.f32.gmra.mxu0 %v9768
        %v9980 = vpop.f32.mrf.mxu0
        %v9981 = vadd.f32 0.0, %v9980
        %9982 = vmatmul.f32.gmra.mxu0 %v9771
        %v9983 = vpop.f32.mrf.mxu0
        %v9984 = vadd.f32 0.0, %v9983
        %9985 = vmatmul.f32.gmra.mxu0 %v9774
        %v9986 = vpop.f32.mrf.mxu0
        %v9987 = vadd.f32 0.0, %v9986
        %9988 = vmatmul.f32.gmra.mxu0 %v9777
        %v9989 = vpop.f32.mrf.mxu0
        %v9990 = vadd.f32 0.0, %v9989
        %9991 = vmatmul.f32.gmra.mxu0 %v9780
        %v9992 = vpop.f32.mrf.mxu0
        %v9993 = vadd.f32 0.0, %v9992
        %9994 = vmatmul.f32.gmra.mxu0 %v9783
        %v9995 = vpop.f32.mrf.mxu0
        %v9996 = vadd.f32 0.0, %v9995
        %9997 = vmatmul.f32.gmra.mxu0 %v9786
        %v9998 = vpop.f32.mrf.mxu0
        %v9999 = vadd.f32 0.0, %v9998
        %10000 = vmatmul.f32.gmra.mxu0 %v9789
        %v10001 = vpop.f32.mrf.mxu0
        %v10002 = vadd.f32 0.0, %v10001
        %10003 = vmatmul.f32.gmra.mxu0 %v9792
        %v10004 = vpop.f32.mrf.mxu0
        %v10005 = vadd.f32 0.0, %v10004
        %10006 = vmatmul.f32.gmra.mxu0 %v9795
        %v10007 = vpop.f32.mrf.mxu0
        %v10008 = vadd.f32 0.0, %v10007
        %10009 = vmatmul.f32.gmra.mxu0 %v9798
        %v10010 = vpop.f32.mrf.mxu0
        %v10011 = vadd.f32 0.0, %v10010
        %10012 = vmatmul.f32.gmra.mxu0 %v9801
        %v10013 = vpop.f32.mrf.mxu0
        %v10014 = vadd.f32 0.0, %v10013
        %10015 = vmatmul.f32.gmra.mxu0 %v9804
        %v10016 = vpop.f32.mrf.mxu0
        %v10017 = vadd.f32 0.0, %v10016
        %10018 = vmatmul.f32.gmra.mxu0 %v9807
        %v10019 = vpop.f32.mrf.mxu0
        %v10020 = vadd.f32 0.0, %v10019
        %10021 = vmatmul.f32.gmra.mxu0 %v9810
        %v10022 = vpop.f32.mrf.mxu0
        %v10023 = vadd.f32 0.0, %v10022
        %10024 = vmatmul.f32.gmra.mxu0 %v9813
        %v10025 = vpop.f32.mrf.mxu0
        %v10026 = vadd.f32 0.0, %v10025
        %10027 = vmatmul.f32.gmra.mxu0 %v9816
        %v10028 = vpop.f32.mrf.mxu0
        %v10029 = vadd.f32 0.0, %v10028
        %10030 = vmatmul.f32.gmra.mxu0 %v9819
        %v10031 = vpop.f32.mrf.mxu0
        %v10032 = vadd.f32 0.0, %v10031
        %10033 = vmatmul.f32.gmra.mxu0 %v9822
        %v10034 = vpop.f32.mrf.mxu0
        %v10035 = vadd.f32 0.0, %v10034
        %10036 = vmatmul.f32.gmra.mxu0 %v9825
        %v10037 = vpop.f32.mrf.mxu0
        %v10038 = vadd.f32 0.0, %v10037
        %10039 = vmatmul.f32.gmra.mxu0 %v9828
        %v10040 = vpop.f32.mrf.mxu0
        %v10041 = vadd.f32 0.0, %v10040
        %10042 = vmatmul.f32.gmra.mxu0 %v9831
        %v10043 = vpop.f32.mrf.mxu0
        %v10044 = vadd.f32 0.0, %v10043
        %10045 = vmatmul.f32.gmra.mxu0 %v9834
        %v10046 = vpop.f32.mrf.mxu0
        %v10047 = vadd.f32 0.0, %v10046
        %10048 = vmatmul.f32.gmra.mxu0 %v9837
        %v10049 = vpop.f32.mrf.mxu0
        %v10050 = vadd.f32 0.0, %v10049
        %10051 = vmatmul.f32.gmra.mxu0 %v9840
        %v10052 = vpop.f32.mrf.mxu0
        %v10053 = vadd.f32 0.0, %v10052
        %10054 = vmatmul.f32.gmra.mxu0 %v9843
        %v10055 = vpop.f32.mrf.mxu0
        %v10056 = vadd.f32 0.0, %v10055
        %10057 = vmatmul.f32.gmra.mxu0 %v9846
        %v10058 = vpop.f32.mrf.mxu0
        %v10059 = vadd.f32 0.0, %v10058
        %10060 = vmatmul.f32.gmra.mxu0 %v9849
        %v10061 = vpop.f32.mrf.mxu0
        %v10062 = vadd.f32 0.0, %v10061
        %10063 = vmatmul.f32.gmra.mxu0 %v9852
        %v10064 = vpop.f32.mrf.mxu0
        %v10065 = vadd.f32 0.0, %v10064
        %10066 = vmatmul.f32.gmra.mxu0 %v9855
        %v10067 = vpop.f32.mrf.mxu0
        %v10068 = vadd.f32 0.0, %v10067
        %10069 = vmatmul.f32.gmra.mxu0 %v9858
        %v10070 = vpop.f32.mrf.mxu0
        %v10071 = vadd.f32 0.0, %v10070
        %10072 = vmatmul.f32.gmra.mxu0 %v9861
        %v10073 = vpop.f32.mrf.mxu0
        %v10074 = vadd.f32 0.0, %v10073
        %10075 = vmatmul.f32.gmra.mxu0 %v9864
        %v10076 = vpop.f32.mrf.mxu0
        %v10077 = vadd.f32 0.0, %v10076
        %10078 = vmatmul.f32.gmra.mxu0 %v9867
        %v10079 = vpop.f32.mrf.mxu0
        %v10080 = vadd.f32 0.0, %v10079
        %10081 = vmatmul.f32.gmra.mxu0 %v9870
        %v10082 = vpop.f32.mrf.mxu0
        %v10083 = vadd.f32 0.0, %v10082
        %10084 = vmatmul.f32.gmra.mxu0 %v9873
        %v10085 = vpop.f32.mrf.mxu0
        %v10086 = vadd.f32 0.0, %v10085
        %10087 = vmatmul.f32.gmra.mxu0 %v9876
        %v10088 = vpop.f32.mrf.mxu0
        %v10089 = vadd.f32 0.0, %v10088
        %10090 = vmatmul.f32.gmra.mxu0 %v9879
        %v10091 = vpop.f32.mrf.mxu0
        %v10092 = vadd.f32 0.0, %v10091
        %10093 = vmatmul.f32.gmra.mxu0 %v9882
        %v10094 = vpop.f32.mrf.mxu0
        %v10095 = vadd.f32 0.0, %v10094
        %10096 = vmatmul.f32.gmra.mxu0 %v9885
        %v10097 = vpop.f32.mrf.mxu0
        %v10098 = vadd.f32 0.0, %v10097
        %10099 = vdwg.mxu0
        %v10100 = vadd.f32 %v8748, 1e-05
        %v10101 = vadd.f32 %v8763, 1e-05
        %v10102 = vadd.f32 %v8778, 1e-05
        %v10103 = vadd.f32 %v8793, 1e-05
        %v10104 = vadd.f32 %v8808, 1e-05
        %v10105 = vadd.f32 %v8823, 1e-05
        %v10106 = vadd.f32 %v8838, 1e-05
        %v10107 = vadd.f32 %v8853, 1e-05
        %v10108 = vadd.f32 %v8868, 1e-05
        %v10109 = vadd.f32 %v8883, 1e-05
        %v10110 = vadd.f32 %v8898, 1e-05
        %v10111 = vadd.f32 %v8913, 1e-05
        %v10112 = vadd.f32 %v8928, 1e-05
        %v10113 = vadd.f32 %v8943, 1e-05
        %v10114 = vadd.f32 %v8958, 1e-05
        %v10115 = vadd.f32 %v8973, 1e-05
        %v10116 = vadd.f32 %v8988, 1e-05
        %v10117 = vadd.f32 %v9003, 1e-05
        %v10118 = vadd.f32 %v9018, 1e-05
        %v10119 = vadd.f32 %v9033, 1e-05
        %v10120 = vadd.f32 %v9048, 1e-05
        %v10121 = vadd.f32 %v9063, 1e-05
        %v10122 = vadd.f32 %v9078, 1e-05
        %v10123 = vadd.f32 %v9093, 1e-05
        %v10124 = vadd.f32 %v9108, 1e-05
        %v10125 = vadd.f32 %v9123, 1e-05
        %v10126 = vadd.f32 %v9138, 1e-05
        %v10127 = vadd.f32 %v9153, 1e-05
        %v10128 = vadd.f32 %v9168, 1e-05
        %v10129 = vadd.f32 %v9183, 1e-05
        %v10130 = vadd.f32 %v9198, 1e-05
        %v10131 = vadd.f32 %v9213, 1e-05
        %v10132 = vadd.f32 %v9228, 1e-05
        %v10133 = vadd.f32 %v9243, 1e-05
        %v10134 = vadd.f32 %v9258, 1e-05
        %v10135 = vadd.f32 %v9273, 1e-05
        %v10136 = vadd.f32 %v9288, 1e-05
        %v10137 = vadd.f32 %v9303, 1e-05
        %v10138 = vadd.f32 %v9318, 1e-05
        %v10139 = vadd.f32 %v9333, 1e-05
        %v10140 = vadd.f32 %v9348, 1e-05
        %v10141 = vadd.f32 %v9363, 1e-05
        %v10142 = vadd.f32 %v9378, 1e-05
        %v10143 = vadd.f32 %v9393, 1e-05
        %v10144 = vadd.f32 %v9408, 1e-05
        %v10145 = vadd.f32 %v9423, 1e-05
        %v10146 = vadd.f32 %v9438, 1e-05
        %v10147 = vadd.f32 %v9453, 1e-05
        %v10148 = vadd.f32 %v9468, 1e-05
        %v10149 = vadd.f32 %v9483, 1e-05
        %v10150 = vadd.f32 %v9498, 1e-05
        %v10151 = vadd.f32 %v9513, 1e-05
        %v10152 = vadd.f32 %v9528, 1e-05
        %v10153 = vadd.f32 %v9543, 1e-05
        %v10154 = vadd.f32 %v9558, 1e-05
        %v10155 = vadd.f32 %v9573, 1e-05
        %v10156 = vadd.f32 %v9588, 1e-05
        %v10157 = vadd.f32 %v9603, 1e-05
        %v10158 = vadd.f32 %v9618, 1e-05
        %v10159 = vadd.f32 %v9633, 1e-05
        %v10160 = vadd.f32 %v9648, 1e-05
        %v10161 = vadd.f32 %v9663, 1e-05
        %v10162 = vadd.f32 %v9678, 1e-05
        %v10163 = vadd.f32 %v9693, 1e-05
        %v10164 = vlog2.pop %v10100
        %v10165 = vmul.f32 %v10164, 0.6931472
        %v10166 = vlog2.pop %v10101
        %v10167 = vmul.f32 %v10166, 0.6931472
        %v10168 = vlog2.pop %v10102
        %v10169 = vmul.f32 %v10168, 0.6931472
        %v10170 = vlog2.pop %v10103
        %v10171 = vmul.f32 %v10170, 0.6931472
        %v10172 = vlog2.pop %v10104
        %v10173 = vmul.f32 %v10172, 0.6931472
        %v10174 = vlog2.pop %v10105
        %v10175 = vmul.f32 %v10174, 0.6931472
        %v10176 = vlog2.pop %v10106
        %v10177 = vmul.f32 %v10176, 0.6931472
        %v10178 = vlog2.pop %v10107
        %v10179 = vmul.f32 %v10178, 0.6931472
        %v10180 = vlog2.pop %v10108
        %v10181 = vmul.f32 %v10180, 0.6931472
        %v10182 = vlog2.pop %v10109
        %v10183 = vmul.f32 %v10182, 0.6931472
        %v10184 = vlog2.pop %v10110
        %v10185 = vmul.f32 %v10184, 0.6931472
        %v10186 = vlog2.pop %v10111
        %v10187 = vmul.f32 %v10186, 0.6931472
        %v10188 = vlog2.pop %v10112
        %v10189 = vmul.f32 %v10188, 0.6931472
        %v10190 = vlog2.pop %v10113
        %v10191 = vmul.f32 %v10190, 0.6931472
        %v10192 = vlog2.pop %v10114
        %v10193 = vmul.f32 %v10192, 0.6931472
        %v10194 = vlog2.pop %v10115
        %v10195 = vmul.f32 %v10194, 0.6931472
        %v10196 = vlog2.pop %v10116
        %v10197 = vmul.f32 %v10196, 0.6931472
        %v10198 = vlog2.pop %v10117
        %v10199 = vmul.f32 %v10198, 0.6931472
        %v10200 = vlog2.pop %v10118
        %v10201 = vmul.f32 %v10200, 0.6931472
        %v10202 = vlog2.pop %v10119
        %v10203 = vmul.f32 %v10202, 0.6931472
        %v10204 = vlog2.pop %v10120
        %v10205 = vmul.f32 %v10204, 0.6931472
        %v10206 = vlog2.pop %v10121
        %v10207 = vmul.f32 %v10206, 0.6931472
        %v10208 = vlog2.pop %v10122
        %v10209 = vmul.f32 %v10208, 0.6931472
        %v10210 = vlog2.pop %v10123
        %v10211 = vmul.f32 %v10210, 0.6931472
        %v10212 = vlog2.pop %v10124
        %v10213 = vmul.f32 %v10212, 0.6931472
        %v10214 = vlog2.pop %v10125
        %v10215 = vmul.f32 %v10214, 0.6931472
        %v10216 = vlog2.pop %v10126
        %v10217 = vmul.f32 %v10216, 0.6931472
        %v10218 = vlog2.pop %v10127
        %v10219 = vmul.f32 %v10218, 0.6931472
        %v10220 = vlog2.pop %v10128
        %v10221 = vmul.f32 %v10220, 0.6931472
        %v10222 = vlog2.pop %v10129
        %v10223 = vmul.f32 %v10222, 0.6931472
        %v10224 = vlog2.pop %v10130
        %v10225 = vmul.f32 %v10224, 0.6931472
        %v10226 = vlog2.pop %v10131
        %v10227 = vmul.f32 %v10226, 0.6931472
        %v10228 = vlog2.pop %v10132
        %v10229 = vmul.f32 %v10228, 0.6931472
        %v10230 = vlog2.pop %v10133
        %v10231 = vmul.f32 %v10230, 0.6931472
        %v10232 = vlog2.pop %v10134
        %v10233 = vmul.f32 %v10232, 0.6931472
        %v10234 = vlog2.pop %v10135
        %v10235 = vmul.f32 %v10234, 0.6931472
        %v10236 = vlog2.pop %v10136
        %v10237 = vmul.f32 %v10236, 0.6931472
        %v10238 = vlog2.pop %v10137
        %v10239 = vmul.f32 %v10238, 0.6931472
        %v10240 = vlog2.pop %v10138
        %v10241 = vmul.f32 %v10240, 0.6931472
        %v10242 = vlog2.pop %v10139
        %v10243 = vmul.f32 %v10242, 0.6931472
        %v10244 = vlog2.pop %v10140
        %v10245 = vmul.f32 %v10244, 0.6931472
        %v10246 = vlog2.pop %v10141
        %v10247 = vmul.f32 %v10246, 0.6931472
        %v10248 = vlog2.pop %v10142
        %v10249 = vmul.f32 %v10248, 0.6931472
        %v10250 = vlog2.pop %v10143
        %v10251 = vmul.f32 %v10250, 0.6931472
        %v10252 = vlog2.pop %v10144
        %v10253 = vmul.f32 %v10252, 0.6931472
        %v10254 = vlog2.pop %v10145
        %v10255 = vmul.f32 %v10254, 0.6931472
        %v10256 = vlog2.pop %v10146
        %v10257 = vmul.f32 %v10256, 0.6931472
        %v10258 = vlog2.pop %v10147
        %v10259 = vmul.f32 %v10258, 0.6931472
        %v10260 = vlog2.pop %v10148
        %v10261 = vmul.f32 %v10260, 0.6931472
        %v10262 = vlog2.pop %v10149
        %v10263 = vmul.f32 %v10262, 0.6931472
        %v10264 = vlog2.pop %v10150
        %v10265 = vmul.f32 %v10264, 0.6931472
        %v10266 = vlog2.pop %v10151
        %v10267 = vmul.f32 %v10266, 0.6931472
        %v10268 = vlog2.pop %v10152
        %v10269 = vmul.f32 %v10268, 0.6931472
        %v10270 = vlog2.pop %v10153
        %v10271 = vmul.f32 %v10270, 0.6931472
        %v10272 = vlog2.pop %v10154
        %v10273 = vmul.f32 %v10272, 0.6931472
        %v10274 = vlog2.pop %v10155
        %v10275 = vmul.f32 %v10274, 0.6931472
        %v10276 = vlog2.pop %v10156
        %v10277 = vmul.f32 %v10276, 0.6931472
        %v10278 = vlog2.pop %v10157
        %v10279 = vmul.f32 %v10278, 0.6931472
        %v10280 = vlog2.pop %v10158
        %v10281 = vmul.f32 %v10280, 0.6931472
        %v10282 = vlog2.pop %v10159
        %v10283 = vmul.f32 %v10282, 0.6931472
        %v10284 = vlog2.pop %v10160
        %v10285 = vmul.f32 %v10284, 0.6931472
        %v10286 = vlog2.pop %v10161
        %v10287 = vmul.f32 %v10286, 0.6931472
        %v10288 = vlog2.pop %v10162
        %v10289 = vmul.f32 %v10288, 0.6931472
        %v10290 = vlog2.pop %v10163
        %v10291 = vmul.f32 %v10290, 0.6931472
        %v10292 = vmul.f32 %v8748, %v10165
        %v10293 = vmul.f32 %v8763, %v10167
        %v10294 = vmul.f32 %v8778, %v10169
        %v10295 = vmul.f32 %v8793, %v10171
        %v10296 = vmul.f32 %v8808, %v10173
        %v10297 = vmul.f32 %v8823, %v10175
        %v10298 = vmul.f32 %v8838, %v10177
        %v10299 = vmul.f32 %v8853, %v10179
        %v10300 = vmul.f32 %v8868, %v10181
        %v10301 = vmul.f32 %v8883, %v10183
        %v10302 = vmul.f32 %v8898, %v10185
        %v10303 = vmul.f32 %v8913, %v10187
        %v10304 = vmul.f32 %v8928, %v10189
        %v10305 = vmul.f32 %v8943, %v10191
        %v10306 = vmul.f32 %v8958, %v10193
        %v10307 = vmul.f32 %v8973, %v10195
        %v10308 = vmul.f32 %v8988, %v10197
        %v10309 = vmul.f32 %v9003, %v10199
        %v10310 = vmul.f32 %v9018, %v10201
        %v10311 = vmul.f32 %v9033, %v10203
        %v10312 = vmul.f32 %v9048, %v10205
        %v10313 = vmul.f32 %v9063, %v10207
        %v10314 = vmul.f32 %v9078, %v10209
        %v10315 = vmul.f32 %v9093, %v10211
        %v10316 = vmul.f32 %v9108, %v10213
        %v10317 = vmul.f32 %v9123, %v10215
        %v10318 = vmul.f32 %v9138, %v10217
        %v10319 = vmul.f32 %v9153, %v10219
        %v10320 = vmul.f32 %v9168, %v10221
        %v10321 = vmul.f32 %v9183, %v10223
        %v10322 = vmul.f32 %v9198, %v10225
        %v10323 = vmul.f32 %v9213, %v10227
        %v10324 = vmul.f32 %v9228, %v10229
        %v10325 = vmul.f32 %v9243, %v10231
        %v10326 = vmul.f32 %v9258, %v10233
        %v10327 = vmul.f32 %v9273, %v10235
        %v10328 = vmul.f32 %v9288, %v10237
        %v10329 = vmul.f32 %v9303, %v10239
        %v10330 = vmul.f32 %v9318, %v10241
        %v10331 = vmul.f32 %v9333, %v10243
        %v10332 = vmul.f32 %v9348, %v10245
        %v10333 = vmul.f32 %v9363, %v10247
        %v10334 = vmul.f32 %v9378, %v10249
        %v10335 = vmul.f32 %v9393, %v10251
        %v10336 = vmul.f32 %v9408, %v10253
        %v10337 = vmul.f32 %v9423, %v10255
        %v10338 = vmul.f32 %v9438, %v10257
        %v10339 = vmul.f32 %v9453, %v10259
        %v10340 = vmul.f32 %v9468, %v10261
        %v10341 = vmul.f32 %v9483, %v10263
        %v10342 = vmul.f32 %v9498, %v10265
        %v10343 = vmul.f32 %v9513, %v10267
        %v10344 = vmul.f32 %v9528, %v10269
        %v10345 = vmul.f32 %v9543, %v10271
        %v10346 = vmul.f32 %v9558, %v10273
        %v10347 = vmul.f32 %v9573, %v10275
        %v10348 = vmul.f32 %v9588, %v10277
        %v10349 = vmul.f32 %v9603, %v10279
        %v10350 = vmul.f32 %v9618, %v10281
        %v10351 = vmul.f32 %v9633, %v10283
        %v10352 = vmul.f32 %v9648, %v10285
        %v10353 = vmul.f32 %v9663, %v10287
        %v10354 = vmul.f32 %v9678, %v10289
        %v10355 = vmul.f32 %v9693, %v10291
        %v10356 = vsel %vm8157, %v10292, 0.0
        %10357 = vadd.xlane.f32.xlu0 %v10356
        %v10358 = vpop.xlane.xlu0 %10357
        %v10359 = vsel %vm8157, %v10293, 0.0
        %10360 = vadd.xlane.f32.xlu0 %v10359
        %v10361 = vpop.xlane.xlu0 %10360
        %v10362 = vsel %vm8157, %v10294, 0.0
        %10363 = vadd.xlane.f32.xlu0 %v10362
        %v10364 = vpop.xlane.xlu0 %10363
        %v10365 = vsel %vm8157, %v10295, 0.0
        %10366 = vadd.xlane.f32.xlu0 %v10365
        %v10367 = vpop.xlane.xlu0 %10366
        %v10368 = vsel %vm8157, %v10296, 0.0
        %10369 = vadd.xlane.f32.xlu0 %v10368
        %v10370 = vpop.xlane.xlu0 %10369
        %v10371 = vsel %vm8157, %v10297, 0.0
        %10372 = vadd.xlane.f32.xlu0 %v10371
        %v10373 = vpop.xlane.xlu0 %10372
        %v10374 = vsel %vm8157, %v10298, 0.0
        %10375 = vadd.xlane.f32.xlu0 %v10374
        %v10376 = vpop.xlane.xlu0 %10375
        %v10377 = vsel %vm8157, %v10299, 0.0
        %10378 = vadd.xlane.f32.xlu0 %v10377
        %v10379 = vpop.xlane.xlu0 %10378
        %v10380 = vsel %vm8157, %v10300, 0.0
        %10381 = vadd.xlane.f32.xlu0 %v10380
        %v10382 = vpop.xlane.xlu0 %10381
        %v10383 = vsel %vm8157, %v10301, 0.0
        %10384 = vadd.xlane.f32.xlu0 %v10383
        %v10385 = vpop.xlane.xlu0 %10384
        %v10386 = vsel %vm8157, %v10302, 0.0
        %10387 = vadd.xlane.f32.xlu0 %v10386
        %v10388 = vpop.xlane.xlu0 %10387
        %v10389 = vsel %vm8157, %v10303, 0.0
        %10390 = vadd.xlane.f32.xlu0 %v10389
        %v10391 = vpop.xlane.xlu0 %10390
        %v10392 = vsel %vm8157, %v10304, 0.0
        %10393 = vadd.xlane.f32.xlu0 %v10392
        %v10394 = vpop.xlane.xlu0 %10393
        %v10395 = vsel %vm8157, %v10305, 0.0
        %10396 = vadd.xlane.f32.xlu0 %v10395
        %v10397 = vpop.xlane.xlu0 %10396
        %v10398 = vsel %vm8157, %v10306, 0.0
        %10399 = vadd.xlane.f32.xlu0 %v10398
        %v10400 = vpop.xlane.xlu0 %10399
        %v10401 = vsel %vm8157, %v10307, 0.0
        %10402 = vadd.xlane.f32.xlu0 %v10401
        %v10403 = vpop.xlane.xlu0 %10402
        %v10404 = vsel %vm8157, %v10308, 0.0
        %10405 = vadd.xlane.f32.xlu0 %v10404
        %v10406 = vpop.xlane.xlu0 %10405
        %v10407 = vsel %vm8157, %v10309, 0.0
        %10408 = vadd.xlane.f32.xlu0 %v10407
        %v10409 = vpop.xlane.xlu0 %10408
        %v10410 = vsel %vm8157, %v10310, 0.0
        %10411 = vadd.xlane.f32.xlu0 %v10410
        %v10412 = vpop.xlane.xlu0 %10411
        %v10413 = vsel %vm8157, %v10311, 0.0
        %10414 = vadd.xlane.f32.xlu0 %v10413
        %v10415 = vpop.xlane.xlu0 %10414
        %v10416 = vsel %vm8157, %v10312, 0.0
        %10417 = vadd.xlane.f32.xlu0 %v10416
        %v10418 = vpop.xlane.xlu0 %10417
        %v10419 = vsel %vm8157, %v10313, 0.0
        %10420 = vadd.xlane.f32.xlu0 %v10419
        %v10421 = vpop.xlane.xlu0 %10420
        %v10422 = vsel %vm8157, %v10314, 0.0
        %10423 = vadd.xlane.f32.xlu0 %v10422
        %v10424 = vpop.xlane.xlu0 %10423
        %v10425 = vsel %vm8157, %v10315, 0.0
        %10426 = vadd.xlane.f32.xlu0 %v10425
        %v10427 = vpop.xlane.xlu0 %10426
        %v10428 = vsel %vm8157, %v10316, 0.0
        %10429 = vadd.xlane.f32.xlu0 %v10428
        %v10430 = vpop.xlane.xlu0 %10429
        %v10431 = vsel %vm8157, %v10317, 0.0
        %10432 = vadd.xlane.f32.xlu0 %v10431
        %v10433 = vpop.xlane.xlu0 %10432
        %v10434 = vsel %vm8157, %v10318, 0.0
        %10435 = vadd.xlane.f32.xlu0 %v10434
        %v10436 = vpop.xlane.xlu0 %10435
        %v10437 = vsel %vm8157, %v10319, 0.0
        %10438 = vadd.xlane.f32.xlu0 %v10437
        %v10439 = vpop.xlane.xlu0 %10438
        %v10440 = vsel %vm8157, %v10320, 0.0
        %10441 = vadd.xlane.f32.xlu0 %v10440
        %v10442 = vpop.xlane.xlu0 %10441
        %v10443 = vsel %vm8157, %v10321, 0.0
        %10444 = vadd.xlane.f32.xlu0 %v10443
        %v10445 = vpop.xlane.xlu0 %10444
        %v10446 = vsel %vm8157, %v10322, 0.0
        %10447 = vadd.xlane.f32.xlu0 %v10446
        %v10448 = vpop.xlane.xlu0 %10447
        %v10449 = vsel %vm8157, %v10323, 0.0
        %10450 = vadd.xlane.f32.xlu0 %v10449
        %v10451 = vpop.xlane.xlu0 %10450
        %v10452 = vsel %vm8157, %v10324, 0.0
        %10453 = vadd.xlane.f32.xlu0 %v10452
        %v10454 = vpop.xlane.xlu0 %10453
        %v10455 = vsel %vm8157, %v10325, 0.0
        %10456 = vadd.xlane.f32.xlu0 %v10455
        %v10457 = vpop.xlane.xlu0 %10456
        %v10458 = vsel %vm8157, %v10326, 0.0
        %10459 = vadd.xlane.f32.xlu0 %v10458
        %v10460 = vpop.xlane.xlu0 %10459
        %v10461 = vsel %vm8157, %v10327, 0.0
        %10462 = vadd.xlane.f32.xlu0 %v10461
        %v10463 = vpop.xlane.xlu0 %10462
        %v10464 = vsel %vm8157, %v10328, 0.0
        %10465 = vadd.xlane.f32.xlu0 %v10464
        %v10466 = vpop.xlane.xlu0 %10465
        %v10467 = vsel %vm8157, %v10329, 0.0
        %10468 = vadd.xlane.f32.xlu0 %v10467
        %v10469 = vpop.xlane.xlu0 %10468
        %v10470 = vsel %vm8157, %v10330, 0.0
        %10471 = vadd.xlane.f32.xlu0 %v10470
        %v10472 = vpop.xlane.xlu0 %10471
        %v10473 = vsel %vm8157, %v10331, 0.0
        %10474 = vadd.xlane.f32.xlu0 %v10473
        %v10475 = vpop.xlane.xlu0 %10474
        %v10476 = vsel %vm8157, %v10332, 0.0
        %10477 = vadd.xlane.f32.xlu0 %v10476
        %v10478 = vpop.xlane.xlu0 %10477
        %v10479 = vsel %vm8157, %v10333, 0.0
        %10480 = vadd.xlane.f32.xlu0 %v10479
        %v10481 = vpop.xlane.xlu0 %10480
        %v10482 = vsel %vm8157, %v10334, 0.0
        %10483 = vadd.xlane.f32.xlu0 %v10482
        %v10484 = vpop.xlane.xlu0 %10483
        %v10485 = vsel %vm8157, %v10335, 0.0
        %10486 = vadd.xlane.f32.xlu0 %v10485
        %v10487 = vpop.xlane.xlu0 %10486
        %v10488 = vsel %vm8157, %v10336, 0.0
        %10489 = vadd.xlane.f32.xlu0 %v10488
        %v10490 = vpop.xlane.xlu0 %10489
        %v10491 = vsel %vm8157, %v10337, 0.0
        %10492 = vadd.xlane.f32.xlu0 %v10491
        %v10493 = vpop.xlane.xlu0 %10492
        %v10494 = vsel %vm8157, %v10338, 0.0
        %10495 = vadd.xlane.f32.xlu0 %v10494
        %v10496 = vpop.xlane.xlu0 %10495
        %v10497 = vsel %vm8157, %v10339, 0.0
        %10498 = vadd.xlane.f32.xlu0 %v10497
        %v10499 = vpop.xlane.xlu0 %10498
        %v10500 = vsel %vm8157, %v10340, 0.0
        %10501 = vadd.xlane.f32.xlu0 %v10500
        %v10502 = vpop.xlane.xlu0 %10501
        %v10503 = vsel %vm8157, %v10341, 0.0
        %10504 = vadd.xlane.f32.xlu0 %v10503
        %v10505 = vpop.xlane.xlu0 %10504
        %v10506 = vsel %vm8157, %v10342, 0.0
        %10507 = vadd.xlane.f32.xlu0 %v10506
        %v10508 = vpop.xlane.xlu0 %10507
        %v10509 = vsel %vm8157, %v10343, 0.0
        %10510 = vadd.xlane.f32.xlu0 %v10509
        %v10511 = vpop.xlane.xlu0 %10510
        %v10512 = vsel %vm8157, %v10344, 0.0
        %10513 = vadd.xlane.f32.xlu0 %v10512
        %v10514 = vpop.xlane.xlu0 %10513
        %v10515 = vsel %vm8157, %v10345, 0.0
        %10516 = vadd.xlane.f32.xlu0 %v10515
        %v10517 = vpop.xlane.xlu0 %10516
        %v10518 = vsel %vm8157, %v10346, 0.0
        %10519 = vadd.xlane.f32.xlu0 %v10518
        %v10520 = vpop.xlane.xlu0 %10519
        %v10521 = vsel %vm8157, %v10347, 0.0
        %10522 = vadd.xlane.f32.xlu0 %v10521
        %v10523 = vpop.xlane.xlu0 %10522
        %v10524 = vsel %vm8157, %v10348, 0.0
        %10525 = vadd.xlane.f32.xlu0 %v10524
        %v10526 = vpop.xlane.xlu0 %10525
        %v10527 = vsel %vm8157, %v10349, 0.0
        %10528 = vadd.xlane.f32.xlu0 %v10527
        %v10529 = vpop.xlane.xlu0 %10528
        %v10530 = vsel %vm8157, %v10350, 0.0
        %10531 = vadd.xlane.f32.xlu0 %v10530
        %v10532 = vpop.xlane.xlu0 %10531
        %v10533 = vsel %vm8157, %v10351, 0.0
        %10534 = vadd.xlane.f32.xlu0 %v10533
        %v10535 = vpop.xlane.xlu0 %10534
        %v10536 = vsel %vm8157, %v10352, 0.0
        %10537 = vadd.xlane.f32.xlu0 %v10536
        %v10538 = vpop.xlane.xlu0 %10537
        %v10539 = vsel %vm8157, %v10353, 0.0
        %10540 = vadd.xlane.f32.xlu0 %v10539
        %v10541 = vpop.xlane.xlu0 %10540
        %v10542 = vsel %vm8157, %v10354, 0.0
        %10543 = vadd.xlane.f32.xlu0 %v10542
        %v10544 = vpop.xlane.xlu0 %10543
        %v10545 = vsel %vm8157, %v10355, 0.0
        %10546 = vadd.xlane.f32.xlu0 %v10545
        %v10547 = vpop.xlane.xlu0 %10546
        %v10548 = vsub.f32 0.0, %v10358
        %v10549 = vsub.f32 0.0, %v10361
        %v10550 = vsub.f32 0.0, %v10364
        %v10551 = vsub.f32 0.0, %v10367
        %v10552 = vsub.f32 0.0, %v10370
        %v10553 = vsub.f32 0.0, %v10373
        %v10554 = vsub.f32 0.0, %v10376
        %v10555 = vsub.f32 0.0, %v10379
        %v10556 = vsub.f32 0.0, %v10382
        %v10557 = vsub.f32 0.0, %v10385
        %v10558 = vsub.f32 0.0, %v10388
        %v10559 = vsub.f32 0.0, %v10391
        %v10560 = vsub.f32 0.0, %v10394
        %v10561 = vsub.f32 0.0, %v10397
        %v10562 = vsub.f32 0.0, %v10400
        %v10563 = vsub.f32 0.0, %v10403
        %v10564 = vsub.f32 0.0, %v10406
        %v10565 = vsub.f32 0.0, %v10409
        %v10566 = vsub.f32 0.0, %v10412
        %v10567 = vsub.f32 0.0, %v10415
        %v10568 = vsub.f32 0.0, %v10418
        %v10569 = vsub.f32 0.0, %v10421
        %v10570 = vsub.f32 0.0, %v10424
        %v10571 = vsub.f32 0.0, %v10427
        %v10572 = vsub.f32 0.0, %v10430
        %v10573 = vsub.f32 0.0, %v10433
        %v10574 = vsub.f32 0.0, %v10436
        %v10575 = vsub.f32 0.0, %v10439
        %v10576 = vsub.f32 0.0, %v10442
        %v10577 = vsub.f32 0.0, %v10445
        %v10578 = vsub.f32 0.0, %v10448
        %v10579 = vsub.f32 0.0, %v10451
        %v10580 = vsub.f32 0.0, %v10454
        %v10581 = vsub.f32 0.0, %v10457
        %v10582 = vsub.f32 0.0, %v10460
        %v10583 = vsub.f32 0.0, %v10463
        %v10584 = vsub.f32 0.0, %v10466
        %v10585 = vsub.f32 0.0, %v10469
        %v10586 = vsub.f32 0.0, %v10472
        %v10587 = vsub.f32 0.0, %v10475
        %v10588 = vsub.f32 0.0, %v10478
        %v10589 = vsub.f32 0.0, %v10481
        %v10590 = vsub.f32 0.0, %v10484
        %v10591 = vsub.f32 0.0, %v10487
        %v10592 = vsub.f32 0.0, %v10490
        %v10593 = vsub.f32 0.0, %v10493
        %v10594 = vsub.f32 0.0, %v10496
        %v10595 = vsub.f32 0.0, %v10499
        %v10596 = vsub.f32 0.0, %v10502
        %v10597 = vsub.f32 0.0, %v10505
        %v10598 = vsub.f32 0.0, %v10508
        %v10599 = vsub.f32 0.0, %v10511
        %v10600 = vsub.f32 0.0, %v10514
        %v10601 = vsub.f32 0.0, %v10517
        %v10602 = vsub.f32 0.0, %v10520
        %v10603 = vsub.f32 0.0, %v10523
        %v10604 = vsub.f32 0.0, %v10526
        %v10605 = vsub.f32 0.0, %v10529
        %v10606 = vsub.f32 0.0, %v10532
        %v10607 = vsub.f32 0.0, %v10535
        %v10608 = vsub.f32 0.0, %v10538
        %v10609 = vsub.f32 0.0, %v10541
        %v10610 = vsub.f32 0.0, %v10544
        %v10611 = vsub.f32 0.0, %v10547
        %v10612 = vlaneseq
        %v10613 = vand.u32 %v10612, 127
        %vm10614 = vcmp.eq.s32.totalorder %v10613, 96
        %v10615 = vsel %vm10614, 1, 0
        %vm10616 = vcmp.eq.s32.totalorder %v10615, 1
        %v10617 = vsel %vm10616, %v10548, %v9909
        %v10618 = vsel %vm10616, %v10549, %v9912
        %v10619 = vsel %vm10616, %v10550, %v9915
        %v10620 = vsel %vm10616, %v10551, %v9918
        %v10621 = vsel %vm10616, %v10552, %v9921
        %v10622 = vsel %vm10616, %v10553, %v9924
        %v10623 = vsel %vm10616, %v10554, %v9927
        %v10624 = vsel %vm10616, %v10555, %v9930
        %v10625 = vsel %vm10616, %v10556, %v9933
        %v10626 = vsel %vm10616, %v10557, %v9936
        %v10627 = vsel %vm10616, %v10558, %v9939
        %v10628 = vsel %vm10616, %v10559, %v9942
        %v10629 = vsel %vm10616, %v10560, %v9945
        %v10630 = vsel %vm10616, %v10561, %v9948
        %v10631 = vsel %vm10616, %v10562, %v9951
        %v10632 = vsel %vm10616, %v10563, %v9954
        %v10633 = vsel %vm10616, %v10564, %v9957
        %v10634 = vsel %vm10616, %v10565, %v9960
        %v10635 = vsel %vm10616, %v10566, %v9963
        %v10636 = vsel %vm10616, %v10567, %v9966
        %v10637 = vsel %vm10616, %v10568, %v9969
        %v10638 = vsel %vm10616, %v10569, %v9972
        %v10639 = vsel %vm10616, %v10570, %v9975
        %v10640 = vsel %vm10616, %v10571, %v9978
        %v10641 = vsel %vm10616, %v10572, %v9981
        %v10642 = vsel %vm10616, %v10573, %v9984
        %v10643 = vsel %vm10616, %v10574, %v9987
        %v10644 = vsel %vm10616, %v10575, %v9990
        %v10645 = vsel %vm10616, %v10576, %v9993
        %v10646 = vsel %vm10616, %v10577, %v9996
        %v10647 = vsel %vm10616, %v10578, %v9999
        %v10648 = vsel %vm10616, %v10579, %v10002
        %v10649 = vsel %vm10616, %v10580, %v10005
        %v10650 = vsel %vm10616, %v10581, %v10008
        %v10651 = vsel %vm10616, %v10582, %v10011
        %v10652 = vsel %vm10616, %v10583, %v10014
        %v10653 = vsel %vm10616, %v10584, %v10017
        %v10654 = vsel %vm10616, %v10585, %v10020
        %v10655 = vsel %vm10616, %v10586, %v10023
        %v10656 = vsel %vm10616, %v10587, %v10026
        %v10657 = vsel %vm10616, %v10588, %v10029
        %v10658 = vsel %vm10616, %v10589, %v10032
        %v10659 = vsel %vm10616, %v10590, %v10035
        %v10660 = vsel %vm10616, %v10591, %v10038
        %v10661 = vsel %vm10616, %v10592, %v10041
        %v10662 = vsel %vm10616, %v10593, %v10044
        %v10663 = vsel %vm10616, %v10594, %v10047
        %v10664 = vsel %vm10616, %v10595, %v10050
        %v10665 = vsel %vm10616, %v10596, %v10053
        %v10666 = vsel %vm10616, %v10597, %v10056
        %v10667 = vsel %vm10616, %v10598, %v10059
        %v10668 = vsel %vm10616, %v10599, %v10062
        %v10669 = vsel %vm10616, %v10600, %v10065
        %v10670 = vsel %vm10616, %v10601, %v10068
        %v10671 = vsel %vm10616, %v10602, %v10071
        %v10672 = vsel %vm10616, %v10603, %v10074
        %v10673 = vsel %vm10616, %v10604, %v10077
        %v10674 = vsel %vm10616, %v10605, %v10080
        %v10675 = vsel %vm10616, %v10606, %v10083
        %v10676 = vsel %vm10616, %v10607, %v10086
        %v10677 = vsel %vm10616, %v10608, %v10089
        %v10678 = vsel %vm10616, %v10609, %v10092
        %v10679 = vsel %vm10616, %v10610, %v10095
        %v10680 = vsel %vm10616, %v10611, %v10098
        %10681 = vst [vmem:[%s299] sm:$0xff] %v10617
        %10682 = vst [vmem:[%s299 + $0x8] sm:$0xff] %v10618
        %10683 = vst [vmem:[%s299 + $0x10] sm:$0xff] %v10619
        %10684 = vst [vmem:[%s299 + $0x18] sm:$0xff] %v10620
        %10685 = vst [vmem:[%s299 + $0x20] sm:$0xff] %v10621
        %10686 = vst [vmem:[%s299 + $0x28] sm:$0xff] %v10622
        %10687 = vst [vmem:[%s299 + $0x30] sm:$0xff] %v10623
        %10688 = vst [vmem:[%s299 + $0x38] sm:$0xff] %v10624
        %10689 = vst [vmem:[%s299 + $0x40] sm:$0xff] %v10625
        %10690 = vst [vmem:[%s299 + $0x48] sm:$0xff] %v10626
        %10691 = vst [vmem:[%s299 + $0x50] sm:$0xff] %v10627
        %10692 = vst [vmem:[%s299 + $0x58] sm:$0xff] %v10628
        %10693 = vst [vmem:[%s299 + $0x60] sm:$0xff] %v10629
        %10694 = vst [vmem:[%s299 + $0x68] sm:$0xff] %v10630
        %10695 = vst [vmem:[%s299 + $0x70] sm:$0xff] %v10631
        %10696 = vst [vmem:[%s299 + $0x78] sm:$0xff] %v10632
        %10697 = vst [vmem:[%s299 + $0x80] sm:$0xff] %v10633
        %10698 = vst [vmem:[%s299 + $0x88] sm:$0xff] %v10634
        %10699 = vst [vmem:[%s299 + $0x90] sm:$0xff] %v10635
        %10700 = vst [vmem:[%s299 + $0x98] sm:$0xff] %v10636
        %10701 = vst [vmem:[%s299 + $0xa0] sm:$0xff] %v10637
        %10702 = vst [vmem:[%s299 + $0xa8] sm:$0xff] %v10638
        %10703 = vst [vmem:[%s299 + $0xb0] sm:$0xff] %v10639
        %10704 = vst [vmem:[%s299 + $0xb8] sm:$0xff] %v10640
        %10705 = vst [vmem:[%s299 + $0xc0] sm:$0xff] %v10641
        %10706 = vst [vmem:[%s299 + $0xc8] sm:$0xff] %v10642
        %10707 = vst [vmem:[%s299 + $0xd0] sm:$0xff] %v10643
        %10708 = vst [vmem:[%s299 + $0xd8] sm:$0xff] %v10644
        %10709 = vst [vmem:[%s299 + $0xe0] sm:$0xff] %v10645
        %10710 = vst [vmem:[%s299 + $0xe8] sm:$0xff] %v10646
        %10711 = vst [vmem:[%s299 + $0xf0] sm:$0xff] %v10647
        %10712 = vst [vmem:[%s299 + $0xf8] sm:$0xff] %v10648
        %10713 = vst [vmem:[%s299 + $0x100] sm:$0xff] %v10649
        %10714 = vst [vmem:[%s299 + $0x108] sm:$0xff] %v10650
        %10715 = vst [vmem:[%s299 + $0x110] sm:$0xff] %v10651
        %10716 = vst [vmem:[%s299 + $0x118] sm:$0xff] %v10652
        %10717 = vst [vmem:[%s299 + $0x120] sm:$0xff] %v10653
        %10718 = vst [vmem:[%s299 + $0x128] sm:$0xff] %v10654
        %10719 = vst [vmem:[%s299 + $0x130] sm:$0xff] %v10655
        %10720 = vst [vmem:[%s299 + $0x138] sm:$0xff] %v10656
        %10721 = vst [vmem:[%s299 + $0x140] sm:$0xff] %v10657
        %10722 = vst [vmem:[%s299 + $0x148] sm:$0xff] %v10658
        %10723 = vst [vmem:[%s299 + $0x150] sm:$0xff] %v10659
        %10724 = vst [vmem:[%s299 + $0x158] sm:$0xff] %v10660
        %10725 = vst [vmem:[%s299 + $0x160] sm:$0xff] %v10661
        %10726 = vst [vmem:[%s299 + $0x168] sm:$0xff] %v10662
        %10727 = vst [vmem:[%s299 + $0x170] sm:$0xff] %v10663
        %10728 = vst [vmem:[%s299 + $0x178] sm:$0xff] %v10664
        %10729 = vst [vmem:[%s299 + $0x180] sm:$0xff] %v10665
        %10730 = vst [vmem:[%s299 + $0x188] sm:$0xff] %v10666
        %10731 = vst [vmem:[%s299 + $0x190] sm:$0xff] %v10667
        %10732 = vst [vmem:[%s299 + $0x198] sm:$0xff] %v10668
        %10733 = vst [vmem:[%s299 + $0x1a0] sm:$0xff] %v10669
        %10734 = vst [vmem:[%s299 + $0x1a8] sm:$0xff] %v10670
        %10735 = vst [vmem:[%s299 + $0x1b0] sm:$0xff] %v10671
        %10736 = vst [vmem:[%s299 + $0x1b8] sm:$0xff] %v10672
        %10737 = vst [vmem:[%s299 + $0x1c0] sm:$0xff] %v10673
        %10738 = vst [vmem:[%s299 + $0x1c8] sm:$0xff] %v10674
        %10739 = vst [vmem:[%s299 + $0x1d0] sm:$0xff] %v10675
        %10740 = vst [vmem:[%s299 + $0x1d8] sm:$0xff] %v10676
        %10741 = vst [vmem:[%s299 + $0x1e0] sm:$0xff] %v10677
        %10742 = vst [vmem:[%s299 + $0x1e8] sm:$0xff] %v10678
        %10743 = vst [vmem:[%s299 + $0x1f0] sm:$0xff] %v10679
        %10744 = vst [vmem:[%s299 + $0x1f8] sm:$0xff] %v10680
        %s10745 = sand.u32 %s203, 1
        %s10746 = scalar_lea.sflag [#allocation3], %s10745
        %s10747 = sand.u32 %s203, 1
        %s10748 = smul.addr %s10747, 512
        %s10749 = scalar_lea.vmem [#allocation2], %s10748
        // Predicated region
        $region53: #{tpu_custom_call.1} parent=51 // pred_check
          %p10750 = pneg %p213
        $region54: #{tpu_custom_call.1} parent=51 // pred_check_branch
          %10752 = sbr.rel (%p10750) target = $region56
        $region55: #{tpu_custom_call.1} parent=51 // pred_region
          %s10753 = smul.u32 64, %s22
          %10755 = vsyncadd %s10746, 0
          %s10756 = smul.addr %s10753, 8
          %s10757 = scalar_lea.hbm %s8, %s10756
          %s10758 = sshll.u32 %s10749, 4
          %s10759 = int_to_ptr.vmem [resolvable:$true] %s10758
          %s10760 = sshll.u32 %s10757, 4
          %s10761 = int_to_ptr.hbm [resolvable:$true] %s10760
          %10766 = dma.vmem_to_hbm [thread:$0]  %s10759, 8192, %s10761, %s10746, 128, 128, 8
        $region56: #{tpu_custom_call.1} parent=51 // pred_fallthru
          _
      $region52: #{tpu_custom_call.1} parent=5 // pred_fallthru
        _
      %p10767 = scmp.le.s32.totalorder 2, %s17
      // Predicated region
      $region57: #{tpu_custom_call.1} parent=5 // pred_check
        %p10768 = pneg %p10767
      $region58: #{tpu_custom_call.1} parent=5 // pred_check_branch
        %10770 = sbr.rel (%p10768) target = $region60
      $region59: #{tpu_custom_call.1} parent=5 // pred_region
        %s10771 = ssub.s32 %s17, 2
        // Predicated region
        $region61: #{tpu_custom_call.1} parent=59 // pred_check
          %p10772 = pneg %p219
        $region62: #{tpu_custom_call.1} parent=59 // pred_check_branch
          %10774 = sbr.rel (%p10772) target = $region64
        $region63: #{tpu_custom_call.1} parent=59 // pred_region
          %s10775 = sand.u32 %s204, 1
          %s10776 = scalar_lea.sflag [#allocation3], %s10775
          %s10777 = sand.u32 %s204, 1
          %s10778 = smul.addr %s10777, 512
          %s10779 = scalar_lea.vmem [#allocation2], %s10778
          %10781 = dma.done %s10776, 8192
        $region64: #{tpu_custom_call.1} parent=59 // pred_fallthru
          _
      $region60: #{tpu_custom_call.1} parent=5 // pred_fallthru
        _
    $region6: #{tpu_custom_call.1} parent=1 // loop_footer
      %s21 = sadd.s32 1, %s17
    $region7: #{tpu_custom_call.1} parent=1 // loop_footer_branch
      %16 = sbr.rel target = $region3
    $region8: #{tpu_custom_call.1} parent=1 // loop_exit
      _
    %10782 = vsyncpa [#allocation3], 1
    %s10783 = scalar_lea.sflag [#allocation3], 1
    %10784 = vsyncpa %s10783, 1

</llo_original>
